<compile_context>
chip_gen: v7x
topology: tpu7x:2x2x1
jax: 0.10.0
libtpu: 0.0.40
codegen_flags: <defaults>
</compile_context>

<pallas_src>
import jax
import jax.numpy as jnp
from jax import lax
from jax.experimental import pallas as pl
from jax.experimental.pallas import tpu as pltpu

# ------------------------- config (small, synthetic) -------------------------
V = 50                 # word vocab size
D = 32                 # d_word_embed
C = 4                  # channel_size
K1, K2 = 3, 3          # conv_kernel_1 / conv_kernel_2 (odd => no maxlen adjust)
SEQ_MAXLEN = 8         # config.seq_maxlen (+ (K1+1)%2 == 0)
REL_MAXLEN = 8         # config.rel_maxlen (+ (K2+1)%2 == 0)
PK1, PK2 = 2, 2        # pool_kernel_1 / pool_kernel_2
P1 = SEQ_MAXLEN // PK1
P2 = REL_MAXLEN // PK2
FC_HID = 20
L1 = SEQ_MAXLEN        # inputs are padded to maxlen
L2 = REL_MAXLEN
EPS = 1e-12            # cosine-norm guard (all-zero / padded rows)
NEG_BIG = -1e30        # additive "not selected" value (safe: conv output >= 0, f32)


# ------------------------------- Pallas kernel -------------------------------
def _match_pyramid_kernel(seq_ref, rel_ref, rowadd_ref, coladd_ref,
                          convw_ref, convb_ref, w1_ref, b1_ref, w2_ref, b2_ref,
                          o_ref):
    f32 = jnp.float32
    bb = seq_ref.shape[-1]                       # batch rows per block (lane axis)

    seq = seq_ref[...]                           # (D, L1, BB) -- batch on lanes
    rel = rel_ref[0]                             # (D, L2, BB)

    # cosine normalization over the embedding axis (leading D) -- rsqrt on EUP
    seq_n = seq * lax.rsqrt(jnp.sum(seq * seq, axis=0, keepdims=True) + EPS)
    rel_n = rel * lax.rsqrt(jnp.sum(rel * rel, axis=0, keepdims=True) + EPS)

    # cross[i, j, b] = sum_d seq_n[d, i, b] * rel_n[d, j, b]
    # lane-dense VPU FMAs (256 full-vreg FMAs) instead of 128 tiny batched matmuls.
    cross = jnp.zeros((L1, L2, bb), f32)
    for d in range(D):
        cross = cross + seq_n[d][:, None, :] * rel_n[d][None, :, :]

    # Conv2d(1, C, (3,3), "same"): tap-outer / channel-inner accumulation.
    # Row (di) shift = static slice along the leading L1 axis (zero padded);
    # column (dj) shift = one sublane roll + a one-vreg boundary mask.
    zero_row = jnp.zeros((1, L2, bb), f32)
    col_idx = lax.broadcasted_iota(jnp.int32, (1, L2, bb), 1)
    accs = [None] * C
    for di in (-1, 0, 1):
        if di == 0:
            srow = cross
        elif di == 1:                            # shifted[i] = cross[i+1]
            srow = jnp.concatenate([cross[1:], zero_row], axis=0)
        else:                                    # shifted[i] = cross[i-1]
            srow = jnp.concatenate([zero_row, cross[:-1]], axis=0)
        for dj in (-1, 0, 1):
            if dj == 0:
                s = srow
            else:
                s = pltpu.roll(srow, shift=(-dj) % L2, axis=1)
                if dj == 1:
                    s = jnp.where(col_idx < (L2 - 1), s, 0.0)
                else:
                    s = jnp.where(col_idx >= 1, s, 0.0)
            k = (di + 1) * K2 + (dj + 1)         # flattened 3x3 tap index
            for c in range(C):
                tap = s * convw_ref[c, k]
                accs[c] = tap if accs[c] is None else accs[c] + tap

    # ReLU + dynamic-pooling gather + 2x2 max-pool fused as two masked max-reductions.
    rowadd = rowadd_ref[...]                     # (P1, L1, BB), 0 / -1e30
    coladd = coladd_ref[0]                       # (P2, L2, BB), 0 / -1e30
    pieces = []
    for c in range(C):
        conv_c = jnp.maximum(accs[c] + convb_ref[c], 0.0)             # (L1, L2, BB)
        for pi in range(P1):
            grow = jnp.max(conv_c + rowadd[pi][:, None, :], axis=0)   # (L2, BB)
            pooled = jnp.max(grow[None, :, :] + coladd, axis=1)       # (P2, BB)
            pieces.append(pooled)
    # flat row order = c*P1*P2 + pi*P2 + pj, matching torch .view on (B, C, P1, P2)
    flat = jnp.concatenate(pieces, axis=0)       # (C*P1*P2, BB) = (64, BB)

    # fc1 + ReLU (MXU), fc2 + sigmoid; batch stays on the lane axis -> lane-dense store.
    h = jnp.dot(w1_ref[...], flat, preferred_element_type=f32)        # (FC_HID, BB)
    h = jnp.maximum(h + b1_ref[...], 0.0)
    s = jnp.dot(w2_ref[...], h, preferred_element_type=f32) + b2_ref[...]   # (1, BB)
    o_ref[0, 0] = pl.reciprocal(1.0 + jnp.exp(-s), approx=True)


# ------------------------------- glue / wrappers ------------------------------
def _round_up(x, m):
    return ((x + m - 1) // m) * m


def _dpool_index(lengths, max_len):
    # matches torch: stride = max_len/len ; idx[i] = int(i/stride); len clamped >= 1
    lens = jnp.maximum(lengths.astype(jnp.float32), 1.0)
    i = jnp.arange(max_len, dtype=jnp.float32)[None, :]
    stride = max_len / lens[:, None]
    idx = jnp.floor(i / stride).astype(jnp.int32)
    return jnp.clip(idx, 0, max_len - 1)


def _relation_scores(params, seq_emb, seq_len, rel_emb, rel_len):
    """seq_emb: (B, L1, D); rel_emb: (G, B, L2, D); rel_len: (G, B) -> (G, B) scores."""
    f32 = jnp.float32
    G, B = rel_len.shape
    BB = min(512, _round_up(B, 128))             # lane-dense batch block (multiple of 128)
    B_pad = _round_up(B, BB)
    nb = B_pad // BB
    pad = B_pad - B

    seq_emb = jnp.pad(seq_emb.astype(f32), ((0, pad), (0, 0), (0, 0)))
    rel_emb = jnp.pad(rel_emb.astype(f32), ((0, 0), (0, pad), (0, 0), (0, 0)))
    seq_len_p = jnp.pad(seq_len, (0, pad), constant_values=1)
    rel_len_p = jnp.pad(rel_len, ((0, 0), (0, pad)), constant_values=1)

    # batch-on-lane layouts: embeddings (D, L, B_pad), masks (P, L, B_pad)
    seq_t = jnp.transpose(seq_emb, (2, 1, 0))                                # (D, L1, B_pad)
    rel_t = jnp.transpose(rel_emb, (0, 3, 2, 1))                             # (G, D, L2, B_pad)

    # TODO(synk): the original dynamic_pooling_index builds Python lists on the host;
    # here it is vectorized into compact additive 0/-1e30 select masks (JAX glue).
    idx1 = _dpool_index(seq_len_p, SEQ_MAXLEN)                               # (B_pad, L1)
    idx2 = _dpool_index(rel_len_p.reshape(-1), REL_MAXLEN).reshape(G, B_pad, L2)

    sel1 = (idx1.reshape(B_pad, P1, PK1)[:, :, :, None]
            == jnp.arange(L1, dtype=jnp.int32)[None, None, None, :]).any(axis=2)
    rowadd = jnp.where(sel1, 0.0, NEG_BIG).astype(f32)                       # (B_pad, P1, L1)
    rowadd = jnp.transpose(rowadd, (1, 2, 0))                                # (P1, L1, B_pad)

    sel2 = (idx2.reshape(G, B_pad, P2, PK2)[..., None]
            == jnp.arange(L2, dtype=jnp.int32)).any(axis=3)
    coladd = jnp.where(sel2, 0.0, NEG_BIG).astype(f32)                       # (G, B_pad, P2, L2)
    coladd = jnp.transpose(coladd, (0, 2, 3, 1))                             # (G, P2, L2, B_pad)

    convw = params["conv_w"].reshape(C, K1 * K2).astype(f32)                 # (C, 9)
    convb = params["conv_b"].astype(f32)                                     # (C,)
    w1 = params["fc1_w"].astype(f32)                                         # (FC_HID, 64)
    b1 = params["fc1_b"].astype(f32)[:, None]                                # (FC_HID, 1)
    w2 = params["fc2_w"].astype(f32)                                         # (1, FC_HID)
    b2 = params["fc2_b"].astype(f32)[:, None]                                # (1, 1)

    smem = pltpu.MemorySpace.SMEM
    out = pl.pallas_call(
        _match_pyramid_kernel,
        out_shape=jax.ShapeDtypeStruct((nb, G, 1, BB), f32),
        grid=(nb, G),
        in_specs=[
            pl.BlockSpec((D, L1, BB), lambda bb, g: (0, 0, bb)),             # seq (shared over g)
            pl.BlockSpec((1, D, L2, BB), lambda bb, g: (g, 0, 0, bb)),       # rel
            pl.BlockSpec((P1, L1, BB), lambda bb, g: (0, 0, bb)),            # row select mask
            pl.BlockSpec((1, P2, L2, BB), lambda bb, g: (g, 0, 0, bb)),      # col select mask
            pl.BlockSpec((C, K1 * K2), lambda bb, g: (0, 0), memory_space=smem),
            pl.BlockSpec((C,), lambda bb, g: (0,), memory_space=smem),
            pl.BlockSpec((FC_HID, C * P1 * P2), lambda bb, g: (0, 0)),
            pl.BlockSpec((FC_HID, 1), lambda bb, g: (0, 0)),
            pl.BlockSpec((1, FC_HID), lambda bb, g: (0, 0)),
            pl.BlockSpec((1, 1), lambda bb, g: (0, 0)),
        ],
        out_specs=pl.BlockSpec((1, 1, 1, BB), lambda bb, g: (bb, g, 0, 0)),
        compiler_params=pltpu.CompilerParams(
            dimension_semantics=("parallel", "parallel")),
    )(seq_t, rel_t, rowadd, coladd, convw, convb, w1, b1, w2, b2)

    scores = jnp.transpose(out[:, :, 0, :], (1, 0, 2)).reshape(G, B_pad)
    return scores[:, :B]


def forward(params, seqs, seq_len, pos_rel, pos_rel_len, neg_rel, neg_rel_len):
    neg_size, batch, neg_len = neg_rel.shape
    emb = params["embed"]
    seqs_embed = emb[seqs]                                   # (B, L1, D)
    pos_embed = emb[pos_rel]                                 # (B, L2, D)
    neg_embed = emb[neg_rel]                                 # (NEG, B, L2, D)

    rel_g = jnp.concatenate([pos_embed[None], neg_embed], axis=0)            # (NEG+1, B, L2, D)
    rel_len_g = jnp.concatenate([pos_rel_len[None], neg_rel_len], axis=0)    # (NEG+1, B)

    scores = _relation_scores(params, seqs_embed, seq_len, rel_g, rel_len_g)  # (NEG+1, B)
    pos_score = jnp.broadcast_to(scores[0][None, :], (neg_size, batch))
    neg_score = scores[1:]
    return pos_score, neg_score


# ----------------------------- pure-JAX reference -----------------------------
def _match_pyramid_ref(params, seq, rel, seq_len, rel_len):
    b = seq.shape[0]
    seq_n = seq / jnp.sqrt(jnp.sum(seq * seq, axis=2, keepdims=True) + EPS)
    rel_n = rel / jnp.sqrt(jnp.sum(rel * rel, axis=2, keepdims=True) + EPS)
    cross = jnp.einsum("bld,bmd->blm", seq_n, rel_n,
                       precision=lax.Precision.HIGHEST)[:, None]             # (B,1,L1,L2)
    conv = lax.conv_general_dilated(cross, params["conv_w"], (1, 1),
                                    [(K1 // 2, K1 // 2), (K2 // 2, K2 // 2)],
                                    dimension_numbers=("NCHW", "OIHW", "NCHW"),
                                    precision=lax.Precision.HIGHEST)
    conv = jnp.maximum(conv + params["conv_b"][None, :, None, None], 0.0)
    idx1 = _dpool_index(seq_len, SEQ_MAXLEN)
    idx2 = _dpool_index(rel_len, REL_MAXLEN)
    g1 = jnp.take_along_axis(conv, jnp.broadcast_to(idx1[:, None, :, None],
                                                    (b, C, SEQ_MAXLEN, L2)), axis=2)
    g2 = jnp.take_along_axis(g1, jnp.broadcast_to(idx2[:, None, None, :],
                                                  (b, C, SEQ_MAXLEN, REL_MAXLEN)), axis=3)
    pooled = g2.reshape(b, C, P1, PK1, P2, PK2).max(axis=(3, 5))
    flat = pooled.reshape(b, -1)
    h = jnp.maximum(flat @ params["fc1_w"].T + params["fc1_b"], 0.0)
    out = h @ params["fc2_w"].T + params["fc2_b"]
    return jax.nn.sigmoid(out)


def forward_ref(params, seqs, seq_len, pos_rel, pos_rel_len, neg_rel, neg_rel_len):
    neg_size, batch, neg_len = neg_rel.shape
    emb = params["embed"]
    seqs_embed = emb[seqs]
    pos_embed = emb[pos_rel]
    pos_score = _match_pyramid_ref(params, seqs_embed, pos_embed, seq_len, pos_rel_len)
    pos_score = jnp.broadcast_to(pos_score[:, 0][None, :], (neg_size, batch))
    neg_embed = emb[neg_rel.reshape(-1, neg_len)]
    seqs_rep = jnp.broadcast_to(seqs_embed[None], (neg_size, batch, L1, D)).reshape(-1, L1, D)
    seq_len_rep = jnp.broadcast_to(seq_len[None], (neg_size, batch)).reshape(-1)
    neg_score = _match_pyramid_ref(params, seqs_rep, neg_embed, seq_len_rep,
                                   neg_rel_len.reshape(-1))
    neg_score = neg_score[:, 0].reshape(neg_size, batch)
    return pos_score, neg_score


# -------------------------------- parameters ----------------------------------
def init_params(key):
    ks = jax.random.split(key, 7)
    embed = jax.random.normal(ks[0], (V, D), jnp.float32)
    conv_w = jax.random.normal(ks[1], (C, 1, K1, K2), jnp.float32) / (K1 * K2)
    conv_b = jax.random.normal(ks[2], (C,), jnp.float32) * 0.1
    fc1_w = jax.random.normal(ks[3], (FC_HID, C * P1 * P2), jnp.float32) / jnp.sqrt(1.0 * C * P1 * P2)
    fc1_b = jax.random.normal(ks[4], (FC_HID,), jnp.float32) * 0.1
    fc2_w = jax.random.normal(ks[5], (1, FC_HID), jnp.float32) / jnp.sqrt(1.0 * FC_HID)
    fc2_b = jax.random.normal(ks[6], (1,), jnp.float32) * 0.1
    return {"embed": embed, "conv_w": conv_w, "conv_b": conv_b,
            "fc1_w": fc1_w, "fc1_b": fc1_b, "fc2_w": fc2_w, "fc2_b": fc2_b}


# ------------------------------------ main -------------------------------------
if __name__ == "__main__":
    key = jax.random.PRNGKey(0)
    kp, ki = jax.random.split(key)
    params = init_params(kp)

    B, NEG = 2, 2
    k1, k2, k3 = jax.random.split(ki, 3)
    seqs = jax.random.randint(k1, (B, L1), 0, V)
    seq_len = jnp.array([L1, 5], dtype=jnp.int32)
    pos_rel = jax.random.randint(k2, (B, L2), 0, V)
    pos_rel_len = jnp.array([6, L2], dtype=jnp.int32)
    neg_rel = jax.random.randint(k3, (NEG, B, L2), 0, V)
    neg_rel_len = jnp.array([[7, 4], [L2, 3]], dtype=jnp.int32)
    # (pos_rel1/pos_rel2/neg_rel1/neg_rel2 from the batch tuple are unused in forward)

    fwd = jax.jit(forward)
    pos_score, neg_score = fwd(params, seqs, seq_len, pos_rel, pos_rel_len,
                               neg_rel, neg_rel_len)
    jax.block_until_ready((pos_score, neg_score))

    pos_ref, neg_ref = forward_ref(params, seqs, seq_len, pos_rel, pos_rel_len,
                                   neg_rel, neg_rel_len)

    assert pos_score.shape == (NEG, B) and neg_score.shape == (NEG, B)
    assert jnp.allclose(pos_score, pos_ref, atol=5e-3), (pos_score, pos_ref)
    assert jnp.allclose(neg_score, neg_ref, atol=5e-3), (neg_score, neg_ref)
    print("KERNEL_OK")
</pallas_src>

<mosaic_0001>
module attributes {stable_mosaic.version = 11 : i64} {
  func.func @_match_pyramid_kernel(%arg0: i32, %arg1: i32, %arg2: memref<32x8x128xf32, #tpu.memory_space<vmem>>, %arg3: memref<1x32x8x128xf32, #tpu.memory_space<vmem>>, %arg4: memref<4x8x128xf32, #tpu.memory_space<vmem>>, %arg5: memref<1x4x8x128xf32, #tpu.memory_space<vmem>>, %arg6: memref<4x9xf32, #tpu.memory_space<smem>>, %arg7: memref<4xf32, #tpu.memory_space<smem>>, %arg8: memref<20x64xf32, #tpu.memory_space<vmem>>, %arg9: memref<20x1xf32, #tpu.memory_space<vmem>>, %arg10: memref<1x20xf32, #tpu.memory_space<vmem>>, %arg11: memref<1x1xf32, #tpu.memory_space<vmem>>, %arg12: memref<1x1x1x128xf32, #tpu.memory_space<vmem>>) attributes {dimension_semantics = [#tpu.dimension_semantics<parallel>, #tpu.dimension_semantics<parallel>], iteration_bounds = array<i64: 1, 3>, scalar_prefetch = 0 : i64, scratch_operands = 0 : i64, tpu.core_type = #tpu.core_type<tc>, window_params = [{transform_indices = @transform_0, window_bounds = array<i64: 32, 8, 128>}, {transform_indices = @transform_1, window_bounds = array<i64: 1, 32, 8, 128>}, {transform_indices = @transform_2, window_bounds = array<i64: 4, 8, 128>}, {transform_indices = @transform_3, window_bounds = array<i64: 1, 4, 8, 128>}, {transform_indices = @transform_4, window_bounds = array<i64: 4, 9>}, {transform_indices = @transform_5, window_bounds = array<i64: 4>}, {pipeline_mode = #tpu.pipeline_mode<synchronous>, transform_indices = @transform_6, window_bounds = array<i64: 20, 64>}, {pipeline_mode = #tpu.pipeline_mode<synchronous>, transform_indices = @transform_7, window_bounds = array<i64: 20, 1>}, {pipeline_mode = #tpu.pipeline_mode<synchronous>, transform_indices = @transform_8, window_bounds = array<i64: 1, 20>}, {pipeline_mode = #tpu.pipeline_mode<synchronous>, transform_indices = @transform_9, window_bounds = array<i64: 1, 1>}, {transform_indices = @transform_10, window_bounds = array<i64: 1, 1, 1, 128>}]} {
    %c0 = arith.constant 0 : index
    %c0_0 = arith.constant 0 : index
    %c0_1 = arith.constant 0 : index
    %0 = vector.load %arg2[%c0, %c0_0, %c0_1] : memref<32x8x128xf32, #tpu.memory_space<vmem>>, vector<32x8x128xf32>
    %c0_2 = arith.constant 0 : index
    %c0_3 = arith.constant 0 : index
    %c0_4 = arith.constant 0 : index
    %c0_5 = arith.constant 0 : index
    %1 = vector.load %arg3[%c0_2, %c0_3, %c0_4, %c0_5] : memref<1x32x8x128xf32, #tpu.memory_space<vmem>>, vector<1x32x8x128xf32>
    %2 = vector.shape_cast %1 : vector<1x32x8x128xf32> to vector<32x8x128xf32>
    %3 = arith.mulf %0, %0 : vector<32x8x128xf32>
    %cst = arith.constant dense<0.000000e+00> : vector<8x128xf32>
    %4 = vector.multi_reduction <add>, %3, %cst [0] : vector<32x8x128xf32> to vector<8x128xf32>
    %5 = vector.shape_cast %4 : vector<8x128xf32> to vector<1x8x128xf32>
    %cst_6 = arith.constant 9.99999996E-13 : f32
    %6 = vector.broadcast %cst_6 : f32 to vector<1x8x128xf32>
    %7 = arith.addf %5, %6 : vector<1x8x128xf32>
    %8 = math.rsqrt %7 : vector<1x8x128xf32>
    %9 = vector.broadcast %8 : vector<1x8x128xf32> to vector<32x8x128xf32>
    %10 = arith.mulf %0, %9 : vector<32x8x128xf32>
    %11 = arith.mulf %2, %2 : vector<32x8x128xf32>
    %cst_7 = arith.constant dense<0.000000e+00> : vector<8x128xf32>
    %12 = vector.multi_reduction <add>, %11, %cst_7 [0] : vector<32x8x128xf32> to vector<8x128xf32>
    %13 = vector.shape_cast %12 : vector<8x128xf32> to vector<1x8x128xf32>
    %cst_8 = arith.constant 9.99999996E-13 : f32
    %14 = vector.broadcast %cst_8 : f32 to vector<1x8x128xf32>
    %15 = arith.addf %13, %14 : vector<1x8x128xf32>
    %16 = math.rsqrt %15 : vector<1x8x128xf32>
    %17 = vector.broadcast %16 : vector<1x8x128xf32> to vector<32x8x128xf32>
    %18 = arith.mulf %2, %17 : vector<32x8x128xf32>
    %cst_9 = arith.constant 0.000000e+00 : f32
    %19 = vector.broadcast %cst_9 : f32 to vector<8x8x128xf32>
    %20 = vector.extract_strided_slice %10 {offsets = [0, 0, 0], sizes = [1, 8, 128], strides = [1, 1, 1]} : vector<32x8x128xf32> to vector<1x8x128xf32>
    %21 = vector.shape_cast %20 : vector<1x8x128xf32> to vector<8x128xf32>
    %22 = vector.shape_cast %21 : vector<8x128xf32> to vector<8x1x128xf32>
    %23 = vector.extract_strided_slice %18 {offsets = [0, 0, 0], sizes = [1, 8, 128], strides = [1, 1, 1]} : vector<32x8x128xf32> to vector<1x8x128xf32>
    %24 = vector.shape_cast %23 : vector<1x8x128xf32> to vector<8x128xf32>
    %25 = vector.shape_cast %24 : vector<8x128xf32> to vector<1x8x128xf32>
    %26 = vector.broadcast %22 : vector<8x1x128xf32> to vector<8x8x128xf32>
    %27 = vector.broadcast %25 : vector<1x8x128xf32> to vector<8x8x128xf32>
    %28 = arith.mulf %26, %27 : vector<8x8x128xf32>
    %29 = arith.addf %19, %28 : vector<8x8x128xf32>
    %30 = vector.extract_strided_slice %10 {offsets = [1, 0, 0], sizes = [1, 8, 128], strides = [1, 1, 1]} : vector<32x8x128xf32> to vector<1x8x128xf32>
    %31 = vector.shape_cast %30 : vector<1x8x128xf32> to vector<8x128xf32>
    %32 = vector.shape_cast %31 : vector<8x128xf32> to vector<8x1x128xf32>
    %33 = vector.extract_strided_slice %18 {offsets = [1, 0, 0], sizes = [1, 8, 128], strides = [1, 1, 1]} : vector<32x8x128xf32> to vector<1x8x128xf32>
    %34 = vector.shape_cast %33 : vector<1x8x128xf32> to vector<8x128xf32>
    %35 = vector.shape_cast %34 : vector<8x128xf32> to vector<1x8x128xf32>
    %36 = vector.broadcast %32 : vector<8x1x128xf32> to vector<8x8x128xf32>
    %37 = vector.broadcast %35 : vector<1x8x128xf32> to vector<8x8x128xf32>
    %38 = arith.mulf %36, %37 : vector<8x8x128xf32>
    %39 = arith.addf %29, %38 : vector<8x8x128xf32>
    %40 = vector.extract_strided_slice %10 {offsets = [2, 0, 0], sizes = [1, 8, 128], strides = [1, 1, 1]} : vector<32x8x128xf32> to vector<1x8x128xf32>
    %41 = vector.shape_cast %40 : vector<1x8x128xf32> to vector<8x128xf32>
    %42 = vector.shape_cast %41 : vector<8x128xf32> to vector<8x1x128xf32>
    %43 = vector.extract_strided_slice %18 {offsets = [2, 0, 0], sizes = [1, 8, 128], strides = [1, 1, 1]} : vector<32x8x128xf32> to vector<1x8x128xf32>
    %44 = vector.shape_cast %43 : vector<1x8x128xf32> to vector<8x128xf32>
    %45 = vector.shape_cast %44 : vector<8x128xf32> to vector<1x8x128xf32>
    %46 = vector.broadcast %42 : vector<8x1x128xf32> to vector<8x8x128xf32>
    %47 = vector.broadcast %45 : vector<1x8x128xf32> to vector<8x8x128xf32>
    %48 = arith.mulf %46, %47 : vector<8x8x128xf32>
    %49 = arith.addf %39, %48 : vector<8x8x128xf32>
    %50 = vector.extract_strided_slice %10 {offsets = [3, 0, 0], sizes = [1, 8, 128], strides = [1, 1, 1]} : vector<32x8x128xf32> to vector<1x8x128xf32>
    %51 = vector.shape_cast %50 : vector<1x8x128xf32> to vector<8x128xf32>
    %52 = vector.shape_cast %51 : vector<8x128xf32> to vector<8x1x128xf32>
    %53 = vector.extract_strided_slice %18 {offsets = [3, 0, 0], sizes = [1, 8, 128], strides = [1, 1, 1]} : vector<32x8x128xf32> to vector<1x8x128xf32>
    %54 = vector.shape_cast %53 : vector<1x8x128xf32> to vector<8x128xf32>
    %55 = vector.shape_cast %54 : vector<8x128xf32> to vector<1x8x128xf32>
    %56 = vector.broadcast %52 : vector<8x1x128xf32> to vector<8x8x128xf32>
    %57 = vector.broadcast %55 : vector<1x8x128xf32> to vector<8x8x128xf32>
    %58 = arith.mulf %56, %57 : vector<8x8x128xf32>
    %59 = arith.addf %49, %58 : vector<8x8x128xf32>
    %60 = vector.extract_strided_slice %10 {offsets = [4, 0, 0], sizes = [1, 8, 128], strides = [1, 1, 1]} : vector<32x8x128xf32> to vector<1x8x128xf32>
    %61 = vector.shape_cast %60 : vector<1x8x128xf32> to vector<8x128xf32>
    %62 = vector.shape_cast %61 : vector<8x128xf32> to vector<8x1x128xf32>
    %63 = vector.extract_strided_slice %18 {offsets = [4, 0, 0], sizes = [1, 8, 128], strides = [1, 1, 1]} : vector<32x8x128xf32> to vector<1x8x128xf32>
    %64 = vector.shape_cast %63 : vector<1x8x128xf32> to vector<8x128xf32>
    %65 = vector.shape_cast %64 : vector<8x128xf32> to vector<1x8x128xf32>
    %66 = vector.broadcast %62 : vector<8x1x128xf32> to vector<8x8x128xf32>
    %67 = vector.broadcast %65 : vector<1x8x128xf32> to vector<8x8x128xf32>
    %68 = arith.mulf %66, %67 : vector<8x8x128xf32>
    %69 = arith.addf %59, %68 : vector<8x8x128xf32>
    %70 = vector.extract_strided_slice %10 {offsets = [5, 0, 0], sizes = [1, 8, 128], strides = [1, 1, 1]} : vector<32x8x128xf32> to vector<1x8x128xf32>
    %71 = vector.shape_cast %70 : vector<1x8x128xf32> to vector<8x128xf32>
    %72 = vector.shape_cast %71 : vector<8x128xf32> to vector<8x1x128xf32>
    %73 = vector.extract_strided_slice %18 {offsets = [5, 0, 0], sizes = [1, 8, 128], strides = [1, 1, 1]} : vector<32x8x128xf32> to vector<1x8x128xf32>
    %74 = vector.shape_cast %73 : vector<1x8x128xf32> to vector<8x128xf32>
    %75 = vector.shape_cast %74 : vector<8x128xf32> to vector<1x8x128xf32>
    %76 = vector.broadcast %72 : vector<8x1x128xf32> to vector<8x8x128xf32>
    %77 = vector.broadcast %75 : vector<1x8x128xf32> to vector<8x8x128xf32>
    %78 = arith.mulf %76, %77 : vector<8x8x128xf32>
    %79 = arith.addf %69, %78 : vector<8x8x128xf32>
    %80 = vector.extract_strided_slice %10 {offsets = [6, 0, 0], sizes = [1, 8, 128], strides = [1, 1, 1]} : vector<32x8x128xf32> to vector<1x8x128xf32>
    %81 = vector.shape_cast %80 : vector<1x8x128xf32> to vector<8x128xf32>
    %82 = vector.shape_cast %81 : vector<8x128xf32> to vector<8x1x128xf32>
    %83 = vector.extract_strided_slice %18 {offsets = [6, 0, 0], sizes = [1, 8, 128], strides = [1, 1, 1]} : vector<32x8x128xf32> to vector<1x8x128xf32>
    %84 = vector.shape_cast %83 : vector<1x8x128xf32> to vector<8x128xf32>
    %85 = vector.shape_cast %84 : vector<8x128xf32> to vector<1x8x128xf32>
    %86 = vector.broadcast %82 : vector<8x1x128xf32> to vector<8x8x128xf32>
    %87 = vector.broadcast %85 : vector<1x8x128xf32> to vector<8x8x128xf32>
    %88 = arith.mulf %86, %87 : vector<8x8x128xf32>
    %89 = arith.addf %79, %88 : vector<8x8x128xf32>
    %90 = vector.extract_strided_slice %10 {offsets = [7, 0, 0], sizes = [1, 8, 128], strides = [1, 1, 1]} : vector<32x8x128xf32> to vector<1x8x128xf32>
    %91 = vector.shape_cast %90 : vector<1x8x128xf32> to vector<8x128xf32>
    %92 = vector.shape_cast %91 : vector<8x128xf32> to vector<8x1x128xf32>
    %93 = vector.extract_strided_slice %18 {offsets = [7, 0, 0], sizes = [1, 8, 128], strides = [1, 1, 1]} : vector<32x8x128xf32> to vector<1x8x128xf32>
    %94 = vector.shape_cast %93 : vector<1x8x128xf32> to vector<8x128xf32>
    %95 = vector.shape_cast %94 : vector<8x128xf32> to vector<1x8x128xf32>
    %96 = vector.broadcast %92 : vector<8x1x128xf32> to vector<8x8x128xf32>
    %97 = vector.broadcast %95 : vector<1x8x128xf32> to vector<8x8x128xf32>
    %98 = arith.mulf %96, %97 : vector<8x8x128xf32>
    %99 = arith.addf %89, %98 : vector<8x8x128xf32>
    %100 = vector.extract_strided_slice %10 {offsets = [8, 0, 0], sizes = [1, 8, 128], strides = [1, 1, 1]} : vector<32x8x128xf32> to vector<1x8x128xf32>
    %101 = vector.shape_cast %100 : vector<1x8x128xf32> to vector<8x128xf32>
    %102 = vector.shape_cast %101 : vector<8x128xf32> to vector<8x1x128xf32>
    %103 = vector.extract_strided_slice %18 {offsets = [8, 0, 0], sizes = [1, 8, 128], strides = [1, 1, 1]} : vector<32x8x128xf32> to vector<1x8x128xf32>
    %104 = vector.shape_cast %103 : vector<1x8x128xf32> to vector<8x128xf32>
    %105 = vector.shape_cast %104 : vector<8x128xf32> to vector<1x8x128xf32>
    %106 = vector.broadcast %102 : vector<8x1x128xf32> to vector<8x8x128xf32>
    %107 = vector.broadcast %105 : vector<1x8x128xf32> to vector<8x8x128xf32>
    %108 = arith.mulf %106, %107 : vector<8x8x128xf32>
    %109 = arith.addf %99, %108 : vector<8x8x128xf32>
    %110 = vector.extract_strided_slice %10 {offsets = [9, 0, 0], sizes = [1, 8, 128], strides = [1, 1, 1]} : vector<32x8x128xf32> to vector<1x8x128xf32>
    %111 = vector.shape_cast %110 : vector<1x8x128xf32> to vector<8x128xf32>
    %112 = vector.shape_cast %111 : vector<8x128xf32> to vector<8x1x128xf32>
    %113 = vector.extract_strided_slice %18 {offsets = [9, 0, 0], sizes = [1, 8, 128], strides = [1, 1, 1]} : vector<32x8x128xf32> to vector<1x8x128xf32>
    %114 = vector.shape_cast %113 : vector<1x8x128xf32> to vector<8x128xf32>
    %115 = vector.shape_cast %114 : vector<8x128xf32> to vector<1x8x128xf32>
    %116 = vector.broadcast %112 : vector<8x1x128xf32> to vector<8x8x128xf32>
    %117 = vector.broadcast %115 : vector<1x8x128xf32> to vector<8x8x128xf32>
    %118 = arith.mulf %116, %117 : vector<8x8x128xf32>
    %119 = arith.addf %109, %118 : vector<8x8x128xf32>
    %120 = vector.extract_strided_slice %10 {offsets = [10, 0, 0], sizes = [1, 8, 128], strides = [1, 1, 1]} : vector<32x8x128xf32> to vector<1x8x128xf32>
    %121 = vector.shape_cast %120 : vector<1x8x128xf32> to vector<8x128xf32>
    %122 = vector.shape_cast %121 : vector<8x128xf32> to vector<8x1x128xf32>
    %123 = vector.extract_strided_slice %18 {offsets = [10, 0, 0], sizes = [1, 8, 128], strides = [1, 1, 1]} : vector<32x8x128xf32> to vector<1x8x128xf32>
    %124 = vector.shape_cast %123 : vector<1x8x128xf32> to vector<8x128xf32>
    %125 = vector.shape_cast %124 : vector<8x128xf32> to vector<1x8x128xf32>
    %126 = vector.broadcast %122 : vector<8x1x128xf32> to vector<8x8x128xf32>
    %127 = vector.broadcast %125 : vector<1x8x128xf32> to vector<8x8x128xf32>
    %128 = arith.mulf %126, %127 : vector<8x8x128xf32>
    %129 = arith.addf %119, %128 : vector<8x8x128xf32>
    %130 = vector.extract_strided_slice %10 {offsets = [11, 0, 0], sizes = [1, 8, 128], strides = [1, 1, 1]} : vector<32x8x128xf32> to vector<1x8x128xf32>
    %131 = vector.shape_cast %130 : vector<1x8x128xf32> to vector<8x128xf32>
    %132 = vector.shape_cast %131 : vector<8x128xf32> to vector<8x1x128xf32>
    %133 = vector.extract_strided_slice %18 {offsets = [11, 0, 0], sizes = [1, 8, 128], strides = [1, 1, 1]} : vector<32x8x128xf32> to vector<1x8x128xf32>
    %134 = vector.shape_cast %133 : vector<1x8x128xf32> to vector<8x128xf32>
    %135 = vector.shape_cast %134 : vector<8x128xf32> to vector<1x8x128xf32>
    %136 = vector.broadcast %132 : vector<8x1x128xf32> to vector<8x8x128xf32>
    %137 = vector.broadcast %135 : vector<1x8x128xf32> to vector<8x8x128xf32>
    %138 = arith.mulf %136, %137 : vector<8x8x128xf32>
    %139 = arith.addf %129, %138 : vector<8x8x128xf32>
    %140 = vector.extract_strided_slice %10 {offsets = [12, 0, 0], sizes = [1, 8, 128], strides = [1, 1, 1]} : vector<32x8x128xf32> to vector<1x8x128xf32>
    %141 = vector.shape_cast %140 : vector<1x8x128xf32> to vector<8x128xf32>
    %142 = vector.shape_cast %141 : vector<8x128xf32> to vector<8x1x128xf32>
    %143 = vector.extract_strided_slice %18 {offsets = [12, 0, 0], sizes = [1, 8, 128], strides = [1, 1, 1]} : vector<32x8x128xf32> to vector<1x8x128xf32>
    %144 = vector.shape_cast %143 : vector<1x8x128xf32> to vector<8x128xf32>
    %145 = vector.shape_cast %144 : vector<8x128xf32> to vector<1x8x128xf32>
    %146 = vector.broadcast %142 : vector<8x1x128xf32> to vector<8x8x128xf32>
    %147 = vector.broadcast %145 : vector<1x8x128xf32> to vector<8x8x128xf32>
    %148 = arith.mulf %146, %147 : vector<8x8x128xf32>
    %149 = arith.addf %139, %148 : vector<8x8x128xf32>
    %150 = vector.extract_strided_slice %10 {offsets = [13, 0, 0], sizes = [1, 8, 128], strides = [1, 1, 1]} : vector<32x8x128xf32> to vector<1x8x128xf32>
    %151 = vector.shape_cast %150 : vector<1x8x128xf32> to vector<8x128xf32>
    %152 = vector.shape_cast %151 : vector<8x128xf32> to vector<8x1x128xf32>
    %153 = vector.extract_strided_slice %18 {offsets = [13, 0, 0], sizes = [1, 8, 128], strides = [1, 1, 1]} : vector<32x8x128xf32> to vector<1x8x128xf32>
    %154 = vector.shape_cast %153 : vector<1x8x128xf32> to vector<8x128xf32>
    %155 = vector.shape_cast %154 : vector<8x128xf32> to vector<1x8x128xf32>
    %156 = vector.broadcast %152 : vector<8x1x128xf32> to vector<8x8x128xf32>
    %157 = vector.broadcast %155 : vector<1x8x128xf32> to vector<8x8x128xf32>
    %158 = arith.mulf %156, %157 : vector<8x8x128xf32>
    %159 = arith.addf %149, %158 : vector<8x8x128xf32>
    %160 = vector.extract_strided_slice %10 {offsets = [14, 0, 0], sizes = [1, 8, 128], strides = [1, 1, 1]} : vector<32x8x128xf32> to vector<1x8x128xf32>
    %161 = vector.shape_cast %160 : vector<1x8x128xf32> to vector<8x128xf32>
    %162 = vector.shape_cast %161 : vector<8x128xf32> to vector<8x1x128xf32>
    %163 = vector.extract_strided_slice %18 {offsets = [14, 0, 0], sizes = [1, 8, 128], strides = [1, 1, 1]} : vector<32x8x128xf32> to vector<1x8x128xf32>
    %164 = vector.shape_cast %163 : vector<1x8x128xf32> to vector<8x128xf32>
    %165 = vector.shape_cast %164 : vector<8x128xf32> to vector<1x8x128xf32>
    %166 = vector.broadcast %162 : vector<8x1x128xf32> to vector<8x8x128xf32>
    %167 = vector.broadcast %165 : vector<1x8x128xf32> to vector<8x8x128xf32>
    %168 = arith.mulf %166, %167 : vector<8x8x128xf32>
    %169 = arith.addf %159, %168 : vector<8x8x128xf32>
    %170 = vector.extract_strided_slice %10 {offsets = [15, 0, 0], sizes = [1, 8, 128], strides = [1, 1, 1]} : vector<32x8x128xf32> to vector<1x8x128xf32>
    %171 = vector.shape_cast %170 : vector<1x8x128xf32> to vector<8x128xf32>
    %172 = vector.shape_cast %171 : vector<8x128xf32> to vector<8x1x128xf32>
    %173 = vector.extract_strided_slice %18 {offsets = [15, 0, 0], sizes = [1, 8, 128], strides = [1, 1, 1]} : vector<32x8x128xf32> to vector<1x8x128xf32>
    %174 = vector.shape_cast %173 : vector<1x8x128xf32> to vector<8x128xf32>
    %175 = vector.shape_cast %174 : vector<8x128xf32> to vector<1x8x128xf32>
    %176 = vector.broadcast %172 : vector<8x1x128xf32> to vector<8x8x128xf32>
    %177 = vector.broadcast %175 : vector<1x8x128xf32> to vector<8x8x128xf32>
    %178 = arith.mulf %176, %177 : vector<8x8x128xf32>
    %179 = arith.addf %169, %178 : vector<8x8x128xf32>
    %180 = vector.extract_strided_slice %10 {offsets = [16, 0, 0], sizes = [1, 8, 128], strides = [1, 1, 1]} : vector<32x8x128xf32> to vector<1x8x128xf32>
    %181 = vector.shape_cast %180 : vector<1x8x128xf32> to vector<8x128xf32>
    %182 = vector.shape_cast %181 : vector<8x128xf32> to vector<8x1x128xf32>
    %183 = vector.extract_strided_slice %18 {offsets = [16, 0, 0], sizes = [1, 8, 128], strides = [1, 1, 1]} : vector<32x8x128xf32> to vector<1x8x128xf32>
    %184 = vector.shape_cast %183 : vector<1x8x128xf32> to vector<8x128xf32>
    %185 = vector.shape_cast %184 : vector<8x128xf32> to vector<1x8x128xf32>
    %186 = vector.broadcast %182 : vector<8x1x128xf32> to vector<8x8x128xf32>
    %187 = vector.broadcast %185 : vector<1x8x128xf32> to vector<8x8x128xf32>
    %188 = arith.mulf %186, %187 : vector<8x8x128xf32>
    %189 = arith.addf %179, %188 : vector<8x8x128xf32>
    %190 = vector.extract_strided_slice %10 {offsets = [17, 0, 0], sizes = [1, 8, 128], strides = [1, 1, 1]} : vector<32x8x128xf32> to vector<1x8x128xf32>
    %191 = vector.shape_cast %190 : vector<1x8x128xf32> to vector<8x128xf32>
    %192 = vector.shape_cast %191 : vector<8x128xf32> to vector<8x1x128xf32>
    %193 = vector.extract_strided_slice %18 {offsets = [17, 0, 0], sizes = [1, 8, 128], strides = [1, 1, 1]} : vector<32x8x128xf32> to vector<1x8x128xf32>
    %194 = vector.shape_cast %193 : vector<1x8x128xf32> to vector<8x128xf32>
    %195 = vector.shape_cast %194 : vector<8x128xf32> to vector<1x8x128xf32>
    %196 = vector.broadcast %192 : vector<8x1x128xf32> to vector<8x8x128xf32>
    %197 = vector.broadcast %195 : vector<1x8x128xf32> to vector<8x8x128xf32>
    %198 = arith.mulf %196, %197 : vector<8x8x128xf32>
    %199 = arith.addf %189, %198 : vector<8x8x128xf32>
    %200 = vector.extract_strided_slice %10 {offsets = [18, 0, 0], sizes = [1, 8, 128], strides = [1, 1, 1]} : vector<32x8x128xf32> to vector<1x8x128xf32>
    %201 = vector.shape_cast %200 : vector<1x8x128xf32> to vector<8x128xf32>
    %202 = vector.shape_cast %201 : vector<8x128xf32> to vector<8x1x128xf32>
    %203 = vector.extract_strided_slice %18 {offsets = [18, 0, 0], sizes = [1, 8, 128], strides = [1, 1, 1]} : vector<32x8x128xf32> to vector<1x8x128xf32>
    %204 = vector.shape_cast %203 : vector<1x8x128xf32> to vector<8x128xf32>
    %205 = vector.shape_cast %204 : vector<8x128xf32> to vector<1x8x128xf32>
    %206 = vector.broadcast %202 : vector<8x1x128xf32> to vector<8x8x128xf32>
    %207 = vector.broadcast %205 : vector<1x8x128xf32> to vector<8x8x128xf32>
    %208 = arith.mulf %206, %207 : vector<8x8x128xf32>
    %209 = arith.addf %199, %208 : vector<8x8x128xf32>
    %210 = vector.extract_strided_slice %10 {offsets = [19, 0, 0], sizes = [1, 8, 128], strides = [1, 1, 1]} : vector<32x8x128xf32> to vector<1x8x128xf32>
    %211 = vector.shape_cast %210 : vector<1x8x128xf32> to vector<8x128xf32>
    %212 = vector.shape_cast %211 : vector<8x128xf32> to vector<8x1x128xf32>
    %213 = vector.extract_strided_slice %18 {offsets = [19, 0, 0], sizes = [1, 8, 128], strides = [1, 1, 1]} : vector<32x8x128xf32> to vector<1x8x128xf32>
    %214 = vector.shape_cast %213 : vector<1x8x128xf32> to vector<8x128xf32>
    %215 = vector.shape_cast %214 : vector<8x128xf32> to vector<1x8x128xf32>
    %216 = vector.broadcast %212 : vector<8x1x128xf32> to vector<8x8x128xf32>
    %217 = vector.broadcast %215 : vector<1x8x128xf32> to vector<8x8x128xf32>
    %218 = arith.mulf %216, %217 : vector<8x8x128xf32>
    %219 = arith.addf %209, %218 : vector<8x8x128xf32>
    %220 = vector.extract_strided_slice %10 {offsets = [20, 0, 0], sizes = [1, 8, 128], strides = [1, 1, 1]} : vector<32x8x128xf32> to vector<1x8x128xf32>
    %221 = vector.shape_cast %220 : vector<1x8x128xf32> to vector<8x128xf32>
    %222 = vector.shape_cast %221 : vector<8x128xf32> to vector<8x1x128xf32>
    %223 = vector.extract_strided_slice %18 {offsets = [20, 0, 0], sizes = [1, 8, 128], strides = [1, 1, 1]} : vector<32x8x128xf32> to vector<1x8x128xf32>
    %224 = vector.shape_cast %223 : vector<1x8x128xf32> to vector<8x128xf32>
    %225 = vector.shape_cast %224 : vector<8x128xf32> to vector<1x8x128xf32>
    %226 = vector.broadcast %222 : vector<8x1x128xf32> to vector<8x8x128xf32>
    %227 = vector.broadcast %225 : vector<1x8x128xf32> to vector<8x8x128xf32>
    %228 = arith.mulf %226, %227 : vector<8x8x128xf32>
    %229 = arith.addf %219, %228 : vector<8x8x128xf32>
    %230 = vector.extract_strided_slice %10 {offsets = [21, 0, 0], sizes = [1, 8, 128], strides = [1, 1, 1]} : vector<32x8x128xf32> to vector<1x8x128xf32>
    %231 = vector.shape_cast %230 : vector<1x8x128xf32> to vector<8x128xf32>
    %232 = vector.shape_cast %231 : vector<8x128xf32> to vector<8x1x128xf32>
    %233 = vector.extract_strided_slice %18 {offsets = [21, 0, 0], sizes = [1, 8, 128], strides = [1, 1, 1]} : vector<32x8x128xf32> to vector<1x8x128xf32>
    %234 = vector.shape_cast %233 : vector<1x8x128xf32> to vector<8x128xf32>
    %235 = vector.shape_cast %234 : vector<8x128xf32> to vector<1x8x128xf32>
    %236 = vector.broadcast %232 : vector<8x1x128xf32> to vector<8x8x128xf32>
    %237 = vector.broadcast %235 : vector<1x8x128xf32> to vector<8x8x128xf32>
    %238 = arith.mulf %236, %237 : vector<8x8x128xf32>
    %239 = arith.addf %229, %238 : vector<8x8x128xf32>
    %240 = vector.extract_strided_slice %10 {offsets = [22, 0, 0], sizes = [1, 8, 128], strides = [1, 1, 1]} : vector<32x8x128xf32> to vector<1x8x128xf32>
    %241 = vector.shape_cast %240 : vector<1x8x128xf32> to vector<8x128xf32>
    %242 = vector.shape_cast %241 : vector<8x128xf32> to vector<8x1x128xf32>
    %243 = vector.extract_strided_slice %18 {offsets = [22, 0, 0], sizes = [1, 8, 128], strides = [1, 1, 1]} : vector<32x8x128xf32> to vector<1x8x128xf32>
    %244 = vector.shape_cast %243 : vector<1x8x128xf32> to vector<8x128xf32>
    %245 = vector.shape_cast %244 : vector<8x128xf32> to vector<1x8x128xf32>
    %246 = vector.broadcast %242 : vector<8x1x128xf32> to vector<8x8x128xf32>
    %247 = vector.broadcast %245 : vector<1x8x128xf32> to vector<8x8x128xf32>
    %248 = arith.mulf %246, %247 : vector<8x8x128xf32>
    %249 = arith.addf %239, %248 : vector<8x8x128xf32>
    %250 = vector.extract_strided_slice %10 {offsets = [23, 0, 0], sizes = [1, 8, 128], strides = [1, 1, 1]} : vector<32x8x128xf32> to vector<1x8x128xf32>
    %251 = vector.shape_cast %250 : vector<1x8x128xf32> to vector<8x128xf32>
    %252 = vector.shape_cast %251 : vector<8x128xf32> to vector<8x1x128xf32>
    %253 = vector.extract_strided_slice %18 {offsets = [23, 0, 0], sizes = [1, 8, 128], strides = [1, 1, 1]} : vector<32x8x128xf32> to vector<1x8x128xf32>
    %254 = vector.shape_cast %253 : vector<1x8x128xf32> to vector<8x128xf32>
    %255 = vector.shape_cast %254 : vector<8x128xf32> to vector<1x8x128xf32>
    %256 = vector.broadcast %252 : vector<8x1x128xf32> to vector<8x8x128xf32>
    %257 = vector.broadcast %255 : vector<1x8x128xf32> to vector<8x8x128xf32>
    %258 = arith.mulf %256, %257 : vector<8x8x128xf32>
    %259 = arith.addf %249, %258 : vector<8x8x128xf32>
    %260 = vector.extract_strided_slice %10 {offsets = [24, 0, 0], sizes = [1, 8, 128], strides = [1, 1, 1]} : vector<32x8x128xf32> to vector<1x8x128xf32>
    %261 = vector.shape_cast %260 : vector<1x8x128xf32> to vector<8x128xf32>
    %262 = vector.shape_cast %261 : vector<8x128xf32> to vector<8x1x128xf32>
    %263 = vector.extract_strided_slice %18 {offsets = [24, 0, 0], sizes = [1, 8, 128], strides = [1, 1, 1]} : vector<32x8x128xf32> to vector<1x8x128xf32>
    %264 = vector.shape_cast %263 : vector<1x8x128xf32> to vector<8x128xf32>
    %265 = vector.shape_cast %264 : vector<8x128xf32> to vector<1x8x128xf32>
    %266 = vector.broadcast %262 : vector<8x1x128xf32> to vector<8x8x128xf32>
    %267 = vector.broadcast %265 : vector<1x8x128xf32> to vector<8x8x128xf32>
    %268 = arith.mulf %266, %267 : vector<8x8x128xf32>
    %269 = arith.addf %259, %268 : vector<8x8x128xf32>
    %270 = vector.extract_strided_slice %10 {offsets = [25, 0, 0], sizes = [1, 8, 128], strides = [1, 1, 1]} : vector<32x8x128xf32> to vector<1x8x128xf32>
    %271 = vector.shape_cast %270 : vector<1x8x128xf32> to vector<8x128xf32>
    %272 = vector.shape_cast %271 : vector<8x128xf32> to vector<8x1x128xf32>
    %273 = vector.extract_strided_slice %18 {offsets = [25, 0, 0], sizes = [1, 8, 128], strides = [1, 1, 1]} : vector<32x8x128xf32> to vector<1x8x128xf32>
    %274 = vector.shape_cast %273 : vector<1x8x128xf32> to vector<8x128xf32>
    %275 = vector.shape_cast %274 : vector<8x128xf32> to vector<1x8x128xf32>
    %276 = vector.broadcast %272 : vector<8x1x128xf32> to vector<8x8x128xf32>
    %277 = vector.broadcast %275 : vector<1x8x128xf32> to vector<8x8x128xf32>
    %278 = arith.mulf %276, %277 : vector<8x8x128xf32>
    %279 = arith.addf %269, %278 : vector<8x8x128xf32>
    %280 = vector.extract_strided_slice %10 {offsets = [26, 0, 0], sizes = [1, 8, 128], strides = [1, 1, 1]} : vector<32x8x128xf32> to vector<1x8x128xf32>
    %281 = vector.shape_cast %280 : vector<1x8x128xf32> to vector<8x128xf32>
    %282 = vector.shape_cast %281 : vector<8x128xf32> to vector<8x1x128xf32>
    %283 = vector.extract_strided_slice %18 {offsets = [26, 0, 0], sizes = [1, 8, 128], strides = [1, 1, 1]} : vector<32x8x128xf32> to vector<1x8x128xf32>
    %284 = vector.shape_cast %283 : vector<1x8x128xf32> to vector<8x128xf32>
    %285 = vector.shape_cast %284 : vector<8x128xf32> to vector<1x8x128xf32>
    %286 = vector.broadcast %282 : vector<8x1x128xf32> to vector<8x8x128xf32>
    %287 = vector.broadcast %285 : vector<1x8x128xf32> to vector<8x8x128xf32>
    %288 = arith.mulf %286, %287 : vector<8x8x128xf32>
    %289 = arith.addf %279, %288 : vector<8x8x128xf32>
    %290 = vector.extract_strided_slice %10 {offsets = [27, 0, 0], sizes = [1, 8, 128], strides = [1, 1, 1]} : vector<32x8x128xf32> to vector<1x8x128xf32>
    %291 = vector.shape_cast %290 : vector<1x8x128xf32> to vector<8x128xf32>
    %292 = vector.shape_cast %291 : vector<8x128xf32> to vector<8x1x128xf32>
    %293 = vector.extract_strided_slice %18 {offsets = [27, 0, 0], sizes = [1, 8, 128], strides = [1, 1, 1]} : vector<32x8x128xf32> to vector<1x8x128xf32>
    %294 = vector.shape_cast %293 : vector<1x8x128xf32> to vector<8x128xf32>
    %295 = vector.shape_cast %294 : vector<8x128xf32> to vector<1x8x128xf32>
    %296 = vector.broadcast %292 : vector<8x1x128xf32> to vector<8x8x128xf32>
    %297 = vector.broadcast %295 : vector<1x8x128xf32> to vector<8x8x128xf32>
    %298 = arith.mulf %296, %297 : vector<8x8x128xf32>
    %299 = arith.addf %289, %298 : vector<8x8x128xf32>
    %300 = vector.extract_strided_slice %10 {offsets = [28, 0, 0], sizes = [1, 8, 128], strides = [1, 1, 1]} : vector<32x8x128xf32> to vector<1x8x128xf32>
    %301 = vector.shape_cast %300 : vector<1x8x128xf32> to vector<8x128xf32>
    %302 = vector.shape_cast %301 : vector<8x128xf32> to vector<8x1x128xf32>
    %303 = vector.extract_strided_slice %18 {offsets = [28, 0, 0], sizes = [1, 8, 128], strides = [1, 1, 1]} : vector<32x8x128xf32> to vector<1x8x128xf32>
    %304 = vector.shape_cast %303 : vector<1x8x128xf32> to vector<8x128xf32>
    %305 = vector.shape_cast %304 : vector<8x128xf32> to vector<1x8x128xf32>
    %306 = vector.broadcast %302 : vector<8x1x128xf32> to vector<8x8x128xf32>
    %307 = vector.broadcast %305 : vector<1x8x128xf32> to vector<8x8x128xf32>
    %308 = arith.mulf %306, %307 : vector<8x8x128xf32>
    %309 = arith.addf %299, %308 : vector<8x8x128xf32>
    %310 = vector.extract_strided_slice %10 {offsets = [29, 0, 0], sizes = [1, 8, 128], strides = [1, 1, 1]} : vector<32x8x128xf32> to vector<1x8x128xf32>
    %311 = vector.shape_cast %310 : vector<1x8x128xf32> to vector<8x128xf32>
    %312 = vector.shape_cast %311 : vector<8x128xf32> to vector<8x1x128xf32>
    %313 = vector.extract_strided_slice %18 {offsets = [29, 0, 0], sizes = [1, 8, 128], strides = [1, 1, 1]} : vector<32x8x128xf32> to vector<1x8x128xf32>
    %314 = vector.shape_cast %313 : vector<1x8x128xf32> to vector<8x128xf32>
    %315 = vector.shape_cast %314 : vector<8x128xf32> to vector<1x8x128xf32>
    %316 = vector.broadcast %312 : vector<8x1x128xf32> to vector<8x8x128xf32>
    %317 = vector.broadcast %315 : vector<1x8x128xf32> to vector<8x8x128xf32>
    %318 = arith.mulf %316, %317 : vector<8x8x128xf32>
    %319 = arith.addf %309, %318 : vector<8x8x128xf32>
    %320 = vector.extract_strided_slice %10 {offsets = [30, 0, 0], sizes = [1, 8, 128], strides = [1, 1, 1]} : vector<32x8x128xf32> to vector<1x8x128xf32>
    %321 = vector.shape_cast %320 : vector<1x8x128xf32> to vector<8x128xf32>
    %322 = vector.shape_cast %321 : vector<8x128xf32> to vector<8x1x128xf32>
    %323 = vector.extract_strided_slice %18 {offsets = [30, 0, 0], sizes = [1, 8, 128], strides = [1, 1, 1]} : vector<32x8x128xf32> to vector<1x8x128xf32>
    %324 = vector.shape_cast %323 : vector<1x8x128xf32> to vector<8x128xf32>
    %325 = vector.shape_cast %324 : vector<8x128xf32> to vector<1x8x128xf32>
    %326 = vector.broadcast %322 : vector<8x1x128xf32> to vector<8x8x128xf32>
    %327 = vector.broadcast %325 : vector<1x8x128xf32> to vector<8x8x128xf32>
    %328 = arith.mulf %326, %327 : vector<8x8x128xf32>
    %329 = arith.addf %319, %328 : vector<8x8x128xf32>
    %330 = vector.extract_strided_slice %10 {offsets = [31, 0, 0], sizes = [1, 8, 128], strides = [1, 1, 1]} : vector<32x8x128xf32> to vector<1x8x128xf32>
    %331 = vector.shape_cast %330 : vector<1x8x128xf32> to vector<8x128xf32>
    %332 = vector.shape_cast %331 : vector<8x128xf32> to vector<8x1x128xf32>
    %333 = vector.extract_strided_slice %18 {offsets = [31, 0, 0], sizes = [1, 8, 128], strides = [1, 1, 1]} : vector<32x8x128xf32> to vector<1x8x128xf32>
    %334 = vector.shape_cast %333 : vector<1x8x128xf32> to vector<8x128xf32>
    %335 = vector.shape_cast %334 : vector<8x128xf32> to vector<1x8x128xf32>
    %336 = vector.broadcast %332 : vector<8x1x128xf32> to vector<8x8x128xf32>
    %337 = vector.broadcast %335 : vector<1x8x128xf32> to vector<8x8x128xf32>
    %338 = arith.mulf %336, %337 : vector<8x8x128xf32>
    %339 = arith.addf %329, %338 : vector<8x8x128xf32>
    %cst_10 = arith.constant 0.000000e+00 : f32
    %340 = vector.broadcast %cst_10 : f32 to vector<1x8x128xf32>
    %341 = tpu.iota {dimensions = array<i32: 1>} : vector<1x8x128xi32>
    %342 = vector.extract_strided_slice %339 {offsets = [0, 0, 0], sizes = [7, 8, 128], strides = [1, 1, 1]} : vector<8x8x128xf32> to vector<7x8x128xf32>
    %343 = tpu.concatenate %340, %342 in 0 : vector<1x8x128xf32>, vector<7x8x128xf32> -> vector<8x8x128xf32>
    %c1_i32 = arith.constant 1 : i32
    %344 = tpu.dynamic_rotate %343 by %c1_i32 dim 1 : vector<8x8x128xf32>, i32 -> vector<8x8x128xf32>
    %c1_i32_11 = arith.constant 1 : i32
    %345 = vector.broadcast %c1_i32_11 : i32 to vector<1x8x128xi32>
    %346 = arith.cmpi sge, %341, %345 : vector<1x8x128xi32>
    %cst_12 = arith.constant 0.000000e+00 : f32
    %347 = vector.shape_cast %346 : vector<1x8x128xi1> to vector<1x8x128xi1>
    %348 = vector.broadcast %347 : vector<1x8x128xi1> to vector<8x8x128xi1>
    %349 = vector.broadcast %cst_12 : f32 to vector<8x8x128xf32>
    %350 = arith.select %348, %344, %349 : vector<8x8x128xi1>, vector<8x8x128xf32>
    %c0_13 = arith.constant 0 : index
    %c0_14 = arith.constant 0 : index
    %351 = memref.load %arg6[%c0_13, %c0_14] : memref<4x9xf32, #tpu.memory_space<smem>>
    %352 = vector.broadcast %351 : f32 to vector<8x8x128xf32>
    %353 = arith.mulf %350, %352 : vector<8x8x128xf32>
    %c1 = arith.constant 1 : index
    %c0_15 = arith.constant 0 : index
    %354 = memref.load %arg6[%c1, %c0_15] : memref<4x9xf32, #tpu.memory_space<smem>>
    %355 = vector.broadcast %354 : f32 to vector<8x8x128xf32>
    %356 = arith.mulf %350, %355 : vector<8x8x128xf32>
    %c2 = arith.constant 2 : index
    %c0_16 = arith.constant 0 : index
    %357 = memref.load %arg6[%c2, %c0_16] : memref<4x9xf32, #tpu.memory_space<smem>>
    %358 = vector.broadcast %357 : f32 to vector<8x8x128xf32>
    %359 = arith.mulf %350, %358 : vector<8x8x128xf32>
    %c3 = arith.constant 3 : index
    %c0_17 = arith.constant 0 : index
    %360 = memref.load %arg6[%c3, %c0_17] : memref<4x9xf32, #tpu.memory_space<smem>>
    %361 = vector.broadcast %360 : f32 to vector<8x8x128xf32>
    %362 = arith.mulf %350, %361 : vector<8x8x128xf32>
    %c0_18 = arith.constant 0 : index
    %c1_19 = arith.constant 1 : index
    %363 = memref.load %arg6[%c0_18, %c1_19] : memref<4x9xf32, #tpu.memory_space<smem>>
    %364 = vector.broadcast %363 : f32 to vector<8x8x128xf32>
    %365 = arith.mulf %343, %364 : vector<8x8x128xf32>
    %366 = arith.addf %353, %365 : vector<8x8x128xf32>
    %c1_20 = arith.constant 1 : index
    %c1_21 = arith.constant 1 : index
    %367 = memref.load %arg6[%c1_20, %c1_21] : memref<4x9xf32, #tpu.memory_space<smem>>
    %368 = vector.broadcast %367 : f32 to vector<8x8x128xf32>
    %369 = arith.mulf %343, %368 : vector<8x8x128xf32>
    %370 = arith.addf %356, %369 : vector<8x8x128xf32>
    %c2_22 = arith.constant 2 : index
    %c1_23 = arith.constant 1 : index
    %371 = memref.load %arg6[%c2_22, %c1_23] : memref<4x9xf32, #tpu.memory_space<smem>>
    %372 = vector.broadcast %371 : f32 to vector<8x8x128xf32>
    %373 = arith.mulf %343, %372 : vector<8x8x128xf32>
    %374 = arith.addf %359, %373 : vector<8x8x128xf32>
    %c3_24 = arith.constant 3 : index
    %c1_25 = arith.constant 1 : index
    %375 = memref.load %arg6[%c3_24, %c1_25] : memref<4x9xf32, #tpu.memory_space<smem>>
    %376 = vector.broadcast %375 : f32 to vector<8x8x128xf32>
    %377 = arith.mulf %343, %376 : vector<8x8x128xf32>
    %378 = arith.addf %362, %377 : vector<8x8x128xf32>
    %c7_i32 = arith.constant 7 : i32
    %379 = tpu.dynamic_rotate %343 by %c7_i32 dim 1 : vector<8x8x128xf32>, i32 -> vector<8x8x128xf32>
    %c7_i32_26 = arith.constant 7 : i32
    %380 = vector.broadcast %c7_i32_26 : i32 to vector<1x8x128xi32>
    %381 = arith.cmpi slt, %341, %380 : vector<1x8x128xi32>
    %cst_27 = arith.constant 0.000000e+00 : f32
    %382 = vector.shape_cast %381 : vector<1x8x128xi1> to vector<1x8x128xi1>
    %383 = vector.broadcast %382 : vector<1x8x128xi1> to vector<8x8x128xi1>
    %384 = vector.broadcast %cst_27 : f32 to vector<8x8x128xf32>
    %385 = arith.select %383, %379, %384 : vector<8x8x128xi1>, vector<8x8x128xf32>
    %c0_28 = arith.constant 0 : index
    %c2_29 = arith.constant 2 : index
    %386 = memref.load %arg6[%c0_28, %c2_29] : memref<4x9xf32, #tpu.memory_space<smem>>
    %387 = vector.broadcast %386 : f32 to vector<8x8x128xf32>
    %388 = arith.mulf %385, %387 : vector<8x8x128xf32>
    %389 = arith.addf %366, %388 : vector<8x8x128xf32>
    %c1_30 = arith.constant 1 : index
    %c2_31 = arith.constant 2 : index
    %390 = memref.load %arg6[%c1_30, %c2_31] : memref<4x9xf32, #tpu.memory_space<smem>>
    %391 = vector.broadcast %390 : f32 to vector<8x8x128xf32>
    %392 = arith.mulf %385, %391 : vector<8x8x128xf32>
    %393 = arith.addf %370, %392 : vector<8x8x128xf32>
    %c2_32 = arith.constant 2 : index
    %c2_33 = arith.constant 2 : index
    %394 = memref.load %arg6[%c2_32, %c2_33] : memref<4x9xf32, #tpu.memory_space<smem>>
    %395 = vector.broadcast %394 : f32 to vector<8x8x128xf32>
    %396 = arith.mulf %385, %395 : vector<8x8x128xf32>
    %397 = arith.addf %374, %396 : vector<8x8x128xf32>
    %c3_34 = arith.constant 3 : index
    %c2_35 = arith.constant 2 : index
    %398 = memref.load %arg6[%c3_34, %c2_35] : memref<4x9xf32, #tpu.memory_space<smem>>
    %399 = vector.broadcast %398 : f32 to vector<8x8x128xf32>
    %400 = arith.mulf %385, %399 : vector<8x8x128xf32>
    %401 = arith.addf %378, %400 : vector<8x8x128xf32>
    %c1_i32_36 = arith.constant 1 : i32
    %402 = tpu.dynamic_rotate %339 by %c1_i32_36 dim 1 : vector<8x8x128xf32>, i32 -> vector<8x8x128xf32>
    %c1_i32_37 = arith.constant 1 : i32
    %403 = vector.broadcast %c1_i32_37 : i32 to vector<1x8x128xi32>
    %404 = arith.cmpi sge, %341, %403 : vector<1x8x128xi32>
    %cst_38 = arith.constant 0.000000e+00 : f32
    %405 = vector.shape_cast %404 : vector<1x8x128xi1> to vector<1x8x128xi1>
    %406 = vector.broadcast %405 : vector<1x8x128xi1> to vector<8x8x128xi1>
    %407 = vector.broadcast %cst_38 : f32 to vector<8x8x128xf32>
    %408 = arith.select %406, %402, %407 : vector<8x8x128xi1>, vector<8x8x128xf32>
    %c0_39 = arith.constant 0 : index
    %c3_40 = arith.constant 3 : index
    %409 = memref.load %arg6[%c0_39, %c3_40] : memref<4x9xf32, #tpu.memory_space<smem>>
    %410 = vector.broadcast %409 : f32 to vector<8x8x128xf32>
    %411 = arith.mulf %408, %410 : vector<8x8x128xf32>
    %412 = arith.addf %389, %411 : vector<8x8x128xf32>
    %c1_41 = arith.constant 1 : index
    %c3_42 = arith.constant 3 : index
    %413 = memref.load %arg6[%c1_41, %c3_42] : memref<4x9xf32, #tpu.memory_space<smem>>
    %414 = vector.broadcast %413 : f32 to vector<8x8x128xf32>
    %415 = arith.mulf %408, %414 : vector<8x8x128xf32>
    %416 = arith.addf %393, %415 : vector<8x8x128xf32>
    %c2_43 = arith.constant 2 : index
    %c3_44 = arith.constant 3 : index
    %417 = memref.load %arg6[%c2_43, %c3_44] : memref<4x9xf32, #tpu.memory_space<smem>>
    %418 = vector.broadcast %417 : f32 to vector<8x8x128xf32>
    %419 = arith.mulf %408, %418 : vector<8x8x128xf32>
    %420 = arith.addf %397, %419 : vector<8x8x128xf32>
    %c3_45 = arith.constant 3 : index
    %c3_46 = arith.constant 3 : index
    %421 = memref.load %arg6[%c3_45, %c3_46] : memref<4x9xf32, #tpu.memory_space<smem>>
    %422 = vector.broadcast %421 : f32 to vector<8x8x128xf32>
    %423 = arith.mulf %408, %422 : vector<8x8x128xf32>
    %424 = arith.addf %401, %423 : vector<8x8x128xf32>
    %c0_47 = arith.constant 0 : index
    %c4 = arith.constant 4 : index
    %425 = memref.load %arg6[%c0_47, %c4] : memref<4x9xf32, #tpu.memory_space<smem>>
    %426 = vector.broadcast %425 : f32 to vector<8x8x128xf32>
    %427 = arith.mulf %339, %426 : vector<8x8x128xf32>
    %428 = arith.addf %412, %427 : vector<8x8x128xf32>
    %c1_48 = arith.constant 1 : index
    %c4_49 = arith.constant 4 : index
    %429 = memref.load %arg6[%c1_48, %c4_49] : memref<4x9xf32, #tpu.memory_space<smem>>
    %430 = vector.broadcast %429 : f32 to vector<8x8x128xf32>
    %431 = arith.mulf %339, %430 : vector<8x8x128xf32>
    %432 = arith.addf %416, %431 : vector<8x8x128xf32>
    %c2_50 = arith.constant 2 : index
    %c4_51 = arith.constant 4 : index
    %433 = memref.load %arg6[%c2_50, %c4_51] : memref<4x9xf32, #tpu.memory_space<smem>>
    %434 = vector.broadcast %433 : f32 to vector<8x8x128xf32>
    %435 = arith.mulf %339, %434 : vector<8x8x128xf32>
    %436 = arith.addf %420, %435 : vector<8x8x128xf32>
    %c3_52 = arith.constant 3 : index
    %c4_53 = arith.constant 4 : index
    %437 = memref.load %arg6[%c3_52, %c4_53] : memref<4x9xf32, #tpu.memory_space<smem>>
    %438 = vector.broadcast %437 : f32 to vector<8x8x128xf32>
    %439 = arith.mulf %339, %438 : vector<8x8x128xf32>
    %440 = arith.addf %424, %439 : vector<8x8x128xf32>
    %c7_i32_54 = arith.constant 7 : i32
    %441 = tpu.dynamic_rotate %339 by %c7_i32_54 dim 1 : vector<8x8x128xf32>, i32 -> vector<8x8x128xf32>
    %c7_i32_55 = arith.constant 7 : i32
    %442 = vector.broadcast %c7_i32_55 : i32 to vector<1x8x128xi32>
    %443 = arith.cmpi slt, %341, %442 : vector<1x8x128xi32>
    %cst_56 = arith.constant 0.000000e+00 : f32
    %444 = vector.shape_cast %443 : vector<1x8x128xi1> to vector<1x8x128xi1>
    %445 = vector.broadcast %444 : vector<1x8x128xi1> to vector<8x8x128xi1>
    %446 = vector.broadcast %cst_56 : f32 to vector<8x8x128xf32>
    %447 = arith.select %445, %441, %446 : vector<8x8x128xi1>, vector<8x8x128xf32>
    %c0_57 = arith.constant 0 : index
    %c5 = arith.constant 5 : index
    %448 = memref.load %arg6[%c0_57, %c5] : memref<4x9xf32, #tpu.memory_space<smem>>
    %449 = vector.broadcast %448 : f32 to vector<8x8x128xf32>
    %450 = arith.mulf %447, %449 : vector<8x8x128xf32>
    %451 = arith.addf %428, %450 : vector<8x8x128xf32>
    %c1_58 = arith.constant 1 : index
    %c5_59 = arith.constant 5 : index
    %452 = memref.load %arg6[%c1_58, %c5_59] : memref<4x9xf32, #tpu.memory_space<smem>>
    %453 = vector.broadcast %452 : f32 to vector<8x8x128xf32>
    %454 = arith.mulf %447, %453 : vector<8x8x128xf32>
    %455 = arith.addf %432, %454 : vector<8x8x128xf32>
    %c2_60 = arith.constant 2 : index
    %c5_61 = arith.constant 5 : index
    %456 = memref.load %arg6[%c2_60, %c5_61] : memref<4x9xf32, #tpu.memory_space<smem>>
    %457 = vector.broadcast %456 : f32 to vector<8x8x128xf32>
    %458 = arith.mulf %447, %457 : vector<8x8x128xf32>
    %459 = arith.addf %436, %458 : vector<8x8x128xf32>
    %c3_62 = arith.constant 3 : index
    %c5_63 = arith.constant 5 : index
    %460 = memref.load %arg6[%c3_62, %c5_63] : memref<4x9xf32, #tpu.memory_space<smem>>
    %461 = vector.broadcast %460 : f32 to vector<8x8x128xf32>
    %462 = arith.mulf %447, %461 : vector<8x8x128xf32>
    %463 = arith.addf %440, %462 : vector<8x8x128xf32>
    %464 = vector.extract_strided_slice %339 {offsets = [1, 0, 0], sizes = [7, 8, 128], strides = [1, 1, 1]} : vector<8x8x128xf32> to vector<7x8x128xf32>
    %465 = tpu.concatenate %464, %340 in 0 : vector<7x8x128xf32>, vector<1x8x128xf32> -> vector<8x8x128xf32>
    %c1_i32_64 = arith.constant 1 : i32
    %466 = tpu.dynamic_rotate %465 by %c1_i32_64 dim 1 : vector<8x8x128xf32>, i32 -> vector<8x8x128xf32>
    %c1_i32_65 = arith.constant 1 : i32
    %467 = vector.broadcast %c1_i32_65 : i32 to vector<1x8x128xi32>
    %468 = arith.cmpi sge, %341, %467 : vector<1x8x128xi32>
    %cst_66 = arith.constant 0.000000e+00 : f32
    %469 = vector.shape_cast %468 : vector<1x8x128xi1> to vector<1x8x128xi1>
    %470 = vector.broadcast %469 : vector<1x8x128xi1> to vector<8x8x128xi1>
    %471 = vector.broadcast %cst_66 : f32 to vector<8x8x128xf32>
    %472 = arith.select %470, %466, %471 : vector<8x8x128xi1>, vector<8x8x128xf32>
    %c0_67 = arith.constant 0 : index
    %c6 = arith.constant 6 : index
    %473 = memref.load %arg6[%c0_67, %c6] : memref<4x9xf32, #tpu.memory_space<smem>>
    %474 = vector.broadcast %473 : f32 to vector<8x8x128xf32>
    %475 = arith.mulf %472, %474 : vector<8x8x128xf32>
    %476 = arith.addf %451, %475 : vector<8x8x128xf32>
    %c1_68 = arith.constant 1 : index
    %c6_69 = arith.constant 6 : index
    %477 = memref.load %arg6[%c1_68, %c6_69] : memref<4x9xf32, #tpu.memory_space<smem>>
    %478 = vector.broadcast %477 : f32 to vector<8x8x128xf32>
    %479 = arith.mulf %472, %478 : vector<8x8x128xf32>
    %480 = arith.addf %455, %479 : vector<8x8x128xf32>
    %c2_70 = arith.constant 2 : index
    %c6_71 = arith.constant 6 : index
    %481 = memref.load %arg6[%c2_70, %c6_71] : memref<4x9xf32, #tpu.memory_space<smem>>
    %482 = vector.broadcast %481 : f32 to vector<8x8x128xf32>
    %483 = arith.mulf %472, %482 : vector<8x8x128xf32>
    %484 = arith.addf %459, %483 : vector<8x8x128xf32>
    %c3_72 = arith.constant 3 : index
    %c6_73 = arith.constant 6 : index
    %485 = memref.load %arg6[%c3_72, %c6_73] : memref<4x9xf32, #tpu.memory_space<smem>>
    %486 = vector.broadcast %485 : f32 to vector<8x8x128xf32>
    %487 = arith.mulf %472, %486 : vector<8x8x128xf32>
    %488 = arith.addf %463, %487 : vector<8x8x128xf32>
    %c0_74 = arith.constant 0 : index
    %c7 = arith.constant 7 : index
    %489 = memref.load %arg6[%c0_74, %c7] : memref<4x9xf32, #tpu.memory_space<smem>>
    %490 = vector.broadcast %489 : f32 to vector<8x8x128xf32>
    %491 = arith.mulf %465, %490 : vector<8x8x128xf32>
    %492 = arith.addf %476, %491 : vector<8x8x128xf32>
    %c1_75 = arith.constant 1 : index
    %c7_76 = arith.constant 7 : index
    %493 = memref.load %arg6[%c1_75, %c7_76] : memref<4x9xf32, #tpu.memory_space<smem>>
    %494 = vector.broadcast %493 : f32 to vector<8x8x128xf32>
    %495 = arith.mulf %465, %494 : vector<8x8x128xf32>
    %496 = arith.addf %480, %495 : vector<8x8x128xf32>
    %c2_77 = arith.constant 2 : index
    %c7_78 = arith.constant 7 : index
    %497 = memref.load %arg6[%c2_77, %c7_78] : memref<4x9xf32, #tpu.memory_space<smem>>
    %498 = vector.broadcast %497 : f32 to vector<8x8x128xf32>
    %499 = arith.mulf %465, %498 : vector<8x8x128xf32>
    %500 = arith.addf %484, %499 : vector<8x8x128xf32>
    %c3_79 = arith.constant 3 : index
    %c7_80 = arith.constant 7 : index
    %501 = memref.load %arg6[%c3_79, %c7_80] : memref<4x9xf32, #tpu.memory_space<smem>>
    %502 = vector.broadcast %501 : f32 to vector<8x8x128xf32>
    %503 = arith.mulf %465, %502 : vector<8x8x128xf32>
    %504 = arith.addf %488, %503 : vector<8x8x128xf32>
    %c7_i32_81 = arith.constant 7 : i32
    %505 = tpu.dynamic_rotate %465 by %c7_i32_81 dim 1 : vector<8x8x128xf32>, i32 -> vector<8x8x128xf32>
    %c7_i32_82 = arith.constant 7 : i32
    %506 = vector.broadcast %c7_i32_82 : i32 to vector<1x8x128xi32>
    %507 = arith.cmpi slt, %341, %506 : vector<1x8x128xi32>
    %cst_83 = arith.constant 0.000000e+00 : f32
    %508 = vector.shape_cast %507 : vector<1x8x128xi1> to vector<1x8x128xi1>
    %509 = vector.broadcast %508 : vector<1x8x128xi1> to vector<8x8x128xi1>
    %510 = vector.broadcast %cst_83 : f32 to vector<8x8x128xf32>
    %511 = arith.select %509, %505, %510 : vector<8x8x128xi1>, vector<8x8x128xf32>
    %c0_84 = arith.constant 0 : index
    %c8 = arith.constant 8 : index
    %512 = memref.load %arg6[%c0_84, %c8] : memref<4x9xf32, #tpu.memory_space<smem>>
    %513 = vector.broadcast %512 : f32 to vector<8x8x128xf32>
    %514 = arith.mulf %511, %513 : vector<8x8x128xf32>
    %515 = arith.addf %492, %514 : vector<8x8x128xf32>
    %c1_85 = arith.constant 1 : index
    %c8_86 = arith.constant 8 : index
    %516 = memref.load %arg6[%c1_85, %c8_86] : memref<4x9xf32, #tpu.memory_space<smem>>
    %517 = vector.broadcast %516 : f32 to vector<8x8x128xf32>
    %518 = arith.mulf %511, %517 : vector<8x8x128xf32>
    %519 = arith.addf %496, %518 : vector<8x8x128xf32>
    %c2_87 = arith.constant 2 : index
    %c8_88 = arith.constant 8 : index
    %520 = memref.load %arg6[%c2_87, %c8_88] : memref<4x9xf32, #tpu.memory_space<smem>>
    %521 = vector.broadcast %520 : f32 to vector<8x8x128xf32>
    %522 = arith.mulf %511, %521 : vector<8x8x128xf32>
    %523 = arith.addf %500, %522 : vector<8x8x128xf32>
    %c3_89 = arith.constant 3 : index
    %c8_90 = arith.constant 8 : index
    %524 = memref.load %arg6[%c3_89, %c8_90] : memref<4x9xf32, #tpu.memory_space<smem>>
    %525 = vector.broadcast %524 : f32 to vector<8x8x128xf32>
    %526 = arith.mulf %511, %525 : vector<8x8x128xf32>
    %527 = arith.addf %504, %526 : vector<8x8x128xf32>
    %c0_91 = arith.constant 0 : index
    %c0_92 = arith.constant 0 : index
    %c0_93 = arith.constant 0 : index
    %528 = vector.load %arg4[%c0_91, %c0_92, %c0_93] : memref<4x8x128xf32, #tpu.memory_space<vmem>>, vector<4x8x128xf32>
    %c0_94 = arith.constant 0 : index
    %c0_95 = arith.constant 0 : index
    %c0_96 = arith.constant 0 : index
    %c0_97 = arith.constant 0 : index
    %529 = vector.load %arg5[%c0_94, %c0_95, %c0_96, %c0_97] : memref<1x4x8x128xf32, #tpu.memory_space<vmem>>, vector<1x4x8x128xf32>
    %530 = vector.shape_cast %529 : vector<1x4x8x128xf32> to vector<4x8x128xf32>
    %c0_98 = arith.constant 0 : index
    %531 = memref.load %arg7[%c0_98] : memref<4xf32, #tpu.memory_space<smem>>
    %532 = vector.broadcast %531 : f32 to vector<8x8x128xf32>
    %533 = arith.addf %515, %532 : vector<8x8x128xf32>
    %cst_99 = arith.constant 0.000000e+00 : f32
    %534 = vector.broadcast %cst_99 : f32 to vector<8x8x128xf32>
    %535 = arith.maximumf %533, %534 : vector<8x8x128xf32>
    %536 = vector.extract_strided_slice %528 {offsets = [0, 0, 0], sizes = [1, 8, 128], strides = [1, 1, 1]} : vector<4x8x128xf32> to vector<1x8x128xf32>
    %537 = vector.shape_cast %536 : vector<1x8x128xf32> to vector<8x128xf32>
    %538 = vector.shape_cast %537 : vector<8x128xf32> to vector<8x1x128xf32>
    %539 = vector.broadcast %538 : vector<8x1x128xf32> to vector<8x8x128xf32>
    %540 = arith.addf %535, %539 : vector<8x8x128xf32>
    %cst_100 = arith.constant dense<0xFF800000> : vector<8x128xf32>
    %541 = vector.multi_reduction <maximumf>, %540, %cst_100 [0] : vector<8x8x128xf32> to vector<8x128xf32>
    %542 = vector.shape_cast %541 : vector<8x128xf32> to vector<1x8x128xf32>
    %543 = vector.broadcast %542 : vector<1x8x128xf32> to vector<4x8x128xf32>
    %544 = arith.addf %543, %530 : vector<4x8x128xf32>
    %cst_101 = arith.constant dense<0xFF800000> : vector<4x128xf32>
    %545 = vector.multi_reduction <maximumf>, %544, %cst_101 [1] : vector<4x8x128xf32> to vector<4x128xf32>
    %546 = vector.extract_strided_slice %528 {offsets = [1, 0, 0], sizes = [1, 8, 128], strides = [1, 1, 1]} : vector<4x8x128xf32> to vector<1x8x128xf32>
    %547 = vector.shape_cast %546 : vector<1x8x128xf32> to vector<8x128xf32>
    %548 = vector.shape_cast %547 : vector<8x128xf32> to vector<8x1x128xf32>
    %549 = vector.broadcast %548 : vector<8x1x128xf32> to vector<8x8x128xf32>
    %550 = arith.addf %535, %549 : vector<8x8x128xf32>
    %cst_102 = arith.constant dense<0xFF800000> : vector<8x128xf32>
    %551 = vector.multi_reduction <maximumf>, %550, %cst_102 [0] : vector<8x8x128xf32> to vector<8x128xf32>
    %552 = vector.shape_cast %551 : vector<8x128xf32> to vector<1x8x128xf32>
    %553 = vector.broadcast %552 : vector<1x8x128xf32> to vector<4x8x128xf32>
    %554 = arith.addf %553, %530 : vector<4x8x128xf32>
    %cst_103 = arith.constant dense<0xFF800000> : vector<4x128xf32>
    %555 = vector.multi_reduction <maximumf>, %554, %cst_103 [1] : vector<4x8x128xf32> to vector<4x128xf32>
    %556 = vector.extract_strided_slice %528 {offsets = [2, 0, 0], sizes = [1, 8, 128], strides = [1, 1, 1]} : vector<4x8x128xf32> to vector<1x8x128xf32>
    %557 = vector.shape_cast %556 : vector<1x8x128xf32> to vector<8x128xf32>
    %558 = vector.shape_cast %557 : vector<8x128xf32> to vector<8x1x128xf32>
    %559 = vector.broadcast %558 : vector<8x1x128xf32> to vector<8x8x128xf32>
    %560 = arith.addf %535, %559 : vector<8x8x128xf32>
    %cst_104 = arith.constant dense<0xFF800000> : vector<8x128xf32>
    %561 = vector.multi_reduction <maximumf>, %560, %cst_104 [0] : vector<8x8x128xf32> to vector<8x128xf32>
    %562 = vector.shape_cast %561 : vector<8x128xf32> to vector<1x8x128xf32>
    %563 = vector.broadcast %562 : vector<1x8x128xf32> to vector<4x8x128xf32>
    %564 = arith.addf %563, %530 : vector<4x8x128xf32>
    %cst_105 = arith.constant dense<0xFF800000> : vector<4x128xf32>
    %565 = vector.multi_reduction <maximumf>, %564, %cst_105 [1] : vector<4x8x128xf32> to vector<4x128xf32>
    %566 = vector.extract_strided_slice %528 {offsets = [3, 0, 0], sizes = [1, 8, 128], strides = [1, 1, 1]} : vector<4x8x128xf32> to vector<1x8x128xf32>
    %567 = vector.shape_cast %566 : vector<1x8x128xf32> to vector<8x128xf32>
    %568 = vector.shape_cast %567 : vector<8x128xf32> to vector<8x1x128xf32>
    %569 = vector.broadcast %568 : vector<8x1x128xf32> to vector<8x8x128xf32>
    %570 = arith.addf %535, %569 : vector<8x8x128xf32>
    %cst_106 = arith.constant dense<0xFF800000> : vector<8x128xf32>
    %571 = vector.multi_reduction <maximumf>, %570, %cst_106 [0] : vector<8x8x128xf32> to vector<8x128xf32>
    %572 = vector.shape_cast %571 : vector<8x128xf32> to vector<1x8x128xf32>
    %573 = vector.broadcast %572 : vector<1x8x128xf32> to vector<4x8x128xf32>
    %574 = arith.addf %573, %530 : vector<4x8x128xf32>
    %cst_107 = arith.constant dense<0xFF800000> : vector<4x128xf32>
    %575 = vector.multi_reduction <maximumf>, %574, %cst_107 [1] : vector<4x8x128xf32> to vector<4x128xf32>
    %c1_108 = arith.constant 1 : index
    %576 = memref.load %arg7[%c1_108] : memref<4xf32, #tpu.memory_space<smem>>
    %577 = vector.broadcast %576 : f32 to vector<8x8x128xf32>
    %578 = arith.addf %519, %577 : vector<8x8x128xf32>
    %cst_109 = arith.constant 0.000000e+00 : f32
    %579 = vector.broadcast %cst_109 : f32 to vector<8x8x128xf32>
    %580 = arith.maximumf %578, %579 : vector<8x8x128xf32>
    %581 = vector.extract_strided_slice %528 {offsets = [0, 0, 0], sizes = [1, 8, 128], strides = [1, 1, 1]} : vector<4x8x128xf32> to vector<1x8x128xf32>
    %582 = vector.shape_cast %581 : vector<1x8x128xf32> to vector<8x128xf32>
    %583 = vector.shape_cast %582 : vector<8x128xf32> to vector<8x1x128xf32>
    %584 = vector.broadcast %583 : vector<8x1x128xf32> to vector<8x8x128xf32>
    %585 = arith.addf %580, %584 : vector<8x8x128xf32>
    %cst_110 = arith.constant dense<0xFF800000> : vector<8x128xf32>
    %586 = vector.multi_reduction <maximumf>, %585, %cst_110 [0] : vector<8x8x128xf32> to vector<8x128xf32>
    %587 = vector.shape_cast %586 : vector<8x128xf32> to vector<1x8x128xf32>
    %588 = vector.broadcast %587 : vector<1x8x128xf32> to vector<4x8x128xf32>
    %589 = arith.addf %588, %530 : vector<4x8x128xf32>
    %cst_111 = arith.constant dense<0xFF800000> : vector<4x128xf32>
    %590 = vector.multi_reduction <maximumf>, %589, %cst_111 [1] : vector<4x8x128xf32> to vector<4x128xf32>
    %591 = vector.extract_strided_slice %528 {offsets = [1, 0, 0], sizes = [1, 8, 128], strides = [1, 1, 1]} : vector<4x8x128xf32> to vector<1x8x128xf32>
    %592 = vector.shape_cast %591 : vector<1x8x128xf32> to vector<8x128xf32>
    %593 = vector.shape_cast %592 : vector<8x128xf32> to vector<8x1x128xf32>
    %594 = vector.broadcast %593 : vector<8x1x128xf32> to vector<8x8x128xf32>
    %595 = arith.addf %580, %594 : vector<8x8x128xf32>
    %cst_112 = arith.constant dense<0xFF800000> : vector<8x128xf32>
    %596 = vector.multi_reduction <maximumf>, %595, %cst_112 [0] : vector<8x8x128xf32> to vector<8x128xf32>
    %597 = vector.shape_cast %596 : vector<8x128xf32> to vector<1x8x128xf32>
    %598 = vector.broadcast %597 : vector<1x8x128xf32> to vector<4x8x128xf32>
    %599 = arith.addf %598, %530 : vector<4x8x128xf32>
    %cst_113 = arith.constant dense<0xFF800000> : vector<4x128xf32>
    %600 = vector.multi_reduction <maximumf>, %599, %cst_113 [1] : vector<4x8x128xf32> to vector<4x128xf32>
    %601 = vector.extract_strided_slice %528 {offsets = [2, 0, 0], sizes = [1, 8, 128], strides = [1, 1, 1]} : vector<4x8x128xf32> to vector<1x8x128xf32>
    %602 = vector.shape_cast %601 : vector<1x8x128xf32> to vector<8x128xf32>
    %603 = vector.shape_cast %602 : vector<8x128xf32> to vector<8x1x128xf32>
    %604 = vector.broadcast %603 : vector<8x1x128xf32> to vector<8x8x128xf32>
    %605 = arith.addf %580, %604 : vector<8x8x128xf32>
    %cst_114 = arith.constant dense<0xFF800000> : vector<8x128xf32>
    %606 = vector.multi_reduction <maximumf>, %605, %cst_114 [0] : vector<8x8x128xf32> to vector<8x128xf32>
    %607 = vector.shape_cast %606 : vector<8x128xf32> to vector<1x8x128xf32>
    %608 = vector.broadcast %607 : vector<1x8x128xf32> to vector<4x8x128xf32>
    %609 = arith.addf %608, %530 : vector<4x8x128xf32>
    %cst_115 = arith.constant dense<0xFF800000> : vector<4x128xf32>
    %610 = vector.multi_reduction <maximumf>, %609, %cst_115 [1] : vector<4x8x128xf32> to vector<4x128xf32>
    %611 = vector.extract_strided_slice %528 {offsets = [3, 0, 0], sizes = [1, 8, 128], strides = [1, 1, 1]} : vector<4x8x128xf32> to vector<1x8x128xf32>
    %612 = vector.shape_cast %611 : vector<1x8x128xf32> to vector<8x128xf32>
    %613 = vector.shape_cast %612 : vector<8x128xf32> to vector<8x1x128xf32>
    %614 = vector.broadcast %613 : vector<8x1x128xf32> to vector<8x8x128xf32>
    %615 = arith.addf %580, %614 : vector<8x8x128xf32>
    %cst_116 = arith.constant dense<0xFF800000> : vector<8x128xf32>
    %616 = vector.multi_reduction <maximumf>, %615, %cst_116 [0] : vector<8x8x128xf32> to vector<8x128xf32>
    %617 = vector.shape_cast %616 : vector<8x128xf32> to vector<1x8x128xf32>
    %618 = vector.broadcast %617 : vector<1x8x128xf32> to vector<4x8x128xf32>
    %619 = arith.addf %618, %530 : vector<4x8x128xf32>
    %cst_117 = arith.constant dense<0xFF800000> : vector<4x128xf32>
    %620 = vector.multi_reduction <maximumf>, %619, %cst_117 [1] : vector<4x8x128xf32> to vector<4x128xf32>
    %c2_118 = arith.constant 2 : index
    %621 = memref.load %arg7[%c2_118] : memref<4xf32, #tpu.memory_space<smem>>
    %622 = vector.broadcast %621 : f32 to vector<8x8x128xf32>
    %623 = arith.addf %523, %622 : vector<8x8x128xf32>
    %cst_119 = arith.constant 0.000000e+00 : f32
    %624 = vector.broadcast %cst_119 : f32 to vector<8x8x128xf32>
    %625 = arith.maximumf %623, %624 : vector<8x8x128xf32>
    %626 = vector.extract_strided_slice %528 {offsets = [0, 0, 0], sizes = [1, 8, 128], strides = [1, 1, 1]} : vector<4x8x128xf32> to vector<1x8x128xf32>
    %627 = vector.shape_cast %626 : vector<1x8x128xf32> to vector<8x128xf32>
    %628 = vector.shape_cast %627 : vector<8x128xf32> to vector<8x1x128xf32>
    %629 = vector.broadcast %628 : vector<8x1x128xf32> to vector<8x8x128xf32>
    %630 = arith.addf %625, %629 : vector<8x8x128xf32>
    %cst_120 = arith.constant dense<0xFF800000> : vector<8x128xf32>
    %631 = vector.multi_reduction <maximumf>, %630, %cst_120 [0] : vector<8x8x128xf32> to vector<8x128xf32>
    %632 = vector.shape_cast %631 : vector<8x128xf32> to vector<1x8x128xf32>
    %633 = vector.broadcast %632 : vector<1x8x128xf32> to vector<4x8x128xf32>
    %634 = arith.addf %633, %530 : vector<4x8x128xf32>
    %cst_121 = arith.constant dense<0xFF800000> : vector<4x128xf32>
    %635 = vector.multi_reduction <maximumf>, %634, %cst_121 [1] : vector<4x8x128xf32> to vector<4x128xf32>
    %636 = vector.extract_strided_slice %528 {offsets = [1, 0, 0], sizes = [1, 8, 128], strides = [1, 1, 1]} : vector<4x8x128xf32> to vector<1x8x128xf32>
    %637 = vector.shape_cast %636 : vector<1x8x128xf32> to vector<8x128xf32>
    %638 = vector.shape_cast %637 : vector<8x128xf32> to vector<8x1x128xf32>
    %639 = vector.broadcast %638 : vector<8x1x128xf32> to vector<8x8x128xf32>
    %640 = arith.addf %625, %639 : vector<8x8x128xf32>
    %cst_122 = arith.constant dense<0xFF800000> : vector<8x128xf32>
    %641 = vector.multi_reduction <maximumf>, %640, %cst_122 [0] : vector<8x8x128xf32> to vector<8x128xf32>
    %642 = vector.shape_cast %641 : vector<8x128xf32> to vector<1x8x128xf32>
    %643 = vector.broadcast %642 : vector<1x8x128xf32> to vector<4x8x128xf32>
    %644 = arith.addf %643, %530 : vector<4x8x128xf32>
    %cst_123 = arith.constant dense<0xFF800000> : vector<4x128xf32>
    %645 = vector.multi_reduction <maximumf>, %644, %cst_123 [1] : vector<4x8x128xf32> to vector<4x128xf32>
    %646 = vector.extract_strided_slice %528 {offsets = [2, 0, 0], sizes = [1, 8, 128], strides = [1, 1, 1]} : vector<4x8x128xf32> to vector<1x8x128xf32>
    %647 = vector.shape_cast %646 : vector<1x8x128xf32> to vector<8x128xf32>
    %648 = vector.shape_cast %647 : vector<8x128xf32> to vector<8x1x128xf32>
    %649 = vector.broadcast %648 : vector<8x1x128xf32> to vector<8x8x128xf32>
    %650 = arith.addf %625, %649 : vector<8x8x128xf32>
    %cst_124 = arith.constant dense<0xFF800000> : vector<8x128xf32>
    %651 = vector.multi_reduction <maximumf>, %650, %cst_124 [0] : vector<8x8x128xf32> to vector<8x128xf32>
    %652 = vector.shape_cast %651 : vector<8x128xf32> to vector<1x8x128xf32>
    %653 = vector.broadcast %652 : vector<1x8x128xf32> to vector<4x8x128xf32>
    %654 = arith.addf %653, %530 : vector<4x8x128xf32>
    %cst_125 = arith.constant dense<0xFF800000> : vector<4x128xf32>
    %655 = vector.multi_reduction <maximumf>, %654, %cst_125 [1] : vector<4x8x128xf32> to vector<4x128xf32>
    %656 = vector.extract_strided_slice %528 {offsets = [3, 0, 0], sizes = [1, 8, 128], strides = [1, 1, 1]} : vector<4x8x128xf32> to vector<1x8x128xf32>
    %657 = vector.shape_cast %656 : vector<1x8x128xf32> to vector<8x128xf32>
    %658 = vector.shape_cast %657 : vector<8x128xf32> to vector<8x1x128xf32>
    %659 = vector.broadcast %658 : vector<8x1x128xf32> to vector<8x8x128xf32>
    %660 = arith.addf %625, %659 : vector<8x8x128xf32>
    %cst_126 = arith.constant dense<0xFF800000> : vector<8x128xf32>
    %661 = vector.multi_reduction <maximumf>, %660, %cst_126 [0] : vector<8x8x128xf32> to vector<8x128xf32>
    %662 = vector.shape_cast %661 : vector<8x128xf32> to vector<1x8x128xf32>
    %663 = vector.broadcast %662 : vector<1x8x128xf32> to vector<4x8x128xf32>
    %664 = arith.addf %663, %530 : vector<4x8x128xf32>
    %cst_127 = arith.constant dense<0xFF800000> : vector<4x128xf32>
    %665 = vector.multi_reduction <maximumf>, %664, %cst_127 [1] : vector<4x8x128xf32> to vector<4x128xf32>
    %c3_128 = arith.constant 3 : index
    %666 = memref.load %arg7[%c3_128] : memref<4xf32, #tpu.memory_space<smem>>
    %667 = vector.broadcast %666 : f32 to vector<8x8x128xf32>
    %668 = arith.addf %527, %667 : vector<8x8x128xf32>
    %cst_129 = arith.constant 0.000000e+00 : f32
    %669 = vector.broadcast %cst_129 : f32 to vector<8x8x128xf32>
    %670 = arith.maximumf %668, %669 : vector<8x8x128xf32>
    %671 = vector.extract_strided_slice %528 {offsets = [0, 0, 0], sizes = [1, 8, 128], strides = [1, 1, 1]} : vector<4x8x128xf32> to vector<1x8x128xf32>
    %672 = vector.shape_cast %671 : vector<1x8x128xf32> to vector<8x128xf32>
    %673 = vector.shape_cast %672 : vector<8x128xf32> to vector<8x1x128xf32>
    %674 = vector.broadcast %673 : vector<8x1x128xf32> to vector<8x8x128xf32>
    %675 = arith.addf %670, %674 : vector<8x8x128xf32>
    %cst_130 = arith.constant dense<0xFF800000> : vector<8x128xf32>
    %676 = vector.multi_reduction <maximumf>, %675, %cst_130 [0] : vector<8x8x128xf32> to vector<8x128xf32>
    %677 = vector.shape_cast %676 : vector<8x128xf32> to vector<1x8x128xf32>
    %678 = vector.broadcast %677 : vector<1x8x128xf32> to vector<4x8x128xf32>
    %679 = arith.addf %678, %530 : vector<4x8x128xf32>
    %cst_131 = arith.constant dense<0xFF800000> : vector<4x128xf32>
    %680 = vector.multi_reduction <maximumf>, %679, %cst_131 [1] : vector<4x8x128xf32> to vector<4x128xf32>
    %681 = vector.extract_strided_slice %528 {offsets = [1, 0, 0], sizes = [1, 8, 128], strides = [1, 1, 1]} : vector<4x8x128xf32> to vector<1x8x128xf32>
    %682 = vector.shape_cast %681 : vector<1x8x128xf32> to vector<8x128xf32>
    %683 = vector.shape_cast %682 : vector<8x128xf32> to vector<8x1x128xf32>
    %684 = vector.broadcast %683 : vector<8x1x128xf32> to vector<8x8x128xf32>
    %685 = arith.addf %670, %684 : vector<8x8x128xf32>
    %cst_132 = arith.constant dense<0xFF800000> : vector<8x128xf32>
    %686 = vector.multi_reduction <maximumf>, %685, %cst_132 [0] : vector<8x8x128xf32> to vector<8x128xf32>
    %687 = vector.shape_cast %686 : vector<8x128xf32> to vector<1x8x128xf32>
    %688 = vector.broadcast %687 : vector<1x8x128xf32> to vector<4x8x128xf32>
    %689 = arith.addf %688, %530 : vector<4x8x128xf32>
    %cst_133 = arith.constant dense<0xFF800000> : vector<4x128xf32>
    %690 = vector.multi_reduction <maximumf>, %689, %cst_133 [1] : vector<4x8x128xf32> to vector<4x128xf32>
    %691 = vector.extract_strided_slice %528 {offsets = [2, 0, 0], sizes = [1, 8, 128], strides = [1, 1, 1]} : vector<4x8x128xf32> to vector<1x8x128xf32>
    %692 = vector.shape_cast %691 : vector<1x8x128xf32> to vector<8x128xf32>
    %693 = vector.shape_cast %692 : vector<8x128xf32> to vector<8x1x128xf32>
    %694 = vector.broadcast %693 : vector<8x1x128xf32> to vector<8x8x128xf32>
    %695 = arith.addf %670, %694 : vector<8x8x128xf32>
    %cst_134 = arith.constant dense<0xFF800000> : vector<8x128xf32>
    %696 = vector.multi_reduction <maximumf>, %695, %cst_134 [0] : vector<8x8x128xf32> to vector<8x128xf32>
    %697 = vector.shape_cast %696 : vector<8x128xf32> to vector<1x8x128xf32>
    %698 = vector.broadcast %697 : vector<1x8x128xf32> to vector<4x8x128xf32>
    %699 = arith.addf %698, %530 : vector<4x8x128xf32>
    %cst_135 = arith.constant dense<0xFF800000> : vector<4x128xf32>
    %700 = vector.multi_reduction <maximumf>, %699, %cst_135 [1] : vector<4x8x128xf32> to vector<4x128xf32>
    %701 = vector.extract_strided_slice %528 {offsets = [3, 0, 0], sizes = [1, 8, 128], strides = [1, 1, 1]} : vector<4x8x128xf32> to vector<1x8x128xf32>
    %702 = vector.shape_cast %701 : vector<1x8x128xf32> to vector<8x128xf32>
    %703 = vector.shape_cast %702 : vector<8x128xf32> to vector<8x1x128xf32>
    %704 = vector.broadcast %703 : vector<8x1x128xf32> to vector<8x8x128xf32>
    %705 = arith.addf %670, %704 : vector<8x8x128xf32>
    %cst_136 = arith.constant dense<0xFF800000> : vector<8x128xf32>
    %706 = vector.multi_reduction <maximumf>, %705, %cst_136 [0] : vector<8x8x128xf32> to vector<8x128xf32>
    %707 = vector.shape_cast %706 : vector<8x128xf32> to vector<1x8x128xf32>
    %708 = vector.broadcast %707 : vector<1x8x128xf32> to vector<4x8x128xf32>
    %709 = arith.addf %708, %530 : vector<4x8x128xf32>
    %cst_137 = arith.constant dense<0xFF800000> : vector<4x128xf32>
    %710 = vector.multi_reduction <maximumf>, %709, %cst_137 [1] : vector<4x8x128xf32> to vector<4x128xf32>
    %711 = tpu.concatenate %545, %555, %565, %575, %590, %600, %610, %620, %635, %645, %655, %665, %680, %690, %700, %710 in 0 : vector<4x128xf32>, vector<4x128xf32>, vector<4x128xf32>, vector<4x128xf32>, vector<4x128xf32>, vector<4x128xf32>, vector<4x128xf32>, vector<4x128xf32>, vector<4x128xf32>, vector<4x128xf32>, vector<4x128xf32>, vector<4x128xf32>, vector<4x128xf32>, vector<4x128xf32>, vector<4x128xf32>, vector<4x128xf32> -> vector<64x128xf32>
    %c0_138 = arith.constant 0 : index
    %c0_139 = arith.constant 0 : index
    %712 = vector.load %arg8[%c0_138, %c0_139] : memref<20x64xf32, #tpu.memory_space<vmem>>, vector<20x64xf32>
    %cst_140 = arith.constant dense<0.000000e+00> : vector<20x128xf32>
    %713 = tpu.matmul %712, %711, %cst_140 {dimension_numbers = #tpu.dot_dimension_numbers<[1], [0], [0], [1], [0, 0, 1, 1], [], []>} : vector<20x64xf32>, vector<64x128xf32>, vector<20x128xf32> -> vector<20x128xf32>
    %c0_141 = arith.constant 0 : index
    %c0_142 = arith.constant 0 : index
    %714 = vector.load %arg9[%c0_141, %c0_142] : memref<20x1xf32, #tpu.memory_space<vmem>>, vector<20x1xf32>
    %715 = vector.broadcast %714 : vector<20x1xf32> to vector<20x128xf32>
    %716 = arith.addf %713, %715 : vector<20x128xf32>
    %cst_143 = arith.constant 0.000000e+00 : f32
    %717 = vector.broadcast %cst_143 : f32 to vector<20x128xf32>
    %718 = arith.maximumf %716, %717 : vector<20x128xf32>
    %c0_144 = arith.constant 0 : index
    %c0_145 = arith.constant 0 : index
    %719 = vector.load %arg10[%c0_144, %c0_145] : memref<1x20xf32, #tpu.memory_space<vmem>>, vector<1x20xf32>
    %cst_146 = arith.constant dense<0.000000e+00> : vector<1x128xf32>
    %720 = tpu.matmul %719, %718, %cst_146 {dimension_numbers = #tpu.dot_dimension_numbers<[1], [0], [0], [1], [0, 0, 1, 1], [], []>} : vector<1x20xf32>, vector<20x128xf32>, vector<1x128xf32> -> vector<1x128xf32>
    %c0_147 = arith.constant 0 : index
    %c0_148 = arith.constant 0 : index
    %721 = vector.load %arg11[%c0_147, %c0_148] : memref<1x1xf32, #tpu.memory_space<vmem>>, vector<1x1xf32>
    %722 = vector.broadcast %721 : vector<1x1xf32> to vector<1x128xf32>
    %723 = arith.addf %720, %722 : vector<1x128xf32>
    %cst_149 = arith.constant 0.000000e+00 : f32
    %724 = vector.broadcast %cst_149 : f32 to vector<1x128xf32>
    %725 = arith.subf %724, %723 : vector<1x128xf32>
    %726 = math.exp %725 : vector<1x128xf32>
    %cst_150 = arith.constant 1.000000e+00 : f32
    %727 = vector.broadcast %cst_150 : f32 to vector<1x128xf32>
    %728 = arith.addf %727, %726 : vector<1x128xf32>
    %729 = tpu.reciprocal %728 {approx = true} : vector<1x128xf32> -> vector<1x128xf32>
    %c0_151 = arith.constant 0 : index
    %c0_152 = arith.constant 0 : index
    %c0_153 = arith.constant 0 : index
    %c0_154 = arith.constant 0 : index
    %730 = vector.load %arg12[%c0_151, %c0_152, %c0_153, %c0_154] : memref<1x1x1x128xf32, #tpu.memory_space<vmem>>, vector<1x1x1x128xf32>
    %731 = vector.shape_cast %730 : vector<1x1x1x128xf32> to vector<1x128xf32>
    %732 = vector.shape_cast %729 : vector<1x128xf32> to vector<1x1x1x128xf32>
    tpu.vector_store %arg12[%c0_151, %c0_152, %c0_153, %c0_154], %732 {strides = array<i32>} : memref<1x1x1x128xf32, #tpu.memory_space<vmem>>, vector<1x1x1x128xf32>,
    return
  }
  func.func @transform_0(%arg0: i32, %arg1: i32) -> (i32, i32, i32) {
    %c0_i32 = arith.constant 0 : i32
    %c0_i32_0 = arith.constant 0 : i32
    %c0_i32_1 = arith.constant 0 : i32
    return %c0_i32, %c0_i32_0, %arg0 : i32, i32, i32
  }
  func.func @transform_1(%arg0: i32, %arg1: i32) -> (i32, i32, i32, i32) {
    %c0_i32 = arith.constant 0 : i32
    %c0_i32_0 = arith.constant 0 : i32
    %c0_i32_1 = arith.constant 0 : i32
    return %arg1, %c0_i32, %c0_i32_0, %arg0 : i32, i32, i32, i32
  }
  func.func @transform_2(%arg0: i32, %arg1: i32) -> (i32, i32, i32) {
    %c0_i32 = arith.constant 0 : i32
    %c0_i32_0 = arith.constant 0 : i32
    %c0_i32_1 = arith.constant 0 : i32
    return %c0_i32, %c0_i32_0, %arg0 : i32, i32, i32
  }
  func.func @transform_3(%arg0: i32, %arg1: i32) -> (i32, i32, i32, i32) {
    %c0_i32 = arith.constant 0 : i32
    %c0_i32_0 = arith.constant 0 : i32
    %c0_i32_1 = arith.constant 0 : i32
    return %arg1, %c0_i32, %c0_i32_0, %arg0 : i32, i32, i32, i32
  }
  func.func @transform_4(%arg0: i32, %arg1: i32) -> (i32, i32) {
    %c0_i32 = arith.constant 0 : i32
    %c0_i32_0 = arith.constant 0 : i32
    %c0_i32_1 = arith.constant 0 : i32
    return %c0_i32, %c0_i32_0 : i32, i32
  }
  func.func @transform_5(%arg0: i32, %arg1: i32) -> i32 {
    %c0_i32 = arith.constant 0 : i32
    %c0_i32_0 = arith.constant 0 : i32
    return %c0_i32 : i32
  }
  func.func @transform_6(%arg0: i32, %arg1: i32) -> (i32, i32) {
    %c0_i32 = arith.constant 0 : i32
    %c0_i32_0 = arith.constant 0 : i32
    %c0_i32_1 = arith.constant 0 : i32
    return %c0_i32, %c0_i32_0 : i32, i32
  }
  func.func @transform_7(%arg0: i32, %arg1: i32) -> (i32, i32) {
    %c0_i32 = arith.constant 0 : i32
    %c0_i32_0 = arith.constant 0 : i32
    %c0_i32_1 = arith.constant 0 : i32
    return %c0_i32, %c0_i32_0 : i32, i32
  }
  func.func @transform_8(%arg0: i32, %arg1: i32) -> (i32, i32) {
    %c0_i32 = arith.constant 0 : i32
    %c0_i32_0 = arith.constant 0 : i32
    %c0_i32_1 = arith.constant 0 : i32
    return %c0_i32, %c0_i32_0 : i32, i32
  }
  func.func @transform_9(%arg0: i32, %arg1: i32) -> (i32, i32) {
    %c0_i32 = arith.constant 0 : i32
    %c0_i32_0 = arith.constant 0 : i32
    %c0_i32_1 = arith.constant 0 : i32
    return %c0_i32, %c0_i32_0 : i32, i32
  }
  func.func @transform_10(%arg0: i32, %arg1: i32) -> (i32, i32, i32, i32) {
    %c0_i32 = arith.constant 0 : i32
    %c0_i32_0 = arith.constant 0 : i32
    %c0_i32_1 = arith.constant 0 : i32
    return %arg0, %arg1, %c0_i32, %c0_i32_0 : i32, i32, i32, i32
  }
}

</mosaic_0001>

<llo_original>
// kernel: forward.1
$region0: #{forward.1}
  #allocation0 [shape = 'u32[]', space=smem, size = 0x4, offset = 0x4, fixed_abs, tag = 'smem constant byte address 0x4 - core index']
  #allocation1 [shape = 'u32[144,128]{1,0:T(1,128)}', space=vmem, size = 0x12000, scoped, tag = 'internal scratch']
  #allocation2 [shape = 'f32[1,1]{1,0:T(1,128)S(1)}', space=vmem, size = 0x200, scoped, tag = 'scoped memory for forward.1']
  %s0 = inlined_call_operand.vmem [shape: f32[32,8,128], index: 0, kind: input, shape index: {}]
  %s1 = inlined_call_operand.vmem [shape: f32[3,32,8,128], index: 1, kind: input, shape index: {}]
  %s2 = inlined_call_operand.vmem [shape: f32[4,8,128], index: 2, kind: input, shape index: {}]
  %s3 = inlined_call_operand.vmem [shape: f32[3,4,8,128], index: 3, kind: input, shape index: {}]
  %s4 = inlined_call_operand.vmem [shape: f32[4,9], index: 4, kind: input, shape index: {}]
  %s5 = inlined_call_operand.vmem [shape: f32[4], index: 5, kind: input, shape index: {}]
  %s6 = inlined_call_operand.vmem [shape: f32[20,64], index: 6, kind: input, shape index: {}]
  %s7 = inlined_call_operand.vmem [shape: f32[20,1], index: 7, kind: input, shape index: {}]
  %s8 = inlined_call_operand.vmem [shape: f32[1,20], index: 8, kind: input, shape index: {}]
  %s9 = inlined_call_operand.<no memory space> [shape: f32[1,1], index: 9, kind: input, shape index: {}]
  %s10 = inlined_call_operand.vmem [shape: f32[1,3,1,128], index: 10, kind: output, shape index: {}]
  %s11 = sld [smem:[#allocation0]]
  $region81: #{forward.1} parent=0
    _
  %s13 = ssub.s32 1, %s11
  %s14 = scalar_select 0, %s13, %s11
  %v15 = vstv %s9
  %16 = vst [vmem:[#allocation2] sm:$0x1] %v15
  $region1: #{forward.1} parent=0
    #allocation3 [shape = 'u8[2048]{0}', space=smem, size = 0x800, scoped, tag = 'input window, operand 4, single buffered']
    #allocation4 [shape = 's32[2]{0}', space=sflag, size = 0x8, scoped, tag = 'scoped memory for forward.1']
    #allocation5 [shape = 'u8[512]{0}', space=smem, size = 0x200, scoped, tag = 'input window, operand 5, single buffered']
    #allocation6 [shape = 's32[1]{0}', space=sflag, size = 0x4, scoped, tag = 'scoped memory for forward.1']
    %17 = vsyncpa [#allocation4], 0
    %18 = vsyncpa [#allocation6], 0
    loop: start=0, step=1, limit=5
    $region2: #{forward.1} parent=1 // loop_pre_header
      _
    $region3: #{forward.1} parent=1 // loop_header
      %s20 = sphi 0, %s24
      %p21 = scmp.ge.s32.totalorder %s20, 5
      %s27 = sphi 0, %s39
      %s28 = sphi 0, %s35
      %s29 = sphi 0, %s27
      %s30 = sphi 0, %s28
      %s31 = sphi 0, %s29
      %s32 = sphi 0, %s30
      %s42 = sphi 0, %s44
      %s45 = sphi 0, %s42
      %s46 = sphi 0, %s45
      %s62 = sphi 0, %s46
      %s70 = sphi 0, %s72
      %s73 = sphi 0, %s70
      %s74 = sphi 0, %s73
      %s90 = sphi 0, %s74
      %s96 = sphi 0, %s98
      %s99 = sphi 0, %s96
      %s100 = sphi 0, %s99
      %s116 = sphi 0, %s100
      %s124 = sphi 0, %s126
      %s127 = sphi 0, %s124
      %s128 = sphi 0, %s127
      %s144 = sphi 0, %s128
      %s148 = sphi 0, %s148
      %s150 = sphi 0, %s148
      %s151 = sphi 0, %s150
      %s165 = sphi 0, %s151
      %s169 = sphi 0, %s169
      %s171 = sphi 0, %s169
      %s172 = sphi 0, %s171
      %s186 = sphi 0, %s172
      %s190 = sphi 0, %s190
      %s192 = sphi 0, %s190
      %s193 = sphi 0, %s192
      %s207 = sphi 0, %s193
      %s211 = sphi 0, %s211
      %s213 = sphi 0, %s211
      %s214 = sphi 0, %s213
      %s228 = sphi 0, %s214
      %s232 = sphi 0, %s232
      %s234 = sphi 0, %s232
      %s235 = sphi 0, %s234
      %s249 = sphi 0, %s235
      %s253 = sphi 0, %s253
      %s255 = sphi 0, %s253
      %s256 = sphi 0, %s255
      %s270 = sphi 0, %s256
      %s278 = sphi 0, %s280
      %s281 = sphi 0, %s278
      %s282 = sphi 0, %s281
      %s298 = sphi 0, %s282
    $region4: #{forward.1} parent=1 // loop_header_branch
      %23 = sbr.rel (%p21) target = $region8
    $region5: #{forward.1} parent=1 // loop_body
      %s25 = ssub.s32 %s20, 1
      %s26 = ssub.s32 %s20, 2
      %s33 = sadd.s32 1, %s28
      %p34 = scmp.ge.s32.totalorder %s33, 3
      %s35 = scalar_select %p34, 0, %s33
      %s36 = sadd.s32 1, %s27
      %s37 = scalar_select %p34, %s36, %s27
      %p38 = scmp.ge.s32.totalorder %s37, 1
      %s39 = scalar_select %p38, 0, %s37
      %s40 = ssub.s32 %s27, %s39
      %p41 = scmp.eq.s32.totalorder %s40, 0
      %s43 = sadd.s32 %s42, 1
      %s44 = scalar_select %p41, %s42, %s43
      %p47 = pneg %p41
      %p48 = scmp.eq.s32.totalorder %s20, 2
      %p49 = por %p47, %p48
      %p50 = scmp.ne.s32.totalorder %s42, %s45
      %p51 = scmp.eq.s32.totalorder %s20, 0
      %p52 = por %p50, %p51
      %p53 = scmp.ne.s32.totalorder %s42, %s45
      %p54 = scmp.eq.s32.totalorder %s25, 2
      %p55 = por %p53, %p54
      %p56 = scmp.ne.s32.totalorder %s45, %s46
      %p57 = scmp.eq.s32.totalorder %s25, 0
      %p58 = por %p56, %p57
      %p59 = scmp.ne.s32.totalorder %s45, %s46
      %p60 = scmp.eq.s32.totalorder %s26, 2
      %p61 = por %p59, %p60
      %p63 = scmp.ne.s32.totalorder %s46, %s62
      %p64 = scmp.eq.s32.totalorder %s26, 0
      %p65 = por %p63, %p64
      %s66 = ssub.s32 %s28, %s35
      %s67 = ssub.s32 %s27, %s39
      %s68 = sor.u32 %s66, %s67
      %p69 = scmp.eq.s32.totalorder %s68, 0
      %s71 = sadd.s32 %s70, 1
      %s72 = scalar_select %p69, %s70, %s71
      %p75 = pneg %p69
      %p76 = scmp.eq.s32.totalorder %s20, 2
      %p77 = por %p75, %p76
      %p78 = scmp.ne.s32.totalorder %s70, %s73
      %p79 = scmp.eq.s32.totalorder %s20, 0
      %p80 = por %p78, %p79
      %p81 = scmp.ne.s32.totalorder %s70, %s73
      %p82 = scmp.eq.s32.totalorder %s25, 2
      %p83 = por %p81, %p82
      %p84 = scmp.ne.s32.totalorder %s73, %s74
      %p85 = scmp.eq.s32.totalorder %s25, 0
      %p86 = por %p84, %p85
      %p87 = scmp.ne.s32.totalorder %s73, %s74
      %p88 = scmp.eq.s32.totalorder %s26, 2
      %p89 = por %p87, %p88
      %p91 = scmp.ne.s32.totalorder %s74, %s90
      %p92 = scmp.eq.s32.totalorder %s26, 0
      %p93 = por %p91, %p92
      %s94 = ssub.s32 %s27, %s39
      %p95 = scmp.eq.s32.totalorder %s94, 0
      %s97 = sadd.s32 %s96, 1
      %s98 = scalar_select %p95, %s96, %s97
      %p101 = pneg %p95
      %p102 = scmp.eq.s32.totalorder %s20, 2
      %p103 = por %p101, %p102
      %p104 = scmp.ne.s32.totalorder %s96, %s99
      %p105 = scmp.eq.s32.totalorder %s20, 0
      %p106 = por %p104, %p105
      %p107 = scmp.ne.s32.totalorder %s96, %s99
      %p108 = scmp.eq.s32.totalorder %s25, 2
      %p109 = por %p107, %p108
      %p110 = scmp.ne.s32.totalorder %s99, %s100
      %p111 = scmp.eq.s32.totalorder %s25, 0
      %p112 = por %p110, %p111
      %p113 = scmp.ne.s32.totalorder %s99, %s100
      %p114 = scmp.eq.s32.totalorder %s26, 2
      %p115 = por %p113, %p114
      %p117 = scmp.ne.s32.totalorder %s100, %s116
      %p118 = scmp.eq.s32.totalorder %s26, 0
      %p119 = por %p117, %p118
      %s120 = ssub.s32 %s28, %s35
      %s121 = ssub.s32 %s27, %s39
      %s122 = sor.u32 %s120, %s121
      %p123 = scmp.eq.s32.totalorder %s122, 0
      %s125 = sadd.s32 %s124, 1
      %s126 = scalar_select %p123, %s124, %s125
      %p129 = pneg %p123
      %p130 = scmp.eq.s32.totalorder %s20, 2
      %p131 = por %p129, %p130
      %p132 = scmp.ne.s32.totalorder %s124, %s127
      %p133 = scmp.eq.s32.totalorder %s20, 0
      %p134 = por %p132, %p133
      %p135 = scmp.ne.s32.totalorder %s124, %s127
      %p136 = scmp.eq.s32.totalorder %s25, 2
      %p137 = por %p135, %p136
      %p138 = scmp.ne.s32.totalorder %s127, %s128
      %p139 = scmp.eq.s32.totalorder %s25, 0
      %p140 = por %p138, %p139
      %p141 = scmp.ne.s32.totalorder %s127, %s128
      %p142 = scmp.eq.s32.totalorder %s26, 2
      %p143 = por %p141, %p142
      %p145 = scmp.ne.s32.totalorder %s128, %s144
      %p146 = scmp.eq.s32.totalorder %s26, 0
      %p147 = por %p145, %p146
      %s149 = sadd.s32 %s148, 1
      %p152 = scmp.eq.s32.totalorder %s20, 2
      %p153 = scmp.ne.s32.totalorder %s148, %s150
      %p154 = scmp.eq.s32.totalorder %s20, 0
      %p155 = por %p153, %p154
      %p156 = scmp.ne.s32.totalorder %s148, %s150
      %p157 = scmp.eq.s32.totalorder %s25, 2
      %p158 = por %p156, %p157
      %p159 = scmp.ne.s32.totalorder %s150, %s151
      %p160 = scmp.eq.s32.totalorder %s25, 0
      %p161 = por %p159, %p160
      %p162 = scmp.ne.s32.totalorder %s150, %s151
      %p163 = scmp.eq.s32.totalorder %s26, 2
      %p164 = por %p162, %p163
      %p166 = scmp.ne.s32.totalorder %s151, %s165
      %p167 = scmp.eq.s32.totalorder %s26, 0
      %p168 = por %p166, %p167
      %s170 = sadd.s32 %s169, 1
      %p173 = scmp.eq.s32.totalorder %s20, 2
      %p174 = scmp.ne.s32.totalorder %s169, %s171
      %p175 = scmp.eq.s32.totalorder %s20, 0
      %p176 = por %p174, %p175
      %p177 = scmp.ne.s32.totalorder %s169, %s171
      %p178 = scmp.eq.s32.totalorder %s25, 2
      %p179 = por %p177, %p178
      %p180 = scmp.ne.s32.totalorder %s171, %s172
      %p181 = scmp.eq.s32.totalorder %s25, 0
      %p182 = por %p180, %p181
      %p183 = scmp.ne.s32.totalorder %s171, %s172
      %p184 = scmp.eq.s32.totalorder %s26, 2
      %p185 = por %p183, %p184
      %p187 = scmp.ne.s32.totalorder %s172, %s186
      %p188 = scmp.eq.s32.totalorder %s26, 0
      %p189 = por %p187, %p188
      %s191 = sadd.s32 %s190, 1
      %p194 = scmp.eq.s32.totalorder %s20, 2
      %p195 = scmp.ne.s32.totalorder %s190, %s192
      %p196 = scmp.eq.s32.totalorder %s20, 0
      %p197 = por %p195, %p196
      %p198 = scmp.ne.s32.totalorder %s190, %s192
      %p199 = scmp.eq.s32.totalorder %s25, 2
      %p200 = por %p198, %p199
      %p201 = scmp.ne.s32.totalorder %s192, %s193
      %p202 = scmp.eq.s32.totalorder %s25, 0
      %p203 = por %p201, %p202
      %p204 = scmp.ne.s32.totalorder %s192, %s193
      %p205 = scmp.eq.s32.totalorder %s26, 2
      %p206 = por %p204, %p205
      %p208 = scmp.ne.s32.totalorder %s193, %s207
      %p209 = scmp.eq.s32.totalorder %s26, 0
      %p210 = por %p208, %p209
      %s212 = sadd.s32 %s211, 1
      %p215 = scmp.eq.s32.totalorder %s20, 2
      %p216 = scmp.ne.s32.totalorder %s211, %s213
      %p217 = scmp.eq.s32.totalorder %s20, 0
      %p218 = por %p216, %p217
      %p219 = scmp.ne.s32.totalorder %s211, %s213
      %p220 = scmp.eq.s32.totalorder %s25, 2
      %p221 = por %p219, %p220
      %p222 = scmp.ne.s32.totalorder %s213, %s214
      %p223 = scmp.eq.s32.totalorder %s25, 0
      %p224 = por %p222, %p223
      %p225 = scmp.ne.s32.totalorder %s213, %s214
      %p226 = scmp.eq.s32.totalorder %s26, 2
      %p227 = por %p225, %p226
      %p229 = scmp.ne.s32.totalorder %s214, %s228
      %p230 = scmp.eq.s32.totalorder %s26, 0
      %p231 = por %p229, %p230
      %s233 = sadd.s32 %s232, 1
      %p236 = scmp.eq.s32.totalorder %s20, 2
      %p237 = scmp.ne.s32.totalorder %s232, %s234
      %p238 = scmp.eq.s32.totalorder %s20, 0
      %p239 = por %p237, %p238
      %p240 = scmp.ne.s32.totalorder %s232, %s234
      %p241 = scmp.eq.s32.totalorder %s25, 2
      %p242 = por %p240, %p241
      %p243 = scmp.ne.s32.totalorder %s234, %s235
      %p244 = scmp.eq.s32.totalorder %s25, 0
      %p245 = por %p243, %p244
      %p246 = scmp.ne.s32.totalorder %s234, %s235
      %p247 = scmp.eq.s32.totalorder %s26, 2
      %p248 = por %p246, %p247
      %p250 = scmp.ne.s32.totalorder %s235, %s249
      %p251 = scmp.eq.s32.totalorder %s26, 0
      %p252 = por %p250, %p251
      %s254 = sadd.s32 %s253, 1
      %p257 = scmp.eq.s32.totalorder %s20, 2
      %p258 = scmp.ne.s32.totalorder %s253, %s255
      %p259 = scmp.eq.s32.totalorder %s20, 0
      %p260 = por %p258, %p259
      %p261 = scmp.ne.s32.totalorder %s253, %s255
      %p262 = scmp.eq.s32.totalorder %s25, 2
      %p263 = por %p261, %p262
      %p264 = scmp.ne.s32.totalorder %s255, %s256
      %p265 = scmp.eq.s32.totalorder %s25, 0
      %p266 = por %p264, %p265
      %p267 = scmp.ne.s32.totalorder %s255, %s256
      %p268 = scmp.eq.s32.totalorder %s26, 2
      %p269 = por %p267, %p268
      %p271 = scmp.ne.s32.totalorder %s256, %s270
      %p272 = scmp.eq.s32.totalorder %s26, 0
      %p273 = por %p271, %p272
      %s274 = ssub.s32 %s27, %s39
      %s275 = ssub.s32 %s28, %s35
      %s276 = sor.u32 %s274, %s275
      %p277 = scmp.eq.s32.totalorder %s276, 0
      %s279 = sadd.s32 %s278, 1
      %s280 = scalar_select %p277, %s278, %s279
      %p283 = pneg %p277
      %p284 = scmp.eq.s32.totalorder %s20, 2
      %p285 = por %p283, %p284
      %p286 = scmp.ne.s32.totalorder %s278, %s281
      %p287 = scmp.eq.s32.totalorder %s20, 0
      %p288 = por %p286, %p287
      %p289 = scmp.ne.s32.totalorder %s278, %s281
      %p290 = scmp.eq.s32.totalorder %s25, 2
      %p291 = por %p289, %p290
      %p292 = scmp.ne.s32.totalorder %s281, %s282
      %p293 = scmp.eq.s32.totalorder %s25, 0
      %p294 = por %p292, %p293
      %p295 = scmp.ne.s32.totalorder %s281, %s282
      %p296 = scmp.eq.s32.totalorder %s26, 2
      %p297 = por %p295, %p296
      %p299 = scmp.ne.s32.totalorder %s282, %s298
      %p300 = scmp.eq.s32.totalorder %s26, 0
      %p301 = por %p299, %p300
      %p302 = scmp.le.s32.totalorder 1, %s20
      %p303 = scmp.lt.s32.totalorder %s20, 4
      %p304 = pnand %p302, %p303
      %p305 = pneg %p304
      // Predicated region
      $region9: #{forward.1} parent=5 // pred_check
        _
      $region10: #{forward.1} parent=5 // pred_check_branch
        %307 = sbr.rel (%p304) target = $region12
      $region11: #{forward.1} parent=5 // pred_region
        %s308 = ssub.s32 %s20, 1
        // Predicated region
        $region13: #{forward.1} parent=11 // pred_check
          %p309 = pneg %p58
        $region14: #{forward.1} parent=11 // pred_check_branch
          %311 = sbr.rel (%p309) target = $region16
        $region15: #{forward.1} parent=11 // pred_region
          %p312 = scmp.lt.s32.totalorder %s29, 0
          %s313 = scalar_select %p312, %s29, 0
          %s314 = smul.addr %s313, 8
          %s315 = scalar_lea.vmem %s0, %s314
        $region16: #{forward.1} parent=11 // pred_fallthru
          _
        // Predicated region
        $region17: #{forward.1} parent=11 // pred_check
          %p316 = pneg %p112
        $region18: #{forward.1} parent=11 // pred_check_branch
          %318 = sbr.rel (%p316) target = $region20
        $region19: #{forward.1} parent=11 // pred_region
          %p319 = scmp.lt.s32.totalorder %s29, 0
          %s320 = scalar_select %p319, %s29, 0
          %s321 = smul.addr %s320, 8
          %s322 = scalar_lea.vmem %s2, %s321
        $region20: #{forward.1} parent=11 // pred_fallthru
          _
        // Predicated region
        $region21: #{forward.1} parent=11 // pred_check
          %p323 = pneg %p161
        $region22: #{forward.1} parent=11 // pred_check_branch
          %325 = sbr.rel (%p323) target = $region24
        $region23: #{forward.1} parent=11 // pred_region
          %s327 = ssub.s32 64, 64
          %328 = vsyncadd [#allocation4], %s327
          %s330 = sshll.u32 %s4, 4
          %s331 = int_to_ptr.vmem [resolvable:$true] %s330
          %333 = dma.vmem_to_smem %s331, 64, [#allocation3], [#allocation4]
        $region24: #{forward.1} parent=11 // pred_fallthru
          _
        // Predicated region
        $region25: #{forward.1} parent=11 // pred_check
          %p334 = pneg %p182
        $region26: #{forward.1} parent=11 // pred_check_branch
          %336 = sbr.rel (%p334) target = $region28
        $region27: #{forward.1} parent=11 // pred_region
          %s338 = ssub.s32 16, 16
          %339 = vsyncadd [#allocation6], %s338
          %s341 = sshll.u32 %s5, 4
          %s342 = int_to_ptr.vmem [resolvable:$true] %s341
          %344 = dma.vmem_to_smem %s342, 16, [#allocation5], [#allocation6]
        $region28: #{forward.1} parent=11 // pred_fallthru
          _
        // Predicated region
        $region29: #{forward.1} parent=11 // pred_check
          %p345 = pneg %p203
        $region30: #{forward.1} parent=11 // pred_check_branch
          %347 = sbr.rel (%p345) target = $region32
        $region31: #{forward.1} parent=11 // pred_region
          _
        $region32: #{forward.1} parent=11 // pred_fallthru
          _
        // Predicated region
        $region33: #{forward.1} parent=11 // pred_check
          %p348 = pneg %p224
        $region34: #{forward.1} parent=11 // pred_check_branch
          %350 = sbr.rel (%p348) target = $region36
        $region35: #{forward.1} parent=11 // pred_region
          _
        $region36: #{forward.1} parent=11 // pred_fallthru
          _
        // Predicated region
        $region37: #{forward.1} parent=11 // pred_check
          %p351 = pneg %p245
        $region38: #{forward.1} parent=11 // pred_check_branch
          %353 = sbr.rel (%p351) target = $region40
        $region39: #{forward.1} parent=11 // pred_region
          _
        $region40: #{forward.1} parent=11 // pred_fallthru
          _
        // Predicated region
        $region41: #{forward.1} parent=11 // pred_check
          %p354 = pneg %p266
        $region42: #{forward.1} parent=11 // pred_check_branch
          %356 = sbr.rel (%p354) target = $region44
        $region43: #{forward.1} parent=11 // pred_region
          _
        $region44: #{forward.1} parent=11 // pred_fallthru
          _
      $region12: #{forward.1} parent=5 // pred_fallthru
        _
      %p357 = scmp.lt.s32.totalorder %s20, 3
      // Predicated region
      $region45: #{forward.1} parent=5 // pred_check
        %p358 = pneg %p357
      $region46: #{forward.1} parent=5 // pred_check_branch
        %360 = sbr.rel (%p358) target = $region48
      $region47: #{forward.1} parent=5 // pred_region
        // Predicated region
        $region49: #{forward.1} parent=47 // pred_check
          %p361 = pneg %p80
        $region50: #{forward.1} parent=47 // pred_check_branch
          %363 = sbr.rel (%p361) target = $region52
        $region51: #{forward.1} parent=47 // pred_region
          %p364 = scmp.lt.s32.totalorder %s28, 2
          %s365 = scalar_select %p364, %s28, 2
          %p366 = scmp.lt.s32.totalorder %s27, 0
          %s367 = scalar_select %p366, %s27, 0
          %s368 = smul.addr %s365, 32
          %s369 = sadd.s32 %s367, %s368
          %s370 = smul.addr %s369, 8
          %s371 = scalar_lea.vmem %s1, %s370
        $region52: #{forward.1} parent=47 // pred_fallthru
          _
        // Predicated region
        $region53: #{forward.1} parent=47 // pred_check
          %p372 = pneg %p134
        $region54: #{forward.1} parent=47 // pred_check_branch
          %374 = sbr.rel (%p372) target = $region56
        $region55: #{forward.1} parent=47 // pred_region
          %p375 = scmp.lt.s32.totalorder %s28, 2
          %s376 = scalar_select %p375, %s28, 2
          %p377 = scmp.lt.s32.totalorder %s27, 0
          %s378 = scalar_select %p377, %s27, 0
          %s379 = smul.addr %s376, 4
          %s380 = sadd.s32 %s378, %s379
          %s381 = smul.addr %s380, 8
          %s382 = scalar_lea.vmem %s3, %s381
        $region56: #{forward.1} parent=47 // pred_fallthru
          _
      $region48: #{forward.1} parent=5 // pred_fallthru
        _
      %p383 = scmp.le.s32.totalorder 1, %s20
      %p384 = scmp.lt.s32.totalorder %s20, 4
      %p385 = pnand %p383, %p384
      %p386 = pneg %p385
      // Predicated region
      $region57: #{forward.1} parent=5 // pred_check
        _
      $region58: #{forward.1} parent=5 // pred_check_branch
        %388 = sbr.rel (%p385) target = $region60
      $region59: #{forward.1} parent=5 // pred_region
        %s389 = ssub.s32 %s20, 1
        // Predicated region
        $region61: #{forward.1} parent=59 // pred_check
          %p390 = pneg %p161
        $region62: #{forward.1} parent=59 // pred_check_branch
          %392 = sbr.rel (%p390) target = $region64
        $region63: #{forward.1} parent=59 // pred_region
          %393 = dma.done [#allocation4], 64
        $region64: #{forward.1} parent=59 // pred_fallthru
          _
        // Predicated region
        $region65: #{forward.1} parent=59 // pred_check
          %p394 = pneg %p182
        $region66: #{forward.1} parent=59 // pred_check_branch
          %396 = sbr.rel (%p394) target = $region68
        $region67: #{forward.1} parent=59 // pred_region
          %397 = dma.done [#allocation6], 16
        $region68: #{forward.1} parent=59 // pred_fallthru
          _
        %398 = sfence
        %p399 = scmp.lt.s32.totalorder %s29, 0
        %s400 = scalar_select %p399, %s29, 0
        %s401 = smul.addr %s400, 8
        %s402 = scalar_lea.vmem %s0, %s401
        %p403 = pneg %p58
        %p404 = pneg %p55
        %p405 = scmp.lt.s32.totalorder %s30, 2
        %s406 = scalar_select %p405, %s30, 2
        %p407 = scmp.lt.s32.totalorder %s29, 0
        %s408 = scalar_select %p407, %s29, 0
        %s409 = smul.addr %s406, 32
        %s410 = sadd.s32 %s408, %s409
        %s411 = smul.addr %s410, 8
        %s412 = scalar_lea.vmem %s1, %s411
        %p413 = pneg %p86
        %p414 = pneg %p83
        %p415 = scmp.lt.s32.totalorder %s29, 0
        %s416 = scalar_select %p415, %s29, 0
        %s417 = smul.addr %s416, 8
        %s418 = scalar_lea.vmem %s2, %s417
        %p419 = pneg %p112
        %p420 = pneg %p109
        %p421 = scmp.lt.s32.totalorder %s30, 2
        %s422 = scalar_select %p421, %s30, 2
        %p423 = scmp.lt.s32.totalorder %s29, 0
        %s424 = scalar_select %p423, %s29, 0
        %s425 = smul.addr %s422, 4
        %s426 = sadd.s32 %s424, %s425
        %s427 = smul.addr %s426, 8
        %s428 = scalar_lea.vmem %s3, %s427
        %p429 = pneg %p140
        %p430 = pneg %p137
        %p431 = pneg %p161
        %p432 = pneg %p158
        %p433 = pneg %p182
        %p434 = pneg %p179
        %p435 = pneg %p203
        %p436 = pneg %p200
        %p437 = pneg %p224
        %p438 = pneg %p221
        %p439 = pneg %p245
        %p440 = pneg %p242
        %p441 = pneg %p266
        %p442 = pneg %p263
        %p443 = pneg %p294
        %p444 = pneg %p291
        %p445 = scmp.lt.s32.totalorder %s29, 0
        %s446 = scalar_select %p445, %s29, 0
        %p447 = scmp.lt.s32.totalorder %s30, 2
        %s448 = scalar_select %p447, %s30, 2
        %s449 = smul.addr %s446, 3
        %s450 = sadd.s32 %s448, %s449
        %s451 = scalar_lea.vmem %s10, %s450
        %p452 = scmp.lt.s32.totalorder %s29, 0
        %s453 = scalar_select %p452, %s29, 0
        %s454 = smul.addr %s453, 8
        %s455 = scalar_lea.vmem %s0, %s454
        %p456 = scmp.lt.s32.totalorder %s30, 2
        %s457 = scalar_select %p456, %s30, 2
        %p458 = scmp.lt.s32.totalorder %s29, 0
        %s459 = scalar_select %p458, %s29, 0
        %s460 = smul.addr %s457, 32
        %s461 = sadd.s32 %s459, %s460
        %s462 = smul.addr %s461, 8
        %s463 = scalar_lea.vmem %s1, %s462
        %p464 = scmp.lt.s32.totalorder %s29, 0
        %s465 = scalar_select %p464, %s29, 0
        %s466 = smul.addr %s465, 8
        %s467 = scalar_lea.vmem %s2, %s466
        %p468 = scmp.lt.s32.totalorder %s30, 2
        %s469 = scalar_select %p468, %s30, 2
        %p470 = scmp.lt.s32.totalorder %s29, 0
        %s471 = scalar_select %p470, %s29, 0
        %s472 = smul.addr %s469, 4
        %s473 = sadd.s32 %s471, %s472
        %s474 = smul.addr %s473, 8
        %s475 = scalar_lea.vmem %s3, %s474
        %p476 = scmp.lt.s32.totalorder %s29, 0
        %s477 = scalar_select %p476, %s29, 0
        %p478 = scmp.lt.s32.totalorder %s30, 2
        %s479 = scalar_select %p478, %s30, 2
        %s480 = smul.addr %s477, 3
        %s481 = sadd.s32 %s479, %s480
        %s482 = scalar_lea.vmem %s10, %s481
        %v483 = vld [vmem:[%s455] sm:$0xff]
        %v484 = vld [vmem:[%s455 + $0x8] sm:$0xff]
        %v485 = vld [vmem:[%s455 + $0x10] sm:$0xff]
        %v486 = vld [vmem:[%s455 + $0x18] sm:$0xff]
        %v487 = vld [vmem:[%s455 + $0x20] sm:$0xff]
        %v488 = vld [vmem:[%s455 + $0x28] sm:$0xff]
        %v489 = vld [vmem:[%s455 + $0x30] sm:$0xff]
        %v490 = vld [vmem:[%s455 + $0x38] sm:$0xff]
        %v491 = vld [vmem:[%s455 + $0x40] sm:$0xff]
        %v492 = vld [vmem:[%s455 + $0x48] sm:$0xff]
        %v493 = vld [vmem:[%s455 + $0x50] sm:$0xff]
        %v494 = vld [vmem:[%s455 + $0x58] sm:$0xff]
        %v495 = vld [vmem:[%s455 + $0x60] sm:$0xff]
        %v496 = vld [vmem:[%s455 + $0x68] sm:$0xff]
        %v497 = vld [vmem:[%s455 + $0x70] sm:$0xff]
        %v498 = vld [vmem:[%s455 + $0x78] sm:$0xff]
        %v499 = vld [vmem:[%s455 + $0x80] sm:$0xff]
        %v500 = vld [vmem:[%s455 + $0x88] sm:$0xff]
        %v501 = vld [vmem:[%s455 + $0x90] sm:$0xff]
        %v502 = vld [vmem:[%s455 + $0x98] sm:$0xff]
        %v503 = vld [vmem:[%s455 + $0xa0] sm:$0xff]
        %v504 = vld [vmem:[%s455 + $0xa8] sm:$0xff]
        %v505 = vld [vmem:[%s455 + $0xb0] sm:$0xff]
        %v506 = vld [vmem:[%s455 + $0xb8] sm:$0xff]
        %v507 = vld [vmem:[%s455 + $0xc0] sm:$0xff]
        %v508 = vld [vmem:[%s455 + $0xc8] sm:$0xff]
        %v509 = vld [vmem:[%s455 + $0xd0] sm:$0xff]
        %v510 = vld [vmem:[%s455 + $0xd8] sm:$0xff]
        %v511 = vld [vmem:[%s455 + $0xe0] sm:$0xff]
        %v512 = vld [vmem:[%s455 + $0xe8] sm:$0xff]
        %v513 = vld [vmem:[%s455 + $0xf0] sm:$0xff]
        %v514 = vld [vmem:[%s455 + $0xf8] sm:$0xff]
        %v515 = vld [vmem:[%s463] sm:$0xff]
        %v516 = vld [vmem:[%s463 + $0x8] sm:$0xff]
        %v517 = vld [vmem:[%s463 + $0x10] sm:$0xff]
        %v518 = vld [vmem:[%s463 + $0x18] sm:$0xff]
        %v519 = vld [vmem:[%s463 + $0x20] sm:$0xff]
        %v520 = vld [vmem:[%s463 + $0x28] sm:$0xff]
        %v521 = vld [vmem:[%s463 + $0x30] sm:$0xff]
        %v522 = vld [vmem:[%s463 + $0x38] sm:$0xff]
        %v523 = vld [vmem:[%s463 + $0x40] sm:$0xff]
        %v524 = vld [vmem:[%s463 + $0x48] sm:$0xff]
        %v525 = vld [vmem:[%s463 + $0x50] sm:$0xff]
        %v526 = vld [vmem:[%s463 + $0x58] sm:$0xff]
        %v527 = vld [vmem:[%s463 + $0x60] sm:$0xff]
        %v528 = vld [vmem:[%s463 + $0x68] sm:$0xff]
        %v529 = vld [vmem:[%s463 + $0x70] sm:$0xff]
        %v530 = vld [vmem:[%s463 + $0x78] sm:$0xff]
        %v531 = vld [vmem:[%s463 + $0x80] sm:$0xff]
        %v532 = vld [vmem:[%s463 + $0x88] sm:$0xff]
        %v533 = vld [vmem:[%s463 + $0x90] sm:$0xff]
        %v534 = vld [vmem:[%s463 + $0x98] sm:$0xff]
        %v535 = vld [vmem:[%s463 + $0xa0] sm:$0xff]
        %v536 = vld [vmem:[%s463 + $0xa8] sm:$0xff]
        %v537 = vld [vmem:[%s463 + $0xb0] sm:$0xff]
        %v538 = vld [vmem:[%s463 + $0xb8] sm:$0xff]
        %v539 = vld [vmem:[%s463 + $0xc0] sm:$0xff]
        %v540 = vld [vmem:[%s463 + $0xc8] sm:$0xff]
        %v541 = vld [vmem:[%s463 + $0xd0] sm:$0xff]
        %v542 = vld [vmem:[%s463 + $0xd8] sm:$0xff]
        %v543 = vld [vmem:[%s463 + $0xe0] sm:$0xff]
        %v544 = vld [vmem:[%s463 + $0xe8] sm:$0xff]
        %v545 = vld [vmem:[%s463 + $0xf0] sm:$0xff]
        %v546 = vld [vmem:[%s463 + $0xf8] sm:$0xff]
        %v547 = vmul.f32 %v483, %v483
        %v548 = vmul.f32 %v484, %v484
        %v549 = vmul.f32 %v485, %v485
        %v550 = vmul.f32 %v486, %v486
        %v551 = vmul.f32 %v487, %v487
        %v552 = vmul.f32 %v488, %v488
        %v553 = vmul.f32 %v489, %v489
        %v554 = vmul.f32 %v490, %v490
        %v555 = vmul.f32 %v491, %v491
        %v556 = vmul.f32 %v492, %v492
        %v557 = vmul.f32 %v493, %v493
        %v558 = vmul.f32 %v494, %v494
        %v559 = vmul.f32 %v495, %v495
        %v560 = vmul.f32 %v496, %v496
        %v561 = vmul.f32 %v497, %v497
        %v562 = vmul.f32 %v498, %v498
        %v563 = vmul.f32 %v499, %v499
        %v564 = vmul.f32 %v500, %v500
        %v565 = vmul.f32 %v501, %v501
        %v566 = vmul.f32 %v502, %v502
        %v567 = vmul.f32 %v503, %v503
        %v568 = vmul.f32 %v504, %v504
        %v569 = vmul.f32 %v505, %v505
        %v570 = vmul.f32 %v506, %v506
        %v571 = vmul.f32 %v507, %v507
        %v572 = vmul.f32 %v508, %v508
        %v573 = vmul.f32 %v509, %v509
        %v574 = vmul.f32 %v510, %v510
        %v575 = vmul.f32 %v511, %v511
        %v576 = vmul.f32 %v512, %v512
        %v577 = vmul.f32 %v513, %v513
        %v578 = vmul.f32 %v514, %v514
        %v579 = vadd.f32 %v547, %v548
        %v580 = vadd.f32 %v579, %v549
        %v581 = vadd.f32 %v580, %v550
        %v582 = vadd.f32 %v581, %v551
        %v583 = vadd.f32 %v582, %v552
        %v584 = vadd.f32 %v583, %v553
        %v585 = vadd.f32 %v584, %v554
        %v586 = vadd.f32 %v585, %v555
        %v587 = vadd.f32 %v586, %v556
        %v588 = vadd.f32 %v587, %v557
        %v589 = vadd.f32 %v588, %v558
        %v590 = vadd.f32 %v589, %v559
        %v591 = vadd.f32 %v590, %v560
        %v592 = vadd.f32 %v591, %v561
        %v593 = vadd.f32 %v592, %v562
        %v594 = vadd.f32 %v593, %v563
        %v595 = vadd.f32 %v594, %v564
        %v596 = vadd.f32 %v595, %v565
        %v597 = vadd.f32 %v596, %v566
        %v598 = vadd.f32 %v597, %v567
        %v599 = vadd.f32 %v598, %v568
        %v600 = vadd.f32 %v599, %v569
        %v601 = vadd.f32 %v600, %v570
        %v602 = vadd.f32 %v601, %v571
        %v603 = vadd.f32 %v602, %v572
        %v604 = vadd.f32 %v603, %v573
        %v605 = vadd.f32 %v604, %v574
        %v606 = vadd.f32 %v605, %v575
        %v607 = vadd.f32 %v606, %v576
        %v608 = vadd.f32 %v607, %v577
        %v609 = vadd.f32 %v608, %v578
        %v610 = vadd.f32 %v609, 1e-12
        %v611 = vrsqrt.pop %v610
        %v612 = vmul.f32 %v483, %v611
        %v613 = vmul.f32 %v484, %v611
        %v614 = vmul.f32 %v485, %v611
        %v615 = vmul.f32 %v486, %v611
        %v616 = vmul.f32 %v487, %v611
        %v617 = vmul.f32 %v488, %v611
        %v618 = vmul.f32 %v489, %v611
        %v619 = vmul.f32 %v490, %v611
        %v620 = vmul.f32 %v491, %v611
        %v621 = vmul.f32 %v492, %v611
        %v622 = vmul.f32 %v493, %v611
        %v623 = vmul.f32 %v494, %v611
        %v624 = vmul.f32 %v495, %v611
        %v625 = vmul.f32 %v496, %v611
        %v626 = vmul.f32 %v497, %v611
        %v627 = vmul.f32 %v498, %v611
        %v628 = vmul.f32 %v499, %v611
        %v629 = vmul.f32 %v500, %v611
        %v630 = vmul.f32 %v501, %v611
        %v631 = vmul.f32 %v502, %v611
        %v632 = vmul.f32 %v503, %v611
        %v633 = vmul.f32 %v504, %v611
        %v634 = vmul.f32 %v505, %v611
        %v635 = vmul.f32 %v506, %v611
        %v636 = vmul.f32 %v507, %v611
        %v637 = vmul.f32 %v508, %v611
        %v638 = vmul.f32 %v509, %v611
        %v639 = vmul.f32 %v510, %v611
        %v640 = vmul.f32 %v511, %v611
        %v641 = vmul.f32 %v512, %v611
        %v642 = vmul.f32 %v513, %v611
        %v643 = vmul.f32 %v514, %v611
        %v644 = vmul.f32 %v515, %v515
        %v645 = vmul.f32 %v516, %v516
        %v646 = vmul.f32 %v517, %v517
        %v647 = vmul.f32 %v518, %v518
        %v648 = vmul.f32 %v519, %v519
        %v649 = vmul.f32 %v520, %v520
        %v650 = vmul.f32 %v521, %v521
        %v651 = vmul.f32 %v522, %v522
        %v652 = vmul.f32 %v523, %v523
        %v653 = vmul.f32 %v524, %v524
        %v654 = vmul.f32 %v525, %v525
        %v655 = vmul.f32 %v526, %v526
        %v656 = vmul.f32 %v527, %v527
        %v657 = vmul.f32 %v528, %v528
        %v658 = vmul.f32 %v529, %v529
        %v659 = vmul.f32 %v530, %v530
        %v660 = vmul.f32 %v531, %v531
        %v661 = vmul.f32 %v532, %v532
        %v662 = vmul.f32 %v533, %v533
        %v663 = vmul.f32 %v534, %v534
        %v664 = vmul.f32 %v535, %v535
        %v665 = vmul.f32 %v536, %v536
        %v666 = vmul.f32 %v537, %v537
        %v667 = vmul.f32 %v538, %v538
        %v668 = vmul.f32 %v539, %v539
        %v669 = vmul.f32 %v540, %v540
        %v670 = vmul.f32 %v541, %v541
        %v671 = vmul.f32 %v542, %v542
        %v672 = vmul.f32 %v543, %v543
        %v673 = vmul.f32 %v544, %v544
        %v674 = vmul.f32 %v545, %v545
        %v675 = vmul.f32 %v546, %v546
        %v676 = vadd.f32 %v644, %v645
        %v677 = vadd.f32 %v676, %v646
        %v678 = vadd.f32 %v677, %v647
        %v679 = vadd.f32 %v678, %v648
        %v680 = vadd.f32 %v679, %v649
        %v681 = vadd.f32 %v680, %v650
        %v682 = vadd.f32 %v681, %v651
        %v683 = vadd.f32 %v682, %v652
        %v684 = vadd.f32 %v683, %v653
        %v685 = vadd.f32 %v684, %v654
        %v686 = vadd.f32 %v685, %v655
        %v687 = vadd.f32 %v686, %v656
        %v688 = vadd.f32 %v687, %v657
        %v689 = vadd.f32 %v688, %v658
        %v690 = vadd.f32 %v689, %v659
        %v691 = vadd.f32 %v690, %v660
        %v692 = vadd.f32 %v691, %v661
        %v693 = vadd.f32 %v692, %v662
        %v694 = vadd.f32 %v693, %v663
        %v695 = vadd.f32 %v694, %v664
        %v696 = vadd.f32 %v695, %v665
        %v697 = vadd.f32 %v696, %v666
        %v698 = vadd.f32 %v697, %v667
        %v699 = vadd.f32 %v698, %v668
        %v700 = vadd.f32 %v699, %v669
        %v701 = vadd.f32 %v700, %v670
        %v702 = vadd.f32 %v701, %v671
        %v703 = vadd.f32 %v702, %v672
        %v704 = vadd.f32 %v703, %v673
        %v705 = vadd.f32 %v704, %v674
        %v706 = vadd.f32 %v705, %v675
        %v707 = vadd.f32 %v706, 1e-12
        %v708 = vrsqrt.pop %v707
        %v709 = vmul.f32 %v515, %v708
        %v710 = vmul.f32 %v516, %v708
        %v711 = vmul.f32 %v517, %v708
        %v712 = vmul.f32 %v518, %v708
        %v713 = vmul.f32 %v519, %v708
        %v714 = vmul.f32 %v520, %v708
        %v715 = vmul.f32 %v521, %v708
        %v716 = vmul.f32 %v522, %v708
        %v717 = vmul.f32 %v523, %v708
        %v718 = vmul.f32 %v524, %v708
        %v719 = vmul.f32 %v525, %v708
        %v720 = vmul.f32 %v526, %v708
        %v721 = vmul.f32 %v527, %v708
        %v722 = vmul.f32 %v528, %v708
        %v723 = vmul.f32 %v529, %v708
        %v724 = vmul.f32 %v530, %v708
        %v725 = vmul.f32 %v531, %v708
        %v726 = vmul.f32 %v532, %v708
        %v727 = vmul.f32 %v533, %v708
        %v728 = vmul.f32 %v534, %v708
        %v729 = vmul.f32 %v535, %v708
        %v730 = vmul.f32 %v536, %v708
        %v731 = vmul.f32 %v537, %v708
        %v732 = vmul.f32 %v538, %v708
        %v733 = vmul.f32 %v539, %v708
        %v734 = vmul.f32 %v540, %v708
        %v735 = vmul.f32 %v541, %v708
        %v736 = vmul.f32 %v542, %v708
        %v737 = vmul.f32 %v543, %v708
        %v738 = vmul.f32 %v544, %v708
        %v739 = vmul.f32 %v545, %v708
        %v740 = vmul.f32 %v546, %v708
        %v742 = vcombine.high %v612, %v612
        %v744 = vunpack.c.l.s4 1966171168
        %v745 = vunpack.c.0.s8 %v744
        %v746 = vlaneseq
        %v747 = vshrl.u32 %v746, 7
        %v748 = vsub.s32 %v745, %v747
        %v749 = vrot.slane %v612, %v748
        %v751 = vunpack.c.l.s4 1966171168
        %v752 = vunpack.c.0.s8 %v751
        %v753 = vlaneseq
        %v754 = vshrl.u32 %v753, 7
        %v755 = vsub.s32 %v752, %v754
        %v756 = vrot.slane %v742, %v755
        %v757 = vcombine.high %v749, %v749
        %v758 = vcombine.high %v756, %v756
        %v760 = vunpack.c.l.s4 1966171168
        %v761 = vunpack.c.0.s8 %v760
        %v762 = vlaneseq
        %v763 = vshrl.u32 %v762, 7
        %v764 = vsub.s32 %v761, %v763
        %v765 = vrot.slane %v749, %v764
        %v767 = vunpack.c.l.s4 1966171168
        %v768 = vunpack.c.0.s8 %v767
        %v769 = vlaneseq
        %v770 = vshrl.u32 %v769, 7
        %v771 = vsub.s32 %v768, %v770
        %v772 = vrot.slane %v756, %v771
        %v774 = vunpack.c.l.s4 1966171168
        %v775 = vunpack.c.0.s8 %v774
        %v776 = vlaneseq
        %v777 = vshrl.u32 %v776, 7
        %v778 = vsub.s32 %v775, %v777
        %v779 = vrot.slane %v757, %v778
        %v781 = vunpack.c.l.s4 1966171168
        %v782 = vunpack.c.0.s8 %v781
        %v783 = vlaneseq
        %v784 = vshrl.u32 %v783, 7
        %v785 = vsub.s32 %v782, %v784
        %v786 = vrot.slane %v758, %v785
        %v787 = vcombine.high %v765, %v765
        %v788 = vcombine.high %v772, %v772
        %v789 = vcombine.high %v779, %v779
        %v790 = vcombine.high %v786, %v786
        %v791 = vlaneseq
        %v792 = vshrl.u32 %v791, 7
        %v793 = vsub.s32 0, %v792
        %v794 = vrot.slane %v765, %v793
        %v795 = vlaneseq
        %v796 = vshrl.u32 %v795, 7
        %v797 = vsub.s32 0, %v796
        %v798 = vrot.slane %v779, %v797
        %v799 = vlaneseq
        %v800 = vshrl.u32 %v799, 7
        %v801 = vsub.s32 0, %v800
        %v802 = vrot.slane %v787, %v801
        %v803 = vlaneseq
        %v804 = vshrl.u32 %v803, 7
        %v805 = vsub.s32 0, %v804
        %v806 = vrot.slane %v789, %v805
        %v807 = vlaneseq
        %v808 = vshrl.u32 %v807, 7
        %v809 = vsub.s32 0, %v808
        %v810 = vrot.slane %v772, %v809
        %v811 = vlaneseq
        %v812 = vshrl.u32 %v811, 7
        %v813 = vsub.s32 0, %v812
        %v814 = vrot.slane %v786, %v813
        %v815 = vlaneseq
        %v816 = vshrl.u32 %v815, 7
        %v817 = vsub.s32 0, %v816
        %v818 = vrot.slane %v788, %v817
        %v819 = vlaneseq
        %v820 = vshrl.u32 %v819, 7
        %v821 = vsub.s32 0, %v820
        %v822 = vrot.slane %v790, %v821
        %v831 = vmul.f32 %v794, %v709
        %v832 = vmul.f32 %v798, %v709
        %v833 = vmul.f32 %v802, %v709
        %v834 = vmul.f32 %v806, %v709
        %v835 = vmul.f32 %v810, %v709
        %v836 = vmul.f32 %v814, %v709
        %v837 = vmul.f32 %v818, %v709
        %v838 = vmul.f32 %v822, %v709
        %v839 = vadd.f32 %v831, 0.0
        %v840 = vadd.f32 %v832, 0.0
        %v841 = vadd.f32 %v833, 0.0
        %v842 = vadd.f32 %v834, 0.0
        %v843 = vadd.f32 %v835, 0.0
        %v844 = vadd.f32 %v836, 0.0
        %v845 = vadd.f32 %v837, 0.0
        %v846 = vadd.f32 %v838, 0.0
        %v848 = vcombine.high %v613, %v613
        %v850 = vunpack.c.l.s4 1966171168
        %v851 = vunpack.c.0.s8 %v850
        %v852 = vlaneseq
        %v853 = vshrl.u32 %v852, 7
        %v854 = vsub.s32 %v851, %v853
        %v855 = vrot.slane %v613, %v854
        %v857 = vunpack.c.l.s4 1966171168
        %v858 = vunpack.c.0.s8 %v857
        %v859 = vlaneseq
        %v860 = vshrl.u32 %v859, 7
        %v861 = vsub.s32 %v858, %v860
        %v862 = vrot.slane %v848, %v861
        %v863 = vcombine.high %v855, %v855
        %v864 = vcombine.high %v862, %v862
        %v866 = vunpack.c.l.s4 1966171168
        %v867 = vunpack.c.0.s8 %v866
        %v868 = vlaneseq
        %v869 = vshrl.u32 %v868, 7
        %v870 = vsub.s32 %v867, %v869
        %v871 = vrot.slane %v855, %v870
        %v873 = vunpack.c.l.s4 1966171168
        %v874 = vunpack.c.0.s8 %v873
        %v875 = vlaneseq
        %v876 = vshrl.u32 %v875, 7
        %v877 = vsub.s32 %v874, %v876
        %v878 = vrot.slane %v862, %v877
        %v880 = vunpack.c.l.s4 1966171168
        %v881 = vunpack.c.0.s8 %v880
        %v882 = vlaneseq
        %v883 = vshrl.u32 %v882, 7
        %v884 = vsub.s32 %v881, %v883
        %v885 = vrot.slane %v863, %v884
        %v887 = vunpack.c.l.s4 1966171168
        %v888 = vunpack.c.0.s8 %v887
        %v889 = vlaneseq
        %v890 = vshrl.u32 %v889, 7
        %v891 = vsub.s32 %v888, %v890
        %v892 = vrot.slane %v864, %v891
        %v893 = vcombine.high %v871, %v871
        %v894 = vcombine.high %v878, %v878
        %v895 = vcombine.high %v885, %v885
        %v896 = vcombine.high %v892, %v892
        %v897 = vlaneseq
        %v898 = vshrl.u32 %v897, 7
        %v899 = vsub.s32 0, %v898
        %v900 = vrot.slane %v871, %v899
        %v901 = vlaneseq
        %v902 = vshrl.u32 %v901, 7
        %v903 = vsub.s32 0, %v902
        %v904 = vrot.slane %v885, %v903
        %v905 = vlaneseq
        %v906 = vshrl.u32 %v905, 7
        %v907 = vsub.s32 0, %v906
        %v908 = vrot.slane %v893, %v907
        %v909 = vlaneseq
        %v910 = vshrl.u32 %v909, 7
        %v911 = vsub.s32 0, %v910
        %v912 = vrot.slane %v895, %v911
        %v913 = vlaneseq
        %v914 = vshrl.u32 %v913, 7
        %v915 = vsub.s32 0, %v914
        %v916 = vrot.slane %v878, %v915
        %v917 = vlaneseq
        %v918 = vshrl.u32 %v917, 7
        %v919 = vsub.s32 0, %v918
        %v920 = vrot.slane %v892, %v919
        %v921 = vlaneseq
        %v922 = vshrl.u32 %v921, 7
        %v923 = vsub.s32 0, %v922
        %v924 = vrot.slane %v894, %v923
        %v925 = vlaneseq
        %v926 = vshrl.u32 %v925, 7
        %v927 = vsub.s32 0, %v926
        %v928 = vrot.slane %v896, %v927
        %v937 = vmul.f32 %v900, %v710
        %v938 = vmul.f32 %v904, %v710
        %v939 = vmul.f32 %v908, %v710
        %v940 = vmul.f32 %v912, %v710
        %v941 = vmul.f32 %v916, %v710
        %v942 = vmul.f32 %v920, %v710
        %v943 = vmul.f32 %v924, %v710
        %v944 = vmul.f32 %v928, %v710
        %v945 = vadd.f32 %v839, %v937
        %v946 = vadd.f32 %v840, %v938
        %v947 = vadd.f32 %v841, %v939
        %v948 = vadd.f32 %v842, %v940
        %v949 = vadd.f32 %v843, %v941
        %v950 = vadd.f32 %v844, %v942
        %v951 = vadd.f32 %v845, %v943
        %v952 = vadd.f32 %v846, %v944
        %v954 = vcombine.high %v614, %v614
        %v956 = vunpack.c.l.s4 1966171168
        %v957 = vunpack.c.0.s8 %v956
        %v958 = vlaneseq
        %v959 = vshrl.u32 %v958, 7
        %v960 = vsub.s32 %v957, %v959
        %v961 = vrot.slane %v614, %v960
        %v963 = vunpack.c.l.s4 1966171168
        %v964 = vunpack.c.0.s8 %v963
        %v965 = vlaneseq
        %v966 = vshrl.u32 %v965, 7
        %v967 = vsub.s32 %v964, %v966
        %v968 = vrot.slane %v954, %v967
        %v969 = vcombine.high %v961, %v961
        %v970 = vcombine.high %v968, %v968
        %v972 = vunpack.c.l.s4 1966171168
        %v973 = vunpack.c.0.s8 %v972
        %v974 = vlaneseq
        %v975 = vshrl.u32 %v974, 7
        %v976 = vsub.s32 %v973, %v975
        %v977 = vrot.slane %v961, %v976
        %v979 = vunpack.c.l.s4 1966171168
        %v980 = vunpack.c.0.s8 %v979
        %v981 = vlaneseq
        %v982 = vshrl.u32 %v981, 7
        %v983 = vsub.s32 %v980, %v982
        %v984 = vrot.slane %v968, %v983
        %v986 = vunpack.c.l.s4 1966171168
        %v987 = vunpack.c.0.s8 %v986
        %v988 = vlaneseq
        %v989 = vshrl.u32 %v988, 7
        %v990 = vsub.s32 %v987, %v989
        %v991 = vrot.slane %v969, %v990
        %v993 = vunpack.c.l.s4 1966171168
        %v994 = vunpack.c.0.s8 %v993
        %v995 = vlaneseq
        %v996 = vshrl.u32 %v995, 7
        %v997 = vsub.s32 %v994, %v996
        %v998 = vrot.slane %v970, %v997
        %v999 = vcombine.high %v977, %v977
        %v1000 = vcombine.high %v984, %v984
        %v1001 = vcombine.high %v991, %v991
        %v1002 = vcombine.high %v998, %v998
        %v1003 = vlaneseq
        %v1004 = vshrl.u32 %v1003, 7
        %v1005 = vsub.s32 0, %v1004
        %v1006 = vrot.slane %v977, %v1005
        %v1007 = vlaneseq
        %v1008 = vshrl.u32 %v1007, 7
        %v1009 = vsub.s32 0, %v1008
        %v1010 = vrot.slane %v991, %v1009
        %v1011 = vlaneseq
        %v1012 = vshrl.u32 %v1011, 7
        %v1013 = vsub.s32 0, %v1012
        %v1014 = vrot.slane %v999, %v1013
        %v1015 = vlaneseq
        %v1016 = vshrl.u32 %v1015, 7
        %v1017 = vsub.s32 0, %v1016
        %v1018 = vrot.slane %v1001, %v1017
        %v1019 = vlaneseq
        %v1020 = vshrl.u32 %v1019, 7
        %v1021 = vsub.s32 0, %v1020
        %v1022 = vrot.slane %v984, %v1021
        %v1023 = vlaneseq
        %v1024 = vshrl.u32 %v1023, 7
        %v1025 = vsub.s32 0, %v1024
        %v1026 = vrot.slane %v998, %v1025
        %v1027 = vlaneseq
        %v1028 = vshrl.u32 %v1027, 7
        %v1029 = vsub.s32 0, %v1028
        %v1030 = vrot.slane %v1000, %v1029
        %v1031 = vlaneseq
        %v1032 = vshrl.u32 %v1031, 7
        %v1033 = vsub.s32 0, %v1032
        %v1034 = vrot.slane %v1002, %v1033
        %v1043 = vmul.f32 %v1006, %v711
        %v1044 = vmul.f32 %v1010, %v711
        %v1045 = vmul.f32 %v1014, %v711
        %v1046 = vmul.f32 %v1018, %v711
        %v1047 = vmul.f32 %v1022, %v711
        %v1048 = vmul.f32 %v1026, %v711
        %v1049 = vmul.f32 %v1030, %v711
        %v1050 = vmul.f32 %v1034, %v711
        %v1051 = vadd.f32 %v945, %v1043
        %v1052 = vadd.f32 %v946, %v1044
        %v1053 = vadd.f32 %v947, %v1045
        %v1054 = vadd.f32 %v948, %v1046
        %v1055 = vadd.f32 %v949, %v1047
        %v1056 = vadd.f32 %v950, %v1048
        %v1057 = vadd.f32 %v951, %v1049
        %v1058 = vadd.f32 %v952, %v1050
        %v1060 = vcombine.high %v615, %v615
        %v1062 = vunpack.c.l.s4 1966171168
        %v1063 = vunpack.c.0.s8 %v1062
        %v1064 = vlaneseq
        %v1065 = vshrl.u32 %v1064, 7
        %v1066 = vsub.s32 %v1063, %v1065
        %v1067 = vrot.slane %v615, %v1066
        %v1069 = vunpack.c.l.s4 1966171168
        %v1070 = vunpack.c.0.s8 %v1069
        %v1071 = vlaneseq
        %v1072 = vshrl.u32 %v1071, 7
        %v1073 = vsub.s32 %v1070, %v1072
        %v1074 = vrot.slane %v1060, %v1073
        %v1075 = vcombine.high %v1067, %v1067
        %v1076 = vcombine.high %v1074, %v1074
        %v1078 = vunpack.c.l.s4 1966171168
        %v1079 = vunpack.c.0.s8 %v1078
        %v1080 = vlaneseq
        %v1081 = vshrl.u32 %v1080, 7
        %v1082 = vsub.s32 %v1079, %v1081
        %v1083 = vrot.slane %v1067, %v1082
        %v1085 = vunpack.c.l.s4 1966171168
        %v1086 = vunpack.c.0.s8 %v1085
        %v1087 = vlaneseq
        %v1088 = vshrl.u32 %v1087, 7
        %v1089 = vsub.s32 %v1086, %v1088
        %v1090 = vrot.slane %v1074, %v1089
        %v1092 = vunpack.c.l.s4 1966171168
        %v1093 = vunpack.c.0.s8 %v1092
        %v1094 = vlaneseq
        %v1095 = vshrl.u32 %v1094, 7
        %v1096 = vsub.s32 %v1093, %v1095
        %v1097 = vrot.slane %v1075, %v1096
        %v1099 = vunpack.c.l.s4 1966171168
        %v1100 = vunpack.c.0.s8 %v1099
        %v1101 = vlaneseq
        %v1102 = vshrl.u32 %v1101, 7
        %v1103 = vsub.s32 %v1100, %v1102
        %v1104 = vrot.slane %v1076, %v1103
        %v1105 = vcombine.high %v1083, %v1083
        %v1106 = vcombine.high %v1090, %v1090
        %v1107 = vcombine.high %v1097, %v1097
        %v1108 = vcombine.high %v1104, %v1104
        %v1109 = vlaneseq
        %v1110 = vshrl.u32 %v1109, 7
        %v1111 = vsub.s32 0, %v1110
        %v1112 = vrot.slane %v1083, %v1111
        %v1113 = vlaneseq
        %v1114 = vshrl.u32 %v1113, 7
        %v1115 = vsub.s32 0, %v1114
        %v1116 = vrot.slane %v1097, %v1115
        %v1117 = vlaneseq
        %v1118 = vshrl.u32 %v1117, 7
        %v1119 = vsub.s32 0, %v1118
        %v1120 = vrot.slane %v1105, %v1119
        %v1121 = vlaneseq
        %v1122 = vshrl.u32 %v1121, 7
        %v1123 = vsub.s32 0, %v1122
        %v1124 = vrot.slane %v1107, %v1123
        %v1125 = vlaneseq
        %v1126 = vshrl.u32 %v1125, 7
        %v1127 = vsub.s32 0, %v1126
        %v1128 = vrot.slane %v1090, %v1127
        %v1129 = vlaneseq
        %v1130 = vshrl.u32 %v1129, 7
        %v1131 = vsub.s32 0, %v1130
        %v1132 = vrot.slane %v1104, %v1131
        %v1133 = vlaneseq
        %v1134 = vshrl.u32 %v1133, 7
        %v1135 = vsub.s32 0, %v1134
        %v1136 = vrot.slane %v1106, %v1135
        %v1137 = vlaneseq
        %v1138 = vshrl.u32 %v1137, 7
        %v1139 = vsub.s32 0, %v1138
        %v1140 = vrot.slane %v1108, %v1139
        %v1149 = vmul.f32 %v1112, %v712
        %v1150 = vmul.f32 %v1116, %v712
        %v1151 = vmul.f32 %v1120, %v712
        %v1152 = vmul.f32 %v1124, %v712
        %v1153 = vmul.f32 %v1128, %v712
        %v1154 = vmul.f32 %v1132, %v712
        %v1155 = vmul.f32 %v1136, %v712
        %v1156 = vmul.f32 %v1140, %v712
        %v1157 = vadd.f32 %v1051, %v1149
        %v1158 = vadd.f32 %v1052, %v1150
        %v1159 = vadd.f32 %v1053, %v1151
        %v1160 = vadd.f32 %v1054, %v1152
        %v1161 = vadd.f32 %v1055, %v1153
        %v1162 = vadd.f32 %v1056, %v1154
        %v1163 = vadd.f32 %v1057, %v1155
        %v1164 = vadd.f32 %v1058, %v1156
        %v1166 = vcombine.high %v616, %v616
        %v1168 = vunpack.c.l.s4 1966171168
        %v1169 = vunpack.c.0.s8 %v1168
        %v1170 = vlaneseq
        %v1171 = vshrl.u32 %v1170, 7
        %v1172 = vsub.s32 %v1169, %v1171
        %v1173 = vrot.slane %v616, %v1172
        %v1175 = vunpack.c.l.s4 1966171168
        %v1176 = vunpack.c.0.s8 %v1175
        %v1177 = vlaneseq
        %v1178 = vshrl.u32 %v1177, 7
        %v1179 = vsub.s32 %v1176, %v1178
        %v1180 = vrot.slane %v1166, %v1179
        %v1181 = vcombine.high %v1173, %v1173
        %v1182 = vcombine.high %v1180, %v1180
        %v1184 = vunpack.c.l.s4 1966171168
        %v1185 = vunpack.c.0.s8 %v1184
        %v1186 = vlaneseq
        %v1187 = vshrl.u32 %v1186, 7
        %v1188 = vsub.s32 %v1185, %v1187
        %v1189 = vrot.slane %v1173, %v1188
        %v1191 = vunpack.c.l.s4 1966171168
        %v1192 = vunpack.c.0.s8 %v1191
        %v1193 = vlaneseq
        %v1194 = vshrl.u32 %v1193, 7
        %v1195 = vsub.s32 %v1192, %v1194
        %v1196 = vrot.slane %v1180, %v1195
        %v1198 = vunpack.c.l.s4 1966171168
        %v1199 = vunpack.c.0.s8 %v1198
        %v1200 = vlaneseq
        %v1201 = vshrl.u32 %v1200, 7
        %v1202 = vsub.s32 %v1199, %v1201
        %v1203 = vrot.slane %v1181, %v1202
        %v1205 = vunpack.c.l.s4 1966171168
        %v1206 = vunpack.c.0.s8 %v1205
        %v1207 = vlaneseq
        %v1208 = vshrl.u32 %v1207, 7
        %v1209 = vsub.s32 %v1206, %v1208
        %v1210 = vrot.slane %v1182, %v1209
        %v1211 = vcombine.high %v1189, %v1189
        %v1212 = vcombine.high %v1196, %v1196
        %v1213 = vcombine.high %v1203, %v1203
        %v1214 = vcombine.high %v1210, %v1210
        %v1215 = vlaneseq
        %v1216 = vshrl.u32 %v1215, 7
        %v1217 = vsub.s32 0, %v1216
        %v1218 = vrot.slane %v1189, %v1217
        %v1219 = vlaneseq
        %v1220 = vshrl.u32 %v1219, 7
        %v1221 = vsub.s32 0, %v1220
        %v1222 = vrot.slane %v1203, %v1221
        %v1223 = vlaneseq
        %v1224 = vshrl.u32 %v1223, 7
        %v1225 = vsub.s32 0, %v1224
        %v1226 = vrot.slane %v1211, %v1225
        %v1227 = vlaneseq
        %v1228 = vshrl.u32 %v1227, 7
        %v1229 = vsub.s32 0, %v1228
        %v1230 = vrot.slane %v1213, %v1229
        %v1231 = vlaneseq
        %v1232 = vshrl.u32 %v1231, 7
        %v1233 = vsub.s32 0, %v1232
        %v1234 = vrot.slane %v1196, %v1233
        %v1235 = vlaneseq
        %v1236 = vshrl.u32 %v1235, 7
        %v1237 = vsub.s32 0, %v1236
        %v1238 = vrot.slane %v1210, %v1237
        %v1239 = vlaneseq
        %v1240 = vshrl.u32 %v1239, 7
        %v1241 = vsub.s32 0, %v1240
        %v1242 = vrot.slane %v1212, %v1241
        %v1243 = vlaneseq
        %v1244 = vshrl.u32 %v1243, 7
        %v1245 = vsub.s32 0, %v1244
        %v1246 = vrot.slane %v1214, %v1245
        %v1255 = vmul.f32 %v1218, %v713
        %v1256 = vmul.f32 %v1222, %v713
        %v1257 = vmul.f32 %v1226, %v713
        %v1258 = vmul.f32 %v1230, %v713
        %v1259 = vmul.f32 %v1234, %v713
        %v1260 = vmul.f32 %v1238, %v713
        %v1261 = vmul.f32 %v1242, %v713
        %v1262 = vmul.f32 %v1246, %v713
        %v1263 = vadd.f32 %v1157, %v1255
        %v1264 = vadd.f32 %v1158, %v1256
        %v1265 = vadd.f32 %v1159, %v1257
        %v1266 = vadd.f32 %v1160, %v1258
        %v1267 = vadd.f32 %v1161, %v1259
        %v1268 = vadd.f32 %v1162, %v1260
        %v1269 = vadd.f32 %v1163, %v1261
        %v1270 = vadd.f32 %v1164, %v1262
        %v1272 = vcombine.high %v617, %v617
        %v1274 = vunpack.c.l.s4 1966171168
        %v1275 = vunpack.c.0.s8 %v1274
        %v1276 = vlaneseq
        %v1277 = vshrl.u32 %v1276, 7
        %v1278 = vsub.s32 %v1275, %v1277
        %v1279 = vrot.slane %v617, %v1278
        %v1281 = vunpack.c.l.s4 1966171168
        %v1282 = vunpack.c.0.s8 %v1281
        %v1283 = vlaneseq
        %v1284 = vshrl.u32 %v1283, 7
        %v1285 = vsub.s32 %v1282, %v1284
        %v1286 = vrot.slane %v1272, %v1285
        %v1287 = vcombine.high %v1279, %v1279
        %v1288 = vcombine.high %v1286, %v1286
        %v1290 = vunpack.c.l.s4 1966171168
        %v1291 = vunpack.c.0.s8 %v1290
        %v1292 = vlaneseq
        %v1293 = vshrl.u32 %v1292, 7
        %v1294 = vsub.s32 %v1291, %v1293
        %v1295 = vrot.slane %v1279, %v1294
        %v1297 = vunpack.c.l.s4 1966171168
        %v1298 = vunpack.c.0.s8 %v1297
        %v1299 = vlaneseq
        %v1300 = vshrl.u32 %v1299, 7
        %v1301 = vsub.s32 %v1298, %v1300
        %v1302 = vrot.slane %v1286, %v1301
        %v1304 = vunpack.c.l.s4 1966171168
        %v1305 = vunpack.c.0.s8 %v1304
        %v1306 = vlaneseq
        %v1307 = vshrl.u32 %v1306, 7
        %v1308 = vsub.s32 %v1305, %v1307
        %v1309 = vrot.slane %v1287, %v1308
        %v1311 = vunpack.c.l.s4 1966171168
        %v1312 = vunpack.c.0.s8 %v1311
        %v1313 = vlaneseq
        %v1314 = vshrl.u32 %v1313, 7
        %v1315 = vsub.s32 %v1312, %v1314
        %v1316 = vrot.slane %v1288, %v1315
        %v1317 = vcombine.high %v1295, %v1295
        %v1318 = vcombine.high %v1302, %v1302
        %v1319 = vcombine.high %v1309, %v1309
        %v1320 = vcombine.high %v1316, %v1316
        %v1321 = vlaneseq
        %v1322 = vshrl.u32 %v1321, 7
        %v1323 = vsub.s32 0, %v1322
        %v1324 = vrot.slane %v1295, %v1323
        %v1325 = vlaneseq
        %v1326 = vshrl.u32 %v1325, 7
        %v1327 = vsub.s32 0, %v1326
        %v1328 = vrot.slane %v1309, %v1327
        %v1329 = vlaneseq
        %v1330 = vshrl.u32 %v1329, 7
        %v1331 = vsub.s32 0, %v1330
        %v1332 = vrot.slane %v1317, %v1331
        %v1333 = vlaneseq
        %v1334 = vshrl.u32 %v1333, 7
        %v1335 = vsub.s32 0, %v1334
        %v1336 = vrot.slane %v1319, %v1335
        %v1337 = vlaneseq
        %v1338 = vshrl.u32 %v1337, 7
        %v1339 = vsub.s32 0, %v1338
        %v1340 = vrot.slane %v1302, %v1339
        %v1341 = vlaneseq
        %v1342 = vshrl.u32 %v1341, 7
        %v1343 = vsub.s32 0, %v1342
        %v1344 = vrot.slane %v1316, %v1343
        %v1345 = vlaneseq
        %v1346 = vshrl.u32 %v1345, 7
        %v1347 = vsub.s32 0, %v1346
        %v1348 = vrot.slane %v1318, %v1347
        %v1349 = vlaneseq
        %v1350 = vshrl.u32 %v1349, 7
        %v1351 = vsub.s32 0, %v1350
        %v1352 = vrot.slane %v1320, %v1351
        %v1361 = vmul.f32 %v1324, %v714
        %v1362 = vmul.f32 %v1328, %v714
        %v1363 = vmul.f32 %v1332, %v714
        %v1364 = vmul.f32 %v1336, %v714
        %v1365 = vmul.f32 %v1340, %v714
        %v1366 = vmul.f32 %v1344, %v714
        %v1367 = vmul.f32 %v1348, %v714
        %v1368 = vmul.f32 %v1352, %v714
        %v1369 = vadd.f32 %v1263, %v1361
        %v1370 = vadd.f32 %v1264, %v1362
        %v1371 = vadd.f32 %v1265, %v1363
        %v1372 = vadd.f32 %v1266, %v1364
        %v1373 = vadd.f32 %v1267, %v1365
        %v1374 = vadd.f32 %v1268, %v1366
        %v1375 = vadd.f32 %v1269, %v1367
        %v1376 = vadd.f32 %v1270, %v1368
        %v1378 = vcombine.high %v618, %v618
        %v1380 = vunpack.c.l.s4 1966171168
        %v1381 = vunpack.c.0.s8 %v1380
        %v1382 = vlaneseq
        %v1383 = vshrl.u32 %v1382, 7
        %v1384 = vsub.s32 %v1381, %v1383
        %v1385 = vrot.slane %v618, %v1384
        %v1387 = vunpack.c.l.s4 1966171168
        %v1388 = vunpack.c.0.s8 %v1387
        %v1389 = vlaneseq
        %v1390 = vshrl.u32 %v1389, 7
        %v1391 = vsub.s32 %v1388, %v1390
        %v1392 = vrot.slane %v1378, %v1391
        %v1393 = vcombine.high %v1385, %v1385
        %v1394 = vcombine.high %v1392, %v1392
        %v1396 = vunpack.c.l.s4 1966171168
        %v1397 = vunpack.c.0.s8 %v1396
        %v1398 = vlaneseq
        %v1399 = vshrl.u32 %v1398, 7
        %v1400 = vsub.s32 %v1397, %v1399
        %v1401 = vrot.slane %v1385, %v1400
        %v1403 = vunpack.c.l.s4 1966171168
        %v1404 = vunpack.c.0.s8 %v1403
        %v1405 = vlaneseq
        %v1406 = vshrl.u32 %v1405, 7
        %v1407 = vsub.s32 %v1404, %v1406
        %v1408 = vrot.slane %v1392, %v1407
        %v1410 = vunpack.c.l.s4 1966171168
        %v1411 = vunpack.c.0.s8 %v1410
        %v1412 = vlaneseq
        %v1413 = vshrl.u32 %v1412, 7
        %v1414 = vsub.s32 %v1411, %v1413
        %v1415 = vrot.slane %v1393, %v1414
        %v1417 = vunpack.c.l.s4 1966171168
        %v1418 = vunpack.c.0.s8 %v1417
        %v1419 = vlaneseq
        %v1420 = vshrl.u32 %v1419, 7
        %v1421 = vsub.s32 %v1418, %v1420
        %v1422 = vrot.slane %v1394, %v1421
        %v1423 = vcombine.high %v1401, %v1401
        %v1424 = vcombine.high %v1408, %v1408
        %v1425 = vcombine.high %v1415, %v1415
        %v1426 = vcombine.high %v1422, %v1422
        %v1427 = vlaneseq
        %v1428 = vshrl.u32 %v1427, 7
        %v1429 = vsub.s32 0, %v1428
        %v1430 = vrot.slane %v1401, %v1429
        %v1431 = vlaneseq
        %v1432 = vshrl.u32 %v1431, 7
        %v1433 = vsub.s32 0, %v1432
        %v1434 = vrot.slane %v1415, %v1433
        %v1435 = vlaneseq
        %v1436 = vshrl.u32 %v1435, 7
        %v1437 = vsub.s32 0, %v1436
        %v1438 = vrot.slane %v1423, %v1437
        %v1439 = vlaneseq
        %v1440 = vshrl.u32 %v1439, 7
        %v1441 = vsub.s32 0, %v1440
        %v1442 = vrot.slane %v1425, %v1441
        %v1443 = vlaneseq
        %v1444 = vshrl.u32 %v1443, 7
        %v1445 = vsub.s32 0, %v1444
        %v1446 = vrot.slane %v1408, %v1445
        %v1447 = vlaneseq
        %v1448 = vshrl.u32 %v1447, 7
        %v1449 = vsub.s32 0, %v1448
        %v1450 = vrot.slane %v1422, %v1449
        %v1451 = vlaneseq
        %v1452 = vshrl.u32 %v1451, 7
        %v1453 = vsub.s32 0, %v1452
        %v1454 = vrot.slane %v1424, %v1453
        %v1455 = vlaneseq
        %v1456 = vshrl.u32 %v1455, 7
        %v1457 = vsub.s32 0, %v1456
        %v1458 = vrot.slane %v1426, %v1457
        %v1467 = vmul.f32 %v1430, %v715
        %v1468 = vmul.f32 %v1434, %v715
        %v1469 = vmul.f32 %v1438, %v715
        %v1470 = vmul.f32 %v1442, %v715
        %v1471 = vmul.f32 %v1446, %v715
        %v1472 = vmul.f32 %v1450, %v715
        %v1473 = vmul.f32 %v1454, %v715
        %v1474 = vmul.f32 %v1458, %v715
        %v1475 = vadd.f32 %v1369, %v1467
        %v1476 = vadd.f32 %v1370, %v1468
        %v1477 = vadd.f32 %v1371, %v1469
        %v1478 = vadd.f32 %v1372, %v1470
        %v1479 = vadd.f32 %v1373, %v1471
        %v1480 = vadd.f32 %v1374, %v1472
        %v1481 = vadd.f32 %v1375, %v1473
        %v1482 = vadd.f32 %v1376, %v1474
        %v1484 = vcombine.high %v619, %v619
        %v1486 = vunpack.c.l.s4 1966171168
        %v1487 = vunpack.c.0.s8 %v1486
        %v1488 = vlaneseq
        %v1489 = vshrl.u32 %v1488, 7
        %v1490 = vsub.s32 %v1487, %v1489
        %v1491 = vrot.slane %v619, %v1490
        %v1493 = vunpack.c.l.s4 1966171168
        %v1494 = vunpack.c.0.s8 %v1493
        %v1495 = vlaneseq
        %v1496 = vshrl.u32 %v1495, 7
        %v1497 = vsub.s32 %v1494, %v1496
        %v1498 = vrot.slane %v1484, %v1497
        %v1499 = vcombine.high %v1491, %v1491
        %v1500 = vcombine.high %v1498, %v1498
        %v1502 = vunpack.c.l.s4 1966171168
        %v1503 = vunpack.c.0.s8 %v1502
        %v1504 = vlaneseq
        %v1505 = vshrl.u32 %v1504, 7
        %v1506 = vsub.s32 %v1503, %v1505
        %v1507 = vrot.slane %v1491, %v1506
        %v1509 = vunpack.c.l.s4 1966171168
        %v1510 = vunpack.c.0.s8 %v1509
        %v1511 = vlaneseq
        %v1512 = vshrl.u32 %v1511, 7
        %v1513 = vsub.s32 %v1510, %v1512
        %v1514 = vrot.slane %v1498, %v1513
        %v1516 = vunpack.c.l.s4 1966171168
        %v1517 = vunpack.c.0.s8 %v1516
        %v1518 = vlaneseq
        %v1519 = vshrl.u32 %v1518, 7
        %v1520 = vsub.s32 %v1517, %v1519
        %v1521 = vrot.slane %v1499, %v1520
        %v1523 = vunpack.c.l.s4 1966171168
        %v1524 = vunpack.c.0.s8 %v1523
        %v1525 = vlaneseq
        %v1526 = vshrl.u32 %v1525, 7
        %v1527 = vsub.s32 %v1524, %v1526
        %v1528 = vrot.slane %v1500, %v1527
        %v1529 = vcombine.high %v1507, %v1507
        %v1530 = vcombine.high %v1514, %v1514
        %v1531 = vcombine.high %v1521, %v1521
        %v1532 = vcombine.high %v1528, %v1528
        %v1533 = vlaneseq
        %v1534 = vshrl.u32 %v1533, 7
        %v1535 = vsub.s32 0, %v1534
        %v1536 = vrot.slane %v1507, %v1535
        %v1537 = vlaneseq
        %v1538 = vshrl.u32 %v1537, 7
        %v1539 = vsub.s32 0, %v1538
        %v1540 = vrot.slane %v1521, %v1539
        %v1541 = vlaneseq
        %v1542 = vshrl.u32 %v1541, 7
        %v1543 = vsub.s32 0, %v1542
        %v1544 = vrot.slane %v1529, %v1543
        %v1545 = vlaneseq
        %v1546 = vshrl.u32 %v1545, 7
        %v1547 = vsub.s32 0, %v1546
        %v1548 = vrot.slane %v1531, %v1547
        %v1549 = vlaneseq
        %v1550 = vshrl.u32 %v1549, 7
        %v1551 = vsub.s32 0, %v1550
        %v1552 = vrot.slane %v1514, %v1551
        %v1553 = vlaneseq
        %v1554 = vshrl.u32 %v1553, 7
        %v1555 = vsub.s32 0, %v1554
        %v1556 = vrot.slane %v1528, %v1555
        %v1557 = vlaneseq
        %v1558 = vshrl.u32 %v1557, 7
        %v1559 = vsub.s32 0, %v1558
        %v1560 = vrot.slane %v1530, %v1559
        %v1561 = vlaneseq
        %v1562 = vshrl.u32 %v1561, 7
        %v1563 = vsub.s32 0, %v1562
        %v1564 = vrot.slane %v1532, %v1563
        %v1573 = vmul.f32 %v1536, %v716
        %v1574 = vmul.f32 %v1540, %v716
        %v1575 = vmul.f32 %v1544, %v716
        %v1576 = vmul.f32 %v1548, %v716
        %v1577 = vmul.f32 %v1552, %v716
        %v1578 = vmul.f32 %v1556, %v716
        %v1579 = vmul.f32 %v1560, %v716
        %v1580 = vmul.f32 %v1564, %v716
        %v1581 = vadd.f32 %v1475, %v1573
        %v1582 = vadd.f32 %v1476, %v1574
        %v1583 = vadd.f32 %v1477, %v1575
        %v1584 = vadd.f32 %v1478, %v1576
        %v1585 = vadd.f32 %v1479, %v1577
        %v1586 = vadd.f32 %v1480, %v1578
        %v1587 = vadd.f32 %v1481, %v1579
        %v1588 = vadd.f32 %v1482, %v1580
        %v1590 = vcombine.high %v620, %v620
        %v1592 = vunpack.c.l.s4 1966171168
        %v1593 = vunpack.c.0.s8 %v1592
        %v1594 = vlaneseq
        %v1595 = vshrl.u32 %v1594, 7
        %v1596 = vsub.s32 %v1593, %v1595
        %v1597 = vrot.slane %v620, %v1596
        %v1599 = vunpack.c.l.s4 1966171168
        %v1600 = vunpack.c.0.s8 %v1599
        %v1601 = vlaneseq
        %v1602 = vshrl.u32 %v1601, 7
        %v1603 = vsub.s32 %v1600, %v1602
        %v1604 = vrot.slane %v1590, %v1603
        %v1605 = vcombine.high %v1597, %v1597
        %v1606 = vcombine.high %v1604, %v1604
        %v1608 = vunpack.c.l.s4 1966171168
        %v1609 = vunpack.c.0.s8 %v1608
        %v1610 = vlaneseq
        %v1611 = vshrl.u32 %v1610, 7
        %v1612 = vsub.s32 %v1609, %v1611
        %v1613 = vrot.slane %v1597, %v1612
        %v1615 = vunpack.c.l.s4 1966171168
        %v1616 = vunpack.c.0.s8 %v1615
        %v1617 = vlaneseq
        %v1618 = vshrl.u32 %v1617, 7
        %v1619 = vsub.s32 %v1616, %v1618
        %v1620 = vrot.slane %v1604, %v1619
        %v1622 = vunpack.c.l.s4 1966171168
        %v1623 = vunpack.c.0.s8 %v1622
        %v1624 = vlaneseq
        %v1625 = vshrl.u32 %v1624, 7
        %v1626 = vsub.s32 %v1623, %v1625
        %v1627 = vrot.slane %v1605, %v1626
        %v1629 = vunpack.c.l.s4 1966171168
        %v1630 = vunpack.c.0.s8 %v1629
        %v1631 = vlaneseq
        %v1632 = vshrl.u32 %v1631, 7
        %v1633 = vsub.s32 %v1630, %v1632
        %v1634 = vrot.slane %v1606, %v1633
        %v1635 = vcombine.high %v1613, %v1613
        %v1636 = vcombine.high %v1620, %v1620
        %v1637 = vcombine.high %v1627, %v1627
        %v1638 = vcombine.high %v1634, %v1634
        %v1639 = vlaneseq
        %v1640 = vshrl.u32 %v1639, 7
        %v1641 = vsub.s32 0, %v1640
        %v1642 = vrot.slane %v1613, %v1641
        %v1643 = vlaneseq
        %v1644 = vshrl.u32 %v1643, 7
        %v1645 = vsub.s32 0, %v1644
        %v1646 = vrot.slane %v1627, %v1645
        %v1647 = vlaneseq
        %v1648 = vshrl.u32 %v1647, 7
        %v1649 = vsub.s32 0, %v1648
        %v1650 = vrot.slane %v1635, %v1649
        %v1651 = vlaneseq
        %v1652 = vshrl.u32 %v1651, 7
        %v1653 = vsub.s32 0, %v1652
        %v1654 = vrot.slane %v1637, %v1653
        %v1655 = vlaneseq
        %v1656 = vshrl.u32 %v1655, 7
        %v1657 = vsub.s32 0, %v1656
        %v1658 = vrot.slane %v1620, %v1657
        %v1659 = vlaneseq
        %v1660 = vshrl.u32 %v1659, 7
        %v1661 = vsub.s32 0, %v1660
        %v1662 = vrot.slane %v1634, %v1661
        %v1663 = vlaneseq
        %v1664 = vshrl.u32 %v1663, 7
        %v1665 = vsub.s32 0, %v1664
        %v1666 = vrot.slane %v1636, %v1665
        %v1667 = vlaneseq
        %v1668 = vshrl.u32 %v1667, 7
        %v1669 = vsub.s32 0, %v1668
        %v1670 = vrot.slane %v1638, %v1669
        %v1679 = vmul.f32 %v1642, %v717
        %v1680 = vmul.f32 %v1646, %v717
        %v1681 = vmul.f32 %v1650, %v717
        %v1682 = vmul.f32 %v1654, %v717
        %v1683 = vmul.f32 %v1658, %v717
        %v1684 = vmul.f32 %v1662, %v717
        %v1685 = vmul.f32 %v1666, %v717
        %v1686 = vmul.f32 %v1670, %v717
        %v1687 = vadd.f32 %v1581, %v1679
        %v1688 = vadd.f32 %v1582, %v1680
        %v1689 = vadd.f32 %v1583, %v1681
        %v1690 = vadd.f32 %v1584, %v1682
        %v1691 = vadd.f32 %v1585, %v1683
        %v1692 = vadd.f32 %v1586, %v1684
        %v1693 = vadd.f32 %v1587, %v1685
        %v1694 = vadd.f32 %v1588, %v1686
        %v1696 = vcombine.high %v621, %v621
        %v1698 = vunpack.c.l.s4 1966171168
        %v1699 = vunpack.c.0.s8 %v1698
        %v1700 = vlaneseq
        %v1701 = vshrl.u32 %v1700, 7
        %v1702 = vsub.s32 %v1699, %v1701
        %v1703 = vrot.slane %v621, %v1702
        %v1705 = vunpack.c.l.s4 1966171168
        %v1706 = vunpack.c.0.s8 %v1705
        %v1707 = vlaneseq
        %v1708 = vshrl.u32 %v1707, 7
        %v1709 = vsub.s32 %v1706, %v1708
        %v1710 = vrot.slane %v1696, %v1709
        %v1711 = vcombine.high %v1703, %v1703
        %v1712 = vcombine.high %v1710, %v1710
        %v1714 = vunpack.c.l.s4 1966171168
        %v1715 = vunpack.c.0.s8 %v1714
        %v1716 = vlaneseq
        %v1717 = vshrl.u32 %v1716, 7
        %v1718 = vsub.s32 %v1715, %v1717
        %v1719 = vrot.slane %v1703, %v1718
        %v1721 = vunpack.c.l.s4 1966171168
        %v1722 = vunpack.c.0.s8 %v1721
        %v1723 = vlaneseq
        %v1724 = vshrl.u32 %v1723, 7
        %v1725 = vsub.s32 %v1722, %v1724
        %v1726 = vrot.slane %v1710, %v1725
        %v1728 = vunpack.c.l.s4 1966171168
        %v1729 = vunpack.c.0.s8 %v1728
        %v1730 = vlaneseq
        %v1731 = vshrl.u32 %v1730, 7
        %v1732 = vsub.s32 %v1729, %v1731
        %v1733 = vrot.slane %v1711, %v1732
        %v1735 = vunpack.c.l.s4 1966171168
        %v1736 = vunpack.c.0.s8 %v1735
        %v1737 = vlaneseq
        %v1738 = vshrl.u32 %v1737, 7
        %v1739 = vsub.s32 %v1736, %v1738
        %v1740 = vrot.slane %v1712, %v1739
        %v1741 = vcombine.high %v1719, %v1719
        %v1742 = vcombine.high %v1726, %v1726
        %v1743 = vcombine.high %v1733, %v1733
        %v1744 = vcombine.high %v1740, %v1740
        %v1745 = vlaneseq
        %v1746 = vshrl.u32 %v1745, 7
        %v1747 = vsub.s32 0, %v1746
        %v1748 = vrot.slane %v1719, %v1747
        %v1749 = vlaneseq
        %v1750 = vshrl.u32 %v1749, 7
        %v1751 = vsub.s32 0, %v1750
        %v1752 = vrot.slane %v1733, %v1751
        %v1753 = vlaneseq
        %v1754 = vshrl.u32 %v1753, 7
        %v1755 = vsub.s32 0, %v1754
        %v1756 = vrot.slane %v1741, %v1755
        %v1757 = vlaneseq
        %v1758 = vshrl.u32 %v1757, 7
        %v1759 = vsub.s32 0, %v1758
        %v1760 = vrot.slane %v1743, %v1759
        %v1761 = vlaneseq
        %v1762 = vshrl.u32 %v1761, 7
        %v1763 = vsub.s32 0, %v1762
        %v1764 = vrot.slane %v1726, %v1763
        %v1765 = vlaneseq
        %v1766 = vshrl.u32 %v1765, 7
        %v1767 = vsub.s32 0, %v1766
        %v1768 = vrot.slane %v1740, %v1767
        %v1769 = vlaneseq
        %v1770 = vshrl.u32 %v1769, 7
        %v1771 = vsub.s32 0, %v1770
        %v1772 = vrot.slane %v1742, %v1771
        %v1773 = vlaneseq
        %v1774 = vshrl.u32 %v1773, 7
        %v1775 = vsub.s32 0, %v1774
        %v1776 = vrot.slane %v1744, %v1775
        %v1785 = vmul.f32 %v1748, %v718
        %v1786 = vmul.f32 %v1752, %v718
        %v1787 = vmul.f32 %v1756, %v718
        %v1788 = vmul.f32 %v1760, %v718
        %v1789 = vmul.f32 %v1764, %v718
        %v1790 = vmul.f32 %v1768, %v718
        %v1791 = vmul.f32 %v1772, %v718
        %v1792 = vmul.f32 %v1776, %v718
        %v1793 = vadd.f32 %v1687, %v1785
        %v1794 = vadd.f32 %v1688, %v1786
        %v1795 = vadd.f32 %v1689, %v1787
        %v1796 = vadd.f32 %v1690, %v1788
        %v1797 = vadd.f32 %v1691, %v1789
        %v1798 = vadd.f32 %v1692, %v1790
        %v1799 = vadd.f32 %v1693, %v1791
        %v1800 = vadd.f32 %v1694, %v1792
        %v1802 = vcombine.high %v622, %v622
        %v1804 = vunpack.c.l.s4 1966171168
        %v1805 = vunpack.c.0.s8 %v1804
        %v1806 = vlaneseq
        %v1807 = vshrl.u32 %v1806, 7
        %v1808 = vsub.s32 %v1805, %v1807
        %v1809 = vrot.slane %v622, %v1808
        %v1811 = vunpack.c.l.s4 1966171168
        %v1812 = vunpack.c.0.s8 %v1811
        %v1813 = vlaneseq
        %v1814 = vshrl.u32 %v1813, 7
        %v1815 = vsub.s32 %v1812, %v1814
        %v1816 = vrot.slane %v1802, %v1815
        %v1817 = vcombine.high %v1809, %v1809
        %v1818 = vcombine.high %v1816, %v1816
        %v1820 = vunpack.c.l.s4 1966171168
        %v1821 = vunpack.c.0.s8 %v1820
        %v1822 = vlaneseq
        %v1823 = vshrl.u32 %v1822, 7
        %v1824 = vsub.s32 %v1821, %v1823
        %v1825 = vrot.slane %v1809, %v1824
        %v1827 = vunpack.c.l.s4 1966171168
        %v1828 = vunpack.c.0.s8 %v1827
        %v1829 = vlaneseq
        %v1830 = vshrl.u32 %v1829, 7
        %v1831 = vsub.s32 %v1828, %v1830
        %v1832 = vrot.slane %v1816, %v1831
        %v1834 = vunpack.c.l.s4 1966171168
        %v1835 = vunpack.c.0.s8 %v1834
        %v1836 = vlaneseq
        %v1837 = vshrl.u32 %v1836, 7
        %v1838 = vsub.s32 %v1835, %v1837
        %v1839 = vrot.slane %v1817, %v1838
        %v1841 = vunpack.c.l.s4 1966171168
        %v1842 = vunpack.c.0.s8 %v1841
        %v1843 = vlaneseq
        %v1844 = vshrl.u32 %v1843, 7
        %v1845 = vsub.s32 %v1842, %v1844
        %v1846 = vrot.slane %v1818, %v1845
        %v1847 = vcombine.high %v1825, %v1825
        %v1848 = vcombine.high %v1832, %v1832
        %v1849 = vcombine.high %v1839, %v1839
        %v1850 = vcombine.high %v1846, %v1846
        %v1851 = vlaneseq
        %v1852 = vshrl.u32 %v1851, 7
        %v1853 = vsub.s32 0, %v1852
        %v1854 = vrot.slane %v1825, %v1853
        %v1855 = vlaneseq
        %v1856 = vshrl.u32 %v1855, 7
        %v1857 = vsub.s32 0, %v1856
        %v1858 = vrot.slane %v1839, %v1857
        %v1859 = vlaneseq
        %v1860 = vshrl.u32 %v1859, 7
        %v1861 = vsub.s32 0, %v1860
        %v1862 = vrot.slane %v1847, %v1861
        %v1863 = vlaneseq
        %v1864 = vshrl.u32 %v1863, 7
        %v1865 = vsub.s32 0, %v1864
        %v1866 = vrot.slane %v1849, %v1865
        %v1867 = vlaneseq
        %v1868 = vshrl.u32 %v1867, 7
        %v1869 = vsub.s32 0, %v1868
        %v1870 = vrot.slane %v1832, %v1869
        %v1871 = vlaneseq
        %v1872 = vshrl.u32 %v1871, 7
        %v1873 = vsub.s32 0, %v1872
        %v1874 = vrot.slane %v1846, %v1873
        %v1875 = vlaneseq
        %v1876 = vshrl.u32 %v1875, 7
        %v1877 = vsub.s32 0, %v1876
        %v1878 = vrot.slane %v1848, %v1877
        %v1879 = vlaneseq
        %v1880 = vshrl.u32 %v1879, 7
        %v1881 = vsub.s32 0, %v1880
        %v1882 = vrot.slane %v1850, %v1881
        %v1891 = vmul.f32 %v1854, %v719
        %v1892 = vmul.f32 %v1858, %v719
        %v1893 = vmul.f32 %v1862, %v719
        %v1894 = vmul.f32 %v1866, %v719
        %v1895 = vmul.f32 %v1870, %v719
        %v1896 = vmul.f32 %v1874, %v719
        %v1897 = vmul.f32 %v1878, %v719
        %v1898 = vmul.f32 %v1882, %v719
        %v1899 = vadd.f32 %v1793, %v1891
        %v1900 = vadd.f32 %v1794, %v1892
        %v1901 = vadd.f32 %v1795, %v1893
        %v1902 = vadd.f32 %v1796, %v1894
        %v1903 = vadd.f32 %v1797, %v1895
        %v1904 = vadd.f32 %v1798, %v1896
        %v1905 = vadd.f32 %v1799, %v1897
        %v1906 = vadd.f32 %v1800, %v1898
        %v1908 = vcombine.high %v623, %v623
        %v1910 = vunpack.c.l.s4 1966171168
        %v1911 = vunpack.c.0.s8 %v1910
        %v1912 = vlaneseq
        %v1913 = vshrl.u32 %v1912, 7
        %v1914 = vsub.s32 %v1911, %v1913
        %v1915 = vrot.slane %v623, %v1914
        %v1917 = vunpack.c.l.s4 1966171168
        %v1918 = vunpack.c.0.s8 %v1917
        %v1919 = vlaneseq
        %v1920 = vshrl.u32 %v1919, 7
        %v1921 = vsub.s32 %v1918, %v1920
        %v1922 = vrot.slane %v1908, %v1921
        %v1923 = vcombine.high %v1915, %v1915
        %v1924 = vcombine.high %v1922, %v1922
        %v1926 = vunpack.c.l.s4 1966171168
        %v1927 = vunpack.c.0.s8 %v1926
        %v1928 = vlaneseq
        %v1929 = vshrl.u32 %v1928, 7
        %v1930 = vsub.s32 %v1927, %v1929
        %v1931 = vrot.slane %v1915, %v1930
        %v1933 = vunpack.c.l.s4 1966171168
        %v1934 = vunpack.c.0.s8 %v1933
        %v1935 = vlaneseq
        %v1936 = vshrl.u32 %v1935, 7
        %v1937 = vsub.s32 %v1934, %v1936
        %v1938 = vrot.slane %v1922, %v1937
        %v1940 = vunpack.c.l.s4 1966171168
        %v1941 = vunpack.c.0.s8 %v1940
        %v1942 = vlaneseq
        %v1943 = vshrl.u32 %v1942, 7
        %v1944 = vsub.s32 %v1941, %v1943
        %v1945 = vrot.slane %v1923, %v1944
        %v1947 = vunpack.c.l.s4 1966171168
        %v1948 = vunpack.c.0.s8 %v1947
        %v1949 = vlaneseq
        %v1950 = vshrl.u32 %v1949, 7
        %v1951 = vsub.s32 %v1948, %v1950
        %v1952 = vrot.slane %v1924, %v1951
        %v1953 = vcombine.high %v1931, %v1931
        %v1954 = vcombine.high %v1938, %v1938
        %v1955 = vcombine.high %v1945, %v1945
        %v1956 = vcombine.high %v1952, %v1952
        %v1957 = vlaneseq
        %v1958 = vshrl.u32 %v1957, 7
        %v1959 = vsub.s32 0, %v1958
        %v1960 = vrot.slane %v1931, %v1959
        %v1961 = vlaneseq
        %v1962 = vshrl.u32 %v1961, 7
        %v1963 = vsub.s32 0, %v1962
        %v1964 = vrot.slane %v1945, %v1963
        %v1965 = vlaneseq
        %v1966 = vshrl.u32 %v1965, 7
        %v1967 = vsub.s32 0, %v1966
        %v1968 = vrot.slane %v1953, %v1967
        %v1969 = vlaneseq
        %v1970 = vshrl.u32 %v1969, 7
        %v1971 = vsub.s32 0, %v1970
        %v1972 = vrot.slane %v1955, %v1971
        %v1973 = vlaneseq
        %v1974 = vshrl.u32 %v1973, 7
        %v1975 = vsub.s32 0, %v1974
        %v1976 = vrot.slane %v1938, %v1975
        %v1977 = vlaneseq
        %v1978 = vshrl.u32 %v1977, 7
        %v1979 = vsub.s32 0, %v1978
        %v1980 = vrot.slane %v1952, %v1979
        %v1981 = vlaneseq
        %v1982 = vshrl.u32 %v1981, 7
        %v1983 = vsub.s32 0, %v1982
        %v1984 = vrot.slane %v1954, %v1983
        %v1985 = vlaneseq
        %v1986 = vshrl.u32 %v1985, 7
        %v1987 = vsub.s32 0, %v1986
        %v1988 = vrot.slane %v1956, %v1987
        %v1997 = vmul.f32 %v1960, %v720
        %v1998 = vmul.f32 %v1964, %v720
        %v1999 = vmul.f32 %v1968, %v720
        %v2000 = vmul.f32 %v1972, %v720
        %v2001 = vmul.f32 %v1976, %v720
        %v2002 = vmul.f32 %v1980, %v720
        %v2003 = vmul.f32 %v1984, %v720
        %v2004 = vmul.f32 %v1988, %v720
        %v2005 = vadd.f32 %v1899, %v1997
        %v2006 = vadd.f32 %v1900, %v1998
        %v2007 = vadd.f32 %v1901, %v1999
        %v2008 = vadd.f32 %v1902, %v2000
        %v2009 = vadd.f32 %v1903, %v2001
        %v2010 = vadd.f32 %v1904, %v2002
        %v2011 = vadd.f32 %v1905, %v2003
        %v2012 = vadd.f32 %v1906, %v2004
        %v2014 = vcombine.high %v624, %v624
        %v2016 = vunpack.c.l.s4 1966171168
        %v2017 = vunpack.c.0.s8 %v2016
        %v2018 = vlaneseq
        %v2019 = vshrl.u32 %v2018, 7
        %v2020 = vsub.s32 %v2017, %v2019
        %v2021 = vrot.slane %v624, %v2020
        %v2023 = vunpack.c.l.s4 1966171168
        %v2024 = vunpack.c.0.s8 %v2023
        %v2025 = vlaneseq
        %v2026 = vshrl.u32 %v2025, 7
        %v2027 = vsub.s32 %v2024, %v2026
        %v2028 = vrot.slane %v2014, %v2027
        %v2029 = vcombine.high %v2021, %v2021
        %v2030 = vcombine.high %v2028, %v2028
        %v2032 = vunpack.c.l.s4 1966171168
        %v2033 = vunpack.c.0.s8 %v2032
        %v2034 = vlaneseq
        %v2035 = vshrl.u32 %v2034, 7
        %v2036 = vsub.s32 %v2033, %v2035
        %v2037 = vrot.slane %v2021, %v2036
        %v2039 = vunpack.c.l.s4 1966171168
        %v2040 = vunpack.c.0.s8 %v2039
        %v2041 = vlaneseq
        %v2042 = vshrl.u32 %v2041, 7
        %v2043 = vsub.s32 %v2040, %v2042
        %v2044 = vrot.slane %v2028, %v2043
        %v2046 = vunpack.c.l.s4 1966171168
        %v2047 = vunpack.c.0.s8 %v2046
        %v2048 = vlaneseq
        %v2049 = vshrl.u32 %v2048, 7
        %v2050 = vsub.s32 %v2047, %v2049
        %v2051 = vrot.slane %v2029, %v2050
        %v2053 = vunpack.c.l.s4 1966171168
        %v2054 = vunpack.c.0.s8 %v2053
        %v2055 = vlaneseq
        %v2056 = vshrl.u32 %v2055, 7
        %v2057 = vsub.s32 %v2054, %v2056
        %v2058 = vrot.slane %v2030, %v2057
        %v2059 = vcombine.high %v2037, %v2037
        %v2060 = vcombine.high %v2044, %v2044
        %v2061 = vcombine.high %v2051, %v2051
        %v2062 = vcombine.high %v2058, %v2058
        %v2063 = vlaneseq
        %v2064 = vshrl.u32 %v2063, 7
        %v2065 = vsub.s32 0, %v2064
        %v2066 = vrot.slane %v2037, %v2065
        %v2067 = vlaneseq
        %v2068 = vshrl.u32 %v2067, 7
        %v2069 = vsub.s32 0, %v2068
        %v2070 = vrot.slane %v2051, %v2069
        %v2071 = vlaneseq
        %v2072 = vshrl.u32 %v2071, 7
        %v2073 = vsub.s32 0, %v2072
        %v2074 = vrot.slane %v2059, %v2073
        %v2075 = vlaneseq
        %v2076 = vshrl.u32 %v2075, 7
        %v2077 = vsub.s32 0, %v2076
        %v2078 = vrot.slane %v2061, %v2077
        %v2079 = vlaneseq
        %v2080 = vshrl.u32 %v2079, 7
        %v2081 = vsub.s32 0, %v2080
        %v2082 = vrot.slane %v2044, %v2081
        %v2083 = vlaneseq
        %v2084 = vshrl.u32 %v2083, 7
        %v2085 = vsub.s32 0, %v2084
        %v2086 = vrot.slane %v2058, %v2085
        %v2087 = vlaneseq
        %v2088 = vshrl.u32 %v2087, 7
        %v2089 = vsub.s32 0, %v2088
        %v2090 = vrot.slane %v2060, %v2089
        %v2091 = vlaneseq
        %v2092 = vshrl.u32 %v2091, 7
        %v2093 = vsub.s32 0, %v2092
        %v2094 = vrot.slane %v2062, %v2093
        %v2103 = vmul.f32 %v2066, %v721
        %v2104 = vmul.f32 %v2070, %v721
        %v2105 = vmul.f32 %v2074, %v721
        %v2106 = vmul.f32 %v2078, %v721
        %v2107 = vmul.f32 %v2082, %v721
        %v2108 = vmul.f32 %v2086, %v721
        %v2109 = vmul.f32 %v2090, %v721
        %v2110 = vmul.f32 %v2094, %v721
        %v2111 = vadd.f32 %v2005, %v2103
        %v2112 = vadd.f32 %v2006, %v2104
        %v2113 = vadd.f32 %v2007, %v2105
        %v2114 = vadd.f32 %v2008, %v2106
        %v2115 = vadd.f32 %v2009, %v2107
        %v2116 = vadd.f32 %v2010, %v2108
        %v2117 = vadd.f32 %v2011, %v2109
        %v2118 = vadd.f32 %v2012, %v2110
        %v2120 = vcombine.high %v625, %v625
        %v2122 = vunpack.c.l.s4 1966171168
        %v2123 = vunpack.c.0.s8 %v2122
        %v2124 = vlaneseq
        %v2125 = vshrl.u32 %v2124, 7
        %v2126 = vsub.s32 %v2123, %v2125
        %v2127 = vrot.slane %v625, %v2126
        %v2129 = vunpack.c.l.s4 1966171168
        %v2130 = vunpack.c.0.s8 %v2129
        %v2131 = vlaneseq
        %v2132 = vshrl.u32 %v2131, 7
        %v2133 = vsub.s32 %v2130, %v2132
        %v2134 = vrot.slane %v2120, %v2133
        %v2135 = vcombine.high %v2127, %v2127
        %v2136 = vcombine.high %v2134, %v2134
        %v2138 = vunpack.c.l.s4 1966171168
        %v2139 = vunpack.c.0.s8 %v2138
        %v2140 = vlaneseq
        %v2141 = vshrl.u32 %v2140, 7
        %v2142 = vsub.s32 %v2139, %v2141
        %v2143 = vrot.slane %v2127, %v2142
        %v2145 = vunpack.c.l.s4 1966171168
        %v2146 = vunpack.c.0.s8 %v2145
        %v2147 = vlaneseq
        %v2148 = vshrl.u32 %v2147, 7
        %v2149 = vsub.s32 %v2146, %v2148
        %v2150 = vrot.slane %v2134, %v2149
        %v2152 = vunpack.c.l.s4 1966171168
        %v2153 = vunpack.c.0.s8 %v2152
        %v2154 = vlaneseq
        %v2155 = vshrl.u32 %v2154, 7
        %v2156 = vsub.s32 %v2153, %v2155
        %v2157 = vrot.slane %v2135, %v2156
        %v2159 = vunpack.c.l.s4 1966171168
        %v2160 = vunpack.c.0.s8 %v2159
        %v2161 = vlaneseq
        %v2162 = vshrl.u32 %v2161, 7
        %v2163 = vsub.s32 %v2160, %v2162
        %v2164 = vrot.slane %v2136, %v2163
        %v2165 = vcombine.high %v2143, %v2143
        %v2166 = vcombine.high %v2150, %v2150
        %v2167 = vcombine.high %v2157, %v2157
        %v2168 = vcombine.high %v2164, %v2164
        %v2169 = vlaneseq
        %v2170 = vshrl.u32 %v2169, 7
        %v2171 = vsub.s32 0, %v2170
        %v2172 = vrot.slane %v2143, %v2171
        %v2173 = vlaneseq
        %v2174 = vshrl.u32 %v2173, 7
        %v2175 = vsub.s32 0, %v2174
        %v2176 = vrot.slane %v2157, %v2175
        %v2177 = vlaneseq
        %v2178 = vshrl.u32 %v2177, 7
        %v2179 = vsub.s32 0, %v2178
        %v2180 = vrot.slane %v2165, %v2179
        %v2181 = vlaneseq
        %v2182 = vshrl.u32 %v2181, 7
        %v2183 = vsub.s32 0, %v2182
        %v2184 = vrot.slane %v2167, %v2183
        %v2185 = vlaneseq
        %v2186 = vshrl.u32 %v2185, 7
        %v2187 = vsub.s32 0, %v2186
        %v2188 = vrot.slane %v2150, %v2187
        %v2189 = vlaneseq
        %v2190 = vshrl.u32 %v2189, 7
        %v2191 = vsub.s32 0, %v2190
        %v2192 = vrot.slane %v2164, %v2191
        %v2193 = vlaneseq
        %v2194 = vshrl.u32 %v2193, 7
        %v2195 = vsub.s32 0, %v2194
        %v2196 = vrot.slane %v2166, %v2195
        %v2197 = vlaneseq
        %v2198 = vshrl.u32 %v2197, 7
        %v2199 = vsub.s32 0, %v2198
        %v2200 = vrot.slane %v2168, %v2199
        %v2209 = vmul.f32 %v2172, %v722
        %v2210 = vmul.f32 %v2176, %v722
        %v2211 = vmul.f32 %v2180, %v722
        %v2212 = vmul.f32 %v2184, %v722
        %v2213 = vmul.f32 %v2188, %v722
        %v2214 = vmul.f32 %v2192, %v722
        %v2215 = vmul.f32 %v2196, %v722
        %v2216 = vmul.f32 %v2200, %v722
        %v2217 = vadd.f32 %v2111, %v2209
        %v2218 = vadd.f32 %v2112, %v2210
        %v2219 = vadd.f32 %v2113, %v2211
        %v2220 = vadd.f32 %v2114, %v2212
        %v2221 = vadd.f32 %v2115, %v2213
        %v2222 = vadd.f32 %v2116, %v2214
        %v2223 = vadd.f32 %v2117, %v2215
        %v2224 = vadd.f32 %v2118, %v2216
        %v2226 = vcombine.high %v626, %v626
        %v2228 = vunpack.c.l.s4 1966171168
        %v2229 = vunpack.c.0.s8 %v2228
        %v2230 = vlaneseq
        %v2231 = vshrl.u32 %v2230, 7
        %v2232 = vsub.s32 %v2229, %v2231
        %v2233 = vrot.slane %v626, %v2232
        %v2235 = vunpack.c.l.s4 1966171168
        %v2236 = vunpack.c.0.s8 %v2235
        %v2237 = vlaneseq
        %v2238 = vshrl.u32 %v2237, 7
        %v2239 = vsub.s32 %v2236, %v2238
        %v2240 = vrot.slane %v2226, %v2239
        %v2241 = vcombine.high %v2233, %v2233
        %v2242 = vcombine.high %v2240, %v2240
        %v2244 = vunpack.c.l.s4 1966171168
        %v2245 = vunpack.c.0.s8 %v2244
        %v2246 = vlaneseq
        %v2247 = vshrl.u32 %v2246, 7
        %v2248 = vsub.s32 %v2245, %v2247
        %v2249 = vrot.slane %v2233, %v2248
        %v2251 = vunpack.c.l.s4 1966171168
        %v2252 = vunpack.c.0.s8 %v2251
        %v2253 = vlaneseq
        %v2254 = vshrl.u32 %v2253, 7
        %v2255 = vsub.s32 %v2252, %v2254
        %v2256 = vrot.slane %v2240, %v2255
        %v2258 = vunpack.c.l.s4 1966171168
        %v2259 = vunpack.c.0.s8 %v2258
        %v2260 = vlaneseq
        %v2261 = vshrl.u32 %v2260, 7
        %v2262 = vsub.s32 %v2259, %v2261
        %v2263 = vrot.slane %v2241, %v2262
        %v2265 = vunpack.c.l.s4 1966171168
        %v2266 = vunpack.c.0.s8 %v2265
        %v2267 = vlaneseq
        %v2268 = vshrl.u32 %v2267, 7
        %v2269 = vsub.s32 %v2266, %v2268
        %v2270 = vrot.slane %v2242, %v2269
        %v2271 = vcombine.high %v2249, %v2249
        %v2272 = vcombine.high %v2256, %v2256
        %v2273 = vcombine.high %v2263, %v2263
        %v2274 = vcombine.high %v2270, %v2270
        %v2275 = vlaneseq
        %v2276 = vshrl.u32 %v2275, 7
        %v2277 = vsub.s32 0, %v2276
        %v2278 = vrot.slane %v2249, %v2277
        %v2279 = vlaneseq
        %v2280 = vshrl.u32 %v2279, 7
        %v2281 = vsub.s32 0, %v2280
        %v2282 = vrot.slane %v2263, %v2281
        %v2283 = vlaneseq
        %v2284 = vshrl.u32 %v2283, 7
        %v2285 = vsub.s32 0, %v2284
        %v2286 = vrot.slane %v2271, %v2285
        %v2287 = vlaneseq
        %v2288 = vshrl.u32 %v2287, 7
        %v2289 = vsub.s32 0, %v2288
        %v2290 = vrot.slane %v2273, %v2289
        %v2291 = vlaneseq
        %v2292 = vshrl.u32 %v2291, 7
        %v2293 = vsub.s32 0, %v2292
        %v2294 = vrot.slane %v2256, %v2293
        %v2295 = vlaneseq
        %v2296 = vshrl.u32 %v2295, 7
        %v2297 = vsub.s32 0, %v2296
        %v2298 = vrot.slane %v2270, %v2297
        %v2299 = vlaneseq
        %v2300 = vshrl.u32 %v2299, 7
        %v2301 = vsub.s32 0, %v2300
        %v2302 = vrot.slane %v2272, %v2301
        %v2303 = vlaneseq
        %v2304 = vshrl.u32 %v2303, 7
        %v2305 = vsub.s32 0, %v2304
        %v2306 = vrot.slane %v2274, %v2305
        %v2315 = vmul.f32 %v2278, %v723
        %v2316 = vmul.f32 %v2282, %v723
        %v2317 = vmul.f32 %v2286, %v723
        %v2318 = vmul.f32 %v2290, %v723
        %v2319 = vmul.f32 %v2294, %v723
        %v2320 = vmul.f32 %v2298, %v723
        %v2321 = vmul.f32 %v2302, %v723
        %v2322 = vmul.f32 %v2306, %v723
        %v2323 = vadd.f32 %v2217, %v2315
        %v2324 = vadd.f32 %v2218, %v2316
        %v2325 = vadd.f32 %v2219, %v2317
        %v2326 = vadd.f32 %v2220, %v2318
        %v2327 = vadd.f32 %v2221, %v2319
        %v2328 = vadd.f32 %v2222, %v2320
        %v2329 = vadd.f32 %v2223, %v2321
        %v2330 = vadd.f32 %v2224, %v2322
        %v2332 = vcombine.high %v627, %v627
        %v2334 = vunpack.c.l.s4 1966171168
        %v2335 = vunpack.c.0.s8 %v2334
        %v2336 = vlaneseq
        %v2337 = vshrl.u32 %v2336, 7
        %v2338 = vsub.s32 %v2335, %v2337
        %v2339 = vrot.slane %v627, %v2338
        %v2341 = vunpack.c.l.s4 1966171168
        %v2342 = vunpack.c.0.s8 %v2341
        %v2343 = vlaneseq
        %v2344 = vshrl.u32 %v2343, 7
        %v2345 = vsub.s32 %v2342, %v2344
        %v2346 = vrot.slane %v2332, %v2345
        %v2347 = vcombine.high %v2339, %v2339
        %v2348 = vcombine.high %v2346, %v2346
        %v2350 = vunpack.c.l.s4 1966171168
        %v2351 = vunpack.c.0.s8 %v2350
        %v2352 = vlaneseq
        %v2353 = vshrl.u32 %v2352, 7
        %v2354 = vsub.s32 %v2351, %v2353
        %v2355 = vrot.slane %v2339, %v2354
        %v2357 = vunpack.c.l.s4 1966171168
        %v2358 = vunpack.c.0.s8 %v2357
        %v2359 = vlaneseq
        %v2360 = vshrl.u32 %v2359, 7
        %v2361 = vsub.s32 %v2358, %v2360
        %v2362 = vrot.slane %v2346, %v2361
        %v2364 = vunpack.c.l.s4 1966171168
        %v2365 = vunpack.c.0.s8 %v2364
        %v2366 = vlaneseq
        %v2367 = vshrl.u32 %v2366, 7
        %v2368 = vsub.s32 %v2365, %v2367
        %v2369 = vrot.slane %v2347, %v2368
        %v2371 = vunpack.c.l.s4 1966171168
        %v2372 = vunpack.c.0.s8 %v2371
        %v2373 = vlaneseq
        %v2374 = vshrl.u32 %v2373, 7
        %v2375 = vsub.s32 %v2372, %v2374
        %v2376 = vrot.slane %v2348, %v2375
        %v2377 = vcombine.high %v2355, %v2355
        %v2378 = vcombine.high %v2362, %v2362
        %v2379 = vcombine.high %v2369, %v2369
        %v2380 = vcombine.high %v2376, %v2376
        %v2381 = vlaneseq
        %v2382 = vshrl.u32 %v2381, 7
        %v2383 = vsub.s32 0, %v2382
        %v2384 = vrot.slane %v2355, %v2383
        %v2385 = vlaneseq
        %v2386 = vshrl.u32 %v2385, 7
        %v2387 = vsub.s32 0, %v2386
        %v2388 = vrot.slane %v2369, %v2387
        %v2389 = vlaneseq
        %v2390 = vshrl.u32 %v2389, 7
        %v2391 = vsub.s32 0, %v2390
        %v2392 = vrot.slane %v2377, %v2391
        %v2393 = vlaneseq
        %v2394 = vshrl.u32 %v2393, 7
        %v2395 = vsub.s32 0, %v2394
        %v2396 = vrot.slane %v2379, %v2395
        %v2397 = vlaneseq
        %v2398 = vshrl.u32 %v2397, 7
        %v2399 = vsub.s32 0, %v2398
        %v2400 = vrot.slane %v2362, %v2399
        %v2401 = vlaneseq
        %v2402 = vshrl.u32 %v2401, 7
        %v2403 = vsub.s32 0, %v2402
        %v2404 = vrot.slane %v2376, %v2403
        %v2405 = vlaneseq
        %v2406 = vshrl.u32 %v2405, 7
        %v2407 = vsub.s32 0, %v2406
        %v2408 = vrot.slane %v2378, %v2407
        %v2409 = vlaneseq
        %v2410 = vshrl.u32 %v2409, 7
        %v2411 = vsub.s32 0, %v2410
        %v2412 = vrot.slane %v2380, %v2411
        %v2421 = vmul.f32 %v2384, %v724
        %v2422 = vmul.f32 %v2388, %v724
        %v2423 = vmul.f32 %v2392, %v724
        %v2424 = vmul.f32 %v2396, %v724
        %v2425 = vmul.f32 %v2400, %v724
        %v2426 = vmul.f32 %v2404, %v724
        %v2427 = vmul.f32 %v2408, %v724
        %v2428 = vmul.f32 %v2412, %v724
        %v2429 = vadd.f32 %v2323, %v2421
        %v2430 = vadd.f32 %v2324, %v2422
        %v2431 = vadd.f32 %v2325, %v2423
        %v2432 = vadd.f32 %v2326, %v2424
        %v2433 = vadd.f32 %v2327, %v2425
        %v2434 = vadd.f32 %v2328, %v2426
        %v2435 = vadd.f32 %v2329, %v2427
        %v2436 = vadd.f32 %v2330, %v2428
        %v2438 = vcombine.high %v628, %v628
        %v2440 = vunpack.c.l.s4 1966171168
        %v2441 = vunpack.c.0.s8 %v2440
        %v2442 = vlaneseq
        %v2443 = vshrl.u32 %v2442, 7
        %v2444 = vsub.s32 %v2441, %v2443
        %v2445 = vrot.slane %v628, %v2444
        %v2447 = vunpack.c.l.s4 1966171168
        %v2448 = vunpack.c.0.s8 %v2447
        %v2449 = vlaneseq
        %v2450 = vshrl.u32 %v2449, 7
        %v2451 = vsub.s32 %v2448, %v2450
        %v2452 = vrot.slane %v2438, %v2451
        %v2453 = vcombine.high %v2445, %v2445
        %v2454 = vcombine.high %v2452, %v2452
        %v2456 = vunpack.c.l.s4 1966171168
        %v2457 = vunpack.c.0.s8 %v2456
        %v2458 = vlaneseq
        %v2459 = vshrl.u32 %v2458, 7
        %v2460 = vsub.s32 %v2457, %v2459
        %v2461 = vrot.slane %v2445, %v2460
        %v2463 = vunpack.c.l.s4 1966171168
        %v2464 = vunpack.c.0.s8 %v2463
        %v2465 = vlaneseq
        %v2466 = vshrl.u32 %v2465, 7
        %v2467 = vsub.s32 %v2464, %v2466
        %v2468 = vrot.slane %v2452, %v2467
        %v2470 = vunpack.c.l.s4 1966171168
        %v2471 = vunpack.c.0.s8 %v2470
        %v2472 = vlaneseq
        %v2473 = vshrl.u32 %v2472, 7
        %v2474 = vsub.s32 %v2471, %v2473
        %v2475 = vrot.slane %v2453, %v2474
        %v2477 = vunpack.c.l.s4 1966171168
        %v2478 = vunpack.c.0.s8 %v2477
        %v2479 = vlaneseq
        %v2480 = vshrl.u32 %v2479, 7
        %v2481 = vsub.s32 %v2478, %v2480
        %v2482 = vrot.slane %v2454, %v2481
        %v2483 = vcombine.high %v2461, %v2461
        %v2484 = vcombine.high %v2468, %v2468
        %v2485 = vcombine.high %v2475, %v2475
        %v2486 = vcombine.high %v2482, %v2482
        %v2487 = vlaneseq
        %v2488 = vshrl.u32 %v2487, 7
        %v2489 = vsub.s32 0, %v2488
        %v2490 = vrot.slane %v2461, %v2489
        %v2491 = vlaneseq
        %v2492 = vshrl.u32 %v2491, 7
        %v2493 = vsub.s32 0, %v2492
        %v2494 = vrot.slane %v2475, %v2493
        %v2495 = vlaneseq
        %v2496 = vshrl.u32 %v2495, 7
        %v2497 = vsub.s32 0, %v2496
        %v2498 = vrot.slane %v2483, %v2497
        %v2499 = vlaneseq
        %v2500 = vshrl.u32 %v2499, 7
        %v2501 = vsub.s32 0, %v2500
        %v2502 = vrot.slane %v2485, %v2501
        %v2503 = vlaneseq
        %v2504 = vshrl.u32 %v2503, 7
        %v2505 = vsub.s32 0, %v2504
        %v2506 = vrot.slane %v2468, %v2505
        %v2507 = vlaneseq
        %v2508 = vshrl.u32 %v2507, 7
        %v2509 = vsub.s32 0, %v2508
        %v2510 = vrot.slane %v2482, %v2509
        %v2511 = vlaneseq
        %v2512 = vshrl.u32 %v2511, 7
        %v2513 = vsub.s32 0, %v2512
        %v2514 = vrot.slane %v2484, %v2513
        %v2515 = vlaneseq
        %v2516 = vshrl.u32 %v2515, 7
        %v2517 = vsub.s32 0, %v2516
        %v2518 = vrot.slane %v2486, %v2517
        %v2527 = vmul.f32 %v2490, %v725
        %v2528 = vmul.f32 %v2494, %v725
        %v2529 = vmul.f32 %v2498, %v725
        %v2530 = vmul.f32 %v2502, %v725
        %v2531 = vmul.f32 %v2506, %v725
        %v2532 = vmul.f32 %v2510, %v725
        %v2533 = vmul.f32 %v2514, %v725
        %v2534 = vmul.f32 %v2518, %v725
        %v2535 = vadd.f32 %v2429, %v2527
        %v2536 = vadd.f32 %v2430, %v2528
        %v2537 = vadd.f32 %v2431, %v2529
        %v2538 = vadd.f32 %v2432, %v2530
        %v2539 = vadd.f32 %v2433, %v2531
        %v2540 = vadd.f32 %v2434, %v2532
        %v2541 = vadd.f32 %v2435, %v2533
        %v2542 = vadd.f32 %v2436, %v2534
        %v2544 = vcombine.high %v629, %v629
        %v2546 = vunpack.c.l.s4 1966171168
        %v2547 = vunpack.c.0.s8 %v2546
        %v2548 = vlaneseq
        %v2549 = vshrl.u32 %v2548, 7
        %v2550 = vsub.s32 %v2547, %v2549
        %v2551 = vrot.slane %v629, %v2550
        %v2553 = vunpack.c.l.s4 1966171168
        %v2554 = vunpack.c.0.s8 %v2553
        %v2555 = vlaneseq
        %v2556 = vshrl.u32 %v2555, 7
        %v2557 = vsub.s32 %v2554, %v2556
        %v2558 = vrot.slane %v2544, %v2557
        %v2559 = vcombine.high %v2551, %v2551
        %v2560 = vcombine.high %v2558, %v2558
        %v2562 = vunpack.c.l.s4 1966171168
        %v2563 = vunpack.c.0.s8 %v2562
        %v2564 = vlaneseq
        %v2565 = vshrl.u32 %v2564, 7
        %v2566 = vsub.s32 %v2563, %v2565
        %v2567 = vrot.slane %v2551, %v2566
        %v2569 = vunpack.c.l.s4 1966171168
        %v2570 = vunpack.c.0.s8 %v2569
        %v2571 = vlaneseq
        %v2572 = vshrl.u32 %v2571, 7
        %v2573 = vsub.s32 %v2570, %v2572
        %v2574 = vrot.slane %v2558, %v2573
        %v2576 = vunpack.c.l.s4 1966171168
        %v2577 = vunpack.c.0.s8 %v2576
        %v2578 = vlaneseq
        %v2579 = vshrl.u32 %v2578, 7
        %v2580 = vsub.s32 %v2577, %v2579
        %v2581 = vrot.slane %v2559, %v2580
        %v2583 = vunpack.c.l.s4 1966171168
        %v2584 = vunpack.c.0.s8 %v2583
        %v2585 = vlaneseq
        %v2586 = vshrl.u32 %v2585, 7
        %v2587 = vsub.s32 %v2584, %v2586
        %v2588 = vrot.slane %v2560, %v2587
        %v2589 = vcombine.high %v2567, %v2567
        %v2590 = vcombine.high %v2574, %v2574
        %v2591 = vcombine.high %v2581, %v2581
        %v2592 = vcombine.high %v2588, %v2588
        %v2593 = vlaneseq
        %v2594 = vshrl.u32 %v2593, 7
        %v2595 = vsub.s32 0, %v2594
        %v2596 = vrot.slane %v2567, %v2595
        %v2597 = vlaneseq
        %v2598 = vshrl.u32 %v2597, 7
        %v2599 = vsub.s32 0, %v2598
        %v2600 = vrot.slane %v2581, %v2599
        %v2601 = vlaneseq
        %v2602 = vshrl.u32 %v2601, 7
        %v2603 = vsub.s32 0, %v2602
        %v2604 = vrot.slane %v2589, %v2603
        %v2605 = vlaneseq
        %v2606 = vshrl.u32 %v2605, 7
        %v2607 = vsub.s32 0, %v2606
        %v2608 = vrot.slane %v2591, %v2607
        %v2609 = vlaneseq
        %v2610 = vshrl.u32 %v2609, 7
        %v2611 = vsub.s32 0, %v2610
        %v2612 = vrot.slane %v2574, %v2611
        %v2613 = vlaneseq
        %v2614 = vshrl.u32 %v2613, 7
        %v2615 = vsub.s32 0, %v2614
        %v2616 = vrot.slane %v2588, %v2615
        %v2617 = vlaneseq
        %v2618 = vshrl.u32 %v2617, 7
        %v2619 = vsub.s32 0, %v2618
        %v2620 = vrot.slane %v2590, %v2619
        %v2621 = vlaneseq
        %v2622 = vshrl.u32 %v2621, 7
        %v2623 = vsub.s32 0, %v2622
        %v2624 = vrot.slane %v2592, %v2623
        %v2633 = vmul.f32 %v2596, %v726
        %v2634 = vmul.f32 %v2600, %v726
        %v2635 = vmul.f32 %v2604, %v726
        %v2636 = vmul.f32 %v2608, %v726
        %v2637 = vmul.f32 %v2612, %v726
        %v2638 = vmul.f32 %v2616, %v726
        %v2639 = vmul.f32 %v2620, %v726
        %v2640 = vmul.f32 %v2624, %v726
        %v2641 = vadd.f32 %v2535, %v2633
        %v2642 = vadd.f32 %v2536, %v2634
        %v2643 = vadd.f32 %v2537, %v2635
        %v2644 = vadd.f32 %v2538, %v2636
        %v2645 = vadd.f32 %v2539, %v2637
        %v2646 = vadd.f32 %v2540, %v2638
        %v2647 = vadd.f32 %v2541, %v2639
        %v2648 = vadd.f32 %v2542, %v2640
        %v2650 = vcombine.high %v630, %v630
        %v2652 = vunpack.c.l.s4 1966171168
        %v2653 = vunpack.c.0.s8 %v2652
        %v2654 = vlaneseq
        %v2655 = vshrl.u32 %v2654, 7
        %v2656 = vsub.s32 %v2653, %v2655
        %v2657 = vrot.slane %v630, %v2656
        %v2659 = vunpack.c.l.s4 1966171168
        %v2660 = vunpack.c.0.s8 %v2659
        %v2661 = vlaneseq
        %v2662 = vshrl.u32 %v2661, 7
        %v2663 = vsub.s32 %v2660, %v2662
        %v2664 = vrot.slane %v2650, %v2663
        %v2665 = vcombine.high %v2657, %v2657
        %v2666 = vcombine.high %v2664, %v2664
        %v2668 = vunpack.c.l.s4 1966171168
        %v2669 = vunpack.c.0.s8 %v2668
        %v2670 = vlaneseq
        %v2671 = vshrl.u32 %v2670, 7
        %v2672 = vsub.s32 %v2669, %v2671
        %v2673 = vrot.slane %v2657, %v2672
        %v2675 = vunpack.c.l.s4 1966171168
        %v2676 = vunpack.c.0.s8 %v2675
        %v2677 = vlaneseq
        %v2678 = vshrl.u32 %v2677, 7
        %v2679 = vsub.s32 %v2676, %v2678
        %v2680 = vrot.slane %v2664, %v2679
        %v2682 = vunpack.c.l.s4 1966171168
        %v2683 = vunpack.c.0.s8 %v2682
        %v2684 = vlaneseq
        %v2685 = vshrl.u32 %v2684, 7
        %v2686 = vsub.s32 %v2683, %v2685
        %v2687 = vrot.slane %v2665, %v2686
        %v2689 = vunpack.c.l.s4 1966171168
        %v2690 = vunpack.c.0.s8 %v2689
        %v2691 = vlaneseq
        %v2692 = vshrl.u32 %v2691, 7
        %v2693 = vsub.s32 %v2690, %v2692
        %v2694 = vrot.slane %v2666, %v2693
        %v2695 = vcombine.high %v2673, %v2673
        %v2696 = vcombine.high %v2680, %v2680
        %v2697 = vcombine.high %v2687, %v2687
        %v2698 = vcombine.high %v2694, %v2694
        %v2699 = vlaneseq
        %v2700 = vshrl.u32 %v2699, 7
        %v2701 = vsub.s32 0, %v2700
        %v2702 = vrot.slane %v2673, %v2701
        %v2703 = vlaneseq
        %v2704 = vshrl.u32 %v2703, 7
        %v2705 = vsub.s32 0, %v2704
        %v2706 = vrot.slane %v2687, %v2705
        %v2707 = vlaneseq
        %v2708 = vshrl.u32 %v2707, 7
        %v2709 = vsub.s32 0, %v2708
        %v2710 = vrot.slane %v2695, %v2709
        %v2711 = vlaneseq
        %v2712 = vshrl.u32 %v2711, 7
        %v2713 = vsub.s32 0, %v2712
        %v2714 = vrot.slane %v2697, %v2713
        %v2715 = vlaneseq
        %v2716 = vshrl.u32 %v2715, 7
        %v2717 = vsub.s32 0, %v2716
        %v2718 = vrot.slane %v2680, %v2717
        %v2719 = vlaneseq
        %v2720 = vshrl.u32 %v2719, 7
        %v2721 = vsub.s32 0, %v2720
        %v2722 = vrot.slane %v2694, %v2721
        %v2723 = vlaneseq
        %v2724 = vshrl.u32 %v2723, 7
        %v2725 = vsub.s32 0, %v2724
        %v2726 = vrot.slane %v2696, %v2725
        %v2727 = vlaneseq
        %v2728 = vshrl.u32 %v2727, 7
        %v2729 = vsub.s32 0, %v2728
        %v2730 = vrot.slane %v2698, %v2729
        %v2739 = vmul.f32 %v2702, %v727
        %v2740 = vmul.f32 %v2706, %v727
        %v2741 = vmul.f32 %v2710, %v727
        %v2742 = vmul.f32 %v2714, %v727
        %v2743 = vmul.f32 %v2718, %v727
        %v2744 = vmul.f32 %v2722, %v727
        %v2745 = vmul.f32 %v2726, %v727
        %v2746 = vmul.f32 %v2730, %v727
        %v2747 = vadd.f32 %v2641, %v2739
        %v2748 = vadd.f32 %v2642, %v2740
        %v2749 = vadd.f32 %v2643, %v2741
        %v2750 = vadd.f32 %v2644, %v2742
        %v2751 = vadd.f32 %v2645, %v2743
        %v2752 = vadd.f32 %v2646, %v2744
        %v2753 = vadd.f32 %v2647, %v2745
        %v2754 = vadd.f32 %v2648, %v2746
        %v2756 = vcombine.high %v631, %v631
        %v2758 = vunpack.c.l.s4 1966171168
        %v2759 = vunpack.c.0.s8 %v2758
        %v2760 = vlaneseq
        %v2761 = vshrl.u32 %v2760, 7
        %v2762 = vsub.s32 %v2759, %v2761
        %v2763 = vrot.slane %v631, %v2762
        %v2765 = vunpack.c.l.s4 1966171168
        %v2766 = vunpack.c.0.s8 %v2765
        %v2767 = vlaneseq
        %v2768 = vshrl.u32 %v2767, 7
        %v2769 = vsub.s32 %v2766, %v2768
        %v2770 = vrot.slane %v2756, %v2769
        %v2771 = vcombine.high %v2763, %v2763
        %v2772 = vcombine.high %v2770, %v2770
        %v2774 = vunpack.c.l.s4 1966171168
        %v2775 = vunpack.c.0.s8 %v2774
        %v2776 = vlaneseq
        %v2777 = vshrl.u32 %v2776, 7
        %v2778 = vsub.s32 %v2775, %v2777
        %v2779 = vrot.slane %v2763, %v2778
        %v2781 = vunpack.c.l.s4 1966171168
        %v2782 = vunpack.c.0.s8 %v2781
        %v2783 = vlaneseq
        %v2784 = vshrl.u32 %v2783, 7
        %v2785 = vsub.s32 %v2782, %v2784
        %v2786 = vrot.slane %v2770, %v2785
        %v2788 = vunpack.c.l.s4 1966171168
        %v2789 = vunpack.c.0.s8 %v2788
        %v2790 = vlaneseq
        %v2791 = vshrl.u32 %v2790, 7
        %v2792 = vsub.s32 %v2789, %v2791
        %v2793 = vrot.slane %v2771, %v2792
        %v2795 = vunpack.c.l.s4 1966171168
        %v2796 = vunpack.c.0.s8 %v2795
        %v2797 = vlaneseq
        %v2798 = vshrl.u32 %v2797, 7
        %v2799 = vsub.s32 %v2796, %v2798
        %v2800 = vrot.slane %v2772, %v2799
        %v2801 = vcombine.high %v2779, %v2779
        %v2802 = vcombine.high %v2786, %v2786
        %v2803 = vcombine.high %v2793, %v2793
        %v2804 = vcombine.high %v2800, %v2800
        %v2805 = vlaneseq
        %v2806 = vshrl.u32 %v2805, 7
        %v2807 = vsub.s32 0, %v2806
        %v2808 = vrot.slane %v2779, %v2807
        %v2809 = vlaneseq
        %v2810 = vshrl.u32 %v2809, 7
        %v2811 = vsub.s32 0, %v2810
        %v2812 = vrot.slane %v2793, %v2811
        %v2813 = vlaneseq
        %v2814 = vshrl.u32 %v2813, 7
        %v2815 = vsub.s32 0, %v2814
        %v2816 = vrot.slane %v2801, %v2815
        %v2817 = vlaneseq
        %v2818 = vshrl.u32 %v2817, 7
        %v2819 = vsub.s32 0, %v2818
        %v2820 = vrot.slane %v2803, %v2819
        %v2821 = vlaneseq
        %v2822 = vshrl.u32 %v2821, 7
        %v2823 = vsub.s32 0, %v2822
        %v2824 = vrot.slane %v2786, %v2823
        %v2825 = vlaneseq
        %v2826 = vshrl.u32 %v2825, 7
        %v2827 = vsub.s32 0, %v2826
        %v2828 = vrot.slane %v2800, %v2827
        %v2829 = vlaneseq
        %v2830 = vshrl.u32 %v2829, 7
        %v2831 = vsub.s32 0, %v2830
        %v2832 = vrot.slane %v2802, %v2831
        %v2833 = vlaneseq
        %v2834 = vshrl.u32 %v2833, 7
        %v2835 = vsub.s32 0, %v2834
        %v2836 = vrot.slane %v2804, %v2835
        %v2845 = vmul.f32 %v2808, %v728
        %v2846 = vmul.f32 %v2812, %v728
        %v2847 = vmul.f32 %v2816, %v728
        %v2848 = vmul.f32 %v2820, %v728
        %v2849 = vmul.f32 %v2824, %v728
        %v2850 = vmul.f32 %v2828, %v728
        %v2851 = vmul.f32 %v2832, %v728
        %v2852 = vmul.f32 %v2836, %v728
        %v2853 = vadd.f32 %v2747, %v2845
        %v2854 = vadd.f32 %v2748, %v2846
        %v2855 = vadd.f32 %v2749, %v2847
        %v2856 = vadd.f32 %v2750, %v2848
        %v2857 = vadd.f32 %v2751, %v2849
        %v2858 = vadd.f32 %v2752, %v2850
        %v2859 = vadd.f32 %v2753, %v2851
        %v2860 = vadd.f32 %v2754, %v2852
        %v2862 = vcombine.high %v632, %v632
        %v2864 = vunpack.c.l.s4 1966171168
        %v2865 = vunpack.c.0.s8 %v2864
        %v2866 = vlaneseq
        %v2867 = vshrl.u32 %v2866, 7
        %v2868 = vsub.s32 %v2865, %v2867
        %v2869 = vrot.slane %v632, %v2868
        %v2871 = vunpack.c.l.s4 1966171168
        %v2872 = vunpack.c.0.s8 %v2871
        %v2873 = vlaneseq
        %v2874 = vshrl.u32 %v2873, 7
        %v2875 = vsub.s32 %v2872, %v2874
        %v2876 = vrot.slane %v2862, %v2875
        %v2877 = vcombine.high %v2869, %v2869
        %v2878 = vcombine.high %v2876, %v2876
        %v2880 = vunpack.c.l.s4 1966171168
        %v2881 = vunpack.c.0.s8 %v2880
        %v2882 = vlaneseq
        %v2883 = vshrl.u32 %v2882, 7
        %v2884 = vsub.s32 %v2881, %v2883
        %v2885 = vrot.slane %v2869, %v2884
        %v2887 = vunpack.c.l.s4 1966171168
        %v2888 = vunpack.c.0.s8 %v2887
        %v2889 = vlaneseq
        %v2890 = vshrl.u32 %v2889, 7
        %v2891 = vsub.s32 %v2888, %v2890
        %v2892 = vrot.slane %v2876, %v2891
        %v2894 = vunpack.c.l.s4 1966171168
        %v2895 = vunpack.c.0.s8 %v2894
        %v2896 = vlaneseq
        %v2897 = vshrl.u32 %v2896, 7
        %v2898 = vsub.s32 %v2895, %v2897
        %v2899 = vrot.slane %v2877, %v2898
        %v2901 = vunpack.c.l.s4 1966171168
        %v2902 = vunpack.c.0.s8 %v2901
        %v2903 = vlaneseq
        %v2904 = vshrl.u32 %v2903, 7
        %v2905 = vsub.s32 %v2902, %v2904
        %v2906 = vrot.slane %v2878, %v2905
        %v2907 = vcombine.high %v2885, %v2885
        %v2908 = vcombine.high %v2892, %v2892
        %v2909 = vcombine.high %v2899, %v2899
        %v2910 = vcombine.high %v2906, %v2906
        %v2911 = vlaneseq
        %v2912 = vshrl.u32 %v2911, 7
        %v2913 = vsub.s32 0, %v2912
        %v2914 = vrot.slane %v2885, %v2913
        %v2915 = vlaneseq
        %v2916 = vshrl.u32 %v2915, 7
        %v2917 = vsub.s32 0, %v2916
        %v2918 = vrot.slane %v2899, %v2917
        %v2919 = vlaneseq
        %v2920 = vshrl.u32 %v2919, 7
        %v2921 = vsub.s32 0, %v2920
        %v2922 = vrot.slane %v2907, %v2921
        %v2923 = vlaneseq
        %v2924 = vshrl.u32 %v2923, 7
        %v2925 = vsub.s32 0, %v2924
        %v2926 = vrot.slane %v2909, %v2925
        %v2927 = vlaneseq
        %v2928 = vshrl.u32 %v2927, 7
        %v2929 = vsub.s32 0, %v2928
        %v2930 = vrot.slane %v2892, %v2929
        %v2931 = vlaneseq
        %v2932 = vshrl.u32 %v2931, 7
        %v2933 = vsub.s32 0, %v2932
        %v2934 = vrot.slane %v2906, %v2933
        %v2935 = vlaneseq
        %v2936 = vshrl.u32 %v2935, 7
        %v2937 = vsub.s32 0, %v2936
        %v2938 = vrot.slane %v2908, %v2937
        %v2939 = vlaneseq
        %v2940 = vshrl.u32 %v2939, 7
        %v2941 = vsub.s32 0, %v2940
        %v2942 = vrot.slane %v2910, %v2941
        %v2951 = vmul.f32 %v2914, %v729
        %v2952 = vmul.f32 %v2918, %v729
        %v2953 = vmul.f32 %v2922, %v729
        %v2954 = vmul.f32 %v2926, %v729
        %v2955 = vmul.f32 %v2930, %v729
        %v2956 = vmul.f32 %v2934, %v729
        %v2957 = vmul.f32 %v2938, %v729
        %v2958 = vmul.f32 %v2942, %v729
        %v2959 = vadd.f32 %v2853, %v2951
        %v2960 = vadd.f32 %v2854, %v2952
        %v2961 = vadd.f32 %v2855, %v2953
        %v2962 = vadd.f32 %v2856, %v2954
        %v2963 = vadd.f32 %v2857, %v2955
        %v2964 = vadd.f32 %v2858, %v2956
        %v2965 = vadd.f32 %v2859, %v2957
        %v2966 = vadd.f32 %v2860, %v2958
        %v2968 = vcombine.high %v633, %v633
        %v2970 = vunpack.c.l.s4 1966171168
        %v2971 = vunpack.c.0.s8 %v2970
        %v2972 = vlaneseq
        %v2973 = vshrl.u32 %v2972, 7
        %v2974 = vsub.s32 %v2971, %v2973
        %v2975 = vrot.slane %v633, %v2974
        %v2977 = vunpack.c.l.s4 1966171168
        %v2978 = vunpack.c.0.s8 %v2977
        %v2979 = vlaneseq
        %v2980 = vshrl.u32 %v2979, 7
        %v2981 = vsub.s32 %v2978, %v2980
        %v2982 = vrot.slane %v2968, %v2981
        %v2983 = vcombine.high %v2975, %v2975
        %v2984 = vcombine.high %v2982, %v2982
        %v2986 = vunpack.c.l.s4 1966171168
        %v2987 = vunpack.c.0.s8 %v2986
        %v2988 = vlaneseq
        %v2989 = vshrl.u32 %v2988, 7
        %v2990 = vsub.s32 %v2987, %v2989
        %v2991 = vrot.slane %v2975, %v2990
        %v2993 = vunpack.c.l.s4 1966171168
        %v2994 = vunpack.c.0.s8 %v2993
        %v2995 = vlaneseq
        %v2996 = vshrl.u32 %v2995, 7
        %v2997 = vsub.s32 %v2994, %v2996
        %v2998 = vrot.slane %v2982, %v2997
        %v3000 = vunpack.c.l.s4 1966171168
        %v3001 = vunpack.c.0.s8 %v3000
        %v3002 = vlaneseq
        %v3003 = vshrl.u32 %v3002, 7
        %v3004 = vsub.s32 %v3001, %v3003
        %v3005 = vrot.slane %v2983, %v3004
        %v3007 = vunpack.c.l.s4 1966171168
        %v3008 = vunpack.c.0.s8 %v3007
        %v3009 = vlaneseq
        %v3010 = vshrl.u32 %v3009, 7
        %v3011 = vsub.s32 %v3008, %v3010
        %v3012 = vrot.slane %v2984, %v3011
        %v3013 = vcombine.high %v2991, %v2991
        %v3014 = vcombine.high %v2998, %v2998
        %v3015 = vcombine.high %v3005, %v3005
        %v3016 = vcombine.high %v3012, %v3012
        %v3017 = vlaneseq
        %v3018 = vshrl.u32 %v3017, 7
        %v3019 = vsub.s32 0, %v3018
        %v3020 = vrot.slane %v2991, %v3019
        %v3021 = vlaneseq
        %v3022 = vshrl.u32 %v3021, 7
        %v3023 = vsub.s32 0, %v3022
        %v3024 = vrot.slane %v3005, %v3023
        %v3025 = vlaneseq
        %v3026 = vshrl.u32 %v3025, 7
        %v3027 = vsub.s32 0, %v3026
        %v3028 = vrot.slane %v3013, %v3027
        %v3029 = vlaneseq
        %v3030 = vshrl.u32 %v3029, 7
        %v3031 = vsub.s32 0, %v3030
        %v3032 = vrot.slane %v3015, %v3031
        %v3033 = vlaneseq
        %v3034 = vshrl.u32 %v3033, 7
        %v3035 = vsub.s32 0, %v3034
        %v3036 = vrot.slane %v2998, %v3035
        %v3037 = vlaneseq
        %v3038 = vshrl.u32 %v3037, 7
        %v3039 = vsub.s32 0, %v3038
        %v3040 = vrot.slane %v3012, %v3039
        %v3041 = vlaneseq
        %v3042 = vshrl.u32 %v3041, 7
        %v3043 = vsub.s32 0, %v3042
        %v3044 = vrot.slane %v3014, %v3043
        %v3045 = vlaneseq
        %v3046 = vshrl.u32 %v3045, 7
        %v3047 = vsub.s32 0, %v3046
        %v3048 = vrot.slane %v3016, %v3047
        %v3057 = vmul.f32 %v3020, %v730
        %v3058 = vmul.f32 %v3024, %v730
        %v3059 = vmul.f32 %v3028, %v730
        %v3060 = vmul.f32 %v3032, %v730
        %v3061 = vmul.f32 %v3036, %v730
        %v3062 = vmul.f32 %v3040, %v730
        %v3063 = vmul.f32 %v3044, %v730
        %v3064 = vmul.f32 %v3048, %v730
        %v3065 = vadd.f32 %v2959, %v3057
        %v3066 = vadd.f32 %v2960, %v3058
        %v3067 = vadd.f32 %v2961, %v3059
        %v3068 = vadd.f32 %v2962, %v3060
        %v3069 = vadd.f32 %v2963, %v3061
        %v3070 = vadd.f32 %v2964, %v3062
        %v3071 = vadd.f32 %v2965, %v3063
        %v3072 = vadd.f32 %v2966, %v3064
        %v3074 = vcombine.high %v634, %v634
        %v3076 = vunpack.c.l.s4 1966171168
        %v3077 = vunpack.c.0.s8 %v3076
        %v3078 = vlaneseq
        %v3079 = vshrl.u32 %v3078, 7
        %v3080 = vsub.s32 %v3077, %v3079
        %v3081 = vrot.slane %v634, %v3080
        %v3083 = vunpack.c.l.s4 1966171168
        %v3084 = vunpack.c.0.s8 %v3083
        %v3085 = vlaneseq
        %v3086 = vshrl.u32 %v3085, 7
        %v3087 = vsub.s32 %v3084, %v3086
        %v3088 = vrot.slane %v3074, %v3087
        %v3089 = vcombine.high %v3081, %v3081
        %v3090 = vcombine.high %v3088, %v3088
        %v3092 = vunpack.c.l.s4 1966171168
        %v3093 = vunpack.c.0.s8 %v3092
        %v3094 = vlaneseq
        %v3095 = vshrl.u32 %v3094, 7
        %v3096 = vsub.s32 %v3093, %v3095
        %v3097 = vrot.slane %v3081, %v3096
        %v3099 = vunpack.c.l.s4 1966171168
        %v3100 = vunpack.c.0.s8 %v3099
        %v3101 = vlaneseq
        %v3102 = vshrl.u32 %v3101, 7
        %v3103 = vsub.s32 %v3100, %v3102
        %v3104 = vrot.slane %v3088, %v3103
        %v3106 = vunpack.c.l.s4 1966171168
        %v3107 = vunpack.c.0.s8 %v3106
        %v3108 = vlaneseq
        %v3109 = vshrl.u32 %v3108, 7
        %v3110 = vsub.s32 %v3107, %v3109
        %v3111 = vrot.slane %v3089, %v3110
        %v3113 = vunpack.c.l.s4 1966171168
        %v3114 = vunpack.c.0.s8 %v3113
        %v3115 = vlaneseq
        %v3116 = vshrl.u32 %v3115, 7
        %v3117 = vsub.s32 %v3114, %v3116
        %v3118 = vrot.slane %v3090, %v3117
        %v3119 = vcombine.high %v3097, %v3097
        %v3120 = vcombine.high %v3104, %v3104
        %v3121 = vcombine.high %v3111, %v3111
        %v3122 = vcombine.high %v3118, %v3118
        %v3123 = vlaneseq
        %v3124 = vshrl.u32 %v3123, 7
        %v3125 = vsub.s32 0, %v3124
        %v3126 = vrot.slane %v3097, %v3125
        %v3127 = vlaneseq
        %v3128 = vshrl.u32 %v3127, 7
        %v3129 = vsub.s32 0, %v3128
        %v3130 = vrot.slane %v3111, %v3129
        %v3131 = vlaneseq
        %v3132 = vshrl.u32 %v3131, 7
        %v3133 = vsub.s32 0, %v3132
        %v3134 = vrot.slane %v3119, %v3133
        %v3135 = vlaneseq
        %v3136 = vshrl.u32 %v3135, 7
        %v3137 = vsub.s32 0, %v3136
        %v3138 = vrot.slane %v3121, %v3137
        %v3139 = vlaneseq
        %v3140 = vshrl.u32 %v3139, 7
        %v3141 = vsub.s32 0, %v3140
        %v3142 = vrot.slane %v3104, %v3141
        %v3143 = vlaneseq
        %v3144 = vshrl.u32 %v3143, 7
        %v3145 = vsub.s32 0, %v3144
        %v3146 = vrot.slane %v3118, %v3145
        %v3147 = vlaneseq
        %v3148 = vshrl.u32 %v3147, 7
        %v3149 = vsub.s32 0, %v3148
        %v3150 = vrot.slane %v3120, %v3149
        %v3151 = vlaneseq
        %v3152 = vshrl.u32 %v3151, 7
        %v3153 = vsub.s32 0, %v3152
        %v3154 = vrot.slane %v3122, %v3153
        %v3163 = vmul.f32 %v3126, %v731
        %v3164 = vmul.f32 %v3130, %v731
        %v3165 = vmul.f32 %v3134, %v731
        %v3166 = vmul.f32 %v3138, %v731
        %v3167 = vmul.f32 %v3142, %v731
        %v3168 = vmul.f32 %v3146, %v731
        %v3169 = vmul.f32 %v3150, %v731
        %v3170 = vmul.f32 %v3154, %v731
        %v3171 = vadd.f32 %v3065, %v3163
        %v3172 = vadd.f32 %v3066, %v3164
        %v3173 = vadd.f32 %v3067, %v3165
        %v3174 = vadd.f32 %v3068, %v3166
        %v3175 = vadd.f32 %v3069, %v3167
        %v3176 = vadd.f32 %v3070, %v3168
        %v3177 = vadd.f32 %v3071, %v3169
        %v3178 = vadd.f32 %v3072, %v3170
        %v3180 = vcombine.high %v635, %v635
        %v3182 = vunpack.c.l.s4 1966171168
        %v3183 = vunpack.c.0.s8 %v3182
        %v3184 = vlaneseq
        %v3185 = vshrl.u32 %v3184, 7
        %v3186 = vsub.s32 %v3183, %v3185
        %v3187 = vrot.slane %v635, %v3186
        %v3189 = vunpack.c.l.s4 1966171168
        %v3190 = vunpack.c.0.s8 %v3189
        %v3191 = vlaneseq
        %v3192 = vshrl.u32 %v3191, 7
        %v3193 = vsub.s32 %v3190, %v3192
        %v3194 = vrot.slane %v3180, %v3193
        %v3195 = vcombine.high %v3187, %v3187
        %v3196 = vcombine.high %v3194, %v3194
        %v3198 = vunpack.c.l.s4 1966171168
        %v3199 = vunpack.c.0.s8 %v3198
        %v3200 = vlaneseq
        %v3201 = vshrl.u32 %v3200, 7
        %v3202 = vsub.s32 %v3199, %v3201
        %v3203 = vrot.slane %v3187, %v3202
        %v3205 = vunpack.c.l.s4 1966171168
        %v3206 = vunpack.c.0.s8 %v3205
        %v3207 = vlaneseq
        %v3208 = vshrl.u32 %v3207, 7
        %v3209 = vsub.s32 %v3206, %v3208
        %v3210 = vrot.slane %v3194, %v3209
        %v3212 = vunpack.c.l.s4 1966171168
        %v3213 = vunpack.c.0.s8 %v3212
        %v3214 = vlaneseq
        %v3215 = vshrl.u32 %v3214, 7
        %v3216 = vsub.s32 %v3213, %v3215
        %v3217 = vrot.slane %v3195, %v3216
        %v3219 = vunpack.c.l.s4 1966171168
        %v3220 = vunpack.c.0.s8 %v3219
        %v3221 = vlaneseq
        %v3222 = vshrl.u32 %v3221, 7
        %v3223 = vsub.s32 %v3220, %v3222
        %v3224 = vrot.slane %v3196, %v3223
        %v3225 = vcombine.high %v3203, %v3203
        %v3226 = vcombine.high %v3210, %v3210
        %v3227 = vcombine.high %v3217, %v3217
        %v3228 = vcombine.high %v3224, %v3224
        %v3229 = vlaneseq
        %v3230 = vshrl.u32 %v3229, 7
        %v3231 = vsub.s32 0, %v3230
        %v3232 = vrot.slane %v3203, %v3231
        %v3233 = vlaneseq
        %v3234 = vshrl.u32 %v3233, 7
        %v3235 = vsub.s32 0, %v3234
        %v3236 = vrot.slane %v3217, %v3235
        %v3237 = vlaneseq
        %v3238 = vshrl.u32 %v3237, 7
        %v3239 = vsub.s32 0, %v3238
        %v3240 = vrot.slane %v3225, %v3239
        %v3241 = vlaneseq
        %v3242 = vshrl.u32 %v3241, 7
        %v3243 = vsub.s32 0, %v3242
        %v3244 = vrot.slane %v3227, %v3243
        %v3245 = vlaneseq
        %v3246 = vshrl.u32 %v3245, 7
        %v3247 = vsub.s32 0, %v3246
        %v3248 = vrot.slane %v3210, %v3247
        %v3249 = vlaneseq
        %v3250 = vshrl.u32 %v3249, 7
        %v3251 = vsub.s32 0, %v3250
        %v3252 = vrot.slane %v3224, %v3251
        %v3253 = vlaneseq
        %v3254 = vshrl.u32 %v3253, 7
        %v3255 = vsub.s32 0, %v3254
        %v3256 = vrot.slane %v3226, %v3255
        %v3257 = vlaneseq
        %v3258 = vshrl.u32 %v3257, 7
        %v3259 = vsub.s32 0, %v3258
        %v3260 = vrot.slane %v3228, %v3259
        %v3269 = vmul.f32 %v3232, %v732
        %v3270 = vmul.f32 %v3236, %v732
        %v3271 = vmul.f32 %v3240, %v732
        %v3272 = vmul.f32 %v3244, %v732
        %v3273 = vmul.f32 %v3248, %v732
        %v3274 = vmul.f32 %v3252, %v732
        %v3275 = vmul.f32 %v3256, %v732
        %v3276 = vmul.f32 %v3260, %v732
        %v3277 = vadd.f32 %v3171, %v3269
        %v3278 = vadd.f32 %v3172, %v3270
        %v3279 = vadd.f32 %v3173, %v3271
        %v3280 = vadd.f32 %v3174, %v3272
        %v3281 = vadd.f32 %v3175, %v3273
        %v3282 = vadd.f32 %v3176, %v3274
        %v3283 = vadd.f32 %v3177, %v3275
        %v3284 = vadd.f32 %v3178, %v3276
        %v3286 = vcombine.high %v636, %v636
        %v3288 = vunpack.c.l.s4 1966171168
        %v3289 = vunpack.c.0.s8 %v3288
        %v3290 = vlaneseq
        %v3291 = vshrl.u32 %v3290, 7
        %v3292 = vsub.s32 %v3289, %v3291
        %v3293 = vrot.slane %v636, %v3292
        %v3295 = vunpack.c.l.s4 1966171168
        %v3296 = vunpack.c.0.s8 %v3295
        %v3297 = vlaneseq
        %v3298 = vshrl.u32 %v3297, 7
        %v3299 = vsub.s32 %v3296, %v3298
        %v3300 = vrot.slane %v3286, %v3299
        %v3301 = vcombine.high %v3293, %v3293
        %v3302 = vcombine.high %v3300, %v3300
        %v3304 = vunpack.c.l.s4 1966171168
        %v3305 = vunpack.c.0.s8 %v3304
        %v3306 = vlaneseq
        %v3307 = vshrl.u32 %v3306, 7
        %v3308 = vsub.s32 %v3305, %v3307
        %v3309 = vrot.slane %v3293, %v3308
        %v3311 = vunpack.c.l.s4 1966171168
        %v3312 = vunpack.c.0.s8 %v3311
        %v3313 = vlaneseq
        %v3314 = vshrl.u32 %v3313, 7
        %v3315 = vsub.s32 %v3312, %v3314
        %v3316 = vrot.slane %v3300, %v3315
        %v3318 = vunpack.c.l.s4 1966171168
        %v3319 = vunpack.c.0.s8 %v3318
        %v3320 = vlaneseq
        %v3321 = vshrl.u32 %v3320, 7
        %v3322 = vsub.s32 %v3319, %v3321
        %v3323 = vrot.slane %v3301, %v3322
        %v3325 = vunpack.c.l.s4 1966171168
        %v3326 = vunpack.c.0.s8 %v3325
        %v3327 = vlaneseq
        %v3328 = vshrl.u32 %v3327, 7
        %v3329 = vsub.s32 %v3326, %v3328
        %v3330 = vrot.slane %v3302, %v3329
        %v3331 = vcombine.high %v3309, %v3309
        %v3332 = vcombine.high %v3316, %v3316
        %v3333 = vcombine.high %v3323, %v3323
        %v3334 = vcombine.high %v3330, %v3330
        %v3335 = vlaneseq
        %v3336 = vshrl.u32 %v3335, 7
        %v3337 = vsub.s32 0, %v3336
        %v3338 = vrot.slane %v3309, %v3337
        %v3339 = vlaneseq
        %v3340 = vshrl.u32 %v3339, 7
        %v3341 = vsub.s32 0, %v3340
        %v3342 = vrot.slane %v3323, %v3341
        %v3343 = vlaneseq
        %v3344 = vshrl.u32 %v3343, 7
        %v3345 = vsub.s32 0, %v3344
        %v3346 = vrot.slane %v3331, %v3345
        %v3347 = vlaneseq
        %v3348 = vshrl.u32 %v3347, 7
        %v3349 = vsub.s32 0, %v3348
        %v3350 = vrot.slane %v3333, %v3349
        %v3351 = vlaneseq
        %v3352 = vshrl.u32 %v3351, 7
        %v3353 = vsub.s32 0, %v3352
        %v3354 = vrot.slane %v3316, %v3353
        %v3355 = vlaneseq
        %v3356 = vshrl.u32 %v3355, 7
        %v3357 = vsub.s32 0, %v3356
        %v3358 = vrot.slane %v3330, %v3357
        %v3359 = vlaneseq
        %v3360 = vshrl.u32 %v3359, 7
        %v3361 = vsub.s32 0, %v3360
        %v3362 = vrot.slane %v3332, %v3361
        %v3363 = vlaneseq
        %v3364 = vshrl.u32 %v3363, 7
        %v3365 = vsub.s32 0, %v3364
        %v3366 = vrot.slane %v3334, %v3365
        %v3375 = vmul.f32 %v3338, %v733
        %v3376 = vmul.f32 %v3342, %v733
        %v3377 = vmul.f32 %v3346, %v733
        %v3378 = vmul.f32 %v3350, %v733
        %v3379 = vmul.f32 %v3354, %v733
        %v3380 = vmul.f32 %v3358, %v733
        %v3381 = vmul.f32 %v3362, %v733
        %v3382 = vmul.f32 %v3366, %v733
        %v3383 = vadd.f32 %v3277, %v3375
        %v3384 = vadd.f32 %v3278, %v3376
        %v3385 = vadd.f32 %v3279, %v3377
        %v3386 = vadd.f32 %v3280, %v3378
        %v3387 = vadd.f32 %v3281, %v3379
        %v3388 = vadd.f32 %v3282, %v3380
        %v3389 = vadd.f32 %v3283, %v3381
        %v3390 = vadd.f32 %v3284, %v3382
        %v3392 = vcombine.high %v637, %v637
        %v3394 = vunpack.c.l.s4 1966171168
        %v3395 = vunpack.c.0.s8 %v3394
        %v3396 = vlaneseq
        %v3397 = vshrl.u32 %v3396, 7
        %v3398 = vsub.s32 %v3395, %v3397
        %v3399 = vrot.slane %v637, %v3398
        %v3401 = vunpack.c.l.s4 1966171168
        %v3402 = vunpack.c.0.s8 %v3401
        %v3403 = vlaneseq
        %v3404 = vshrl.u32 %v3403, 7
        %v3405 = vsub.s32 %v3402, %v3404
        %v3406 = vrot.slane %v3392, %v3405
        %v3407 = vcombine.high %v3399, %v3399
        %v3408 = vcombine.high %v3406, %v3406
        %v3410 = vunpack.c.l.s4 1966171168
        %v3411 = vunpack.c.0.s8 %v3410
        %v3412 = vlaneseq
        %v3413 = vshrl.u32 %v3412, 7
        %v3414 = vsub.s32 %v3411, %v3413
        %v3415 = vrot.slane %v3399, %v3414
        %v3417 = vunpack.c.l.s4 1966171168
        %v3418 = vunpack.c.0.s8 %v3417
        %v3419 = vlaneseq
        %v3420 = vshrl.u32 %v3419, 7
        %v3421 = vsub.s32 %v3418, %v3420
        %v3422 = vrot.slane %v3406, %v3421
        %v3424 = vunpack.c.l.s4 1966171168
        %v3425 = vunpack.c.0.s8 %v3424
        %v3426 = vlaneseq
        %v3427 = vshrl.u32 %v3426, 7
        %v3428 = vsub.s32 %v3425, %v3427
        %v3429 = vrot.slane %v3407, %v3428
        %v3431 = vunpack.c.l.s4 1966171168
        %v3432 = vunpack.c.0.s8 %v3431
        %v3433 = vlaneseq
        %v3434 = vshrl.u32 %v3433, 7
        %v3435 = vsub.s32 %v3432, %v3434
        %v3436 = vrot.slane %v3408, %v3435
        %v3437 = vcombine.high %v3415, %v3415
        %v3438 = vcombine.high %v3422, %v3422
        %v3439 = vcombine.high %v3429, %v3429
        %v3440 = vcombine.high %v3436, %v3436
        %v3441 = vlaneseq
        %v3442 = vshrl.u32 %v3441, 7
        %v3443 = vsub.s32 0, %v3442
        %v3444 = vrot.slane %v3415, %v3443
        %v3445 = vlaneseq
        %v3446 = vshrl.u32 %v3445, 7
        %v3447 = vsub.s32 0, %v3446
        %v3448 = vrot.slane %v3429, %v3447
        %v3449 = vlaneseq
        %v3450 = vshrl.u32 %v3449, 7
        %v3451 = vsub.s32 0, %v3450
        %v3452 = vrot.slane %v3437, %v3451
        %v3453 = vlaneseq
        %v3454 = vshrl.u32 %v3453, 7
        %v3455 = vsub.s32 0, %v3454
        %v3456 = vrot.slane %v3439, %v3455
        %v3457 = vlaneseq
        %v3458 = vshrl.u32 %v3457, 7
        %v3459 = vsub.s32 0, %v3458
        %v3460 = vrot.slane %v3422, %v3459
        %v3461 = vlaneseq
        %v3462 = vshrl.u32 %v3461, 7
        %v3463 = vsub.s32 0, %v3462
        %v3464 = vrot.slane %v3436, %v3463
        %v3465 = vlaneseq
        %v3466 = vshrl.u32 %v3465, 7
        %v3467 = vsub.s32 0, %v3466
        %v3468 = vrot.slane %v3438, %v3467
        %v3469 = vlaneseq
        %v3470 = vshrl.u32 %v3469, 7
        %v3471 = vsub.s32 0, %v3470
        %v3472 = vrot.slane %v3440, %v3471
        %v3481 = vmul.f32 %v3444, %v734
        %v3482 = vmul.f32 %v3448, %v734
        %v3483 = vmul.f32 %v3452, %v734
        %v3484 = vmul.f32 %v3456, %v734
        %v3485 = vmul.f32 %v3460, %v734
        %v3486 = vmul.f32 %v3464, %v734
        %v3487 = vmul.f32 %v3468, %v734
        %v3488 = vmul.f32 %v3472, %v734
        %v3489 = vadd.f32 %v3383, %v3481
        %v3490 = vadd.f32 %v3384, %v3482
        %v3491 = vadd.f32 %v3385, %v3483
        %v3492 = vadd.f32 %v3386, %v3484
        %v3493 = vadd.f32 %v3387, %v3485
        %v3494 = vadd.f32 %v3388, %v3486
        %v3495 = vadd.f32 %v3389, %v3487
        %v3496 = vadd.f32 %v3390, %v3488
        %v3498 = vcombine.high %v638, %v638
        %v3500 = vunpack.c.l.s4 1966171168
        %v3501 = vunpack.c.0.s8 %v3500
        %v3502 = vlaneseq
        %v3503 = vshrl.u32 %v3502, 7
        %v3504 = vsub.s32 %v3501, %v3503
        %v3505 = vrot.slane %v638, %v3504
        %v3507 = vunpack.c.l.s4 1966171168
        %v3508 = vunpack.c.0.s8 %v3507
        %v3509 = vlaneseq
        %v3510 = vshrl.u32 %v3509, 7
        %v3511 = vsub.s32 %v3508, %v3510
        %v3512 = vrot.slane %v3498, %v3511
        %v3513 = vcombine.high %v3505, %v3505
        %v3514 = vcombine.high %v3512, %v3512
        %v3516 = vunpack.c.l.s4 1966171168
        %v3517 = vunpack.c.0.s8 %v3516
        %v3518 = vlaneseq
        %v3519 = vshrl.u32 %v3518, 7
        %v3520 = vsub.s32 %v3517, %v3519
        %v3521 = vrot.slane %v3505, %v3520
        %v3523 = vunpack.c.l.s4 1966171168
        %v3524 = vunpack.c.0.s8 %v3523
        %v3525 = vlaneseq
        %v3526 = vshrl.u32 %v3525, 7
        %v3527 = vsub.s32 %v3524, %v3526
        %v3528 = vrot.slane %v3512, %v3527
        %v3530 = vunpack.c.l.s4 1966171168
        %v3531 = vunpack.c.0.s8 %v3530
        %v3532 = vlaneseq
        %v3533 = vshrl.u32 %v3532, 7
        %v3534 = vsub.s32 %v3531, %v3533
        %v3535 = vrot.slane %v3513, %v3534
        %v3537 = vunpack.c.l.s4 1966171168
        %v3538 = vunpack.c.0.s8 %v3537
        %v3539 = vlaneseq
        %v3540 = vshrl.u32 %v3539, 7
        %v3541 = vsub.s32 %v3538, %v3540
        %v3542 = vrot.slane %v3514, %v3541
        %v3543 = vcombine.high %v3521, %v3521
        %v3544 = vcombine.high %v3528, %v3528
        %v3545 = vcombine.high %v3535, %v3535
        %v3546 = vcombine.high %v3542, %v3542
        %v3547 = vlaneseq
        %v3548 = vshrl.u32 %v3547, 7
        %v3549 = vsub.s32 0, %v3548
        %v3550 = vrot.slane %v3521, %v3549
        %v3551 = vlaneseq
        %v3552 = vshrl.u32 %v3551, 7
        %v3553 = vsub.s32 0, %v3552
        %v3554 = vrot.slane %v3535, %v3553
        %v3555 = vlaneseq
        %v3556 = vshrl.u32 %v3555, 7
        %v3557 = vsub.s32 0, %v3556
        %v3558 = vrot.slane %v3543, %v3557
        %v3559 = vlaneseq
        %v3560 = vshrl.u32 %v3559, 7
        %v3561 = vsub.s32 0, %v3560
        %v3562 = vrot.slane %v3545, %v3561
        %v3563 = vlaneseq
        %v3564 = vshrl.u32 %v3563, 7
        %v3565 = vsub.s32 0, %v3564
        %v3566 = vrot.slane %v3528, %v3565
        %v3567 = vlaneseq
        %v3568 = vshrl.u32 %v3567, 7
        %v3569 = vsub.s32 0, %v3568
        %v3570 = vrot.slane %v3542, %v3569
        %v3571 = vlaneseq
        %v3572 = vshrl.u32 %v3571, 7
        %v3573 = vsub.s32 0, %v3572
        %v3574 = vrot.slane %v3544, %v3573
        %v3575 = vlaneseq
        %v3576 = vshrl.u32 %v3575, 7
        %v3577 = vsub.s32 0, %v3576
        %v3578 = vrot.slane %v3546, %v3577
        %v3587 = vmul.f32 %v3550, %v735
        %v3588 = vmul.f32 %v3554, %v735
        %v3589 = vmul.f32 %v3558, %v735
        %v3590 = vmul.f32 %v3562, %v735
        %v3591 = vmul.f32 %v3566, %v735
        %v3592 = vmul.f32 %v3570, %v735
        %v3593 = vmul.f32 %v3574, %v735
        %v3594 = vmul.f32 %v3578, %v735
        %v3595 = vadd.f32 %v3489, %v3587
        %v3596 = vadd.f32 %v3490, %v3588
        %v3597 = vadd.f32 %v3491, %v3589
        %v3598 = vadd.f32 %v3492, %v3590
        %v3599 = vadd.f32 %v3493, %v3591
        %v3600 = vadd.f32 %v3494, %v3592
        %v3601 = vadd.f32 %v3495, %v3593
        %v3602 = vadd.f32 %v3496, %v3594
        %v3604 = vcombine.high %v639, %v639
        %v3606 = vunpack.c.l.s4 1966171168
        %v3607 = vunpack.c.0.s8 %v3606
        %v3608 = vlaneseq
        %v3609 = vshrl.u32 %v3608, 7
        %v3610 = vsub.s32 %v3607, %v3609
        %v3611 = vrot.slane %v639, %v3610
        %v3613 = vunpack.c.l.s4 1966171168
        %v3614 = vunpack.c.0.s8 %v3613
        %v3615 = vlaneseq
        %v3616 = vshrl.u32 %v3615, 7
        %v3617 = vsub.s32 %v3614, %v3616
        %v3618 = vrot.slane %v3604, %v3617
        %v3619 = vcombine.high %v3611, %v3611
        %v3620 = vcombine.high %v3618, %v3618
        %v3622 = vunpack.c.l.s4 1966171168
        %v3623 = vunpack.c.0.s8 %v3622
        %v3624 = vlaneseq
        %v3625 = vshrl.u32 %v3624, 7
        %v3626 = vsub.s32 %v3623, %v3625
        %v3627 = vrot.slane %v3611, %v3626
        %v3629 = vunpack.c.l.s4 1966171168
        %v3630 = vunpack.c.0.s8 %v3629
        %v3631 = vlaneseq
        %v3632 = vshrl.u32 %v3631, 7
        %v3633 = vsub.s32 %v3630, %v3632
        %v3634 = vrot.slane %v3618, %v3633
        %v3636 = vunpack.c.l.s4 1966171168
        %v3637 = vunpack.c.0.s8 %v3636
        %v3638 = vlaneseq
        %v3639 = vshrl.u32 %v3638, 7
        %v3640 = vsub.s32 %v3637, %v3639
        %v3641 = vrot.slane %v3619, %v3640
        %v3643 = vunpack.c.l.s4 1966171168
        %v3644 = vunpack.c.0.s8 %v3643
        %v3645 = vlaneseq
        %v3646 = vshrl.u32 %v3645, 7
        %v3647 = vsub.s32 %v3644, %v3646
        %v3648 = vrot.slane %v3620, %v3647
        %v3649 = vcombine.high %v3627, %v3627
        %v3650 = vcombine.high %v3634, %v3634
        %v3651 = vcombine.high %v3641, %v3641
        %v3652 = vcombine.high %v3648, %v3648
        %v3653 = vlaneseq
        %v3654 = vshrl.u32 %v3653, 7
        %v3655 = vsub.s32 0, %v3654
        %v3656 = vrot.slane %v3627, %v3655
        %v3657 = vlaneseq
        %v3658 = vshrl.u32 %v3657, 7
        %v3659 = vsub.s32 0, %v3658
        %v3660 = vrot.slane %v3641, %v3659
        %v3661 = vlaneseq
        %v3662 = vshrl.u32 %v3661, 7
        %v3663 = vsub.s32 0, %v3662
        %v3664 = vrot.slane %v3649, %v3663
        %v3665 = vlaneseq
        %v3666 = vshrl.u32 %v3665, 7
        %v3667 = vsub.s32 0, %v3666
        %v3668 = vrot.slane %v3651, %v3667
        %v3669 = vlaneseq
        %v3670 = vshrl.u32 %v3669, 7
        %v3671 = vsub.s32 0, %v3670
        %v3672 = vrot.slane %v3634, %v3671
        %v3673 = vlaneseq
        %v3674 = vshrl.u32 %v3673, 7
        %v3675 = vsub.s32 0, %v3674
        %v3676 = vrot.slane %v3648, %v3675
        %v3677 = vlaneseq
        %v3678 = vshrl.u32 %v3677, 7
        %v3679 = vsub.s32 0, %v3678
        %v3680 = vrot.slane %v3650, %v3679
        %v3681 = vlaneseq
        %v3682 = vshrl.u32 %v3681, 7
        %v3683 = vsub.s32 0, %v3682
        %v3684 = vrot.slane %v3652, %v3683
        %v3693 = vmul.f32 %v3656, %v736
        %v3694 = vmul.f32 %v3660, %v736
        %v3695 = vmul.f32 %v3664, %v736
        %v3696 = vmul.f32 %v3668, %v736
        %v3697 = vmul.f32 %v3672, %v736
        %v3698 = vmul.f32 %v3676, %v736
        %v3699 = vmul.f32 %v3680, %v736
        %v3700 = vmul.f32 %v3684, %v736
        %v3701 = vadd.f32 %v3595, %v3693
        %v3702 = vadd.f32 %v3596, %v3694
        %v3703 = vadd.f32 %v3597, %v3695
        %v3704 = vadd.f32 %v3598, %v3696
        %v3705 = vadd.f32 %v3599, %v3697
        %v3706 = vadd.f32 %v3600, %v3698
        %v3707 = vadd.f32 %v3601, %v3699
        %v3708 = vadd.f32 %v3602, %v3700
        %v3710 = vcombine.high %v640, %v640
        %v3712 = vunpack.c.l.s4 1966171168
        %v3713 = vunpack.c.0.s8 %v3712
        %v3714 = vlaneseq
        %v3715 = vshrl.u32 %v3714, 7
        %v3716 = vsub.s32 %v3713, %v3715
        %v3717 = vrot.slane %v640, %v3716
        %v3719 = vunpack.c.l.s4 1966171168
        %v3720 = vunpack.c.0.s8 %v3719
        %v3721 = vlaneseq
        %v3722 = vshrl.u32 %v3721, 7
        %v3723 = vsub.s32 %v3720, %v3722
        %v3724 = vrot.slane %v3710, %v3723
        %v3725 = vcombine.high %v3717, %v3717
        %v3726 = vcombine.high %v3724, %v3724
        %v3728 = vunpack.c.l.s4 1966171168
        %v3729 = vunpack.c.0.s8 %v3728
        %v3730 = vlaneseq
        %v3731 = vshrl.u32 %v3730, 7
        %v3732 = vsub.s32 %v3729, %v3731
        %v3733 = vrot.slane %v3717, %v3732
        %v3735 = vunpack.c.l.s4 1966171168
        %v3736 = vunpack.c.0.s8 %v3735
        %v3737 = vlaneseq
        %v3738 = vshrl.u32 %v3737, 7
        %v3739 = vsub.s32 %v3736, %v3738
        %v3740 = vrot.slane %v3724, %v3739
        %v3742 = vunpack.c.l.s4 1966171168
        %v3743 = vunpack.c.0.s8 %v3742
        %v3744 = vlaneseq
        %v3745 = vshrl.u32 %v3744, 7
        %v3746 = vsub.s32 %v3743, %v3745
        %v3747 = vrot.slane %v3725, %v3746
        %v3749 = vunpack.c.l.s4 1966171168
        %v3750 = vunpack.c.0.s8 %v3749
        %v3751 = vlaneseq
        %v3752 = vshrl.u32 %v3751, 7
        %v3753 = vsub.s32 %v3750, %v3752
        %v3754 = vrot.slane %v3726, %v3753
        %v3755 = vcombine.high %v3733, %v3733
        %v3756 = vcombine.high %v3740, %v3740
        %v3757 = vcombine.high %v3747, %v3747
        %v3758 = vcombine.high %v3754, %v3754
        %v3759 = vlaneseq
        %v3760 = vshrl.u32 %v3759, 7
        %v3761 = vsub.s32 0, %v3760
        %v3762 = vrot.slane %v3733, %v3761
        %v3763 = vlaneseq
        %v3764 = vshrl.u32 %v3763, 7
        %v3765 = vsub.s32 0, %v3764
        %v3766 = vrot.slane %v3747, %v3765
        %v3767 = vlaneseq
        %v3768 = vshrl.u32 %v3767, 7
        %v3769 = vsub.s32 0, %v3768
        %v3770 = vrot.slane %v3755, %v3769
        %v3771 = vlaneseq
        %v3772 = vshrl.u32 %v3771, 7
        %v3773 = vsub.s32 0, %v3772
        %v3774 = vrot.slane %v3757, %v3773
        %v3775 = vlaneseq
        %v3776 = vshrl.u32 %v3775, 7
        %v3777 = vsub.s32 0, %v3776
        %v3778 = vrot.slane %v3740, %v3777
        %v3779 = vlaneseq
        %v3780 = vshrl.u32 %v3779, 7
        %v3781 = vsub.s32 0, %v3780
        %v3782 = vrot.slane %v3754, %v3781
        %v3783 = vlaneseq
        %v3784 = vshrl.u32 %v3783, 7
        %v3785 = vsub.s32 0, %v3784
        %v3786 = vrot.slane %v3756, %v3785
        %v3787 = vlaneseq
        %v3788 = vshrl.u32 %v3787, 7
        %v3789 = vsub.s32 0, %v3788
        %v3790 = vrot.slane %v3758, %v3789
        %v3799 = vmul.f32 %v3762, %v737
        %v3800 = vmul.f32 %v3766, %v737
        %v3801 = vmul.f32 %v3770, %v737
        %v3802 = vmul.f32 %v3774, %v737
        %v3803 = vmul.f32 %v3778, %v737
        %v3804 = vmul.f32 %v3782, %v737
        %v3805 = vmul.f32 %v3786, %v737
        %v3806 = vmul.f32 %v3790, %v737
        %v3807 = vadd.f32 %v3701, %v3799
        %v3808 = vadd.f32 %v3702, %v3800
        %v3809 = vadd.f32 %v3703, %v3801
        %v3810 = vadd.f32 %v3704, %v3802
        %v3811 = vadd.f32 %v3705, %v3803
        %v3812 = vadd.f32 %v3706, %v3804
        %v3813 = vadd.f32 %v3707, %v3805
        %v3814 = vadd.f32 %v3708, %v3806
        %v3816 = vcombine.high %v641, %v641
        %v3818 = vunpack.c.l.s4 1966171168
        %v3819 = vunpack.c.0.s8 %v3818
        %v3820 = vlaneseq
        %v3821 = vshrl.u32 %v3820, 7
        %v3822 = vsub.s32 %v3819, %v3821
        %v3823 = vrot.slane %v641, %v3822
        %v3825 = vunpack.c.l.s4 1966171168
        %v3826 = vunpack.c.0.s8 %v3825
        %v3827 = vlaneseq
        %v3828 = vshrl.u32 %v3827, 7
        %v3829 = vsub.s32 %v3826, %v3828
        %v3830 = vrot.slane %v3816, %v3829
        %v3831 = vcombine.high %v3823, %v3823
        %v3832 = vcombine.high %v3830, %v3830
        %v3834 = vunpack.c.l.s4 1966171168
        %v3835 = vunpack.c.0.s8 %v3834
        %v3836 = vlaneseq
        %v3837 = vshrl.u32 %v3836, 7
        %v3838 = vsub.s32 %v3835, %v3837
        %v3839 = vrot.slane %v3823, %v3838
        %v3841 = vunpack.c.l.s4 1966171168
        %v3842 = vunpack.c.0.s8 %v3841
        %v3843 = vlaneseq
        %v3844 = vshrl.u32 %v3843, 7
        %v3845 = vsub.s32 %v3842, %v3844
        %v3846 = vrot.slane %v3830, %v3845
        %v3848 = vunpack.c.l.s4 1966171168
        %v3849 = vunpack.c.0.s8 %v3848
        %v3850 = vlaneseq
        %v3851 = vshrl.u32 %v3850, 7
        %v3852 = vsub.s32 %v3849, %v3851
        %v3853 = vrot.slane %v3831, %v3852
        %v3855 = vunpack.c.l.s4 1966171168
        %v3856 = vunpack.c.0.s8 %v3855
        %v3857 = vlaneseq
        %v3858 = vshrl.u32 %v3857, 7
        %v3859 = vsub.s32 %v3856, %v3858
        %v3860 = vrot.slane %v3832, %v3859
        %v3861 = vcombine.high %v3839, %v3839
        %v3862 = vcombine.high %v3846, %v3846
        %v3863 = vcombine.high %v3853, %v3853
        %v3864 = vcombine.high %v3860, %v3860
        %v3865 = vlaneseq
        %v3866 = vshrl.u32 %v3865, 7
        %v3867 = vsub.s32 0, %v3866
        %v3868 = vrot.slane %v3839, %v3867
        %v3869 = vlaneseq
        %v3870 = vshrl.u32 %v3869, 7
        %v3871 = vsub.s32 0, %v3870
        %v3872 = vrot.slane %v3853, %v3871
        %v3873 = vlaneseq
        %v3874 = vshrl.u32 %v3873, 7
        %v3875 = vsub.s32 0, %v3874
        %v3876 = vrot.slane %v3861, %v3875
        %v3877 = vlaneseq
        %v3878 = vshrl.u32 %v3877, 7
        %v3879 = vsub.s32 0, %v3878
        %v3880 = vrot.slane %v3863, %v3879
        %v3881 = vlaneseq
        %v3882 = vshrl.u32 %v3881, 7
        %v3883 = vsub.s32 0, %v3882
        %v3884 = vrot.slane %v3846, %v3883
        %v3885 = vlaneseq
        %v3886 = vshrl.u32 %v3885, 7
        %v3887 = vsub.s32 0, %v3886
        %v3888 = vrot.slane %v3860, %v3887
        %v3889 = vlaneseq
        %v3890 = vshrl.u32 %v3889, 7
        %v3891 = vsub.s32 0, %v3890
        %v3892 = vrot.slane %v3862, %v3891
        %v3893 = vlaneseq
        %v3894 = vshrl.u32 %v3893, 7
        %v3895 = vsub.s32 0, %v3894
        %v3896 = vrot.slane %v3864, %v3895
        %v3905 = vmul.f32 %v3868, %v738
        %v3906 = vmul.f32 %v3872, %v738
        %v3907 = vmul.f32 %v3876, %v738
        %v3908 = vmul.f32 %v3880, %v738
        %v3909 = vmul.f32 %v3884, %v738
        %v3910 = vmul.f32 %v3888, %v738
        %v3911 = vmul.f32 %v3892, %v738
        %v3912 = vmul.f32 %v3896, %v738
        %v3913 = vadd.f32 %v3807, %v3905
        %v3914 = vadd.f32 %v3808, %v3906
        %v3915 = vadd.f32 %v3809, %v3907
        %v3916 = vadd.f32 %v3810, %v3908
        %v3917 = vadd.f32 %v3811, %v3909
        %v3918 = vadd.f32 %v3812, %v3910
        %v3919 = vadd.f32 %v3813, %v3911
        %v3920 = vadd.f32 %v3814, %v3912
        %v3922 = vcombine.high %v642, %v642
        %v3924 = vunpack.c.l.s4 1966171168
        %v3925 = vunpack.c.0.s8 %v3924
        %v3926 = vlaneseq
        %v3927 = vshrl.u32 %v3926, 7
        %v3928 = vsub.s32 %v3925, %v3927
        %v3929 = vrot.slane %v642, %v3928
        %v3931 = vunpack.c.l.s4 1966171168
        %v3932 = vunpack.c.0.s8 %v3931
        %v3933 = vlaneseq
        %v3934 = vshrl.u32 %v3933, 7
        %v3935 = vsub.s32 %v3932, %v3934
        %v3936 = vrot.slane %v3922, %v3935
        %v3937 = vcombine.high %v3929, %v3929
        %v3938 = vcombine.high %v3936, %v3936
        %v3940 = vunpack.c.l.s4 1966171168
        %v3941 = vunpack.c.0.s8 %v3940
        %v3942 = vlaneseq
        %v3943 = vshrl.u32 %v3942, 7
        %v3944 = vsub.s32 %v3941, %v3943
        %v3945 = vrot.slane %v3929, %v3944
        %v3947 = vunpack.c.l.s4 1966171168
        %v3948 = vunpack.c.0.s8 %v3947
        %v3949 = vlaneseq
        %v3950 = vshrl.u32 %v3949, 7
        %v3951 = vsub.s32 %v3948, %v3950
        %v3952 = vrot.slane %v3936, %v3951
        %v3954 = vunpack.c.l.s4 1966171168
        %v3955 = vunpack.c.0.s8 %v3954
        %v3956 = vlaneseq
        %v3957 = vshrl.u32 %v3956, 7
        %v3958 = vsub.s32 %v3955, %v3957
        %v3959 = vrot.slane %v3937, %v3958
        %v3961 = vunpack.c.l.s4 1966171168
        %v3962 = vunpack.c.0.s8 %v3961
        %v3963 = vlaneseq
        %v3964 = vshrl.u32 %v3963, 7
        %v3965 = vsub.s32 %v3962, %v3964
        %v3966 = vrot.slane %v3938, %v3965
        %v3967 = vcombine.high %v3945, %v3945
        %v3968 = vcombine.high %v3952, %v3952
        %v3969 = vcombine.high %v3959, %v3959
        %v3970 = vcombine.high %v3966, %v3966
        %v3971 = vlaneseq
        %v3972 = vshrl.u32 %v3971, 7
        %v3973 = vsub.s32 0, %v3972
        %v3974 = vrot.slane %v3945, %v3973
        %v3975 = vlaneseq
        %v3976 = vshrl.u32 %v3975, 7
        %v3977 = vsub.s32 0, %v3976
        %v3978 = vrot.slane %v3959, %v3977
        %v3979 = vlaneseq
        %v3980 = vshrl.u32 %v3979, 7
        %v3981 = vsub.s32 0, %v3980
        %v3982 = vrot.slane %v3967, %v3981
        %v3983 = vlaneseq
        %v3984 = vshrl.u32 %v3983, 7
        %v3985 = vsub.s32 0, %v3984
        %v3986 = vrot.slane %v3969, %v3985
        %v3987 = vlaneseq
        %v3988 = vshrl.u32 %v3987, 7
        %v3989 = vsub.s32 0, %v3988
        %v3990 = vrot.slane %v3952, %v3989
        %v3991 = vlaneseq
        %v3992 = vshrl.u32 %v3991, 7
        %v3993 = vsub.s32 0, %v3992
        %v3994 = vrot.slane %v3966, %v3993
        %v3995 = vlaneseq
        %v3996 = vshrl.u32 %v3995, 7
        %v3997 = vsub.s32 0, %v3996
        %v3998 = vrot.slane %v3968, %v3997
        %v3999 = vlaneseq
        %v4000 = vshrl.u32 %v3999, 7
        %v4001 = vsub.s32 0, %v4000
        %v4002 = vrot.slane %v3970, %v4001
        %v4011 = vmul.f32 %v3974, %v739
        %v4012 = vmul.f32 %v3978, %v739
        %v4013 = vmul.f32 %v3982, %v739
        %v4014 = vmul.f32 %v3986, %v739
        %v4015 = vmul.f32 %v3990, %v739
        %v4016 = vmul.f32 %v3994, %v739
        %v4017 = vmul.f32 %v3998, %v739
        %v4018 = vmul.f32 %v4002, %v739
        %v4019 = vadd.f32 %v3913, %v4011
        %v4020 = vadd.f32 %v3914, %v4012
        %v4021 = vadd.f32 %v3915, %v4013
        %v4022 = vadd.f32 %v3916, %v4014
        %v4023 = vadd.f32 %v3917, %v4015
        %v4024 = vadd.f32 %v3918, %v4016
        %v4025 = vadd.f32 %v3919, %v4017
        %v4026 = vadd.f32 %v3920, %v4018
        %v4028 = vcombine.high %v643, %v643
        %v4030 = vunpack.c.l.s4 1966171168
        %v4031 = vunpack.c.0.s8 %v4030
        %v4032 = vlaneseq
        %v4033 = vshrl.u32 %v4032, 7
        %v4034 = vsub.s32 %v4031, %v4033
        %v4035 = vrot.slane %v643, %v4034
        %v4037 = vunpack.c.l.s4 1966171168
        %v4038 = vunpack.c.0.s8 %v4037
        %v4039 = vlaneseq
        %v4040 = vshrl.u32 %v4039, 7
        %v4041 = vsub.s32 %v4038, %v4040
        %v4042 = vrot.slane %v4028, %v4041
        %v4043 = vcombine.high %v4035, %v4035
        %v4044 = vcombine.high %v4042, %v4042
        %v4046 = vunpack.c.l.s4 1966171168
        %v4047 = vunpack.c.0.s8 %v4046
        %v4048 = vlaneseq
        %v4049 = vshrl.u32 %v4048, 7
        %v4050 = vsub.s32 %v4047, %v4049
        %v4051 = vrot.slane %v4035, %v4050
        %v4053 = vunpack.c.l.s4 1966171168
        %v4054 = vunpack.c.0.s8 %v4053
        %v4055 = vlaneseq
        %v4056 = vshrl.u32 %v4055, 7
        %v4057 = vsub.s32 %v4054, %v4056
        %v4058 = vrot.slane %v4042, %v4057
        %v4060 = vunpack.c.l.s4 1966171168
        %v4061 = vunpack.c.0.s8 %v4060
        %v4062 = vlaneseq
        %v4063 = vshrl.u32 %v4062, 7
        %v4064 = vsub.s32 %v4061, %v4063
        %v4065 = vrot.slane %v4043, %v4064
        %v4067 = vunpack.c.l.s4 1966171168
        %v4068 = vunpack.c.0.s8 %v4067
        %v4069 = vlaneseq
        %v4070 = vshrl.u32 %v4069, 7
        %v4071 = vsub.s32 %v4068, %v4070
        %v4072 = vrot.slane %v4044, %v4071
        %v4073 = vcombine.high %v4051, %v4051
        %v4074 = vcombine.high %v4058, %v4058
        %v4075 = vcombine.high %v4065, %v4065
        %v4076 = vcombine.high %v4072, %v4072
        %v4077 = vlaneseq
        %v4078 = vshrl.u32 %v4077, 7
        %v4079 = vsub.s32 0, %v4078
        %v4080 = vrot.slane %v4051, %v4079
        %v4081 = vlaneseq
        %v4082 = vshrl.u32 %v4081, 7
        %v4083 = vsub.s32 0, %v4082
        %v4084 = vrot.slane %v4065, %v4083
        %v4085 = vlaneseq
        %v4086 = vshrl.u32 %v4085, 7
        %v4087 = vsub.s32 0, %v4086
        %v4088 = vrot.slane %v4073, %v4087
        %v4089 = vlaneseq
        %v4090 = vshrl.u32 %v4089, 7
        %v4091 = vsub.s32 0, %v4090
        %v4092 = vrot.slane %v4075, %v4091
        %v4093 = vlaneseq
        %v4094 = vshrl.u32 %v4093, 7
        %v4095 = vsub.s32 0, %v4094
        %v4096 = vrot.slane %v4058, %v4095
        %v4097 = vlaneseq
        %v4098 = vshrl.u32 %v4097, 7
        %v4099 = vsub.s32 0, %v4098
        %v4100 = vrot.slane %v4072, %v4099
        %v4101 = vlaneseq
        %v4102 = vshrl.u32 %v4101, 7
        %v4103 = vsub.s32 0, %v4102
        %v4104 = vrot.slane %v4074, %v4103
        %v4105 = vlaneseq
        %v4106 = vshrl.u32 %v4105, 7
        %v4107 = vsub.s32 0, %v4106
        %v4108 = vrot.slane %v4076, %v4107
        %v4117 = vmul.f32 %v4080, %v740
        %v4118 = vmul.f32 %v4084, %v740
        %v4119 = vmul.f32 %v4088, %v740
        %v4120 = vmul.f32 %v4092, %v740
        %v4121 = vmul.f32 %v4096, %v740
        %v4122 = vmul.f32 %v4100, %v740
        %v4123 = vmul.f32 %v4104, %v740
        %v4124 = vmul.f32 %v4108, %v740
        %v4125 = vadd.f32 %v4019, %v4117
        %v4126 = vadd.f32 %v4020, %v4118
        %v4127 = vadd.f32 %v4021, %v4119
        %v4128 = vadd.f32 %v4022, %v4120
        %v4129 = vadd.f32 %v4023, %v4121
        %v4130 = vadd.f32 %v4024, %v4122
        %v4131 = vadd.f32 %v4025, %v4123
        %v4132 = vadd.f32 %v4026, %v4124
        %v4133 = vlaneseq
        %v4134 = vshrl.u32 %v4133, 7
        %v4135 = vrot.slane %v4125, 7
        %v4136 = vrot.slane %v4126, 7
        %v4137 = vrot.slane %v4127, 7
        %v4138 = vrot.slane %v4128, 7
        %v4139 = vrot.slane %v4129, 7
        %v4140 = vrot.slane %v4130, 7
        %v4141 = vrot.slane %v4131, 7
        %vm4142 = vcmp.ge.s32.totalorder %v4134, 1
        %v4143 = vsel %vm4142, 1, 0
        %vm4144 = vcmp.eq.s32.totalorder %v4143, 1
        %v4145 = vsel %vm4144, 0.0, 0.0
        %v4146 = vsel %vm4144, %v4135, 0.0
        %v4147 = vsel %vm4144, %v4136, 0.0
        %v4148 = vsel %vm4144, %v4137, 0.0
        %v4149 = vsel %vm4144, %v4138, 0.0
        %v4150 = vsel %vm4144, %v4139, 0.0
        %v4151 = vsel %vm4144, %v4140, 0.0
        %v4152 = vsel %vm4144, %v4141, 0.0
        %s4153 = sld [smem:[#allocation3]]
        %v4154 = vstv %s4153
        %v4155 = vmul.f32 %v4145, %v4154
        %v4156 = vmul.f32 %v4146, %v4154
        %v4157 = vmul.f32 %v4147, %v4154
        %v4158 = vmul.f32 %v4148, %v4154
        %v4159 = vmul.f32 %v4149, %v4154
        %v4160 = vmul.f32 %v4150, %v4154
        %v4161 = vmul.f32 %v4151, %v4154
        %v4162 = vmul.f32 %v4152, %v4154
        %s4163 = sld [smem:[#allocation3 + $0x80]]
        %v4164 = vstv %s4163
        %v4165 = vmul.f32 %v4145, %v4164
        %v4166 = vmul.f32 %v4146, %v4164
        %v4167 = vmul.f32 %v4147, %v4164
        %v4168 = vmul.f32 %v4148, %v4164
        %v4169 = vmul.f32 %v4149, %v4164
        %v4170 = vmul.f32 %v4150, %v4164
        %v4171 = vmul.f32 %v4151, %v4164
        %v4172 = vmul.f32 %v4152, %v4164
        %s4173 = sld [smem:[#allocation3 + $0x100]]
        %v4174 = vstv %s4173
        %v4175 = vmul.f32 %v4145, %v4174
        %v4176 = vmul.f32 %v4146, %v4174
        %v4177 = vmul.f32 %v4147, %v4174
        %v4178 = vmul.f32 %v4148, %v4174
        %v4179 = vmul.f32 %v4149, %v4174
        %v4180 = vmul.f32 %v4150, %v4174
        %v4181 = vmul.f32 %v4151, %v4174
        %v4182 = vmul.f32 %v4152, %v4174
        %s4183 = sld [smem:[#allocation3 + $0x180]]
        %v4184 = vstv %s4183
        %v4185 = vmul.f32 %v4145, %v4184
        %v4186 = vmul.f32 %v4146, %v4184
        %v4187 = vmul.f32 %v4147, %v4184
        %v4188 = vmul.f32 %v4148, %v4184
        %v4189 = vmul.f32 %v4149, %v4184
        %v4190 = vmul.f32 %v4150, %v4184
        %v4191 = vmul.f32 %v4151, %v4184
        %v4192 = vmul.f32 %v4152, %v4184
        %s4193 = sld [smem:[#allocation3 + $0x1]]
        %v4194 = vstv %s4193
        %v4195 = vmul.f32 %v4194, 0.0
        %v4196 = vmul.f32 %v4125, %v4194
        %v4197 = vmul.f32 %v4126, %v4194
        %v4198 = vmul.f32 %v4127, %v4194
        %v4199 = vmul.f32 %v4128, %v4194
        %v4200 = vmul.f32 %v4129, %v4194
        %v4201 = vmul.f32 %v4130, %v4194
        %v4202 = vmul.f32 %v4131, %v4194
        %v4203 = vadd.f32 %v4155, %v4195
        %v4204 = vadd.f32 %v4156, %v4196
        %v4205 = vadd.f32 %v4157, %v4197
        %v4206 = vadd.f32 %v4158, %v4198
        %v4207 = vadd.f32 %v4159, %v4199
        %v4208 = vadd.f32 %v4160, %v4200
        %v4209 = vadd.f32 %v4161, %v4201
        %v4210 = vadd.f32 %v4162, %v4202
        %s4211 = sld [smem:[#allocation3 + $0x81]]
        %v4212 = vstv %s4211
        %v4213 = vmul.f32 %v4212, 0.0
        %v4214 = vmul.f32 %v4125, %v4212
        %v4215 = vmul.f32 %v4126, %v4212
        %v4216 = vmul.f32 %v4127, %v4212
        %v4217 = vmul.f32 %v4128, %v4212
        %v4218 = vmul.f32 %v4129, %v4212
        %v4219 = vmul.f32 %v4130, %v4212
        %v4220 = vmul.f32 %v4131, %v4212
        %v4221 = vadd.f32 %v4165, %v4213
        %v4222 = vadd.f32 %v4166, %v4214
        %v4223 = vadd.f32 %v4167, %v4215
        %v4224 = vadd.f32 %v4168, %v4216
        %v4225 = vadd.f32 %v4169, %v4217
        %v4226 = vadd.f32 %v4170, %v4218
        %v4227 = vadd.f32 %v4171, %v4219
        %v4228 = vadd.f32 %v4172, %v4220
        %s4229 = sld [smem:[#allocation3 + $0x101]]
        %v4230 = vstv %s4229
        %v4231 = vmul.f32 %v4230, 0.0
        %v4232 = vmul.f32 %v4125, %v4230
        %v4233 = vmul.f32 %v4126, %v4230
        %v4234 = vmul.f32 %v4127, %v4230
        %v4235 = vmul.f32 %v4128, %v4230
        %v4236 = vmul.f32 %v4129, %v4230
        %v4237 = vmul.f32 %v4130, %v4230
        %v4238 = vmul.f32 %v4131, %v4230
        %v4239 = vadd.f32 %v4175, %v4231
        %v4240 = vadd.f32 %v4176, %v4232
        %v4241 = vadd.f32 %v4177, %v4233
        %v4242 = vadd.f32 %v4178, %v4234
        %v4243 = vadd.f32 %v4179, %v4235
        %v4244 = vadd.f32 %v4180, %v4236
        %v4245 = vadd.f32 %v4181, %v4237
        %v4246 = vadd.f32 %v4182, %v4238
        %s4247 = sld [smem:[#allocation3 + $0x181]]
        %v4248 = vstv %s4247
        %v4249 = vmul.f32 %v4248, 0.0
        %v4250 = vmul.f32 %v4125, %v4248
        %v4251 = vmul.f32 %v4126, %v4248
        %v4252 = vmul.f32 %v4127, %v4248
        %v4253 = vmul.f32 %v4128, %v4248
        %v4254 = vmul.f32 %v4129, %v4248
        %v4255 = vmul.f32 %v4130, %v4248
        %v4256 = vmul.f32 %v4131, %v4248
        %v4257 = vadd.f32 %v4185, %v4249
        %v4258 = vadd.f32 %v4186, %v4250
        %v4259 = vadd.f32 %v4187, %v4251
        %v4260 = vadd.f32 %v4188, %v4252
        %v4261 = vadd.f32 %v4189, %v4253
        %v4262 = vadd.f32 %v4190, %v4254
        %v4263 = vadd.f32 %v4191, %v4255
        %v4264 = vadd.f32 %v4192, %v4256
        %v4265 = vrot.slane %v4125, 1
        %v4266 = vrot.slane %v4126, 1
        %v4267 = vrot.slane %v4127, 1
        %v4268 = vrot.slane %v4128, 1
        %v4269 = vrot.slane %v4129, 1
        %v4270 = vrot.slane %v4130, 1
        %v4271 = vrot.slane %v4131, 1
        %vm4272 = vcmp.lt.s32.totalorder %v4134, 7
        %v4273 = vsel %vm4272, 1, 0
        %vm4274 = vcmp.eq.s32.totalorder %v4273, 1
        %v4275 = vsel %vm4274, 0.0, 0.0
        %v4276 = vsel %vm4274, %v4265, 0.0
        %v4277 = vsel %vm4274, %v4266, 0.0
        %v4278 = vsel %vm4274, %v4267, 0.0
        %v4279 = vsel %vm4274, %v4268, 0.0
        %v4280 = vsel %vm4274, %v4269, 0.0
        %v4281 = vsel %vm4274, %v4270, 0.0
        %v4282 = vsel %vm4274, %v4271, 0.0
        %s4283 = sld [smem:[#allocation3 + $0x2]]
        %v4284 = vstv %s4283
        %v4285 = vmul.f32 %v4275, %v4284
        %v4286 = vmul.f32 %v4276, %v4284
        %v4287 = vmul.f32 %v4277, %v4284
        %v4288 = vmul.f32 %v4278, %v4284
        %v4289 = vmul.f32 %v4279, %v4284
        %v4290 = vmul.f32 %v4280, %v4284
        %v4291 = vmul.f32 %v4281, %v4284
        %v4292 = vmul.f32 %v4282, %v4284
        %v4293 = vadd.f32 %v4203, %v4285
        %v4294 = vadd.f32 %v4204, %v4286
        %v4295 = vadd.f32 %v4205, %v4287
        %v4296 = vadd.f32 %v4206, %v4288
        %v4297 = vadd.f32 %v4207, %v4289
        %v4298 = vadd.f32 %v4208, %v4290
        %v4299 = vadd.f32 %v4209, %v4291
        %v4300 = vadd.f32 %v4210, %v4292
        %s4301 = sld [smem:[#allocation3 + $0x82]]
        %v4302 = vstv %s4301
        %v4303 = vmul.f32 %v4275, %v4302
        %v4304 = vmul.f32 %v4276, %v4302
        %v4305 = vmul.f32 %v4277, %v4302
        %v4306 = vmul.f32 %v4278, %v4302
        %v4307 = vmul.f32 %v4279, %v4302
        %v4308 = vmul.f32 %v4280, %v4302
        %v4309 = vmul.f32 %v4281, %v4302
        %v4310 = vmul.f32 %v4282, %v4302
        %v4311 = vadd.f32 %v4221, %v4303
        %v4312 = vadd.f32 %v4222, %v4304
        %v4313 = vadd.f32 %v4223, %v4305
        %v4314 = vadd.f32 %v4224, %v4306
        %v4315 = vadd.f32 %v4225, %v4307
        %v4316 = vadd.f32 %v4226, %v4308
        %v4317 = vadd.f32 %v4227, %v4309
        %v4318 = vadd.f32 %v4228, %v4310
        %s4319 = sld [smem:[#allocation3 + $0x102]]
        %v4320 = vstv %s4319
        %v4321 = vmul.f32 %v4275, %v4320
        %v4322 = vmul.f32 %v4276, %v4320
        %v4323 = vmul.f32 %v4277, %v4320
        %v4324 = vmul.f32 %v4278, %v4320
        %v4325 = vmul.f32 %v4279, %v4320
        %v4326 = vmul.f32 %v4280, %v4320
        %v4327 = vmul.f32 %v4281, %v4320
        %v4328 = vmul.f32 %v4282, %v4320
        %v4329 = vadd.f32 %v4239, %v4321
        %v4330 = vadd.f32 %v4240, %v4322
        %v4331 = vadd.f32 %v4241, %v4323
        %v4332 = vadd.f32 %v4242, %v4324
        %v4333 = vadd.f32 %v4243, %v4325
        %v4334 = vadd.f32 %v4244, %v4326
        %v4335 = vadd.f32 %v4245, %v4327
        %v4336 = vadd.f32 %v4246, %v4328
        %s4337 = sld [smem:[#allocation3 + $0x182]]
        %v4338 = vstv %s4337
        %v4339 = vmul.f32 %v4275, %v4338
        %v4340 = vmul.f32 %v4276, %v4338
        %v4341 = vmul.f32 %v4277, %v4338
        %v4342 = vmul.f32 %v4278, %v4338
        %v4343 = vmul.f32 %v4279, %v4338
        %v4344 = vmul.f32 %v4280, %v4338
        %v4345 = vmul.f32 %v4281, %v4338
        %v4346 = vmul.f32 %v4282, %v4338
        %v4347 = vadd.f32 %v4257, %v4339
        %v4348 = vadd.f32 %v4258, %v4340
        %v4349 = vadd.f32 %v4259, %v4341
        %v4350 = vadd.f32 %v4260, %v4342
        %v4351 = vadd.f32 %v4261, %v4343
        %v4352 = vadd.f32 %v4262, %v4344
        %v4353 = vadd.f32 %v4263, %v4345
        %v4354 = vadd.f32 %v4264, %v4346
        %v4355 = vrot.slane %v4132, 7
        %v4356 = vsel %vm4144, %v4355, 0.0
        %s4357 = sld [smem:[#allocation3 + $0x3]]
        %v4358 = vstv %s4357
        %v4359 = vmul.f32 %v4146, %v4358
        %v4360 = vmul.f32 %v4147, %v4358
        %v4361 = vmul.f32 %v4148, %v4358
        %v4362 = vmul.f32 %v4149, %v4358
        %v4363 = vmul.f32 %v4150, %v4358
        %v4364 = vmul.f32 %v4151, %v4358
        %v4365 = vmul.f32 %v4152, %v4358
        %v4366 = vmul.f32 %v4356, %v4358
        %v4367 = vadd.f32 %v4293, %v4359
        %v4368 = vadd.f32 %v4294, %v4360
        %v4369 = vadd.f32 %v4295, %v4361
        %v4370 = vadd.f32 %v4296, %v4362
        %v4371 = vadd.f32 %v4297, %v4363
        %v4372 = vadd.f32 %v4298, %v4364
        %v4373 = vadd.f32 %v4299, %v4365
        %v4374 = vadd.f32 %v4300, %v4366
        %s4375 = sld [smem:[#allocation3 + $0x83]]
        %v4376 = vstv %s4375
        %v4377 = vmul.f32 %v4146, %v4376
        %v4378 = vmul.f32 %v4147, %v4376
        %v4379 = vmul.f32 %v4148, %v4376
        %v4380 = vmul.f32 %v4149, %v4376
        %v4381 = vmul.f32 %v4150, %v4376
        %v4382 = vmul.f32 %v4151, %v4376
        %v4383 = vmul.f32 %v4152, %v4376
        %v4384 = vmul.f32 %v4356, %v4376
        %v4385 = vadd.f32 %v4311, %v4377
        %v4386 = vadd.f32 %v4312, %v4378
        %v4387 = vadd.f32 %v4313, %v4379
        %v4388 = vadd.f32 %v4314, %v4380
        %v4389 = vadd.f32 %v4315, %v4381
        %v4390 = vadd.f32 %v4316, %v4382
        %v4391 = vadd.f32 %v4317, %v4383
        %v4392 = vadd.f32 %v4318, %v4384
        %s4393 = sld [smem:[#allocation3 + $0x103]]
        %v4394 = vstv %s4393
        %v4395 = vmul.f32 %v4146, %v4394
        %v4396 = vmul.f32 %v4147, %v4394
        %v4397 = vmul.f32 %v4148, %v4394
        %v4398 = vmul.f32 %v4149, %v4394
        %v4399 = vmul.f32 %v4150, %v4394
        %v4400 = vmul.f32 %v4151, %v4394
        %v4401 = vmul.f32 %v4152, %v4394
        %v4402 = vmul.f32 %v4356, %v4394
        %v4403 = vadd.f32 %v4329, %v4395
        %v4404 = vadd.f32 %v4330, %v4396
        %v4405 = vadd.f32 %v4331, %v4397
        %v4406 = vadd.f32 %v4332, %v4398
        %v4407 = vadd.f32 %v4333, %v4399
        %v4408 = vadd.f32 %v4334, %v4400
        %v4409 = vadd.f32 %v4335, %v4401
        %v4410 = vadd.f32 %v4336, %v4402
        %s4411 = sld [smem:[#allocation3 + $0x183]]
        %v4412 = vstv %s4411
        %v4413 = vmul.f32 %v4146, %v4412
        %v4414 = vmul.f32 %v4147, %v4412
        %v4415 = vmul.f32 %v4148, %v4412
        %v4416 = vmul.f32 %v4149, %v4412
        %v4417 = vmul.f32 %v4150, %v4412
        %v4418 = vmul.f32 %v4151, %v4412
        %v4419 = vmul.f32 %v4152, %v4412
        %v4420 = vmul.f32 %v4356, %v4412
        %v4421 = vadd.f32 %v4347, %v4413
        %v4422 = vadd.f32 %v4348, %v4414
        %v4423 = vadd.f32 %v4349, %v4415
        %v4424 = vadd.f32 %v4350, %v4416
        %v4425 = vadd.f32 %v4351, %v4417
        %v4426 = vadd.f32 %v4352, %v4418
        %v4427 = vadd.f32 %v4353, %v4419
        %v4428 = vadd.f32 %v4354, %v4420
        %s4429 = sld [smem:[#allocation3 + $0x4]]
        %v4430 = vstv %s4429
        %v4431 = vmul.f32 %v4125, %v4430
        %v4432 = vmul.f32 %v4126, %v4430
        %v4433 = vmul.f32 %v4127, %v4430
        %v4434 = vmul.f32 %v4128, %v4430
        %v4435 = vmul.f32 %v4129, %v4430
        %v4436 = vmul.f32 %v4130, %v4430
        %v4437 = vmul.f32 %v4131, %v4430
        %v4438 = vmul.f32 %v4132, %v4430
        %v4439 = vadd.f32 %v4367, %v4431
        %v4440 = vadd.f32 %v4368, %v4432
        %v4441 = vadd.f32 %v4369, %v4433
        %v4442 = vadd.f32 %v4370, %v4434
        %v4443 = vadd.f32 %v4371, %v4435
        %v4444 = vadd.f32 %v4372, %v4436
        %v4445 = vadd.f32 %v4373, %v4437
        %v4446 = vadd.f32 %v4374, %v4438
        %s4447 = sld [smem:[#allocation3 + $0x84]]
        %v4448 = vstv %s4447
        %v4449 = vmul.f32 %v4125, %v4448
        %v4450 = vmul.f32 %v4126, %v4448
        %v4451 = vmul.f32 %v4127, %v4448
        %v4452 = vmul.f32 %v4128, %v4448
        %v4453 = vmul.f32 %v4129, %v4448
        %v4454 = vmul.f32 %v4130, %v4448
        %v4455 = vmul.f32 %v4131, %v4448
        %v4456 = vmul.f32 %v4132, %v4448
        %v4457 = vadd.f32 %v4385, %v4449
        %v4458 = vadd.f32 %v4386, %v4450
        %v4459 = vadd.f32 %v4387, %v4451
        %v4460 = vadd.f32 %v4388, %v4452
        %v4461 = vadd.f32 %v4389, %v4453
        %v4462 = vadd.f32 %v4390, %v4454
        %v4463 = vadd.f32 %v4391, %v4455
        %v4464 = vadd.f32 %v4392, %v4456
        %s4465 = sld [smem:[#allocation3 + $0x104]]
        %v4466 = vstv %s4465
        %v4467 = vmul.f32 %v4125, %v4466
        %v4468 = vmul.f32 %v4126, %v4466
        %v4469 = vmul.f32 %v4127, %v4466
        %v4470 = vmul.f32 %v4128, %v4466
        %v4471 = vmul.f32 %v4129, %v4466
        %v4472 = vmul.f32 %v4130, %v4466
        %v4473 = vmul.f32 %v4131, %v4466
        %v4474 = vmul.f32 %v4132, %v4466
        %v4475 = vadd.f32 %v4403, %v4467
        %v4476 = vadd.f32 %v4404, %v4468
        %v4477 = vadd.f32 %v4405, %v4469
        %v4478 = vadd.f32 %v4406, %v4470
        %v4479 = vadd.f32 %v4407, %v4471
        %v4480 = vadd.f32 %v4408, %v4472
        %v4481 = vadd.f32 %v4409, %v4473
        %v4482 = vadd.f32 %v4410, %v4474
        %s4483 = sld [smem:[#allocation3 + $0x184]]
        %v4484 = vstv %s4483
        %v4485 = vmul.f32 %v4125, %v4484
        %v4486 = vmul.f32 %v4126, %v4484
        %v4487 = vmul.f32 %v4127, %v4484
        %v4488 = vmul.f32 %v4128, %v4484
        %v4489 = vmul.f32 %v4129, %v4484
        %v4490 = vmul.f32 %v4130, %v4484
        %v4491 = vmul.f32 %v4131, %v4484
        %v4492 = vmul.f32 %v4132, %v4484
        %v4493 = vadd.f32 %v4421, %v4485
        %v4494 = vadd.f32 %v4422, %v4486
        %v4495 = vadd.f32 %v4423, %v4487
        %v4496 = vadd.f32 %v4424, %v4488
        %v4497 = vadd.f32 %v4425, %v4489
        %v4498 = vadd.f32 %v4426, %v4490
        %v4499 = vadd.f32 %v4427, %v4491
        %v4500 = vadd.f32 %v4428, %v4492
        %v4501 = vrot.slane %v4132, 1
        %v4502 = vsel %vm4274, %v4501, 0.0
        %s4503 = sld [smem:[#allocation3 + $0x5]]
        %v4504 = vstv %s4503
        %v4505 = vmul.f32 %v4276, %v4504
        %v4506 = vmul.f32 %v4277, %v4504
        %v4507 = vmul.f32 %v4278, %v4504
        %v4508 = vmul.f32 %v4279, %v4504
        %v4509 = vmul.f32 %v4280, %v4504
        %v4510 = vmul.f32 %v4281, %v4504
        %v4511 = vmul.f32 %v4282, %v4504
        %v4512 = vmul.f32 %v4502, %v4504
        %v4513 = vadd.f32 %v4439, %v4505
        %v4514 = vadd.f32 %v4440, %v4506
        %v4515 = vadd.f32 %v4441, %v4507
        %v4516 = vadd.f32 %v4442, %v4508
        %v4517 = vadd.f32 %v4443, %v4509
        %v4518 = vadd.f32 %v4444, %v4510
        %v4519 = vadd.f32 %v4445, %v4511
        %v4520 = vadd.f32 %v4446, %v4512
        %s4521 = sld [smem:[#allocation3 + $0x85]]
        %v4522 = vstv %s4521
        %v4523 = vmul.f32 %v4276, %v4522
        %v4524 = vmul.f32 %v4277, %v4522
        %v4525 = vmul.f32 %v4278, %v4522
        %v4526 = vmul.f32 %v4279, %v4522
        %v4527 = vmul.f32 %v4280, %v4522
        %v4528 = vmul.f32 %v4281, %v4522
        %v4529 = vmul.f32 %v4282, %v4522
        %v4530 = vmul.f32 %v4502, %v4522
        %v4531 = vadd.f32 %v4457, %v4523
        %v4532 = vadd.f32 %v4458, %v4524
        %v4533 = vadd.f32 %v4459, %v4525
        %v4534 = vadd.f32 %v4460, %v4526
        %v4535 = vadd.f32 %v4461, %v4527
        %v4536 = vadd.f32 %v4462, %v4528
        %v4537 = vadd.f32 %v4463, %v4529
        %v4538 = vadd.f32 %v4464, %v4530
        %s4539 = sld [smem:[#allocation3 + $0x105]]
        %v4540 = vstv %s4539
        %v4541 = vmul.f32 %v4276, %v4540
        %v4542 = vmul.f32 %v4277, %v4540
        %v4543 = vmul.f32 %v4278, %v4540
        %v4544 = vmul.f32 %v4279, %v4540
        %v4545 = vmul.f32 %v4280, %v4540
        %v4546 = vmul.f32 %v4281, %v4540
        %v4547 = vmul.f32 %v4282, %v4540
        %v4548 = vmul.f32 %v4502, %v4540
        %v4549 = vadd.f32 %v4475, %v4541
        %v4550 = vadd.f32 %v4476, %v4542
        %v4551 = vadd.f32 %v4477, %v4543
        %v4552 = vadd.f32 %v4478, %v4544
        %v4553 = vadd.f32 %v4479, %v4545
        %v4554 = vadd.f32 %v4480, %v4546
        %v4555 = vadd.f32 %v4481, %v4547
        %v4556 = vadd.f32 %v4482, %v4548
        %s4557 = sld [smem:[#allocation3 + $0x185]]
        %v4558 = vstv %s4557
        %v4559 = vmul.f32 %v4276, %v4558
        %v4560 = vmul.f32 %v4277, %v4558
        %v4561 = vmul.f32 %v4278, %v4558
        %v4562 = vmul.f32 %v4279, %v4558
        %v4563 = vmul.f32 %v4280, %v4558
        %v4564 = vmul.f32 %v4281, %v4558
        %v4565 = vmul.f32 %v4282, %v4558
        %v4566 = vmul.f32 %v4502, %v4558
        %v4567 = vadd.f32 %v4493, %v4559
        %v4568 = vadd.f32 %v4494, %v4560
        %v4569 = vadd.f32 %v4495, %v4561
        %v4570 = vadd.f32 %v4496, %v4562
        %v4571 = vadd.f32 %v4497, %v4563
        %v4572 = vadd.f32 %v4498, %v4564
        %v4573 = vadd.f32 %v4499, %v4565
        %v4574 = vadd.f32 %v4500, %v4566
        %s4575 = sld [smem:[#allocation3 + $0x6]]
        %v4576 = vstv %s4575
        %v4577 = vmul.f32 %v4147, %v4576
        %v4578 = vmul.f32 %v4148, %v4576
        %v4579 = vmul.f32 %v4149, %v4576
        %v4580 = vmul.f32 %v4150, %v4576
        %v4581 = vmul.f32 %v4151, %v4576
        %v4582 = vmul.f32 %v4152, %v4576
        %v4583 = vmul.f32 %v4356, %v4576
        %v4584 = vmul.f32 %v4145, %v4576
        %v4585 = vadd.f32 %v4513, %v4577
        %v4586 = vadd.f32 %v4514, %v4578
        %v4587 = vadd.f32 %v4515, %v4579
        %v4588 = vadd.f32 %v4516, %v4580
        %v4589 = vadd.f32 %v4517, %v4581
        %v4590 = vadd.f32 %v4518, %v4582
        %v4591 = vadd.f32 %v4519, %v4583
        %v4592 = vadd.f32 %v4520, %v4584
        %s4593 = sld [smem:[#allocation3 + $0x86]]
        %v4594 = vstv %s4593
        %v4595 = vmul.f32 %v4147, %v4594
        %v4596 = vmul.f32 %v4148, %v4594
        %v4597 = vmul.f32 %v4149, %v4594
        %v4598 = vmul.f32 %v4150, %v4594
        %v4599 = vmul.f32 %v4151, %v4594
        %v4600 = vmul.f32 %v4152, %v4594
        %v4601 = vmul.f32 %v4356, %v4594
        %v4602 = vmul.f32 %v4145, %v4594
        %v4603 = vadd.f32 %v4531, %v4595
        %v4604 = vadd.f32 %v4532, %v4596
        %v4605 = vadd.f32 %v4533, %v4597
        %v4606 = vadd.f32 %v4534, %v4598
        %v4607 = vadd.f32 %v4535, %v4599
        %v4608 = vadd.f32 %v4536, %v4600
        %v4609 = vadd.f32 %v4537, %v4601
        %v4610 = vadd.f32 %v4538, %v4602
        %s4611 = sld [smem:[#allocation3 + $0x106]]
        %v4612 = vstv %s4611
        %v4613 = vmul.f32 %v4147, %v4612
        %v4614 = vmul.f32 %v4148, %v4612
        %v4615 = vmul.f32 %v4149, %v4612
        %v4616 = vmul.f32 %v4150, %v4612
        %v4617 = vmul.f32 %v4151, %v4612
        %v4618 = vmul.f32 %v4152, %v4612
        %v4619 = vmul.f32 %v4356, %v4612
        %v4620 = vmul.f32 %v4145, %v4612
        %v4621 = vadd.f32 %v4549, %v4613
        %v4622 = vadd.f32 %v4550, %v4614
        %v4623 = vadd.f32 %v4551, %v4615
        %v4624 = vadd.f32 %v4552, %v4616
        %v4625 = vadd.f32 %v4553, %v4617
        %v4626 = vadd.f32 %v4554, %v4618
        %v4627 = vadd.f32 %v4555, %v4619
        %v4628 = vadd.f32 %v4556, %v4620
        %s4629 = sld [smem:[#allocation3 + $0x186]]
        %v4630 = vstv %s4629
        %v4631 = vmul.f32 %v4147, %v4630
        %v4632 = vmul.f32 %v4148, %v4630
        %v4633 = vmul.f32 %v4149, %v4630
        %v4634 = vmul.f32 %v4150, %v4630
        %v4635 = vmul.f32 %v4151, %v4630
        %v4636 = vmul.f32 %v4152, %v4630
        %v4637 = vmul.f32 %v4356, %v4630
        %v4638 = vmul.f32 %v4145, %v4630
        %v4639 = vadd.f32 %v4567, %v4631
        %v4640 = vadd.f32 %v4568, %v4632
        %v4641 = vadd.f32 %v4569, %v4633
        %v4642 = vadd.f32 %v4570, %v4634
        %v4643 = vadd.f32 %v4571, %v4635
        %v4644 = vadd.f32 %v4572, %v4636
        %v4645 = vadd.f32 %v4573, %v4637
        %v4646 = vadd.f32 %v4574, %v4638
        %s4647 = sld [smem:[#allocation3 + $0x7]]
        %v4648 = vstv %s4647
        %v4649 = vmul.f32 %v4126, %v4648
        %v4650 = vmul.f32 %v4127, %v4648
        %v4651 = vmul.f32 %v4128, %v4648
        %v4652 = vmul.f32 %v4129, %v4648
        %v4653 = vmul.f32 %v4130, %v4648
        %v4654 = vmul.f32 %v4131, %v4648
        %v4655 = vmul.f32 %v4132, %v4648
        %v4656 = vmul.f32 %v4648, 0.0
        %v4657 = vadd.f32 %v4585, %v4649
        %v4658 = vadd.f32 %v4586, %v4650
        %v4659 = vadd.f32 %v4587, %v4651
        %v4660 = vadd.f32 %v4588, %v4652
        %v4661 = vadd.f32 %v4589, %v4653
        %v4662 = vadd.f32 %v4590, %v4654
        %v4663 = vadd.f32 %v4591, %v4655
        %v4664 = vadd.f32 %v4592, %v4656
        %s4665 = sld [smem:[#allocation3 + $0x87]]
        %v4666 = vstv %s4665
        %v4667 = vmul.f32 %v4126, %v4666
        %v4668 = vmul.f32 %v4127, %v4666
        %v4669 = vmul.f32 %v4128, %v4666
        %v4670 = vmul.f32 %v4129, %v4666
        %v4671 = vmul.f32 %v4130, %v4666
        %v4672 = vmul.f32 %v4131, %v4666
        %v4673 = vmul.f32 %v4132, %v4666
        %v4674 = vmul.f32 %v4666, 0.0
        %v4675 = vadd.f32 %v4603, %v4667
        %v4676 = vadd.f32 %v4604, %v4668
        %v4677 = vadd.f32 %v4605, %v4669
        %v4678 = vadd.f32 %v4606, %v4670
        %v4679 = vadd.f32 %v4607, %v4671
        %v4680 = vadd.f32 %v4608, %v4672
        %v4681 = vadd.f32 %v4609, %v4673
        %v4682 = vadd.f32 %v4610, %v4674
        %s4683 = sld [smem:[#allocation3 + $0x107]]
        %v4684 = vstv %s4683
        %v4685 = vmul.f32 %v4126, %v4684
        %v4686 = vmul.f32 %v4127, %v4684
        %v4687 = vmul.f32 %v4128, %v4684
        %v4688 = vmul.f32 %v4129, %v4684
        %v4689 = vmul.f32 %v4130, %v4684
        %v4690 = vmul.f32 %v4131, %v4684
        %v4691 = vmul.f32 %v4132, %v4684
        %v4692 = vmul.f32 %v4684, 0.0
        %v4693 = vadd.f32 %v4621, %v4685
        %v4694 = vadd.f32 %v4622, %v4686
        %v4695 = vadd.f32 %v4623, %v4687
        %v4696 = vadd.f32 %v4624, %v4688
        %v4697 = vadd.f32 %v4625, %v4689
        %v4698 = vadd.f32 %v4626, %v4690
        %v4699 = vadd.f32 %v4627, %v4691
        %v4700 = vadd.f32 %v4628, %v4692
        %s4701 = sld [smem:[#allocation3 + $0x187]]
        %v4702 = vstv %s4701
        %v4703 = vmul.f32 %v4126, %v4702
        %v4704 = vmul.f32 %v4127, %v4702
        %v4705 = vmul.f32 %v4128, %v4702
        %v4706 = vmul.f32 %v4129, %v4702
        %v4707 = vmul.f32 %v4130, %v4702
        %v4708 = vmul.f32 %v4131, %v4702
        %v4709 = vmul.f32 %v4132, %v4702
        %v4710 = vmul.f32 %v4702, 0.0
        %v4711 = vadd.f32 %v4639, %v4703
        %v4712 = vadd.f32 %v4640, %v4704
        %v4713 = vadd.f32 %v4641, %v4705
        %v4714 = vadd.f32 %v4642, %v4706
        %v4715 = vadd.f32 %v4643, %v4707
        %v4716 = vadd.f32 %v4644, %v4708
        %v4717 = vadd.f32 %v4645, %v4709
        %v4718 = vadd.f32 %v4646, %v4710
        %s4719 = sld [smem:[#allocation3 + $0x8]]
        %v4720 = vstv %s4719
        %v4721 = vmul.f32 %v4277, %v4720
        %v4722 = vmul.f32 %v4278, %v4720
        %v4723 = vmul.f32 %v4279, %v4720
        %v4724 = vmul.f32 %v4280, %v4720
        %v4725 = vmul.f32 %v4281, %v4720
        %v4726 = vmul.f32 %v4282, %v4720
        %v4727 = vmul.f32 %v4502, %v4720
        %v4728 = vmul.f32 %v4275, %v4720
        %v4729 = vadd.f32 %v4657, %v4721
        %v4730 = vadd.f32 %v4658, %v4722
        %v4731 = vadd.f32 %v4659, %v4723
        %v4732 = vadd.f32 %v4660, %v4724
        %v4733 = vadd.f32 %v4661, %v4725
        %v4734 = vadd.f32 %v4662, %v4726
        %v4735 = vadd.f32 %v4663, %v4727
        %v4736 = vadd.f32 %v4664, %v4728
        %s4737 = sld [smem:[#allocation3 + $0x88]]
        %v4738 = vstv %s4737
        %v4739 = vmul.f32 %v4277, %v4738
        %v4740 = vmul.f32 %v4278, %v4738
        %v4741 = vmul.f32 %v4279, %v4738
        %v4742 = vmul.f32 %v4280, %v4738
        %v4743 = vmul.f32 %v4281, %v4738
        %v4744 = vmul.f32 %v4282, %v4738
        %v4745 = vmul.f32 %v4502, %v4738
        %v4746 = vmul.f32 %v4275, %v4738
        %v4747 = vadd.f32 %v4675, %v4739
        %v4748 = vadd.f32 %v4676, %v4740
        %v4749 = vadd.f32 %v4677, %v4741
        %v4750 = vadd.f32 %v4678, %v4742
        %v4751 = vadd.f32 %v4679, %v4743
        %v4752 = vadd.f32 %v4680, %v4744
        %v4753 = vadd.f32 %v4681, %v4745
        %v4754 = vadd.f32 %v4682, %v4746
        %s4755 = sld [smem:[#allocation3 + $0x108]]
        %v4756 = vstv %s4755
        %v4757 = vmul.f32 %v4277, %v4756
        %v4758 = vmul.f32 %v4278, %v4756
        %v4759 = vmul.f32 %v4279, %v4756
        %v4760 = vmul.f32 %v4280, %v4756
        %v4761 = vmul.f32 %v4281, %v4756
        %v4762 = vmul.f32 %v4282, %v4756
        %v4763 = vmul.f32 %v4502, %v4756
        %v4764 = vmul.f32 %v4275, %v4756
        %v4765 = vadd.f32 %v4693, %v4757
        %v4766 = vadd.f32 %v4694, %v4758
        %v4767 = vadd.f32 %v4695, %v4759
        %v4768 = vadd.f32 %v4696, %v4760
        %v4769 = vadd.f32 %v4697, %v4761
        %v4770 = vadd.f32 %v4698, %v4762
        %v4771 = vadd.f32 %v4699, %v4763
        %v4772 = vadd.f32 %v4700, %v4764
        %s4773 = sld [smem:[#allocation3 + $0x188]]
        %v4774 = vstv %s4773
        %v4775 = vmul.f32 %v4277, %v4774
        %v4776 = vmul.f32 %v4278, %v4774
        %v4777 = vmul.f32 %v4279, %v4774
        %v4778 = vmul.f32 %v4280, %v4774
        %v4779 = vmul.f32 %v4281, %v4774
        %v4780 = vmul.f32 %v4282, %v4774
        %v4781 = vmul.f32 %v4502, %v4774
        %v4782 = vmul.f32 %v4275, %v4774
        %v4783 = vadd.f32 %v4711, %v4775
        %v4784 = vadd.f32 %v4712, %v4776
        %v4785 = vadd.f32 %v4713, %v4777
        %v4786 = vadd.f32 %v4714, %v4778
        %v4787 = vadd.f32 %v4715, %v4779
        %v4788 = vadd.f32 %v4716, %v4780
        %v4789 = vadd.f32 %v4717, %v4781
        %v4790 = vadd.f32 %v4718, %v4782
        %v4791 = vld [vmem:[%s467] sm:$0xff]
        %v4792 = vld [vmem:[%s467 + $0x8] sm:$0xff]
        %v4793 = vld [vmem:[%s467 + $0x10] sm:$0xff]
        %v4794 = vld [vmem:[%s467 + $0x18] sm:$0xff]
        %v4795 = vld [vmem:[%s475] sm:$0xff]
        %v4796 = vld [vmem:[%s475 + $0x8] sm:$0xff]
        %v4797 = vld [vmem:[%s475 + $0x10] sm:$0xff]
        %v4798 = vld [vmem:[%s475 + $0x18] sm:$0xff]
        %s4799 = sld [smem:[#allocation5]]
        %v4800 = vstv %s4799
        %v4801 = vadd.f32 %v4729, %v4800
        %v4802 = vadd.f32 %v4730, %v4800
        %v4803 = vadd.f32 %v4731, %v4800
        %v4804 = vadd.f32 %v4732, %v4800
        %v4805 = vadd.f32 %v4733, %v4800
        %v4806 = vadd.f32 %v4734, %v4800
        %v4807 = vadd.f32 %v4735, %v4800
        %v4808 = vadd.f32 %v4736, %v4800
        %v4809 = vmax.f32 %v4801, 0.0
        %v4810 = vmax.f32 %v4802, 0.0
        %v4811 = vmax.f32 %v4803, 0.0
        %v4812 = vmax.f32 %v4804, 0.0
        %v4813 = vmax.f32 %v4805, 0.0
        %v4814 = vmax.f32 %v4806, 0.0
        %v4815 = vmax.f32 %v4807, 0.0
        %v4816 = vmax.f32 %v4808, 0.0
        %v4818 = vcombine.high %v4791, %v4791
        %v4820 = vunpack.c.l.s4 1966171168
        %v4821 = vunpack.c.0.s8 %v4820
        %v4822 = vlaneseq
        %v4823 = vshrl.u32 %v4822, 7
        %v4824 = vsub.s32 %v4821, %v4823
        %v4825 = vrot.slane %v4791, %v4824
        %v4827 = vunpack.c.l.s4 1966171168
        %v4828 = vunpack.c.0.s8 %v4827
        %v4829 = vlaneseq
        %v4830 = vshrl.u32 %v4829, 7
        %v4831 = vsub.s32 %v4828, %v4830
        %v4832 = vrot.slane %v4818, %v4831
        %v4833 = vcombine.high %v4825, %v4825
        %v4834 = vcombine.high %v4832, %v4832
        %v4836 = vunpack.c.l.s4 1966171168
        %v4837 = vunpack.c.0.s8 %v4836
        %v4838 = vlaneseq
        %v4839 = vshrl.u32 %v4838, 7
        %v4840 = vsub.s32 %v4837, %v4839
        %v4841 = vrot.slane %v4825, %v4840
        %v4843 = vunpack.c.l.s4 1966171168
        %v4844 = vunpack.c.0.s8 %v4843
        %v4845 = vlaneseq
        %v4846 = vshrl.u32 %v4845, 7
        %v4847 = vsub.s32 %v4844, %v4846
        %v4848 = vrot.slane %v4832, %v4847
        %v4850 = vunpack.c.l.s4 1966171168
        %v4851 = vunpack.c.0.s8 %v4850
        %v4852 = vlaneseq
        %v4853 = vshrl.u32 %v4852, 7
        %v4854 = vsub.s32 %v4851, %v4853
        %v4855 = vrot.slane %v4833, %v4854
        %v4857 = vunpack.c.l.s4 1966171168
        %v4858 = vunpack.c.0.s8 %v4857
        %v4859 = vlaneseq
        %v4860 = vshrl.u32 %v4859, 7
        %v4861 = vsub.s32 %v4858, %v4860
        %v4862 = vrot.slane %v4834, %v4861
        %v4863 = vcombine.high %v4841, %v4841
        %v4864 = vcombine.high %v4848, %v4848
        %v4865 = vcombine.high %v4855, %v4855
        %v4866 = vcombine.high %v4862, %v4862
        %v4867 = vlaneseq
        %v4868 = vshrl.u32 %v4867, 7
        %v4869 = vsub.s32 0, %v4868
        %v4870 = vrot.slane %v4841, %v4869
        %v4871 = vlaneseq
        %v4872 = vshrl.u32 %v4871, 7
        %v4873 = vsub.s32 0, %v4872
        %v4874 = vrot.slane %v4855, %v4873
        %v4875 = vlaneseq
        %v4876 = vshrl.u32 %v4875, 7
        %v4877 = vsub.s32 0, %v4876
        %v4878 = vrot.slane %v4863, %v4877
        %v4879 = vlaneseq
        %v4880 = vshrl.u32 %v4879, 7
        %v4881 = vsub.s32 0, %v4880
        %v4882 = vrot.slane %v4865, %v4881
        %v4883 = vlaneseq
        %v4884 = vshrl.u32 %v4883, 7
        %v4885 = vsub.s32 0, %v4884
        %v4886 = vrot.slane %v4848, %v4885
        %v4887 = vlaneseq
        %v4888 = vshrl.u32 %v4887, 7
        %v4889 = vsub.s32 0, %v4888
        %v4890 = vrot.slane %v4862, %v4889
        %v4891 = vlaneseq
        %v4892 = vshrl.u32 %v4891, 7
        %v4893 = vsub.s32 0, %v4892
        %v4894 = vrot.slane %v4864, %v4893
        %v4895 = vlaneseq
        %v4896 = vshrl.u32 %v4895, 7
        %v4897 = vsub.s32 0, %v4896
        %v4898 = vrot.slane %v4866, %v4897
        %v4907 = vadd.f32 %v4809, %v4870
        %v4908 = vadd.f32 %v4810, %v4874
        %v4909 = vadd.f32 %v4811, %v4878
        %v4910 = vadd.f32 %v4812, %v4882
        %v4911 = vadd.f32 %v4813, %v4886
        %v4912 = vadd.f32 %v4814, %v4890
        %v4913 = vadd.f32 %v4815, %v4894
        %v4914 = vadd.f32 %v4816, %v4898
        %v4915 = vmax.f32 %v4907, %v4911
        %v4916 = vmax.f32 %v4908, %v4912
        %v4917 = vmax.f32 %v4909, %v4913
        %v4918 = vmax.f32 %v4910, %v4914
        %v4919 = vmax.f32 %v4915, %v4916
        %v4920 = vmax.f32 %v4917, %v4918
        %v4921 = vmax.f32 %v4919, %v4920
        %v4922 = vadd.f32 %v4921, %v4795
        %v4923 = vadd.f32 %v4921, %v4796
        %v4924 = vadd.f32 %v4921, %v4797
        %v4925 = vadd.f32 %v4921, %v4798
        %v4926 = vrot.slane %v4922, 4
        %v4927 = vmax.f32 %v4922, %v4926
        %v4928 = vrot.slane %v4927, 2
        %v4929 = vmax.f32 %v4927, %v4928
        %v4930 = vrot.slane %v4929, 1
        %v4931 = vmax.f32 %v4929, %v4930
        %v4932 = vrot.slane %v4923, 4
        %v4933 = vmax.f32 %v4923, %v4932
        %v4934 = vrot.slane %v4933, 2
        %v4935 = vmax.f32 %v4933, %v4934
        %v4936 = vrot.slane %v4935, 1
        %v4937 = vmax.f32 %v4935, %v4936
        %v4938 = vrot.slane %v4924, 4
        %v4939 = vmax.f32 %v4924, %v4938
        %v4940 = vrot.slane %v4939, 2
        %v4941 = vmax.f32 %v4939, %v4940
        %v4942 = vrot.slane %v4941, 1
        %v4943 = vmax.f32 %v4941, %v4942
        %v4944 = vrot.slane %v4925, 4
        %v4945 = vmax.f32 %v4925, %v4944
        %v4946 = vrot.slane %v4945, 2
        %v4947 = vmax.f32 %v4945, %v4946
        %v4948 = vrot.slane %v4947, 1
        %v4949 = vmax.f32 %v4947, %v4948
        %v4951 = vcombine.high %v4792, %v4792
        %v4953 = vunpack.c.l.s4 1966171168
        %v4954 = vunpack.c.0.s8 %v4953
        %v4955 = vlaneseq
        %v4956 = vshrl.u32 %v4955, 7
        %v4957 = vsub.s32 %v4954, %v4956
        %v4958 = vrot.slane %v4792, %v4957
        %v4960 = vunpack.c.l.s4 1966171168
        %v4961 = vunpack.c.0.s8 %v4960
        %v4962 = vlaneseq
        %v4963 = vshrl.u32 %v4962, 7
        %v4964 = vsub.s32 %v4961, %v4963
        %v4965 = vrot.slane %v4951, %v4964
        %v4966 = vcombine.high %v4958, %v4958
        %v4967 = vcombine.high %v4965, %v4965
        %v4969 = vunpack.c.l.s4 1966171168
        %v4970 = vunpack.c.0.s8 %v4969
        %v4971 = vlaneseq
        %v4972 = vshrl.u32 %v4971, 7
        %v4973 = vsub.s32 %v4970, %v4972
        %v4974 = vrot.slane %v4958, %v4973
        %v4976 = vunpack.c.l.s4 1966171168
        %v4977 = vunpack.c.0.s8 %v4976
        %v4978 = vlaneseq
        %v4979 = vshrl.u32 %v4978, 7
        %v4980 = vsub.s32 %v4977, %v4979
        %v4981 = vrot.slane %v4965, %v4980
        %v4983 = vunpack.c.l.s4 1966171168
        %v4984 = vunpack.c.0.s8 %v4983
        %v4985 = vlaneseq
        %v4986 = vshrl.u32 %v4985, 7
        %v4987 = vsub.s32 %v4984, %v4986
        %v4988 = vrot.slane %v4966, %v4987
        %v4990 = vunpack.c.l.s4 1966171168
        %v4991 = vunpack.c.0.s8 %v4990
        %v4992 = vlaneseq
        %v4993 = vshrl.u32 %v4992, 7
        %v4994 = vsub.s32 %v4991, %v4993
        %v4995 = vrot.slane %v4967, %v4994
        %v4996 = vcombine.high %v4974, %v4974
        %v4997 = vcombine.high %v4981, %v4981
        %v4998 = vcombine.high %v4988, %v4988
        %v4999 = vcombine.high %v4995, %v4995
        %v5000 = vlaneseq
        %v5001 = vshrl.u32 %v5000, 7
        %v5002 = vsub.s32 0, %v5001
        %v5003 = vrot.slane %v4974, %v5002
        %v5004 = vlaneseq
        %v5005 = vshrl.u32 %v5004, 7
        %v5006 = vsub.s32 0, %v5005
        %v5007 = vrot.slane %v4988, %v5006
        %v5008 = vlaneseq
        %v5009 = vshrl.u32 %v5008, 7
        %v5010 = vsub.s32 0, %v5009
        %v5011 = vrot.slane %v4996, %v5010
        %v5012 = vlaneseq
        %v5013 = vshrl.u32 %v5012, 7
        %v5014 = vsub.s32 0, %v5013
        %v5015 = vrot.slane %v4998, %v5014
        %v5016 = vlaneseq
        %v5017 = vshrl.u32 %v5016, 7
        %v5018 = vsub.s32 0, %v5017
        %v5019 = vrot.slane %v4981, %v5018
        %v5020 = vlaneseq
        %v5021 = vshrl.u32 %v5020, 7
        %v5022 = vsub.s32 0, %v5021
        %v5023 = vrot.slane %v4995, %v5022
        %v5024 = vlaneseq
        %v5025 = vshrl.u32 %v5024, 7
        %v5026 = vsub.s32 0, %v5025
        %v5027 = vrot.slane %v4997, %v5026
        %v5028 = vlaneseq
        %v5029 = vshrl.u32 %v5028, 7
        %v5030 = vsub.s32 0, %v5029
        %v5031 = vrot.slane %v4999, %v5030
        %v5040 = vadd.f32 %v4809, %v5003
        %v5041 = vadd.f32 %v4810, %v5007
        %v5042 = vadd.f32 %v4811, %v5011
        %v5043 = vadd.f32 %v4812, %v5015
        %v5044 = vadd.f32 %v4813, %v5019
        %v5045 = vadd.f32 %v4814, %v5023
        %v5046 = vadd.f32 %v4815, %v5027
        %v5047 = vadd.f32 %v4816, %v5031
        %v5048 = vmax.f32 %v5040, %v5044
        %v5049 = vmax.f32 %v5041, %v5045
        %v5050 = vmax.f32 %v5042, %v5046
        %v5051 = vmax.f32 %v5043, %v5047
        %v5052 = vmax.f32 %v5048, %v5049
        %v5053 = vmax.f32 %v5050, %v5051
        %v5054 = vmax.f32 %v5052, %v5053
        %v5055 = vadd.f32 %v5054, %v4795
        %v5056 = vadd.f32 %v5054, %v4796
        %v5057 = vadd.f32 %v5054, %v4797
        %v5058 = vadd.f32 %v5054, %v4798
        %v5059 = vrot.slane %v5055, 4
        %v5060 = vmax.f32 %v5055, %v5059
        %v5061 = vrot.slane %v5060, 2
        %v5062 = vmax.f32 %v5060, %v5061
        %v5063 = vrot.slane %v5062, 1
        %v5064 = vmax.f32 %v5062, %v5063
        %v5065 = vrot.slane %v5056, 4
        %v5066 = vmax.f32 %v5056, %v5065
        %v5067 = vrot.slane %v5066, 2
        %v5068 = vmax.f32 %v5066, %v5067
        %v5069 = vrot.slane %v5068, 1
        %v5070 = vmax.f32 %v5068, %v5069
        %v5071 = vrot.slane %v5057, 4
        %v5072 = vmax.f32 %v5057, %v5071
        %v5073 = vrot.slane %v5072, 2
        %v5074 = vmax.f32 %v5072, %v5073
        %v5075 = vrot.slane %v5074, 1
        %v5076 = vmax.f32 %v5074, %v5075
        %v5077 = vrot.slane %v5058, 4
        %v5078 = vmax.f32 %v5058, %v5077
        %v5079 = vrot.slane %v5078, 2
        %v5080 = vmax.f32 %v5078, %v5079
        %v5081 = vrot.slane %v5080, 1
        %v5082 = vmax.f32 %v5080, %v5081
        %v5084 = vcombine.high %v4793, %v4793
        %v5086 = vunpack.c.l.s4 1966171168
        %v5087 = vunpack.c.0.s8 %v5086
        %v5088 = vlaneseq
        %v5089 = vshrl.u32 %v5088, 7
        %v5090 = vsub.s32 %v5087, %v5089
        %v5091 = vrot.slane %v4793, %v5090
        %v5093 = vunpack.c.l.s4 1966171168
        %v5094 = vunpack.c.0.s8 %v5093
        %v5095 = vlaneseq
        %v5096 = vshrl.u32 %v5095, 7
        %v5097 = vsub.s32 %v5094, %v5096
        %v5098 = vrot.slane %v5084, %v5097
        %v5099 = vcombine.high %v5091, %v5091
        %v5100 = vcombine.high %v5098, %v5098
        %v5102 = vunpack.c.l.s4 1966171168
        %v5103 = vunpack.c.0.s8 %v5102
        %v5104 = vlaneseq
        %v5105 = vshrl.u32 %v5104, 7
        %v5106 = vsub.s32 %v5103, %v5105
        %v5107 = vrot.slane %v5091, %v5106
        %v5109 = vunpack.c.l.s4 1966171168
        %v5110 = vunpack.c.0.s8 %v5109
        %v5111 = vlaneseq
        %v5112 = vshrl.u32 %v5111, 7
        %v5113 = vsub.s32 %v5110, %v5112
        %v5114 = vrot.slane %v5098, %v5113
        %v5116 = vunpack.c.l.s4 1966171168
        %v5117 = vunpack.c.0.s8 %v5116
        %v5118 = vlaneseq
        %v5119 = vshrl.u32 %v5118, 7
        %v5120 = vsub.s32 %v5117, %v5119
        %v5121 = vrot.slane %v5099, %v5120
        %v5123 = vunpack.c.l.s4 1966171168
        %v5124 = vunpack.c.0.s8 %v5123
        %v5125 = vlaneseq
        %v5126 = vshrl.u32 %v5125, 7
        %v5127 = vsub.s32 %v5124, %v5126
        %v5128 = vrot.slane %v5100, %v5127
        %v5129 = vcombine.high %v5107, %v5107
        %v5130 = vcombine.high %v5114, %v5114
        %v5131 = vcombine.high %v5121, %v5121
        %v5132 = vcombine.high %v5128, %v5128
        %v5133 = vlaneseq
        %v5134 = vshrl.u32 %v5133, 7
        %v5135 = vsub.s32 0, %v5134
        %v5136 = vrot.slane %v5107, %v5135
        %v5137 = vlaneseq
        %v5138 = vshrl.u32 %v5137, 7
        %v5139 = vsub.s32 0, %v5138
        %v5140 = vrot.slane %v5121, %v5139
        %v5141 = vlaneseq
        %v5142 = vshrl.u32 %v5141, 7
        %v5143 = vsub.s32 0, %v5142
        %v5144 = vrot.slane %v5129, %v5143
        %v5145 = vlaneseq
        %v5146 = vshrl.u32 %v5145, 7
        %v5147 = vsub.s32 0, %v5146
        %v5148 = vrot.slane %v5131, %v5147
        %v5149 = vlaneseq
        %v5150 = vshrl.u32 %v5149, 7
        %v5151 = vsub.s32 0, %v5150
        %v5152 = vrot.slane %v5114, %v5151
        %v5153 = vlaneseq
        %v5154 = vshrl.u32 %v5153, 7
        %v5155 = vsub.s32 0, %v5154
        %v5156 = vrot.slane %v5128, %v5155
        %v5157 = vlaneseq
        %v5158 = vshrl.u32 %v5157, 7
        %v5159 = vsub.s32 0, %v5158
        %v5160 = vrot.slane %v5130, %v5159
        %v5161 = vlaneseq
        %v5162 = vshrl.u32 %v5161, 7
        %v5163 = vsub.s32 0, %v5162
        %v5164 = vrot.slane %v5132, %v5163
        %v5173 = vadd.f32 %v4809, %v5136
        %v5174 = vadd.f32 %v4810, %v5140
        %v5175 = vadd.f32 %v4811, %v5144
        %v5176 = vadd.f32 %v4812, %v5148
        %v5177 = vadd.f32 %v4813, %v5152
        %v5178 = vadd.f32 %v4814, %v5156
        %v5179 = vadd.f32 %v4815, %v5160
        %v5180 = vadd.f32 %v4816, %v5164
        %v5181 = vmax.f32 %v5173, %v5177
        %v5182 = vmax.f32 %v5174, %v5178
        %v5183 = vmax.f32 %v5175, %v5179
        %v5184 = vmax.f32 %v5176, %v5180
        %v5185 = vmax.f32 %v5181, %v5182
        %v5186 = vmax.f32 %v5183, %v5184
        %v5187 = vmax.f32 %v5185, %v5186
        %v5188 = vadd.f32 %v5187, %v4795
        %v5189 = vadd.f32 %v5187, %v4796
        %v5190 = vadd.f32 %v5187, %v4797
        %v5191 = vadd.f32 %v5187, %v4798
        %v5192 = vrot.slane %v5188, 4
        %v5193 = vmax.f32 %v5188, %v5192
        %v5194 = vrot.slane %v5193, 2
        %v5195 = vmax.f32 %v5193, %v5194
        %v5196 = vrot.slane %v5195, 1
        %v5197 = vmax.f32 %v5195, %v5196
        %v5198 = vrot.slane %v5189, 4
        %v5199 = vmax.f32 %v5189, %v5198
        %v5200 = vrot.slane %v5199, 2
        %v5201 = vmax.f32 %v5199, %v5200
        %v5202 = vrot.slane %v5201, 1
        %v5203 = vmax.f32 %v5201, %v5202
        %v5204 = vrot.slane %v5190, 4
        %v5205 = vmax.f32 %v5190, %v5204
        %v5206 = vrot.slane %v5205, 2
        %v5207 = vmax.f32 %v5205, %v5206
        %v5208 = vrot.slane %v5207, 1
        %v5209 = vmax.f32 %v5207, %v5208
        %v5210 = vrot.slane %v5191, 4
        %v5211 = vmax.f32 %v5191, %v5210
        %v5212 = vrot.slane %v5211, 2
        %v5213 = vmax.f32 %v5211, %v5212
        %v5214 = vrot.slane %v5213, 1
        %v5215 = vmax.f32 %v5213, %v5214
        %v5217 = vcombine.high %v4794, %v4794
        %v5219 = vunpack.c.l.s4 1966171168
        %v5220 = vunpack.c.0.s8 %v5219
        %v5221 = vlaneseq
        %v5222 = vshrl.u32 %v5221, 7
        %v5223 = vsub.s32 %v5220, %v5222
        %v5224 = vrot.slane %v4794, %v5223
        %v5226 = vunpack.c.l.s4 1966171168
        %v5227 = vunpack.c.0.s8 %v5226
        %v5228 = vlaneseq
        %v5229 = vshrl.u32 %v5228, 7
        %v5230 = vsub.s32 %v5227, %v5229
        %v5231 = vrot.slane %v5217, %v5230
        %v5232 = vcombine.high %v5224, %v5224
        %v5233 = vcombine.high %v5231, %v5231
        %v5235 = vunpack.c.l.s4 1966171168
        %v5236 = vunpack.c.0.s8 %v5235
        %v5237 = vlaneseq
        %v5238 = vshrl.u32 %v5237, 7
        %v5239 = vsub.s32 %v5236, %v5238
        %v5240 = vrot.slane %v5224, %v5239
        %v5242 = vunpack.c.l.s4 1966171168
        %v5243 = vunpack.c.0.s8 %v5242
        %v5244 = vlaneseq
        %v5245 = vshrl.u32 %v5244, 7
        %v5246 = vsub.s32 %v5243, %v5245
        %v5247 = vrot.slane %v5231, %v5246
        %v5249 = vunpack.c.l.s4 1966171168
        %v5250 = vunpack.c.0.s8 %v5249
        %v5251 = vlaneseq
        %v5252 = vshrl.u32 %v5251, 7
        %v5253 = vsub.s32 %v5250, %v5252
        %v5254 = vrot.slane %v5232, %v5253
        %v5256 = vunpack.c.l.s4 1966171168
        %v5257 = vunpack.c.0.s8 %v5256
        %v5258 = vlaneseq
        %v5259 = vshrl.u32 %v5258, 7
        %v5260 = vsub.s32 %v5257, %v5259
        %v5261 = vrot.slane %v5233, %v5260
        %v5262 = vcombine.high %v5240, %v5240
        %v5263 = vcombine.high %v5247, %v5247
        %v5264 = vcombine.high %v5254, %v5254
        %v5265 = vcombine.high %v5261, %v5261
        %v5266 = vlaneseq
        %v5267 = vshrl.u32 %v5266, 7
        %v5268 = vsub.s32 0, %v5267
        %v5269 = vrot.slane %v5240, %v5268
        %v5270 = vlaneseq
        %v5271 = vshrl.u32 %v5270, 7
        %v5272 = vsub.s32 0, %v5271
        %v5273 = vrot.slane %v5254, %v5272
        %v5274 = vlaneseq
        %v5275 = vshrl.u32 %v5274, 7
        %v5276 = vsub.s32 0, %v5275
        %v5277 = vrot.slane %v5262, %v5276
        %v5278 = vlaneseq
        %v5279 = vshrl.u32 %v5278, 7
        %v5280 = vsub.s32 0, %v5279
        %v5281 = vrot.slane %v5264, %v5280
        %v5282 = vlaneseq
        %v5283 = vshrl.u32 %v5282, 7
        %v5284 = vsub.s32 0, %v5283
        %v5285 = vrot.slane %v5247, %v5284
        %v5286 = vlaneseq
        %v5287 = vshrl.u32 %v5286, 7
        %v5288 = vsub.s32 0, %v5287
        %v5289 = vrot.slane %v5261, %v5288
        %v5290 = vlaneseq
        %v5291 = vshrl.u32 %v5290, 7
        %v5292 = vsub.s32 0, %v5291
        %v5293 = vrot.slane %v5263, %v5292
        %v5294 = vlaneseq
        %v5295 = vshrl.u32 %v5294, 7
        %v5296 = vsub.s32 0, %v5295
        %v5297 = vrot.slane %v5265, %v5296
        %v5306 = vadd.f32 %v4809, %v5269
        %v5307 = vadd.f32 %v4810, %v5273
        %v5308 = vadd.f32 %v4811, %v5277
        %v5309 = vadd.f32 %v4812, %v5281
        %v5310 = vadd.f32 %v4813, %v5285
        %v5311 = vadd.f32 %v4814, %v5289
        %v5312 = vadd.f32 %v4815, %v5293
        %v5313 = vadd.f32 %v4816, %v5297
        %v5314 = vmax.f32 %v5306, %v5310
        %v5315 = vmax.f32 %v5307, %v5311
        %v5316 = vmax.f32 %v5308, %v5312
        %v5317 = vmax.f32 %v5309, %v5313
        %v5318 = vmax.f32 %v5314, %v5315
        %v5319 = vmax.f32 %v5316, %v5317
        %v5320 = vmax.f32 %v5318, %v5319
        %v5321 = vadd.f32 %v5320, %v4795
        %v5322 = vadd.f32 %v5320, %v4796
        %v5323 = vadd.f32 %v5320, %v4797
        %v5324 = vadd.f32 %v5320, %v4798
        %v5325 = vrot.slane %v5321, 4
        %v5326 = vmax.f32 %v5321, %v5325
        %v5327 = vrot.slane %v5326, 2
        %v5328 = vmax.f32 %v5326, %v5327
        %v5329 = vrot.slane %v5328, 1
        %v5330 = vmax.f32 %v5328, %v5329
        %v5331 = vrot.slane %v5322, 4
        %v5332 = vmax.f32 %v5322, %v5331
        %v5333 = vrot.slane %v5332, 2
        %v5334 = vmax.f32 %v5332, %v5333
        %v5335 = vrot.slane %v5334, 1
        %v5336 = vmax.f32 %v5334, %v5335
        %v5337 = vrot.slane %v5323, 4
        %v5338 = vmax.f32 %v5323, %v5337
        %v5339 = vrot.slane %v5338, 2
        %v5340 = vmax.f32 %v5338, %v5339
        %v5341 = vrot.slane %v5340, 1
        %v5342 = vmax.f32 %v5340, %v5341
        %v5343 = vrot.slane %v5324, 4
        %v5344 = vmax.f32 %v5324, %v5343
        %v5345 = vrot.slane %v5344, 2
        %v5346 = vmax.f32 %v5344, %v5345
        %v5347 = vrot.slane %v5346, 1
        %v5348 = vmax.f32 %v5346, %v5347
        %s5349 = sld [smem:[#allocation5 + $0x1]]
        %v5350 = vstv %s5349
        %v5351 = vadd.f32 %v4747, %v5350
        %v5352 = vadd.f32 %v4748, %v5350
        %v5353 = vadd.f32 %v4749, %v5350
        %v5354 = vadd.f32 %v4750, %v5350
        %v5355 = vadd.f32 %v4751, %v5350
        %v5356 = vadd.f32 %v4752, %v5350
        %v5357 = vadd.f32 %v4753, %v5350
        %v5358 = vadd.f32 %v4754, %v5350
        %v5359 = vmax.f32 %v5351, 0.0
        %v5360 = vmax.f32 %v5352, 0.0
        %v5361 = vmax.f32 %v5353, 0.0
        %v5362 = vmax.f32 %v5354, 0.0
        %v5363 = vmax.f32 %v5355, 0.0
        %v5364 = vmax.f32 %v5356, 0.0
        %v5365 = vmax.f32 %v5357, 0.0
        %v5366 = vmax.f32 %v5358, 0.0
        %v5367 = vadd.f32 %v5359, %v4870
        %v5368 = vadd.f32 %v5360, %v4874
        %v5369 = vadd.f32 %v5361, %v4878
        %v5370 = vadd.f32 %v5362, %v4882
        %v5371 = vadd.f32 %v5363, %v4886
        %v5372 = vadd.f32 %v5364, %v4890
        %v5373 = vadd.f32 %v5365, %v4894
        %v5374 = vadd.f32 %v5366, %v4898
        %v5375 = vmax.f32 %v5367, %v5371
        %v5376 = vmax.f32 %v5368, %v5372
        %v5377 = vmax.f32 %v5369, %v5373
        %v5378 = vmax.f32 %v5370, %v5374
        %v5379 = vmax.f32 %v5375, %v5376
        %v5380 = vmax.f32 %v5377, %v5378
        %v5381 = vmax.f32 %v5379, %v5380
        %v5382 = vadd.f32 %v5381, %v4795
        %v5383 = vadd.f32 %v5381, %v4796
        %v5384 = vadd.f32 %v5381, %v4797
        %v5385 = vadd.f32 %v5381, %v4798
        %v5386 = vrot.slane %v5382, 4
        %v5387 = vmax.f32 %v5382, %v5386
        %v5388 = vrot.slane %v5387, 2
        %v5389 = vmax.f32 %v5387, %v5388
        %v5390 = vrot.slane %v5389, 1
        %v5391 = vmax.f32 %v5389, %v5390
        %v5392 = vrot.slane %v5383, 4
        %v5393 = vmax.f32 %v5383, %v5392
        %v5394 = vrot.slane %v5393, 2
        %v5395 = vmax.f32 %v5393, %v5394
        %v5396 = vrot.slane %v5395, 1
        %v5397 = vmax.f32 %v5395, %v5396
        %v5398 = vrot.slane %v5384, 4
        %v5399 = vmax.f32 %v5384, %v5398
        %v5400 = vrot.slane %v5399, 2
        %v5401 = vmax.f32 %v5399, %v5400
        %v5402 = vrot.slane %v5401, 1
        %v5403 = vmax.f32 %v5401, %v5402
        %v5404 = vrot.slane %v5385, 4
        %v5405 = vmax.f32 %v5385, %v5404
        %v5406 = vrot.slane %v5405, 2
        %v5407 = vmax.f32 %v5405, %v5406
        %v5408 = vrot.slane %v5407, 1
        %v5409 = vmax.f32 %v5407, %v5408
        %v5410 = vadd.f32 %v5359, %v5003
        %v5411 = vadd.f32 %v5360, %v5007
        %v5412 = vadd.f32 %v5361, %v5011
        %v5413 = vadd.f32 %v5362, %v5015
        %v5414 = vadd.f32 %v5363, %v5019
        %v5415 = vadd.f32 %v5364, %v5023
        %v5416 = vadd.f32 %v5365, %v5027
        %v5417 = vadd.f32 %v5366, %v5031
        %v5418 = vmax.f32 %v5410, %v5414
        %v5419 = vmax.f32 %v5411, %v5415
        %v5420 = vmax.f32 %v5412, %v5416
        %v5421 = vmax.f32 %v5413, %v5417
        %v5422 = vmax.f32 %v5418, %v5419
        %v5423 = vmax.f32 %v5420, %v5421
        %v5424 = vmax.f32 %v5422, %v5423
        %v5425 = vadd.f32 %v5424, %v4795
        %v5426 = vadd.f32 %v5424, %v4796
        %v5427 = vadd.f32 %v5424, %v4797
        %v5428 = vadd.f32 %v5424, %v4798
        %v5429 = vrot.slane %v5425, 4
        %v5430 = vmax.f32 %v5425, %v5429
        %v5431 = vrot.slane %v5430, 2
        %v5432 = vmax.f32 %v5430, %v5431
        %v5433 = vrot.slane %v5432, 1
        %v5434 = vmax.f32 %v5432, %v5433
        %v5435 = vrot.slane %v5426, 4
        %v5436 = vmax.f32 %v5426, %v5435
        %v5437 = vrot.slane %v5436, 2
        %v5438 = vmax.f32 %v5436, %v5437
        %v5439 = vrot.slane %v5438, 1
        %v5440 = vmax.f32 %v5438, %v5439
        %v5441 = vrot.slane %v5427, 4
        %v5442 = vmax.f32 %v5427, %v5441
        %v5443 = vrot.slane %v5442, 2
        %v5444 = vmax.f32 %v5442, %v5443
        %v5445 = vrot.slane %v5444, 1
        %v5446 = vmax.f32 %v5444, %v5445
        %v5447 = vrot.slane %v5428, 4
        %v5448 = vmax.f32 %v5428, %v5447
        %v5449 = vrot.slane %v5448, 2
        %v5450 = vmax.f32 %v5448, %v5449
        %v5451 = vrot.slane %v5450, 1
        %v5452 = vmax.f32 %v5450, %v5451
        %v5453 = vadd.f32 %v5359, %v5136
        %v5454 = vadd.f32 %v5360, %v5140
        %v5455 = vadd.f32 %v5361, %v5144
        %v5456 = vadd.f32 %v5362, %v5148
        %v5457 = vadd.f32 %v5363, %v5152
        %v5458 = vadd.f32 %v5364, %v5156
        %v5459 = vadd.f32 %v5365, %v5160
        %v5460 = vadd.f32 %v5366, %v5164
        %v5461 = vmax.f32 %v5453, %v5457
        %v5462 = vmax.f32 %v5454, %v5458
        %v5463 = vmax.f32 %v5455, %v5459
        %v5464 = vmax.f32 %v5456, %v5460
        %v5465 = vmax.f32 %v5461, %v5462
        %v5466 = vmax.f32 %v5463, %v5464
        %v5467 = vmax.f32 %v5465, %v5466
        %v5468 = vadd.f32 %v5467, %v4795
        %v5469 = vadd.f32 %v5467, %v4796
        %v5470 = vadd.f32 %v5467, %v4797
        %v5471 = vadd.f32 %v5467, %v4798
        %v5472 = vrot.slane %v5468, 4
        %v5473 = vmax.f32 %v5468, %v5472
        %v5474 = vrot.slane %v5473, 2
        %v5475 = vmax.f32 %v5473, %v5474
        %v5476 = vrot.slane %v5475, 1
        %v5477 = vmax.f32 %v5475, %v5476
        %v5478 = vrot.slane %v5469, 4
        %v5479 = vmax.f32 %v5469, %v5478
        %v5480 = vrot.slane %v5479, 2
        %v5481 = vmax.f32 %v5479, %v5480
        %v5482 = vrot.slane %v5481, 1
        %v5483 = vmax.f32 %v5481, %v5482
        %v5484 = vrot.slane %v5470, 4
        %v5485 = vmax.f32 %v5470, %v5484
        %v5486 = vrot.slane %v5485, 2
        %v5487 = vmax.f32 %v5485, %v5486
        %v5488 = vrot.slane %v5487, 1
        %v5489 = vmax.f32 %v5487, %v5488
        %v5490 = vrot.slane %v5471, 4
        %v5491 = vmax.f32 %v5471, %v5490
        %v5492 = vrot.slane %v5491, 2
        %v5493 = vmax.f32 %v5491, %v5492
        %v5494 = vrot.slane %v5493, 1
        %v5495 = vmax.f32 %v5493, %v5494
        %v5496 = vadd.f32 %v5359, %v5269
        %v5497 = vadd.f32 %v5360, %v5273
        %v5498 = vadd.f32 %v5361, %v5277
        %v5499 = vadd.f32 %v5362, %v5281
        %v5500 = vadd.f32 %v5363, %v5285
        %v5501 = vadd.f32 %v5364, %v5289
        %v5502 = vadd.f32 %v5365, %v5293
        %v5503 = vadd.f32 %v5366, %v5297
        %v5504 = vmax.f32 %v5496, %v5500
        %v5505 = vmax.f32 %v5497, %v5501
        %v5506 = vmax.f32 %v5498, %v5502
        %v5507 = vmax.f32 %v5499, %v5503
        %v5508 = vmax.f32 %v5504, %v5505
        %v5509 = vmax.f32 %v5506, %v5507
        %v5510 = vmax.f32 %v5508, %v5509
        %v5511 = vadd.f32 %v5510, %v4795
        %v5512 = vadd.f32 %v5510, %v4796
        %v5513 = vadd.f32 %v5510, %v4797
        %v5514 = vadd.f32 %v5510, %v4798
        %v5515 = vrot.slane %v5511, 4
        %v5516 = vmax.f32 %v5511, %v5515
        %v5517 = vrot.slane %v5516, 2
        %v5518 = vmax.f32 %v5516, %v5517
        %v5519 = vrot.slane %v5518, 1
        %v5520 = vmax.f32 %v5518, %v5519
        %v5521 = vrot.slane %v5512, 4
        %v5522 = vmax.f32 %v5512, %v5521
        %v5523 = vrot.slane %v5522, 2
        %v5524 = vmax.f32 %v5522, %v5523
        %v5525 = vrot.slane %v5524, 1
        %v5526 = vmax.f32 %v5524, %v5525
        %v5527 = vrot.slane %v5513, 4
        %v5528 = vmax.f32 %v5513, %v5527
        %v5529 = vrot.slane %v5528, 2
        %v5530 = vmax.f32 %v5528, %v5529
        %v5531 = vrot.slane %v5530, 1
        %v5532 = vmax.f32 %v5530, %v5531
        %v5533 = vrot.slane %v5514, 4
        %v5534 = vmax.f32 %v5514, %v5533
        %v5535 = vrot.slane %v5534, 2
        %v5536 = vmax.f32 %v5534, %v5535
        %v5537 = vrot.slane %v5536, 1
        %v5538 = vmax.f32 %v5536, %v5537
        %s5539 = sld [smem:[#allocation5 + $0x2]]
        %v5540 = vstv %s5539
        %v5541 = vadd.f32 %v4765, %v5540
        %v5542 = vadd.f32 %v4766, %v5540
        %v5543 = vadd.f32 %v4767, %v5540
        %v5544 = vadd.f32 %v4768, %v5540
        %v5545 = vadd.f32 %v4769, %v5540
        %v5546 = vadd.f32 %v4770, %v5540
        %v5547 = vadd.f32 %v4771, %v5540
        %v5548 = vadd.f32 %v4772, %v5540
        %v5549 = vmax.f32 %v5541, 0.0
        %v5550 = vmax.f32 %v5542, 0.0
        %v5551 = vmax.f32 %v5543, 0.0
        %v5552 = vmax.f32 %v5544, 0.0
        %v5553 = vmax.f32 %v5545, 0.0
        %v5554 = vmax.f32 %v5546, 0.0
        %v5555 = vmax.f32 %v5547, 0.0
        %v5556 = vmax.f32 %v5548, 0.0
        %v5557 = vadd.f32 %v5549, %v4870
        %v5558 = vadd.f32 %v5550, %v4874
        %v5559 = vadd.f32 %v5551, %v4878
        %v5560 = vadd.f32 %v5552, %v4882
        %v5561 = vadd.f32 %v5553, %v4886
        %v5562 = vadd.f32 %v5554, %v4890
        %v5563 = vadd.f32 %v5555, %v4894
        %v5564 = vadd.f32 %v5556, %v4898
        %v5565 = vmax.f32 %v5557, %v5561
        %v5566 = vmax.f32 %v5558, %v5562
        %v5567 = vmax.f32 %v5559, %v5563
        %v5568 = vmax.f32 %v5560, %v5564
        %v5569 = vmax.f32 %v5565, %v5566
        %v5570 = vmax.f32 %v5567, %v5568
        %v5571 = vmax.f32 %v5569, %v5570
        %v5572 = vadd.f32 %v5571, %v4795
        %v5573 = vadd.f32 %v5571, %v4796
        %v5574 = vadd.f32 %v5571, %v4797
        %v5575 = vadd.f32 %v5571, %v4798
        %v5576 = vrot.slane %v5572, 4
        %v5577 = vmax.f32 %v5572, %v5576
        %v5578 = vrot.slane %v5577, 2
        %v5579 = vmax.f32 %v5577, %v5578
        %v5580 = vrot.slane %v5579, 1
        %v5581 = vmax.f32 %v5579, %v5580
        %v5582 = vrot.slane %v5573, 4
        %v5583 = vmax.f32 %v5573, %v5582
        %v5584 = vrot.slane %v5583, 2
        %v5585 = vmax.f32 %v5583, %v5584
        %v5586 = vrot.slane %v5585, 1
        %v5587 = vmax.f32 %v5585, %v5586
        %v5588 = vrot.slane %v5574, 4
        %v5589 = vmax.f32 %v5574, %v5588
        %v5590 = vrot.slane %v5589, 2
        %v5591 = vmax.f32 %v5589, %v5590
        %v5592 = vrot.slane %v5591, 1
        %v5593 = vmax.f32 %v5591, %v5592
        %v5594 = vrot.slane %v5575, 4
        %v5595 = vmax.f32 %v5575, %v5594
        %v5596 = vrot.slane %v5595, 2
        %v5597 = vmax.f32 %v5595, %v5596
        %v5598 = vrot.slane %v5597, 1
        %v5599 = vmax.f32 %v5597, %v5598
        %v5600 = vadd.f32 %v5549, %v5003
        %v5601 = vadd.f32 %v5550, %v5007
        %v5602 = vadd.f32 %v5551, %v5011
        %v5603 = vadd.f32 %v5552, %v5015
        %v5604 = vadd.f32 %v5553, %v5019
        %v5605 = vadd.f32 %v5554, %v5023
        %v5606 = vadd.f32 %v5555, %v5027
        %v5607 = vadd.f32 %v5556, %v5031
        %v5608 = vmax.f32 %v5600, %v5604
        %v5609 = vmax.f32 %v5601, %v5605
        %v5610 = vmax.f32 %v5602, %v5606
        %v5611 = vmax.f32 %v5603, %v5607
        %v5612 = vmax.f32 %v5608, %v5609
        %v5613 = vmax.f32 %v5610, %v5611
        %v5614 = vmax.f32 %v5612, %v5613
        %v5615 = vadd.f32 %v5614, %v4795
        %v5616 = vadd.f32 %v5614, %v4796
        %v5617 = vadd.f32 %v5614, %v4797
        %v5618 = vadd.f32 %v5614, %v4798
        %v5619 = vrot.slane %v5615, 4
        %v5620 = vmax.f32 %v5615, %v5619
        %v5621 = vrot.slane %v5620, 2
        %v5622 = vmax.f32 %v5620, %v5621
        %v5623 = vrot.slane %v5622, 1
        %v5624 = vmax.f32 %v5622, %v5623
        %v5625 = vrot.slane %v5616, 4
        %v5626 = vmax.f32 %v5616, %v5625
        %v5627 = vrot.slane %v5626, 2
        %v5628 = vmax.f32 %v5626, %v5627
        %v5629 = vrot.slane %v5628, 1
        %v5630 = vmax.f32 %v5628, %v5629
        %v5631 = vrot.slane %v5617, 4
        %v5632 = vmax.f32 %v5617, %v5631
        %v5633 = vrot.slane %v5632, 2
        %v5634 = vmax.f32 %v5632, %v5633
        %v5635 = vrot.slane %v5634, 1
        %v5636 = vmax.f32 %v5634, %v5635
        %v5637 = vrot.slane %v5618, 4
        %v5638 = vmax.f32 %v5618, %v5637
        %v5639 = vrot.slane %v5638, 2
        %v5640 = vmax.f32 %v5638, %v5639
        %v5641 = vrot.slane %v5640, 1
        %v5642 = vmax.f32 %v5640, %v5641
        %v5643 = vadd.f32 %v5549, %v5136
        %v5644 = vadd.f32 %v5550, %v5140
        %v5645 = vadd.f32 %v5551, %v5144
        %v5646 = vadd.f32 %v5552, %v5148
        %v5647 = vadd.f32 %v5553, %v5152
        %v5648 = vadd.f32 %v5554, %v5156
        %v5649 = vadd.f32 %v5555, %v5160
        %v5650 = vadd.f32 %v5556, %v5164
        %v5651 = vmax.f32 %v5643, %v5647
        %v5652 = vmax.f32 %v5644, %v5648
        %v5653 = vmax.f32 %v5645, %v5649
        %v5654 = vmax.f32 %v5646, %v5650
        %v5655 = vmax.f32 %v5651, %v5652
        %v5656 = vmax.f32 %v5653, %v5654
        %v5657 = vmax.f32 %v5655, %v5656
        %v5658 = vadd.f32 %v5657, %v4795
        %v5659 = vadd.f32 %v5657, %v4796
        %v5660 = vadd.f32 %v5657, %v4797
        %v5661 = vadd.f32 %v5657, %v4798
        %v5662 = vrot.slane %v5658, 4
        %v5663 = vmax.f32 %v5658, %v5662
        %v5664 = vrot.slane %v5663, 2
        %v5665 = vmax.f32 %v5663, %v5664
        %v5666 = vrot.slane %v5665, 1
        %v5667 = vmax.f32 %v5665, %v5666
        %v5668 = vrot.slane %v5659, 4
        %v5669 = vmax.f32 %v5659, %v5668
        %v5670 = vrot.slane %v5669, 2
        %v5671 = vmax.f32 %v5669, %v5670
        %v5672 = vrot.slane %v5671, 1
        %v5673 = vmax.f32 %v5671, %v5672
        %v5674 = vrot.slane %v5660, 4
        %v5675 = vmax.f32 %v5660, %v5674
        %v5676 = vrot.slane %v5675, 2
        %v5677 = vmax.f32 %v5675, %v5676
        %v5678 = vrot.slane %v5677, 1
        %v5679 = vmax.f32 %v5677, %v5678
        %v5680 = vrot.slane %v5661, 4
        %v5681 = vmax.f32 %v5661, %v5680
        %v5682 = vrot.slane %v5681, 2
        %v5683 = vmax.f32 %v5681, %v5682
        %v5684 = vrot.slane %v5683, 1
        %v5685 = vmax.f32 %v5683, %v5684
        %v5686 = vadd.f32 %v5549, %v5269
        %v5687 = vadd.f32 %v5550, %v5273
        %v5688 = vadd.f32 %v5551, %v5277
        %v5689 = vadd.f32 %v5552, %v5281
        %v5690 = vadd.f32 %v5553, %v5285
        %v5691 = vadd.f32 %v5554, %v5289
        %v5692 = vadd.f32 %v5555, %v5293
        %v5693 = vadd.f32 %v5556, %v5297
        %v5694 = vmax.f32 %v5686, %v5690
        %v5695 = vmax.f32 %v5687, %v5691
        %v5696 = vmax.f32 %v5688, %v5692
        %v5697 = vmax.f32 %v5689, %v5693
        %v5698 = vmax.f32 %v5694, %v5695
        %v5699 = vmax.f32 %v5696, %v5697
        %v5700 = vmax.f32 %v5698, %v5699
        %v5701 = vadd.f32 %v5700, %v4795
        %v5702 = vadd.f32 %v5700, %v4796
        %v5703 = vadd.f32 %v5700, %v4797
        %v5704 = vadd.f32 %v5700, %v4798
        %v5705 = vrot.slane %v5701, 4
        %v5706 = vmax.f32 %v5701, %v5705
        %v5707 = vrot.slane %v5706, 2
        %v5708 = vmax.f32 %v5706, %v5707
        %v5709 = vrot.slane %v5708, 1
        %v5710 = vmax.f32 %v5708, %v5709
        %v5711 = vrot.slane %v5702, 4
        %v5712 = vmax.f32 %v5702, %v5711
        %v5713 = vrot.slane %v5712, 2
        %v5714 = vmax.f32 %v5712, %v5713
        %v5715 = vrot.slane %v5714, 1
        %v5716 = vmax.f32 %v5714, %v5715
        %v5717 = vrot.slane %v5703, 4
        %v5718 = vmax.f32 %v5703, %v5717
        %v5719 = vrot.slane %v5718, 2
        %v5720 = vmax.f32 %v5718, %v5719
        %v5721 = vrot.slane %v5720, 1
        %v5722 = vmax.f32 %v5720, %v5721
        %v5723 = vrot.slane %v5704, 4
        %v5724 = vmax.f32 %v5704, %v5723
        %v5725 = vrot.slane %v5724, 2
        %v5726 = vmax.f32 %v5724, %v5725
        %v5727 = vrot.slane %v5726, 1
        %v5728 = vmax.f32 %v5726, %v5727
        %s5729 = sld [smem:[#allocation5 + $0x3]]
        %v5730 = vstv %s5729
        %v5731 = vadd.f32 %v4783, %v5730
        %v5732 = vadd.f32 %v4784, %v5730
        %v5733 = vadd.f32 %v4785, %v5730
        %v5734 = vadd.f32 %v4786, %v5730
        %v5735 = vadd.f32 %v4787, %v5730
        %v5736 = vadd.f32 %v4788, %v5730
        %v5737 = vadd.f32 %v4789, %v5730
        %v5738 = vadd.f32 %v4790, %v5730
        %v5739 = vmax.f32 %v5731, 0.0
        %v5740 = vmax.f32 %v5732, 0.0
        %v5741 = vmax.f32 %v5733, 0.0
        %v5742 = vmax.f32 %v5734, 0.0
        %v5743 = vmax.f32 %v5735, 0.0
        %v5744 = vmax.f32 %v5736, 0.0
        %v5745 = vmax.f32 %v5737, 0.0
        %v5746 = vmax.f32 %v5738, 0.0
        %v5747 = vadd.f32 %v5739, %v4870
        %v5748 = vadd.f32 %v5740, %v4874
        %v5749 = vadd.f32 %v5741, %v4878
        %v5750 = vadd.f32 %v5742, %v4882
        %v5751 = vadd.f32 %v5743, %v4886
        %v5752 = vadd.f32 %v5744, %v4890
        %v5753 = vadd.f32 %v5745, %v4894
        %v5754 = vadd.f32 %v5746, %v4898
        %v5755 = vmax.f32 %v5747, %v5751
        %v5756 = vmax.f32 %v5748, %v5752
        %v5757 = vmax.f32 %v5749, %v5753
        %v5758 = vmax.f32 %v5750, %v5754
        %v5759 = vmax.f32 %v5755, %v5756
        %v5760 = vmax.f32 %v5757, %v5758
        %v5761 = vmax.f32 %v5759, %v5760
        %v5762 = vadd.f32 %v5761, %v4795
        %v5763 = vadd.f32 %v5761, %v4796
        %v5764 = vadd.f32 %v5761, %v4797
        %v5765 = vadd.f32 %v5761, %v4798
        %v5766 = vrot.slane %v5762, 4
        %v5767 = vmax.f32 %v5762, %v5766
        %v5768 = vrot.slane %v5767, 2
        %v5769 = vmax.f32 %v5767, %v5768
        %v5770 = vrot.slane %v5769, 1
        %v5771 = vmax.f32 %v5769, %v5770
        %v5772 = vrot.slane %v5763, 4
        %v5773 = vmax.f32 %v5763, %v5772
        %v5774 = vrot.slane %v5773, 2
        %v5775 = vmax.f32 %v5773, %v5774
        %v5776 = vrot.slane %v5775, 1
        %v5777 = vmax.f32 %v5775, %v5776
        %v5778 = vrot.slane %v5764, 4
        %v5779 = vmax.f32 %v5764, %v5778
        %v5780 = vrot.slane %v5779, 2
        %v5781 = vmax.f32 %v5779, %v5780
        %v5782 = vrot.slane %v5781, 1
        %v5783 = vmax.f32 %v5781, %v5782
        %v5784 = vrot.slane %v5765, 4
        %v5785 = vmax.f32 %v5765, %v5784
        %v5786 = vrot.slane %v5785, 2
        %v5787 = vmax.f32 %v5785, %v5786
        %v5788 = vrot.slane %v5787, 1
        %v5789 = vmax.f32 %v5787, %v5788
        %v5790 = vadd.f32 %v5739, %v5003
        %v5791 = vadd.f32 %v5740, %v5007
        %v5792 = vadd.f32 %v5741, %v5011
        %v5793 = vadd.f32 %v5742, %v5015
        %v5794 = vadd.f32 %v5743, %v5019
        %v5795 = vadd.f32 %v5744, %v5023
        %v5796 = vadd.f32 %v5745, %v5027
        %v5797 = vadd.f32 %v5746, %v5031
        %v5798 = vmax.f32 %v5790, %v5794
        %v5799 = vmax.f32 %v5791, %v5795
        %v5800 = vmax.f32 %v5792, %v5796
        %v5801 = vmax.f32 %v5793, %v5797
        %v5802 = vmax.f32 %v5798, %v5799
        %v5803 = vmax.f32 %v5800, %v5801
        %v5804 = vmax.f32 %v5802, %v5803
        %v5805 = vadd.f32 %v5804, %v4795
        %v5806 = vadd.f32 %v5804, %v4796
        %v5807 = vadd.f32 %v5804, %v4797
        %v5808 = vadd.f32 %v5804, %v4798
        %v5809 = vrot.slane %v5805, 4
        %v5810 = vmax.f32 %v5805, %v5809
        %v5811 = vrot.slane %v5810, 2
        %v5812 = vmax.f32 %v5810, %v5811
        %v5813 = vrot.slane %v5812, 1
        %v5814 = vmax.f32 %v5812, %v5813
        %v5815 = vrot.slane %v5806, 4
        %v5816 = vmax.f32 %v5806, %v5815
        %v5817 = vrot.slane %v5816, 2
        %v5818 = vmax.f32 %v5816, %v5817
        %v5819 = vrot.slane %v5818, 1
        %v5820 = vmax.f32 %v5818, %v5819
        %v5821 = vrot.slane %v5807, 4
        %v5822 = vmax.f32 %v5807, %v5821
        %v5823 = vrot.slane %v5822, 2
        %v5824 = vmax.f32 %v5822, %v5823
        %v5825 = vrot.slane %v5824, 1
        %v5826 = vmax.f32 %v5824, %v5825
        %v5827 = vrot.slane %v5808, 4
        %v5828 = vmax.f32 %v5808, %v5827
        %v5829 = vrot.slane %v5828, 2
        %v5830 = vmax.f32 %v5828, %v5829
        %v5831 = vrot.slane %v5830, 1
        %v5832 = vmax.f32 %v5830, %v5831
        %v5833 = vadd.f32 %v5739, %v5136
        %v5834 = vadd.f32 %v5740, %v5140
        %v5835 = vadd.f32 %v5741, %v5144
        %v5836 = vadd.f32 %v5742, %v5148
        %v5837 = vadd.f32 %v5743, %v5152
        %v5838 = vadd.f32 %v5744, %v5156
        %v5839 = vadd.f32 %v5745, %v5160
        %v5840 = vadd.f32 %v5746, %v5164
        %v5841 = vmax.f32 %v5833, %v5837
        %v5842 = vmax.f32 %v5834, %v5838
        %v5843 = vmax.f32 %v5835, %v5839
        %v5844 = vmax.f32 %v5836, %v5840
        %v5845 = vmax.f32 %v5841, %v5842
        %v5846 = vmax.f32 %v5843, %v5844
        %v5847 = vmax.f32 %v5845, %v5846
        %v5848 = vadd.f32 %v5847, %v4795
        %v5849 = vadd.f32 %v5847, %v4796
        %v5850 = vadd.f32 %v5847, %v4797
        %v5851 = vadd.f32 %v5847, %v4798
        %v5852 = vrot.slane %v5848, 4
        %v5853 = vmax.f32 %v5848, %v5852
        %v5854 = vrot.slane %v5853, 2
        %v5855 = vmax.f32 %v5853, %v5854
        %v5856 = vrot.slane %v5855, 1
        %v5857 = vmax.f32 %v5855, %v5856
        %v5858 = vrot.slane %v5849, 4
        %v5859 = vmax.f32 %v5849, %v5858
        %v5860 = vrot.slane %v5859, 2
        %v5861 = vmax.f32 %v5859, %v5860
        %v5862 = vrot.slane %v5861, 1
        %v5863 = vmax.f32 %v5861, %v5862
        %v5864 = vrot.slane %v5850, 4
        %v5865 = vmax.f32 %v5850, %v5864
        %v5866 = vrot.slane %v5865, 2
        %v5867 = vmax.f32 %v5865, %v5866
        %v5868 = vrot.slane %v5867, 1
        %v5869 = vmax.f32 %v5867, %v5868
        %v5870 = vrot.slane %v5851, 4
        %v5871 = vmax.f32 %v5851, %v5870
        %v5872 = vrot.slane %v5871, 2
        %v5873 = vmax.f32 %v5871, %v5872
        %v5874 = vrot.slane %v5873, 1
        %v5875 = vmax.f32 %v5873, %v5874
        %v5876 = vadd.f32 %v5739, %v5269
        %v5877 = vadd.f32 %v5740, %v5273
        %v5878 = vadd.f32 %v5741, %v5277
        %v5879 = vadd.f32 %v5742, %v5281
        %v5880 = vadd.f32 %v5743, %v5285
        %v5881 = vadd.f32 %v5744, %v5289
        %v5882 = vadd.f32 %v5745, %v5293
        %v5883 = vadd.f32 %v5746, %v5297
        %v5884 = vmax.f32 %v5876, %v5880
        %v5885 = vmax.f32 %v5877, %v5881
        %v5886 = vmax.f32 %v5878, %v5882
        %v5887 = vmax.f32 %v5879, %v5883
        %v5888 = vmax.f32 %v5884, %v5885
        %v5889 = vmax.f32 %v5886, %v5887
        %v5890 = vmax.f32 %v5888, %v5889
        %v5891 = vadd.f32 %v5890, %v4795
        %v5892 = vadd.f32 %v5890, %v4796
        %v5893 = vadd.f32 %v5890, %v4797
        %v5894 = vadd.f32 %v5890, %v4798
        %v5895 = vrot.slane %v5891, 4
        %v5896 = vmax.f32 %v5891, %v5895
        %v5897 = vrot.slane %v5896, 2
        %v5898 = vmax.f32 %v5896, %v5897
        %v5899 = vrot.slane %v5898, 1
        %v5900 = vmax.f32 %v5898, %v5899
        %v5901 = vrot.slane %v5892, 4
        %v5902 = vmax.f32 %v5892, %v5901
        %v5903 = vrot.slane %v5902, 2
        %v5904 = vmax.f32 %v5902, %v5903
        %v5905 = vrot.slane %v5904, 1
        %v5906 = vmax.f32 %v5904, %v5905
        %v5907 = vrot.slane %v5893, 4
        %v5908 = vmax.f32 %v5893, %v5907
        %v5909 = vrot.slane %v5908, 2
        %v5910 = vmax.f32 %v5908, %v5909
        %v5911 = vrot.slane %v5910, 1
        %v5912 = vmax.f32 %v5910, %v5911
        %v5913 = vrot.slane %v5894, 4
        %v5914 = vmax.f32 %v5894, %v5913
        %v5915 = vrot.slane %v5914, 2
        %v5916 = vmax.f32 %v5914, %v5915
        %v5917 = vrot.slane %v5916, 1
        %v5918 = vmax.f32 %v5916, %v5917
        %vm5923 = vcmask 1041409
        %v5924 = vsel %vm5923, %v4937, %v4931
        %vm5925 = vcmask 1042434
        %v5926 = vsel %vm5925, %v4943, %v5924
        %vm5927 = vcmask 1043459
        %v5928 = vsel %vm5927, %v4949, %v5926
        %vm5934 = vcmask 1045509
        %v5935 = vsel %vm5934, %v5070, %v5064
        %vm5936 = vcmask 1046534
        %v5937 = vsel %vm5936, %v5076, %v5935
        %vm5938 = vcmask 1047559
        %v5939 = vsel %vm5938, %v5082, %v5937
        %v5945 = vsel %vm5923, %v5203, %v5197
        %v5946 = vsel %vm5925, %v5209, %v5945
        %v5947 = vsel %vm5927, %v5215, %v5946
        %v5953 = vsel %vm5934, %v5336, %v5330
        %v5954 = vsel %vm5936, %v5342, %v5953
        %v5955 = vsel %vm5938, %v5348, %v5954
        %v5961 = vsel %vm5923, %v5397, %v5391
        %v5962 = vsel %vm5925, %v5403, %v5961
        %v5963 = vsel %vm5927, %v5409, %v5962
        %v5969 = vsel %vm5934, %v5440, %v5434
        %v5970 = vsel %vm5936, %v5446, %v5969
        %v5971 = vsel %vm5938, %v5452, %v5970
        %v5977 = vsel %vm5923, %v5483, %v5477
        %v5978 = vsel %vm5925, %v5489, %v5977
        %v5979 = vsel %vm5927, %v5495, %v5978
        %v5985 = vsel %vm5934, %v5526, %v5520
        %v5986 = vsel %vm5936, %v5532, %v5985
        %v5987 = vsel %vm5938, %v5538, %v5986
        %v5993 = vsel %vm5923, %v5587, %v5581
        %v5994 = vsel %vm5925, %v5593, %v5993
        %v5995 = vsel %vm5927, %v5599, %v5994
        %v6001 = vsel %vm5934, %v5630, %v5624
        %v6002 = vsel %vm5936, %v5636, %v6001
        %v6003 = vsel %vm5938, %v5642, %v6002
        %v6009 = vsel %vm5923, %v5673, %v5667
        %v6010 = vsel %vm5925, %v5679, %v6009
        %v6011 = vsel %vm5927, %v5685, %v6010
        %v6017 = vsel %vm5934, %v5716, %v5710
        %v6018 = vsel %vm5936, %v5722, %v6017
        %v6019 = vsel %vm5938, %v5728, %v6018
        %v6025 = vsel %vm5923, %v5777, %v5771
        %v6026 = vsel %vm5925, %v5783, %v6025
        %v6027 = vsel %vm5927, %v5789, %v6026
        %v6033 = vsel %vm5934, %v5820, %v5814
        %v6034 = vsel %vm5936, %v5826, %v6033
        %v6035 = vsel %vm5938, %v5832, %v6034
        %v6041 = vsel %vm5923, %v5863, %v5857
        %v6042 = vsel %vm5925, %v5869, %v6041
        %v6043 = vsel %vm5927, %v5875, %v6042
        %v6049 = vsel %vm5934, %v5906, %v5900
        %v6050 = vsel %vm5936, %v5912, %v6049
        %v6051 = vsel %vm5938, %v5918, %v6050
        %vm6053 = vcmask 1043456
        %v6054 = vsel %vm6053, %v5928, %v5939
        %v6055 = vsel %vm6053, %v5947, %v5955
        %v6056 = vsel %vm6053, %v5963, %v5971
        %v6057 = vsel %vm6053, %v5979, %v5987
        %v6058 = vsel %vm6053, %v5995, %v6003
        %v6059 = vsel %vm6053, %v6011, %v6019
        %v6060 = vsel %vm6053, %v6027, %v6035
        %v6061 = vsel %vm6053, %v6043, %v6051
        %v6062 = vld [vmem:[%s6] sm:$0xff]
        %v6063 = vld [vmem:[%s6 + $0x8] sm:$0xff]
        %v6064 = vld [vmem:[%s6 + $0x10] sm:$0xf]
        %v6065 = vld [vmem:[%s7] sm:$0xff]
        %v6066 = vld [vmem:[%s7 + $0x8] sm:$0xff]
        %v6067 = vld [vmem:[%s7 + $0x10] sm:$0xf]
        %6069 = vset.pattern.permute.xlu0 0
        %6070 = vperm.xlu0 %6069, %v6065
        %v6071 = vpop.permute.xlu0 %6070
        %6074 = vset.pattern.permute.xlu0 0
        %6075 = vperm.xlu0 %6074, %v6066
        %v6076 = vpop.permute.xlu0 %6075
        %6079 = vset.pattern.permute.xlu0 0
        %6080 = vperm.xlu0 %6079, %v6067
        %v6081 = vpop.permute.xlu0 %6080
        %vm6083 = vcmask 523264
        %v6085 = vsel %vm6083, %v6062, 0
        %v6088 = vsel %vm6083, %v6063, 0
        %v6091 = vsel %vm6083, %v6064, 0
        %6093 = vmatprep.subr.mxu0 0.0
        %6094 = vmatpush1.msra.mxu0 %v6054
        %6095 = vmatprep.subr.mxu0 0.0
        %6096 = vmatpush1.msra.mxu0 %v6055
        %6097 = vmatprep.subr.mxu0 0.0
        %6098 = vmatpush1.msra.mxu0 %v6056
        %6099 = vmatprep.subr.mxu0 0.0
        %6100 = vmatpush1.msra.mxu0 %v6057
        %6101 = vmatprep.subr.mxu0 0.0
        %6102 = vmatpush1.msra.mxu0 %v6058
        %6103 = vmatprep.subr.mxu0 0.0
        %6104 = vmatpush1.msra.mxu0 %v6059
        %6105 = vmatprep.subr.mxu0 0.0
        %6106 = vmatpush1.msra.mxu0 %v6060
        %6107 = vmatprep.subr.mxu0 0.0
        %6108 = vmatpush1.msra.mxu0 %v6061
        %6109 = vmatprep.subr.mxu0 0.0
        %6110 = vmatpush1.msra.mxu0 0.0
        %6111 = vmatprep.subr.mxu0 0.0
        %6112 = vmatpush1.msra.mxu0 0.0
        %6113 = vmatprep.subr.mxu0 0.0
        %6114 = vmatpush1.msra.mxu0 0.0
        %6115 = vmatprep.subr.mxu0 0.0
        %6116 = vmatpush1.msra.mxu0 0.0
        %6117 = vmatprep.subr.mxu0 0.0
        %6118 = vmatpush1.msra.mxu0 0.0
        %6119 = vmatprep.subr.mxu0 0.0
        %6120 = vmatpush1.msra.mxu0 0.0
        %6121 = vmatprep.subr.mxu0 0.0
        %6122 = vmatpush1.msra.mxu0 0.0
        %6123 = vmatprep.subr.mxu0 0.0
        %6124 = vmatpush1.msra.mxu0 0.0
        %6125 = vmatprep.subr.mxu0 0.0
        %6126 = vmatpush1.msra.mxu0 0.0
        %6127 = vmatprep.subr.mxu0 0.0
        %6128 = vmatpush1.msra.mxu0 0.0
        %6129 = vmatprep.subr.mxu0 0.0
        %6130 = vmatpush1.msra.mxu0 0.0
        %6131 = vmatprep.subr.mxu0 0.0
        %6132 = vmatpush1.msra.mxu0 0.0
        %6133 = vmatprep.subr.mxu0 0.0
        %6134 = vmatpush1.msra.mxu0 0.0
        %6135 = vmatprep.subr.mxu0 0.0
        %6136 = vmatpush1.msra.mxu0 0.0
        %6137 = vmatprep.subr.mxu0 0.0
        %6138 = vmatpush1.msra.mxu0 0.0
        %6139 = vmatprep.subr.mxu0 0.0
        %6140 = vmatpush1.msra.mxu0 0.0
        %6141 = vmatprep.subr.mxu0 0.0
        %6142 = vmatpush1.msra.mxu0 0.0
        %6143 = vmatprep.subr.mxu0 0.0
        %6144 = vmatpush1.msra.mxu0 0.0
        %6145 = vmatprep.subr.mxu0 0.0
        %6146 = vmatpush1.msra.mxu0 0.0
        %6147 = vmatprep.subr.mxu0 0.0
        %6148 = vmatpush1.msra.mxu0 0.0
        %6149 = vmatprep.subr.mxu0 0.0
        %6150 = vmatpush1.msra.mxu0 0.0
        %6151 = vmatprep.subr.mxu0 0.0
        %6152 = vmatpush1.msra.mxu0 0.0
        %6153 = vmatprep.subr.mxu0 0.0
        %6154 = vmatpush1.msra.mxu0 0.0
        %6155 = vmatprep.subr.mxu0 0.0
        %6156 = vmatpush1.msra.mxu0 0.0
        %6157 = vmatprep.mubr.f32.mxu0 0.0
        %6158 = vmatmul.mubr.f32.gmra.mrb[0].mxu0 %v6085
        %v6159 = vpop.f32.mrb[0].mxu0
        %v6160 = vadd.f32 %v6071, %v6159
        %v6161 = vpop.f32.mrb[0].mxu0
        %6162 = vmatprep.mubr.f32.mxu0 0.0
        %6163 = vmatmul.mubr.f32.gmra.mrb[0].mxu0 %v6088
        %v6164 = vpop.f32.mrb[0].mxu0
        %v6165 = vadd.f32 %v6076, %v6164
        %v6166 = vpop.f32.mrb[0].mxu0
        %6167 = vmatprep.mubr.f32.mxu0 0.0
        %6168 = vmatmul.mubr.f32.gmra.mrb[0].mxu0 %v6091
        %v6169 = vpop.f32.mrb[0].mxu0
        %v6170 = vadd.f32 %v6081, %v6169
        %v6171 = vpop.f32.mrb[0].mxu0
        %6172 = vdwg.mxu0
        %v6173 = vmax.f32 %v6160, 0.0
        %v6174 = vmax.f32 %v6165, 0.0
        %v6175 = vmax.f32 %v6170, 0.0
        %v6176 = vld [vmem:[%s8] sm:$0x1]
        %v6177 = vld [vmem:[#allocation2] sm:$0x1]
        %6179 = vset.pattern.permute.xlu0 0
        %6180 = vperm.xlu0 %6179, %v6177
        %v6181 = vpop.permute.xlu0 %6180
        %v6183 = vlaneseq
        %v6184 = vshrl.u32 %v6183, 7
        %v6185 = vsub.s32 0, %v6184
        %v6186 = vrot.slane %v6181, %v6185
        %vm6187 = vcmask 162816
        %v6189 = vsel %vm6187, %v6176, 0
        %v6192 = vsel %vm6053, %v6175, 0
        %6194 = vmatprep.subr.mxu0 0.0
        %6195 = vmatpush1.msra.mxu0 %v6173
        %6196 = vmatprep.subr.mxu0 0.0
        %6197 = vmatpush1.msra.mxu0 %v6174
        %6198 = vmatprep.subr.mxu0 0.0
        %6199 = vmatpush1.msra.mxu0 %v6192
        %6200 = vmatprep.subr.mxu0 0.0
        %6201 = vmatpush1.msra.mxu0 0.0
        %6202 = vmatprep.subr.mxu0 0.0
        %6203 = vmatpush1.msra.mxu0 0.0
        %6204 = vmatprep.subr.mxu0 0.0
        %6205 = vmatpush1.msra.mxu0 0.0
        %6206 = vmatprep.subr.mxu0 0.0
        %6207 = vmatpush1.msra.mxu0 0.0
        %6208 = vmatprep.subr.mxu0 0.0
        %6209 = vmatpush1.msra.mxu0 0.0
        %6210 = vmatprep.subr.mxu0 0.0
        %6211 = vmatpush1.msra.mxu0 0.0
        %6212 = vmatprep.subr.mxu0 0.0
        %6213 = vmatpush1.msra.mxu0 0.0
        %6214 = vmatprep.subr.mxu0 0.0
        %6215 = vmatpush1.msra.mxu0 0.0
        %6216 = vmatprep.subr.mxu0 0.0
        %6217 = vmatpush1.msra.mxu0 0.0
        %6218 = vmatprep.subr.mxu0 0.0
        %6219 = vmatpush1.msra.mxu0 0.0
        %6220 = vmatprep.subr.mxu0 0.0
        %6221 = vmatpush1.msra.mxu0 0.0
        %6222 = vmatprep.subr.mxu0 0.0
        %6223 = vmatpush1.msra.mxu0 0.0
        %6224 = vmatprep.subr.mxu0 0.0
        %6225 = vmatpush1.msra.mxu0 0.0
        %6226 = vmatprep.subr.mxu0 0.0
        %6227 = vmatpush1.msra.mxu0 0.0
        %6228 = vmatprep.subr.mxu0 0.0
        %6229 = vmatpush1.msra.mxu0 0.0
        %6230 = vmatprep.subr.mxu0 0.0
        %6231 = vmatpush1.msra.mxu0 0.0
        %6232 = vmatprep.subr.mxu0 0.0
        %6233 = vmatpush1.msra.mxu0 0.0
        %6234 = vmatprep.subr.mxu0 0.0
        %6235 = vmatpush1.msra.mxu0 0.0
        %6236 = vmatprep.subr.mxu0 0.0
        %6237 = vmatpush1.msra.mxu0 0.0
        %6238 = vmatprep.subr.mxu0 0.0
        %6239 = vmatpush1.msra.mxu0 0.0
        %6240 = vmatprep.subr.mxu0 0.0
        %6241 = vmatpush1.msra.mxu0 0.0
        %6242 = vmatprep.subr.mxu0 0.0
        %6243 = vmatpush1.msra.mxu0 0.0
        %6244 = vmatprep.subr.mxu0 0.0
        %6245 = vmatpush1.msra.mxu0 0.0
        %6246 = vmatprep.subr.mxu0 0.0
        %6247 = vmatpush1.msra.mxu0 0.0
        %6248 = vmatprep.subr.mxu0 0.0
        %6249 = vmatpush1.msra.mxu0 0.0
        %6250 = vmatprep.subr.mxu0 0.0
        %6251 = vmatpush1.msra.mxu0 0.0
        %6252 = vmatprep.subr.mxu0 0.0
        %6253 = vmatpush1.msra.mxu0 0.0
        %6254 = vmatprep.subr.mxu0 0.0
        %6255 = vmatpush1.msra.mxu0 0.0
        %6256 = vmatprep.subr.mxu0 0.0
        %6257 = vmatpush1.msra.mxu0 0.0
        %6258 = vmatprep.mubr.f32.mxu0 0.0
        %6259 = vmatmul.mubr.f32.gmra.mrb[0].mxu0 %v6189
        %v6260 = vpop.f32.mrb[0].mxu0
        %v6261 = vadd.f32 %v6186, %v6260
        %v6262 = vpop.f32.mrb[0].mxu0
        %6263 = vdwg.mxu0
        %v6264 = vsub.f32 0.0, %v6261
        %v6265 = vmul.f32 %v6264, 1.442695
        %v6266 = vpow.pop %v6265
        %v6267 = vadd.f32 %v6266, 1.0
        %v6268 = vrcp.pop %v6267
        %6269 = vst [vmem:[%s482] sm:$0x1] %v6268
        %p6270 = scmp.lt.s32.totalorder %s29, 0
        %s6271 = scalar_select %p6270, %s29, 0
        %p6272 = scmp.lt.s32.totalorder %s30, 2
        %s6273 = scalar_select %p6272, %s30, 2
        %s6274 = smul.addr %s6271, 3
        %s6275 = sadd.s32 %s6273, %s6274
        %s6276 = scalar_lea.vmem %s10, %s6275
        // Predicated region
        $region69: #{forward.1} parent=59 // pred_check
          %p6277 = pneg %p291
        $region70: #{forward.1} parent=59 // pred_check_branch
          %6279 = sbr.rel (%p6277) target = $region72
        $region71: #{forward.1} parent=59 // pred_region
          _
        $region72: #{forward.1} parent=59 // pred_fallthru
          _
      $region60: #{forward.1} parent=5 // pred_fallthru
        _
      %p6280 = scmp.le.s32.totalorder 2, %s20
      // Predicated region
      $region73: #{forward.1} parent=5 // pred_check
        %p6281 = pneg %p6280
      $region74: #{forward.1} parent=5 // pred_check_branch
        %6283 = sbr.rel (%p6281) target = $region76
      $region75: #{forward.1} parent=5 // pred_region
        %s6284 = ssub.s32 %s20, 2
        // Predicated region
        $region77: #{forward.1} parent=75 // pred_check
          %p6285 = pneg %p297
        $region78: #{forward.1} parent=75 // pred_check_branch
          %6287 = sbr.rel (%p6285) target = $region80
        $region79: #{forward.1} parent=75 // pred_region
          %p6288 = scmp.lt.s32.totalorder %s31, 0
          %s6289 = scalar_select %p6288, %s31, 0
          %p6290 = scmp.lt.s32.totalorder %s32, 2
          %s6291 = scalar_select %p6290, %s32, 2
          %s6292 = smul.addr %s6289, 3
          %s6293 = sadd.s32 %s6291, %s6292
          %s6294 = scalar_lea.vmem %s10, %s6293
        $region80: #{forward.1} parent=75 // pred_fallthru
          _
      $region76: #{forward.1} parent=5 // pred_fallthru
        _
    $region6: #{forward.1} parent=1 // loop_footer
      %s24 = sadd.s32 1, %s20
    $region7: #{forward.1} parent=1 // loop_footer_branch
      %19 = sbr.rel target = $region3
    $region8: #{forward.1} parent=1 // loop_exit
      _
    %6295 = vsyncpa [#allocation4], 1
    %s6296 = scalar_lea.sflag [#allocation4], 1
    %6297 = vsyncpa %s6296, 1
    %6298 = vsyncpa [#allocation6], 1

</llo_original>
